<compile_context>
chip_gen: v7x
topology: tpu7x:2x2x1
jax: 0.10.0
libtpu: 0.0.40
codegen_flags: <defaults>
</compile_context>

<pallas_src>
import functools
import math

import jax
import jax.numpy as jnp
from jax.experimental import pallas as pl
from jax.experimental.pallas import tpu as pltpu

LANE = 128  # output-channel / class padding target (lane-dense stores)


# ----------------------------------------------------------------------------
# Pallas kernels
# ----------------------------------------------------------------------------
def _make_conv_kernel(has_residual: bool, apply_relu: bool):
  """Fused (im2col-matmul, bf16 operands, f32 acc) + bias [+ residual] [+ relu]."""
  if has_residual:
    def kernel(x_ref, w_ref, b_ref, r_ref, o_ref):
      acc = jnp.dot(x_ref[...], w_ref[...], preferred_element_type=jnp.float32)
      y = acc + b_ref[...] + r_ref[...]
      if apply_relu:
        y = jnp.maximum(y, 0.0)
      o_ref[...] = y.astype(o_ref.dtype)
  else:
    def kernel(x_ref, w_ref, b_ref, o_ref):
      acc = jnp.dot(x_ref[...], w_ref[...], preferred_element_type=jnp.float32)
      y = acc + b_ref[...]
      if apply_relu:
        y = jnp.maximum(y, 0.0)
      o_ref[...] = y.astype(o_ref.dtype)
  return kernel


def _head_kernel(x_ref, w_ref, b_ref, o_ref):
  """AvgPool2d(8) (global spatial mean: final map is exactly 8x8) + Linear."""
  pooled = jnp.mean(x_ref[...], axis=1)                       # (N, C)
  out = jnp.dot(pooled, w_ref[...], preferred_element_type=jnp.float32)
  o_ref[...] = (out + b_ref[...]).astype(o_ref.dtype)


# ----------------------------------------------------------------------------
# Pallas wrappers
# ----------------------------------------------------------------------------
def _tiles_for(m):
  """Pick a big M tile (keeps >=2 grid blocks for the larger layers)."""
  if m >= 1024:
    tm = 512
  elif m >= 512:
    tm = 256
  else:
    tm = ((m + 127) // 128) * 128      # single full block
  mp = ((m + tm - 1) // tm) * tm
  return mp, tm


def _matmul_bn(x, w, bias, res, relu, tm):
  mp, k = x.shape
  cp = w.shape[1]
  kernel = _make_conv_kernel(res is not None, relu)

  in_specs = [
      pl.BlockSpec((tm, k), lambda i: (i, 0)),
      pl.BlockSpec((k, cp), lambda i: (0, 0)),
      pl.BlockSpec((1, cp), lambda i: (0, 0)),
  ]
  args = [x, w, bias]
  if res is not None:
    in_specs.append(pl.BlockSpec((tm, cp), lambda i: (i, 0)))
    args.append(res)

  return pl.pallas_call(
      kernel,
      out_shape=jax.ShapeDtypeStruct((mp, cp), jnp.float32),
      grid=(mp // tm,),
      in_specs=in_specs,
      out_specs=pl.BlockSpec((tm, cp), lambda i: (i, 0)),
      compiler_params=pltpu.CompilerParams(
          dimension_semantics=("parallel",)),
  )(*args)


def conv_bn_act(x, p, c, *, relu, residual=None):
  """x: (N, H, W, Cin) NHWC f32.  p: arrays (w bf16, b f32).  c: static cfg."""
  k, stride, pad = c["ksize"], c["stride"], c["pad"]
  cout = c["cout"]

  n, _, _, cin = x.shape
  if c["cin_pad"] > cin:                       # stem: pad 3 -> 8 input channels
    x = jnp.pad(x, ((0, 0), (0, 0), (0, 0), (0, c["cin_pad"] - cin)))
    cin = c["cin_pad"]
  if pad > 0:
    x = jnp.pad(x, ((0, 0), (pad, pad), (pad, pad), (0, 0)))
  x = x.astype(jnp.bfloat16)                   # bf16 MXU operands / patch bytes

  hp, wp = x.shape[1], x.shape[2]
  ho = (hp - k) // stride + 1
  wo = (wp - k) // stride + 1

  # im2col: feature ordering (ki, kj, cin) -- matches weight reordering.
  # TODO(synk): still materialized by XLA; the 3x3 tap accumulation could move
  # in-kernel for another ~9x HBM-read reduction.
  cols = []
  for i in range(k):
    for j in range(k):
      cols.append(
          x[:, i:i + stride * (ho - 1) + 1:stride,
            j:j + stride * (wo - 1) + 1:stride, :])
  patches = jnp.concatenate(cols, axis=-1)                 # (N,Ho,Wo,k*k*Cin)

  kk = k * k * cin
  m = n * ho * wo
  pm = patches.reshape(m, kk)

  mp, tm = _tiles_for(m)
  if mp > m:
    pm = jnp.pad(pm, ((0, mp - m), (0, 0)))

  cout_pad = p["w"].shape[1]
  res_flat = None
  if residual is not None:
    res_flat = residual.reshape(m, cout).astype(jnp.float32)
    res_flat = jnp.pad(res_flat, ((0, mp - m), (0, cout_pad - cout)))

  out = _matmul_bn(pm, p["w"], p["b"], res_flat, relu, tm)  # (Mp, 128) f32
  return out[:m, :cout].reshape(n, ho, wo, cout)


def head(x_flat, fc_w, fc_b):
  n = x_flat.shape[0]
  cp = fc_w.shape[1]
  return pl.pallas_call(
      _head_kernel,
      out_shape=jax.ShapeDtypeStruct((n, cp), jnp.float32),
  )(x_flat, fc_w, fc_b)


# ----------------------------------------------------------------------------
# Parameter / config construction (mirrors PyTorch __init__, eval-mode BN)
# ----------------------------------------------------------------------------
def _make_conv_params(key, cin, cout, ksize, cin_pad=None):
  if cin_pad is None:
    cin_pad = cin
  # PyTorch init: weight ~ N(0, sqrt(2/(k*k*cout))), shape (cout, cin, k, k)
  nfan = ksize * ksize * cout
  w = jax.random.normal(key, (cout, cin, ksize, ksize), jnp.float32)
  w = w * math.sqrt(2.0 / nfan)
  # Fold eval-mode BN: gamma=1, beta=0, mean=0, var=1 -> scale = 1/sqrt(1+eps)
  w = w * (1.0 / math.sqrt(1.0 + 1e-5))
  if cin_pad > cin:
    w = jnp.pad(w, ((0, 0), (0, cin_pad - cin), (0, 0), (0, 0)))
  # reorder to (ki, kj, cin, cout) -> (k*k*cin, cout); pad cout -> 128 lanes
  w = jnp.transpose(w, (2, 3, 1, 0)).reshape(ksize * ksize * cin_pad, cout)
  w = jnp.pad(w, ((0, 0), (0, LANE - cout)))
  bias = jnp.zeros((1, LANE), jnp.float32)     # folded BN bias (= 0 here)
  return {"w": w.astype(jnp.bfloat16), "b": bias}


def init_model(key, layers=(1, 1, 1), num_classes=10):
  keys = iter(jax.random.split(key, 64))
  cfg = {"num_classes": num_classes}
  params = {}

  cfg["conv1"] = dict(ksize=3, stride=1, pad=1, cin=3, cin_pad=8, cout=16)
  params["conv1"] = _make_conv_params(next(keys), 3, 16, 3, cin_pad=8)

  inplanes = 16
  stage_planes = (16, 32, 64)
  stage_strides = (1, 2, 2)
  cfg_stages, p_stages = [], []
  for planes, s_stride, nblocks in zip(stage_planes, stage_strides, layers):
    cblocks, pblocks = [], []
    for b in range(nblocks):
      stride = s_stride if b == 0 else 1
      bc = {
          "conv1": dict(ksize=3, stride=stride, pad=1,
                        cin=inplanes, cin_pad=inplanes, cout=planes),
          "conv2": dict(ksize=3, stride=1, pad=1,
                        cin=planes, cin_pad=planes, cout=planes),
      }
      bp = {
          "conv1": _make_conv_params(next(keys), inplanes, planes, 3),
          "conv2": _make_conv_params(next(keys), planes, planes, 3),
      }
      if stride != 1 or inplanes != planes:
        bc["ds"] = dict(ksize=1, stride=stride, pad=0,
                        cin=inplanes, cin_pad=inplanes, cout=planes)
        bp["ds"] = _make_conv_params(next(keys), inplanes, planes, 1)
      inplanes = planes
      cblocks.append(bc)
      pblocks.append(bp)
    cfg_stages.append(cblocks)
    p_stages.append(pblocks)
  cfg["stages"] = cfg_stages
  params["stages"] = p_stages

  # nn.Linear(64, num_classes) default init: U(-1/sqrt(64), 1/sqrt(64))
  bound = 1.0 / math.sqrt(64)
  fc_w = jax.random.uniform(next(keys), (64, num_classes), jnp.float32,
                            -bound, bound)
  fc_b = jax.random.uniform(next(keys), (1, num_classes), jnp.float32,
                            -bound, bound)
  params["fc_w"] = jnp.pad(fc_w, ((0, 0), (0, LANE - num_classes)))
  params["fc_b"] = jnp.pad(fc_b, ((0, 0), (0, LANE - num_classes)))
  return cfg, params


# ----------------------------------------------------------------------------
# Forward pass
# ----------------------------------------------------------------------------
def basic_block(x, p, c):
  identity = x
  out = conv_bn_act(x, p["conv1"], c["conv1"], relu=True)
  if "ds" in c:
    identity = conv_bn_act(x, p["ds"], c["ds"], relu=False)
  out = conv_bn_act(out, p["conv2"], c["conv2"], relu=True, residual=identity)
  return out


def resnet_cifar_forward(cfg, params, x_nchw):
  # accept NCHW (PyTorch convention), run NHWC internally
  x = jnp.transpose(x_nchw, (0, 2, 3, 1)).astype(jnp.float32)

  x = conv_bn_act(x, params["conv1"], cfg["conv1"], relu=True)   # conv1+bn1+relu
  for stage_cfg, stage_p in zip(cfg["stages"], params["stages"]):
    for bc, bp in zip(stage_cfg, stage_p):
      x = basic_block(x, bp, bc)

  # x: (N, 8, 8, 64) -> avgpool(8) + flatten + fc
  n, h, w, c = x.shape
  x_flat = x.reshape(n, h * w, c)
  logits = head(x_flat, params["fc_w"], params["fc_b"])          # (N, 128)
  return logits[:, :cfg["num_classes"]]


# ----------------------------------------------------------------------------
if __name__ == "__main__":
  key = jax.random.PRNGKey(0)
  k_param, k_input = jax.random.split(key)

  # ResNet_Cifar(BasicBlock, [1, 1, 1]); CIFAR input is 3x32x32 (the final
  # avgpool(8) requires a 32x32 spatial input).  Small batch of 2.
  cfg, params = init_model(k_param, layers=(1, 1, 1), num_classes=10)
  x = jax.random.normal(k_input, (2, 3, 32, 32), jnp.float32)

  fwd = jax.jit(functools.partial(resnet_cifar_forward, cfg))
  logits = fwd(params, x)
  jax.block_until_ready(logits)

  assert logits.shape == (2, 10), logits.shape
  assert logits.dtype == jnp.float32
  print("KERNEL_OK")
</pallas_src>

<mosaic_0001>
module attributes {stable_mosaic.version = 11 : i64} {
  func.func @kernel(%arg0: i32, %arg1: memref<512x72xbf16, #tpu.memory_space<vmem>>, %arg2: memref<72x128xbf16, #tpu.memory_space<vmem>>, %arg3: memref<1x128xf32, #tpu.memory_space<vmem>>, %arg4: memref<512x128xf32, #tpu.memory_space<vmem>>) attributes {dimension_semantics = [#tpu.dimension_semantics<parallel>], iteration_bounds = array<i64: 4>, scalar_prefetch = 0 : i64, scratch_operands = 0 : i64, tpu.core_type = #tpu.core_type<tc>, window_params = [{transform_indices = @transform_0, window_bounds = array<i64: 512, 72>}, {pipeline_mode = #tpu.pipeline_mode<synchronous>, transform_indices = @transform_1, window_bounds = array<i64: 72, 128>}, {pipeline_mode = #tpu.pipeline_mode<synchronous>, transform_indices = @transform_2, window_bounds = array<i64: 1, 128>}, {transform_indices = @transform_3, window_bounds = array<i64: 512, 128>}]} {
    %c0 = arith.constant 0 : index
    %c0_0 = arith.constant 0 : index
    %0 = vector.load %arg1[%c0, %c0_0] : memref<512x72xbf16, #tpu.memory_space<vmem>>, vector<512x72xbf16>
    %c0_1 = arith.constant 0 : index
    %c0_2 = arith.constant 0 : index
    %1 = vector.load %arg2[%c0_1, %c0_2] : memref<72x128xbf16, #tpu.memory_space<vmem>>, vector<72x128xbf16>
    %cst = arith.constant dense<0.000000e+00> : vector<512x128xf32>
    %2 = tpu.matmul %0, %1, %cst {dimension_numbers = #tpu.dot_dimension_numbers<[1], [0], [0], [1], [0, 0, 1, 1], [], []>} : vector<512x72xbf16>, vector<72x128xbf16>, vector<512x128xf32> -> vector<512x128xf32>
    %c0_3 = arith.constant 0 : index
    %c0_4 = arith.constant 0 : index
    %3 = vector.load %arg3[%c0_3, %c0_4] : memref<1x128xf32, #tpu.memory_space<vmem>>, vector<1x128xf32>
    %4 = vector.broadcast %3 : vector<1x128xf32> to vector<512x128xf32>
    %5 = arith.addf %2, %4 : vector<512x128xf32>
    %cst_5 = arith.constant 0.000000e+00 : f32
    %6 = vector.broadcast %cst_5 : f32 to vector<512x128xf32>
    %7 = arith.maximumf %5, %6 : vector<512x128xf32>
    %c0_6 = arith.constant 0 : index
    %c0_7 = arith.constant 0 : index
    %8 = vector.load %arg4[%c0_6, %c0_7] : memref<512x128xf32, #tpu.memory_space<vmem>>, vector<512x128xf32>
    tpu.vector_store %arg4[%c0_6, %c0_7], %7 {strides = array<i32>} : memref<512x128xf32, #tpu.memory_space<vmem>>, vector<512x128xf32>,
    return
  }
  func.func @transform_0(%arg0: i32) -> (i32, i32) {
    %c0_i32 = arith.constant 0 : i32
    %c0_i32_0 = arith.constant 0 : i32
    return %arg0, %c0_i32 : i32, i32
  }
  func.func @transform_1(%arg0: i32) -> (i32, i32) {
    %c0_i32 = arith.constant 0 : i32
    %c0_i32_0 = arith.constant 0 : i32
    %c0_i32_1 = arith.constant 0 : i32
    return %c0_i32, %c0_i32_0 : i32, i32
  }
  func.func @transform_2(%arg0: i32) -> (i32, i32) {
    %c0_i32 = arith.constant 0 : i32
    %c0_i32_0 = arith.constant 0 : i32
    %c0_i32_1 = arith.constant 0 : i32
    return %c0_i32, %c0_i32_0 : i32, i32
  }
  func.func @transform_3(%arg0: i32) -> (i32, i32) {
    %c0_i32 = arith.constant 0 : i32
    %c0_i32_0 = arith.constant 0 : i32
    return %arg0, %c0_i32 : i32, i32
  }
}

module attributes {stable_mosaic.version = 11 : i64} {
  func.func @kernel(%arg0: i32, %arg1: memref<512x144xbf16, #tpu.memory_space<vmem>>, %arg2: memref<144x128xbf16, #tpu.memory_space<vmem>>, %arg3: memref<1x128xf32, #tpu.memory_space<vmem>>, %arg4: memref<512x128xf32, #tpu.memory_space<vmem>>) attributes {dimension_semantics = [#tpu.dimension_semantics<parallel>], iteration_bounds = array<i64: 4>, scalar_prefetch = 0 : i64, scratch_operands = 0 : i64, tpu.core_type = #tpu.core_type<tc>, window_params = [{transform_indices = @transform_0, window_bounds = array<i64: 512, 144>}, {pipeline_mode = #tpu.pipeline_mode<synchronous>, transform_indices = @transform_1, window_bounds = array<i64: 144, 128>}, {pipeline_mode = #tpu.pipeline_mode<synchronous>, transform_indices = @transform_2, window_bounds = array<i64: 1, 128>}, {transform_indices = @transform_3, window_bounds = array<i64: 512, 128>}]} {
    %c0 = arith.constant 0 : index
    %c0_0 = arith.constant 0 : index
    %0 = vector.load %arg1[%c0, %c0_0] : memref<512x144xbf16, #tpu.memory_space<vmem>>, vector<512x144xbf16>
    %c0_1 = arith.constant 0 : index
    %c0_2 = arith.constant 0 : index
    %1 = vector.load %arg2[%c0_1, %c0_2] : memref<144x128xbf16, #tpu.memory_space<vmem>>, vector<144x128xbf16>
    %cst = arith.constant dense<0.000000e+00> : vector<512x128xf32>
    %2 = tpu.matmul %0, %1, %cst {dimension_numbers = #tpu.dot_dimension_numbers<[1], [0], [0], [1], [0, 0, 1, 1], [], []>} : vector<512x144xbf16>, vector<144x128xbf16>, vector<512x128xf32> -> vector<512x128xf32>
    %c0_3 = arith.constant 0 : index
    %c0_4 = arith.constant 0 : index
    %3 = vector.load %arg3[%c0_3, %c0_4] : memref<1x128xf32, #tpu.memory_space<vmem>>, vector<1x128xf32>
    %4 = vector.broadcast %3 : vector<1x128xf32> to vector<512x128xf32>
    %5 = arith.addf %2, %4 : vector<512x128xf32>
    %cst_5 = arith.constant 0.000000e+00 : f32
    %6 = vector.broadcast %cst_5 : f32 to vector<512x128xf32>
    %7 = arith.maximumf %5, %6 : vector<512x128xf32>
    %c0_6 = arith.constant 0 : index
    %c0_7 = arith.constant 0 : index
    %8 = vector.load %arg4[%c0_6, %c0_7] : memref<512x128xf32, #tpu.memory_space<vmem>>, vector<512x128xf32>
    tpu.vector_store %arg4[%c0_6, %c0_7], %7 {strides = array<i32>} : memref<512x128xf32, #tpu.memory_space<vmem>>, vector<512x128xf32>,
    return
  }
  func.func @transform_0(%arg0: i32) -> (i32, i32) {
    %c0_i32 = arith.constant 0 : i32
    %c0_i32_0 = arith.constant 0 : i32
    return %arg0, %c0_i32 : i32, i32
  }
  func.func @transform_1(%arg0: i32) -> (i32, i32) {
    %c0_i32 = arith.constant 0 : i32
    %c0_i32_0 = arith.constant 0 : i32
    %c0_i32_1 = arith.constant 0 : i32
    return %c0_i32, %c0_i32_0 : i32, i32
  }
  func.func @transform_2(%arg0: i32) -> (i32, i32) {
    %c0_i32 = arith.constant 0 : i32
    %c0_i32_0 = arith.constant 0 : i32
    %c0_i32_1 = arith.constant 0 : i32
    return %c0_i32, %c0_i32_0 : i32, i32
  }
  func.func @transform_3(%arg0: i32) -> (i32, i32) {
    %c0_i32 = arith.constant 0 : i32
    %c0_i32_0 = arith.constant 0 : i32
    return %arg0, %c0_i32 : i32, i32
  }
}

module attributes {stable_mosaic.version = 11 : i64} {
  func.func @kernel(%arg0: i32, %arg1: memref<512x144xbf16, #tpu.memory_space<vmem>>, %arg2: memref<144x128xbf16, #tpu.memory_space<vmem>>, %arg3: memref<1x128xf32, #tpu.memory_space<vmem>>, %arg4: memref<512x128xf32, #tpu.memory_space<vmem>>, %arg5: memref<512x128xf32, #tpu.memory_space<vmem>>) attributes {dimension_semantics = [#tpu.dimension_semantics<parallel>], iteration_bounds = array<i64: 4>, scalar_prefetch = 0 : i64, scratch_operands = 0 : i64, tpu.core_type = #tpu.core_type<tc>, window_params = [{transform_indices = @transform_0, window_bounds = array<i64: 512, 144>}, {pipeline_mode = #tpu.pipeline_mode<synchronous>, transform_indices = @transform_1, window_bounds = array<i64: 144, 128>}, {pipeline_mode = #tpu.pipeline_mode<synchronous>, transform_indices = @transform_2, window_bounds = array<i64: 1, 128>}, {transform_indices = @transform_3, window_bounds = array<i64: 512, 128>}, {transform_indices = @transform_4, window_bounds = array<i64: 512, 128>}]} {
    %c0 = arith.constant 0 : index
    %c0_0 = arith.constant 0 : index
    %0 = vector.load %arg1[%c0, %c0_0] : memref<512x144xbf16, #tpu.memory_space<vmem>>, vector<512x144xbf16>
    %c0_1 = arith.constant 0 : index
    %c0_2 = arith.constant 0 : index
    %1 = vector.load %arg2[%c0_1, %c0_2] : memref<144x128xbf16, #tpu.memory_space<vmem>>, vector<144x128xbf16>
    %cst = arith.constant dense<0.000000e+00> : vector<512x128xf32>
    %2 = tpu.matmul %0, %1, %cst {dimension_numbers = #tpu.dot_dimension_numbers<[1], [0], [0], [1], [0, 0, 1, 1], [], []>} : vector<512x144xbf16>, vector<144x128xbf16>, vector<512x128xf32> -> vector<512x128xf32>
    %c0_3 = arith.constant 0 : index
    %c0_4 = arith.constant 0 : index
    %3 = vector.load %arg3[%c0_3, %c0_4] : memref<1x128xf32, #tpu.memory_space<vmem>>, vector<1x128xf32>
    %4 = vector.broadcast %3 : vector<1x128xf32> to vector<512x128xf32>
    %5 = arith.addf %2, %4 : vector<512x128xf32>
    %c0_5 = arith.constant 0 : index
    %c0_6 = arith.constant 0 : index
    %6 = vector.load %arg4[%c0_5, %c0_6] : memref<512x128xf32, #tpu.memory_space<vmem>>, vector<512x128xf32>
    %7 = arith.addf %5, %6 : vector<512x128xf32>
    %cst_7 = arith.constant 0.000000e+00 : f32
    %8 = vector.broadcast %cst_7 : f32 to vector<512x128xf32>
    %9 = arith.maximumf %7, %8 : vector<512x128xf32>
    %c0_8 = arith.constant 0 : index
    %c0_9 = arith.constant 0 : index
    %10 = vector.load %arg5[%c0_8, %c0_9] : memref<512x128xf32, #tpu.memory_space<vmem>>, vector<512x128xf32>
    tpu.vector_store %arg5[%c0_8, %c0_9], %9 {strides = array<i32>} : memref<512x128xf32, #tpu.memory_space<vmem>>, vector<512x128xf32>,
    return
  }
  func.func @transform_0(%arg0: i32) -> (i32, i32) {
    %c0_i32 = arith.constant 0 : i32
    %c0_i32_0 = arith.constant 0 : i32
    return %arg0, %c0_i32 : i32, i32
  }
  func.func @transform_1(%arg0: i32) -> (i32, i32) {
    %c0_i32 = arith.constant 0 : i32
    %c0_i32_0 = arith.constant 0 : i32
    %c0_i32_1 = arith.constant 0 : i32
    return %c0_i32, %c0_i32_0 : i32, i32
  }
  func.func @transform_2(%arg0: i32) -> (i32, i32) {
    %c0_i32 = arith.constant 0 : i32
    %c0_i32_0 = arith.constant 0 : i32
    %c0_i32_1 = arith.constant 0 : i32
    return %c0_i32, %c0_i32_0 : i32, i32
  }
  func.func @transform_3(%arg0: i32) -> (i32, i32) {
    %c0_i32 = arith.constant 0 : i32
    %c0_i32_0 = arith.constant 0 : i32
    return %arg0, %c0_i32 : i32, i32
  }
  func.func @transform_4(%arg0: i32) -> (i32, i32) {
    %c0_i32 = arith.constant 0 : i32
    %c0_i32_0 = arith.constant 0 : i32
    return %arg0, %c0_i32 : i32, i32
  }
}

module attributes {stable_mosaic.version = 11 : i64} {
  func.func @kernel(%arg0: i32, %arg1: memref<256x16xbf16, #tpu.memory_space<vmem>>, %arg2: memref<16x128xbf16, #tpu.memory_space<vmem>>, %arg3: memref<1x128xf32, #tpu.memory_space<vmem>>, %arg4: memref<256x128xf32, #tpu.memory_space<vmem>>) attributes {dimension_semantics = [#tpu.dimension_semantics<parallel>], iteration_bounds = array<i64: 2>, scalar_prefetch = 0 : i64, scratch_operands = 0 : i64, tpu.core_type = #tpu.core_type<tc>, window_params = [{transform_indices = @transform_0, window_bounds = array<i64: 256, 16>}, {pipeline_mode = #tpu.pipeline_mode<synchronous>, transform_indices = @transform_1, window_bounds = array<i64: 16, 128>}, {pipeline_mode = #tpu.pipeline_mode<synchronous>, transform_indices = @transform_2, window_bounds = array<i64: 1, 128>}, {transform_indices = @transform_3, window_bounds = array<i64: 256, 128>}]} {
    %c0 = arith.constant 0 : index
    %c0_0 = arith.constant 0 : index
    %0 = vector.load %arg1[%c0, %c0_0] : memref<256x16xbf16, #tpu.memory_space<vmem>>, vector<256x16xbf16>
    %c0_1 = arith.constant 0 : index
    %c0_2 = arith.constant 0 : index
    %1 = vector.load %arg2[%c0_1, %c0_2] : memref<16x128xbf16, #tpu.memory_space<vmem>>, vector<16x128xbf16>
    %cst = arith.constant dense<0.000000e+00> : vector<256x128xf32>
    %2 = tpu.matmul %0, %1, %cst {dimension_numbers = #tpu.dot_dimension_numbers<[1], [0], [0], [1], [0, 0, 1, 1], [], []>} : vector<256x16xbf16>, vector<16x128xbf16>, vector<256x128xf32> -> vector<256x128xf32>
    %c0_3 = arith.constant 0 : index
    %c0_4 = arith.constant 0 : index
    %3 = vector.load %arg3[%c0_3, %c0_4] : memref<1x128xf32, #tpu.memory_space<vmem>>, vector<1x128xf32>
    %4 = vector.broadcast %3 : vector<1x128xf32> to vector<256x128xf32>
    %5 = arith.addf %2, %4 : vector<256x128xf32>
    %c0_5 = arith.constant 0 : index
    %c0_6 = arith.constant 0 : index
    %6 = vector.load %arg4[%c0_5, %c0_6] : memref<256x128xf32, #tpu.memory_space<vmem>>, vector<256x128xf32>
    tpu.vector_store %arg4[%c0_5, %c0_6], %5 {strides = array<i32>} : memref<256x128xf32, #tpu.memory_space<vmem>>, vector<256x128xf32>,
    return
  }
  func.func @transform_0(%arg0: i32) -> (i32, i32) {
    %c0_i32 = arith.constant 0 : i32
    %c0_i32_0 = arith.constant 0 : i32
    return %arg0, %c0_i32 : i32, i32
  }
  func.func @transform_1(%arg0: i32) -> (i32, i32) {
    %c0_i32 = arith.constant 0 : i32
    %c0_i32_0 = arith.constant 0 : i32
    %c0_i32_1 = arith.constant 0 : i32
    return %c0_i32, %c0_i32_0 : i32, i32
  }
  func.func @transform_2(%arg0: i32) -> (i32, i32) {
    %c0_i32 = arith.constant 0 : i32
    %c0_i32_0 = arith.constant 0 : i32
    %c0_i32_1 = arith.constant 0 : i32
    return %c0_i32, %c0_i32_0 : i32, i32
  }
  func.func @transform_3(%arg0: i32) -> (i32, i32) {
    %c0_i32 = arith.constant 0 : i32
    %c0_i32_0 = arith.constant 0 : i32
    return %arg0, %c0_i32 : i32, i32
  }
}

module attributes {stable_mosaic.version = 11 : i64} {
  func.func @kernel(%arg0: i32, %arg1: memref<256x144xbf16, #tpu.memory_space<vmem>>, %arg2: memref<144x128xbf16, #tpu.memory_space<vmem>>, %arg3: memref<1x128xf32, #tpu.memory_space<vmem>>, %arg4: memref<256x128xf32, #tpu.memory_space<vmem>>) attributes {dimension_semantics = [#tpu.dimension_semantics<parallel>], iteration_bounds = array<i64: 2>, scalar_prefetch = 0 : i64, scratch_operands = 0 : i64, tpu.core_type = #tpu.core_type<tc>, window_params = [{transform_indices = @transform_0, window_bounds = array<i64: 256, 144>}, {pipeline_mode = #tpu.pipeline_mode<synchronous>, transform_indices = @transform_1, window_bounds = array<i64: 144, 128>}, {pipeline_mode = #tpu.pipeline_mode<synchronous>, transform_indices = @transform_2, window_bounds = array<i64: 1, 128>}, {transform_indices = @transform_3, window_bounds = array<i64: 256, 128>}]} {
    %c0 = arith.constant 0 : index
    %c0_0 = arith.constant 0 : index
    %0 = vector.load %arg1[%c0, %c0_0] : memref<256x144xbf16, #tpu.memory_space<vmem>>, vector<256x144xbf16>
    %c0_1 = arith.constant 0 : index
    %c0_2 = arith.constant 0 : index
    %1 = vector.load %arg2[%c0_1, %c0_2] : memref<144x128xbf16, #tpu.memory_space<vmem>>, vector<144x128xbf16>
    %cst = arith.constant dense<0.000000e+00> : vector<256x128xf32>
    %2 = tpu.matmul %0, %1, %cst {dimension_numbers = #tpu.dot_dimension_numbers<[1], [0], [0], [1], [0, 0, 1, 1], [], []>} : vector<256x144xbf16>, vector<144x128xbf16>, vector<256x128xf32> -> vector<256x128xf32>
    %c0_3 = arith.constant 0 : index
    %c0_4 = arith.constant 0 : index
    %3 = vector.load %arg3[%c0_3, %c0_4] : memref<1x128xf32, #tpu.memory_space<vmem>>, vector<1x128xf32>
    %4 = vector.broadcast %3 : vector<1x128xf32> to vector<256x128xf32>
    %5 = arith.addf %2, %4 : vector<256x128xf32>
    %cst_5 = arith.constant 0.000000e+00 : f32
    %6 = vector.broadcast %cst_5 : f32 to vector<256x128xf32>
    %7 = arith.maximumf %5, %6 : vector<256x128xf32>
    %c0_6 = arith.constant 0 : index
    %c0_7 = arith.constant 0 : index
    %8 = vector.load %arg4[%c0_6, %c0_7] : memref<256x128xf32, #tpu.memory_space<vmem>>, vector<256x128xf32>
    tpu.vector_store %arg4[%c0_6, %c0_7], %7 {strides = array<i32>} : memref<256x128xf32, #tpu.memory_space<vmem>>, vector<256x128xf32>,
    return
  }
  func.func @transform_0(%arg0: i32) -> (i32, i32) {
    %c0_i32 = arith.constant 0 : i32
    %c0_i32_0 = arith.constant 0 : i32
    return %arg0, %c0_i32 : i32, i32
  }
  func.func @transform_1(%arg0: i32) -> (i32, i32) {
    %c0_i32 = arith.constant 0 : i32
    %c0_i32_0 = arith.constant 0 : i32
    %c0_i32_1 = arith.constant 0 : i32
    return %c0_i32, %c0_i32_0 : i32, i32
  }
  func.func @transform_2(%arg0: i32) -> (i32, i32) {
    %c0_i32 = arith.constant 0 : i32
    %c0_i32_0 = arith.constant 0 : i32
    %c0_i32_1 = arith.constant 0 : i32
    return %c0_i32, %c0_i32_0 : i32, i32
  }
  func.func @transform_3(%arg0: i32) -> (i32, i32) {
    %c0_i32 = arith.constant 0 : i32
    %c0_i32_0 = arith.constant 0 : i32
    return %arg0, %c0_i32 : i32, i32
  }
}

module attributes {stable_mosaic.version = 11 : i64} {
  func.func @kernel(%arg0: i32, %arg1: memref<256x288xbf16, #tpu.memory_space<vmem>>, %arg2: memref<288x128xbf16, #tpu.memory_space<vmem>>, %arg3: memref<1x128xf32, #tpu.memory_space<vmem>>, %arg4: memref<256x128xf32, #tpu.memory_space<vmem>>, %arg5: memref<256x128xf32, #tpu.memory_space<vmem>>) attributes {dimension_semantics = [#tpu.dimension_semantics<parallel>], iteration_bounds = array<i64: 2>, scalar_prefetch = 0 : i64, scratch_operands = 0 : i64, tpu.core_type = #tpu.core_type<tc>, window_params = [{transform_indices = @transform_0, window_bounds = array<i64: 256, 288>}, {pipeline_mode = #tpu.pipeline_mode<synchronous>, transform_indices = @transform_1, window_bounds = array<i64: 288, 128>}, {pipeline_mode = #tpu.pipeline_mode<synchronous>, transform_indices = @transform_2, window_bounds = array<i64: 1, 128>}, {transform_indices = @transform_3, window_bounds = array<i64: 256, 128>}, {transform_indices = @transform_4, window_bounds = array<i64: 256, 128>}]} {
    %c0 = arith.constant 0 : index
    %c0_0 = arith.constant 0 : index
    %0 = vector.load %arg1[%c0, %c0_0] : memref<256x288xbf16, #tpu.memory_space<vmem>>, vector<256x288xbf16>
    %c0_1 = arith.constant 0 : index
    %c0_2 = arith.constant 0 : index
    %1 = vector.load %arg2[%c0_1, %c0_2] : memref<288x128xbf16, #tpu.memory_space<vmem>>, vector<288x128xbf16>
    %cst = arith.constant dense<0.000000e+00> : vector<256x128xf32>
    %2 = tpu.matmul %0, %1, %cst {dimension_numbers = #tpu.dot_dimension_numbers<[1], [0], [0], [1], [0, 0, 1, 1], [], []>} : vector<256x288xbf16>, vector<288x128xbf16>, vector<256x128xf32> -> vector<256x128xf32>
    %c0_3 = arith.constant 0 : index
    %c0_4 = arith.constant 0 : index
    %3 = vector.load %arg3[%c0_3, %c0_4] : memref<1x128xf32, #tpu.memory_space<vmem>>, vector<1x128xf32>
    %4 = vector.broadcast %3 : vector<1x128xf32> to vector<256x128xf32>
    %5 = arith.addf %2, %4 : vector<256x128xf32>
    %c0_5 = arith.constant 0 : index
    %c0_6 = arith.constant 0 : index
    %6 = vector.load %arg4[%c0_5, %c0_6] : memref<256x128xf32, #tpu.memory_space<vmem>>, vector<256x128xf32>
    %7 = arith.addf %5, %6 : vector<256x128xf32>
    %cst_7 = arith.constant 0.000000e+00 : f32
    %8 = vector.broadcast %cst_7 : f32 to vector<256x128xf32>
    %9 = arith.maximumf %7, %8 : vector<256x128xf32>
    %c0_8 = arith.constant 0 : index
    %c0_9 = arith.constant 0 : index
    %10 = vector.load %arg5[%c0_8, %c0_9] : memref<256x128xf32, #tpu.memory_space<vmem>>, vector<256x128xf32>
    tpu.vector_store %arg5[%c0_8, %c0_9], %9 {strides = array<i32>} : memref<256x128xf32, #tpu.memory_space<vmem>>, vector<256x128xf32>,
    return
  }
  func.func @transform_0(%arg0: i32) -> (i32, i32) {
    %c0_i32 = arith.constant 0 : i32
    %c0_i32_0 = arith.constant 0 : i32
    return %arg0, %c0_i32 : i32, i32
  }
  func.func @transform_1(%arg0: i32) -> (i32, i32) {
    %c0_i32 = arith.constant 0 : i32
    %c0_i32_0 = arith.constant 0 : i32
    %c0_i32_1 = arith.constant 0 : i32
    return %c0_i32, %c0_i32_0 : i32, i32
  }
  func.func @transform_2(%arg0: i32) -> (i32, i32) {
    %c0_i32 = arith.constant 0 : i32
    %c0_i32_0 = arith.constant 0 : i32
    %c0_i32_1 = arith.constant 0 : i32
    return %c0_i32, %c0_i32_0 : i32, i32
  }
  func.func @transform_3(%arg0: i32) -> (i32, i32) {
    %c0_i32 = arith.constant 0 : i32
    %c0_i32_0 = arith.constant 0 : i32
    return %arg0, %c0_i32 : i32, i32
  }
  func.func @transform_4(%arg0: i32) -> (i32, i32) {
    %c0_i32 = arith.constant 0 : i32
    %c0_i32_0 = arith.constant 0 : i32
    return %arg0, %c0_i32 : i32, i32
  }
}

module attributes {stable_mosaic.version = 11 : i64} {
  func.func @kernel(%arg0: i32, %arg1: memref<128x32xbf16, #tpu.memory_space<vmem>>, %arg2: memref<32x128xbf16, #tpu.memory_space<vmem>>, %arg3: memref<1x128xf32, #tpu.memory_space<vmem>>, %arg4: memref<128x128xf32, #tpu.memory_space<vmem>>) attributes {dimension_semantics = [#tpu.dimension_semantics<parallel>], iteration_bounds = array<i64: 1>, scalar_prefetch = 0 : i64, scratch_operands = 0 : i64, tpu.core_type = #tpu.core_type<tc>, window_params = [{transform_indices = @transform_0, window_bounds = array<i64: 128, 32>}, {pipeline_mode = #tpu.pipeline_mode<synchronous>, transform_indices = @transform_1, window_bounds = array<i64: 32, 128>}, {pipeline_mode = #tpu.pipeline_mode<synchronous>, transform_indices = @transform_2, window_bounds = array<i64: 1, 128>}, {transform_indices = @transform_3, window_bounds = array<i64: 128, 128>}]} {
    %c0 = arith.constant 0 : index
    %c0_0 = arith.constant 0 : index
    %0 = vector.load %arg1[%c0, %c0_0] : memref<128x32xbf16, #tpu.memory_space<vmem>>, vector<128x32xbf16>
    %c0_1 = arith.constant 0 : index
    %c0_2 = arith.constant 0 : index
    %1 = vector.load %arg2[%c0_1, %c0_2] : memref<32x128xbf16, #tpu.memory_space<vmem>>, vector<32x128xbf16>
    %cst = arith.constant dense<0.000000e+00> : vector<128x128xf32>
    %2 = tpu.matmul %0, %1, %cst {dimension_numbers = #tpu.dot_dimension_numbers<[1], [0], [0], [1], [0, 0, 1, 1], [], []>} : vector<128x32xbf16>, vector<32x128xbf16>, vector<128x128xf32> -> vector<128x128xf32>
    %c0_3 = arith.constant 0 : index
    %c0_4 = arith.constant 0 : index
    %3 = vector.load %arg3[%c0_3, %c0_4] : memref<1x128xf32, #tpu.memory_space<vmem>>, vector<1x128xf32>
    %4 = vector.broadcast %3 : vector<1x128xf32> to vector<128x128xf32>
    %5 = arith.addf %2, %4 : vector<128x128xf32>
    %c0_5 = arith.constant 0 : index
    %c0_6 = arith.constant 0 : index
    %6 = vector.load %arg4[%c0_5, %c0_6] : memref<128x128xf32, #tpu.memory_space<vmem>>, vector<128x128xf32>
    tpu.vector_store %arg4[%c0_5, %c0_6], %5 {strides = array<i32>} : memref<128x128xf32, #tpu.memory_space<vmem>>, vector<128x128xf32>,
    return
  }
  func.func @transform_0(%arg0: i32) -> (i32, i32) {
    %c0_i32 = arith.constant 0 : i32
    %c0_i32_0 = arith.constant 0 : i32
    return %arg0, %c0_i32 : i32, i32
  }
  func.func @transform_1(%arg0: i32) -> (i32, i32) {
    %c0_i32 = arith.constant 0 : i32
    %c0_i32_0 = arith.constant 0 : i32
    %c0_i32_1 = arith.constant 0 : i32
    return %c0_i32, %c0_i32_0 : i32, i32
  }
  func.func @transform_2(%arg0: i32) -> (i32, i32) {
    %c0_i32 = arith.constant 0 : i32
    %c0_i32_0 = arith.constant 0 : i32
    %c0_i32_1 = arith.constant 0 : i32
    return %c0_i32, %c0_i32_0 : i32, i32
  }
  func.func @transform_3(%arg0: i32) -> (i32, i32) {
    %c0_i32 = arith.constant 0 : i32
    %c0_i32_0 = arith.constant 0 : i32
    return %arg0, %c0_i32 : i32, i32
  }
}

module attributes {stable_mosaic.version = 11 : i64} {
  func.func @kernel(%arg0: i32, %arg1: memref<128x288xbf16, #tpu.memory_space<vmem>>, %arg2: memref<288x128xbf16, #tpu.memory_space<vmem>>, %arg3: memref<1x128xf32, #tpu.memory_space<vmem>>, %arg4: memref<128x128xf32, #tpu.memory_space<vmem>>) attributes {dimension_semantics = [#tpu.dimension_semantics<parallel>], iteration_bounds = array<i64: 1>, scalar_prefetch = 0 : i64, scratch_operands = 0 : i64, tpu.core_type = #tpu.core_type<tc>, window_params = [{transform_indices = @transform_0, window_bounds = array<i64: 128, 288>}, {pipeline_mode = #tpu.pipeline_mode<synchronous>, transform_indices = @transform_1, window_bounds = array<i64: 288, 128>}, {pipeline_mode = #tpu.pipeline_mode<synchronous>, transform_indices = @transform_2, window_bounds = array<i64: 1, 128>}, {transform_indices = @transform_3, window_bounds = array<i64: 128, 128>}]} {
    %c0 = arith.constant 0 : index
    %c0_0 = arith.constant 0 : index
    %0 = vector.load %arg1[%c0, %c0_0] : memref<128x288xbf16, #tpu.memory_space<vmem>>, vector<128x288xbf16>
    %c0_1 = arith.constant 0 : index
    %c0_2 = arith.constant 0 : index
    %1 = vector.load %arg2[%c0_1, %c0_2] : memref<288x128xbf16, #tpu.memory_space<vmem>>, vector<288x128xbf16>
    %cst = arith.constant dense<0.000000e+00> : vector<128x128xf32>
    %2 = tpu.matmul %0, %1, %cst {dimension_numbers = #tpu.dot_dimension_numbers<[1], [0], [0], [1], [0, 0, 1, 1], [], []>} : vector<128x288xbf16>, vector<288x128xbf16>, vector<128x128xf32> -> vector<128x128xf32>
    %c0_3 = arith.constant 0 : index
    %c0_4 = arith.constant 0 : index
    %3 = vector.load %arg3[%c0_3, %c0_4] : memref<1x128xf32, #tpu.memory_space<vmem>>, vector<1x128xf32>
    %4 = vector.broadcast %3 : vector<1x128xf32> to vector<128x128xf32>
    %5 = arith.addf %2, %4 : vector<128x128xf32>
    %cst_5 = arith.constant 0.000000e+00 : f32
    %6 = vector.broadcast %cst_5 : f32 to vector<128x128xf32>
    %7 = arith.maximumf %5, %6 : vector<128x128xf32>
    %c0_6 = arith.constant 0 : index
    %c0_7 = arith.constant 0 : index
    %8 = vector.load %arg4[%c0_6, %c0_7] : memref<128x128xf32, #tpu.memory_space<vmem>>, vector<128x128xf32>
    tpu.vector_store %arg4[%c0_6, %c0_7], %7 {strides = array<i32>} : memref<128x128xf32, #tpu.memory_space<vmem>>, vector<128x128xf32>,
    return
  }
  func.func @transform_0(%arg0: i32) -> (i32, i32) {
    %c0_i32 = arith.constant 0 : i32
    %c0_i32_0 = arith.constant 0 : i32
    return %arg0, %c0_i32 : i32, i32
  }
  func.func @transform_1(%arg0: i32) -> (i32, i32) {
    %c0_i32 = arith.constant 0 : i32
    %c0_i32_0 = arith.constant 0 : i32
    %c0_i32_1 = arith.constant 0 : i32
    return %c0_i32, %c0_i32_0 : i32, i32
  }
  func.func @transform_2(%arg0: i32) -> (i32, i32) {
    %c0_i32 = arith.constant 0 : i32
    %c0_i32_0 = arith.constant 0 : i32
    %c0_i32_1 = arith.constant 0 : i32
    return %c0_i32, %c0_i32_0 : i32, i32
  }
  func.func @transform_3(%arg0: i32) -> (i32, i32) {
    %c0_i32 = arith.constant 0 : i32
    %c0_i32_0 = arith.constant 0 : i32
    return %arg0, %c0_i32 : i32, i32
  }
}

module attributes {stable_mosaic.version = 11 : i64} {
  func.func @kernel(%arg0: i32, %arg1: memref<128x576xbf16, #tpu.memory_space<vmem>>, %arg2: memref<576x128xbf16, #tpu.memory_space<vmem>>, %arg3: memref<1x128xf32, #tpu.memory_space<vmem>>, %arg4: memref<128x128xf32, #tpu.memory_space<vmem>>, %arg5: memref<128x128xf32, #tpu.memory_space<vmem>>) attributes {dimension_semantics = [#tpu.dimension_semantics<parallel>], iteration_bounds = array<i64: 1>, scalar_prefetch = 0 : i64, scratch_operands = 0 : i64, tpu.core_type = #tpu.core_type<tc>, window_params = [{transform_indices = @transform_0, window_bounds = array<i64: 128, 576>}, {pipeline_mode = #tpu.pipeline_mode<synchronous>, transform_indices = @transform_1, window_bounds = array<i64: 576, 128>}, {pipeline_mode = #tpu.pipeline_mode<synchronous>, transform_indices = @transform_2, window_bounds = array<i64: 1, 128>}, {transform_indices = @transform_3, window_bounds = array<i64: 128, 128>}, {transform_indices = @transform_4, window_bounds = array<i64: 128, 128>}]} {
    %c0 = arith.constant 0 : index
    %c0_0 = arith.constant 0 : index
    %0 = vector.load %arg1[%c0, %c0_0] : memref<128x576xbf16, #tpu.memory_space<vmem>>, vector<128x576xbf16>
    %c0_1 = arith.constant 0 : index
    %c0_2 = arith.constant 0 : index
    %1 = vector.load %arg2[%c0_1, %c0_2] : memref<576x128xbf16, #tpu.memory_space<vmem>>, vector<576x128xbf16>
    %cst = arith.constant dense<0.000000e+00> : vector<128x128xf32>
    %2 = tpu.matmul %0, %1, %cst {dimension_numbers = #tpu.dot_dimension_numbers<[1], [0], [0], [1], [0, 0, 1, 1], [], []>} : vector<128x576xbf16>, vector<576x128xbf16>, vector<128x128xf32> -> vector<128x128xf32>
    %c0_3 = arith.constant 0 : index
    %c0_4 = arith.constant 0 : index
    %3 = vector.load %arg3[%c0_3, %c0_4] : memref<1x128xf32, #tpu.memory_space<vmem>>, vector<1x128xf32>
    %4 = vector.broadcast %3 : vector<1x128xf32> to vector<128x128xf32>
    %5 = arith.addf %2, %4 : vector<128x128xf32>
    %c0_5 = arith.constant 0 : index
    %c0_6 = arith.constant 0 : index
    %6 = vector.load %arg4[%c0_5, %c0_6] : memref<128x128xf32, #tpu.memory_space<vmem>>, vector<128x128xf32>
    %7 = arith.addf %5, %6 : vector<128x128xf32>
    %cst_7 = arith.constant 0.000000e+00 : f32
    %8 = vector.broadcast %cst_7 : f32 to vector<128x128xf32>
    %9 = arith.maximumf %7, %8 : vector<128x128xf32>
    %c0_8 = arith.constant 0 : index
    %c0_9 = arith.constant 0 : index
    %10 = vector.load %arg5[%c0_8, %c0_9] : memref<128x128xf32, #tpu.memory_space<vmem>>, vector<128x128xf32>
    tpu.vector_store %arg5[%c0_8, %c0_9], %9 {strides = array<i32>} : memref<128x128xf32, #tpu.memory_space<vmem>>, vector<128x128xf32>,
    return
  }
  func.func @transform_0(%arg0: i32) -> (i32, i32) {
    %c0_i32 = arith.constant 0 : i32
    %c0_i32_0 = arith.constant 0 : i32
    return %arg0, %c0_i32 : i32, i32
  }
  func.func @transform_1(%arg0: i32) -> (i32, i32) {
    %c0_i32 = arith.constant 0 : i32
    %c0_i32_0 = arith.constant 0 : i32
    %c0_i32_1 = arith.constant 0 : i32
    return %c0_i32, %c0_i32_0 : i32, i32
  }
  func.func @transform_2(%arg0: i32) -> (i32, i32) {
    %c0_i32 = arith.constant 0 : i32
    %c0_i32_0 = arith.constant 0 : i32
    %c0_i32_1 = arith.constant 0 : i32
    return %c0_i32, %c0_i32_0 : i32, i32
  }
  func.func @transform_3(%arg0: i32) -> (i32, i32) {
    %c0_i32 = arith.constant 0 : i32
    %c0_i32_0 = arith.constant 0 : i32
    return %arg0, %c0_i32 : i32, i32
  }
  func.func @transform_4(%arg0: i32) -> (i32, i32) {
    %c0_i32 = arith.constant 0 : i32
    %c0_i32_0 = arith.constant 0 : i32
    return %arg0, %c0_i32 : i32, i32
  }
}

module attributes {stable_mosaic.version = 11 : i64} {
  func.func @_head_kernel(%arg0: memref<2x64x64xf32, #tpu.memory_space<vmem>>, %arg1: memref<64x128xf32, #tpu.memory_space<vmem>>, %arg2: memref<1x128xf32, #tpu.memory_space<vmem>>, %arg3: memref<2x128xf32, #tpu.memory_space<vmem>>) attributes {dimension_semantics = [], scalar_prefetch = 0 : i64, scratch_operands = 0 : i64, tpu.core_type = #tpu.core_type<tc>} {
    %c0 = arith.constant 0 : index
    %c0_0 = arith.constant 0 : index
    %c0_1 = arith.constant 0 : index
    %0 = vector.load %arg0[%c0, %c0_0, %c0_1] : memref<2x64x64xf32, #tpu.memory_space<vmem>>, vector<2x64x64xf32>
    %cst = arith.constant dense<0.000000e+00> : vector<2x64xf32>
    %1 = vector.multi_reduction <add>, %0, %cst [1] : vector<2x64x64xf32> to vector<2x64xf32>
    %cst_2 = arith.constant 6.400000e+01 : f32
    %2 = vector.broadcast %cst_2 : f32 to vector<2x64xf32>
    %3 = arith.divf %1, %2 : vector<2x64xf32>
    %c0_3 = arith.constant 0 : index
    %c0_4 = arith.constant 0 : index
    %4 = vector.load %arg1[%c0_3, %c0_4] : memref<64x128xf32, #tpu.memory_space<vmem>>, vector<64x128xf32>
    %cst_5 = arith.constant dense<0.000000e+00> : vector<2x128xf32>
    %5 = tpu.matmul %3, %4, %cst_5 {dimension_numbers = #tpu.dot_dimension_numbers<[1], [0], [0], [1], [0, 0, 1, 1], [], []>} : vector<2x64xf32>, vector<64x128xf32>, vector<2x128xf32> -> vector<2x128xf32>
    %c0_6 = arith.constant 0 : index
    %c0_7 = arith.constant 0 : index
    %6 = vector.load %arg2[%c0_6, %c0_7] : memref<1x128xf32, #tpu.memory_space<vmem>>, vector<1x128xf32>
    %7 = vector.broadcast %6 : vector<1x128xf32> to vector<2x128xf32>
    %8 = arith.addf %5, %7 : vector<2x128xf32>
    %c0_8 = arith.constant 0 : index
    %c0_9 = arith.constant 0 : index
    %9 = vector.load %arg3[%c0_8, %c0_9] : memref<2x128xf32, #tpu.memory_space<vmem>>, vector<2x128xf32>
    tpu.vector_store %arg3[%c0_8, %c0_9], %8 {strides = array<i32>} : memref<2x128xf32, #tpu.memory_space<vmem>>, vector<2x128xf32>,
    return
  }
}

</mosaic_0001>

<llo_original>
// kernel: resnet_cifar_forward.10
$region0: #{resnet_cifar_forward.10}
  #allocation0 [shape = 'u32[]', space=smem, size = 0x4, offset = 0x4, fixed_abs, tag = 'smem constant byte address 0x4 - core index']
  #allocation1 [shape = 'u32[144,128]{1,0:T(1,128)}', space=vmem, size = 0x12000, scoped, tag = 'internal scratch']
  %s0 = inlined_call_operand.vmem [shape: bf16[2048,72], index: 0, kind: input, shape index: {}]
  %s1 = inlined_call_operand.vmem [shape: bf16[72,128], index: 1, kind: input, shape index: {}]
  %s2 = inlined_call_operand.vmem [shape: f32[1,128], index: 2, kind: input, shape index: {}]
  %s3 = inlined_call_operand.vmem [shape: f32[2048,128], index: 3, kind: output, shape index: {}]
  %s4 = sld [smem:[#allocation0]]
  $region45: #{resnet_cifar_forward.10} parent=0
    _
  %s6 = ssub.s32 1, %s4
  %s7 = scalar_select 0, %s6, %s4
  loop: start=0, step=1, limit=6
  $region2: #{resnet_cifar_forward.10} parent=0 // loop_pre_header
    _
  $region3: #{resnet_cifar_forward.10} parent=0 // loop_header
    %s9 = sphi 0, %s13
    %p10 = scmp.ge.s32.totalorder %s9, 6
    %s19 = sphi 0, %s21
    %s22 = sphi 0, %s19
    %s23 = sphi 0, %s22
    %s39 = sphi 0, %s23
    %s43 = sphi 0, %s43
    %s45 = sphi 0, %s43
    %s46 = sphi 0, %s45
    %s60 = sphi 0, %s46
    %s64 = sphi 0, %s64
    %s66 = sphi 0, %s64
    %s67 = sphi 0, %s66
    %s81 = sphi 0, %s67
    %s87 = sphi 0, %s89
    %s90 = sphi 0, %s87
    %s91 = sphi 0, %s90
    %s107 = sphi 0, %s91
  $region4: #{resnet_cifar_forward.10} parent=0 // loop_header_branch
    %12 = sbr.rel (%p10) target = $region8
  $region5: #{resnet_cifar_forward.10} parent=0 // loop_body
    %s14 = ssub.s32 %s9, 1
    %s15 = ssub.s32 %s9, 2
    %s16 = sadd.s32 %s9, 1
    %s17 = ssub.s32 %s9, %s16
    %p18 = scmp.eq.s32.totalorder %s17, 0
    %s20 = sadd.s32 %s19, 1
    %s21 = scalar_select %p18, %s19, %s20
    %p24 = pneg %p18
    %p25 = scmp.eq.s32.totalorder %s9, 3
    %p26 = por %p24, %p25
    %p27 = scmp.ne.s32.totalorder %s19, %s22
    %p28 = scmp.eq.s32.totalorder %s9, 0
    %p29 = por %p27, %p28
    %p30 = scmp.ne.s32.totalorder %s19, %s22
    %p31 = scmp.eq.s32.totalorder %s14, 3
    %p32 = por %p30, %p31
    %p33 = scmp.ne.s32.totalorder %s22, %s23
    %p34 = scmp.eq.s32.totalorder %s14, 0
    %p35 = por %p33, %p34
    %p36 = scmp.ne.s32.totalorder %s22, %s23
    %p37 = scmp.eq.s32.totalorder %s15, 3
    %p38 = por %p36, %p37
    %p40 = scmp.ne.s32.totalorder %s23, %s39
    %p41 = scmp.eq.s32.totalorder %s15, 0
    %p42 = por %p40, %p41
    %s44 = sadd.s32 %s43, 1
    %p47 = scmp.eq.s32.totalorder %s9, 3
    %p48 = scmp.ne.s32.totalorder %s43, %s45
    %p49 = scmp.eq.s32.totalorder %s9, 0
    %p50 = por %p48, %p49
    %p51 = scmp.ne.s32.totalorder %s43, %s45
    %p52 = scmp.eq.s32.totalorder %s14, 3
    %p53 = por %p51, %p52
    %p54 = scmp.ne.s32.totalorder %s45, %s46
    %p55 = scmp.eq.s32.totalorder %s14, 0
    %p56 = por %p54, %p55
    %p57 = scmp.ne.s32.totalorder %s45, %s46
    %p58 = scmp.eq.s32.totalorder %s15, 3
    %p59 = por %p57, %p58
    %p61 = scmp.ne.s32.totalorder %s46, %s60
    %p62 = scmp.eq.s32.totalorder %s15, 0
    %p63 = por %p61, %p62
    %s65 = sadd.s32 %s64, 1
    %p68 = scmp.eq.s32.totalorder %s9, 3
    %p69 = scmp.ne.s32.totalorder %s64, %s66
    %p70 = scmp.eq.s32.totalorder %s9, 0
    %p71 = por %p69, %p70
    %p72 = scmp.ne.s32.totalorder %s64, %s66
    %p73 = scmp.eq.s32.totalorder %s14, 3
    %p74 = por %p72, %p73
    %p75 = scmp.ne.s32.totalorder %s66, %s67
    %p76 = scmp.eq.s32.totalorder %s14, 0
    %p77 = por %p75, %p76
    %p78 = scmp.ne.s32.totalorder %s66, %s67
    %p79 = scmp.eq.s32.totalorder %s15, 3
    %p80 = por %p78, %p79
    %p82 = scmp.ne.s32.totalorder %s67, %s81
    %p83 = scmp.eq.s32.totalorder %s15, 0
    %p84 = por %p82, %p83
    %s85 = ssub.s32 %s9, %s16
    %p86 = scmp.eq.s32.totalorder %s85, 0
    %s88 = sadd.s32 %s87, 1
    %s89 = scalar_select %p86, %s87, %s88
    %p92 = pneg %p86
    %p93 = scmp.eq.s32.totalorder %s9, 3
    %p94 = por %p92, %p93
    %p95 = scmp.ne.s32.totalorder %s87, %s90
    %p96 = scmp.eq.s32.totalorder %s9, 0
    %p97 = por %p95, %p96
    %p98 = scmp.ne.s32.totalorder %s87, %s90
    %p99 = scmp.eq.s32.totalorder %s14, 3
    %p100 = por %p98, %p99
    %p101 = scmp.ne.s32.totalorder %s90, %s91
    %p102 = scmp.eq.s32.totalorder %s14, 0
    %p103 = por %p101, %p102
    %p104 = scmp.ne.s32.totalorder %s90, %s91
    %p105 = scmp.eq.s32.totalorder %s15, 3
    %p106 = por %p104, %p105
    %p108 = scmp.ne.s32.totalorder %s91, %s107
    %p109 = scmp.eq.s32.totalorder %s15, 0
    %p110 = por %p108, %p109
    %p111 = scmp.le.s32.totalorder 1, %s9
    %p112 = scmp.lt.s32.totalorder %s9, 5
    %p113 = pnand %p111, %p112
    %p114 = pneg %p113
    // Predicated region
    $region9: #{resnet_cifar_forward.10} parent=5 // pred_check
      _
    $region10: #{resnet_cifar_forward.10} parent=5 // pred_check_branch
      %116 = sbr.rel (%p113) target = $region12
    $region11: #{resnet_cifar_forward.10} parent=5 // pred_region
      %s117 = ssub.s32 %s9, 1
      // Predicated region
      $region13: #{resnet_cifar_forward.10} parent=11 // pred_check
        %p118 = pneg %p56
      $region14: #{resnet_cifar_forward.10} parent=11 // pred_check_branch
        %120 = sbr.rel (%p118) target = $region16
      $region15: #{resnet_cifar_forward.10} parent=11 // pred_region
        _
      $region16: #{resnet_cifar_forward.10} parent=11 // pred_fallthru
        _
      // Predicated region
      $region17: #{resnet_cifar_forward.10} parent=11 // pred_check
        %p121 = pneg %p77
      $region18: #{resnet_cifar_forward.10} parent=11 // pred_check_branch
        %123 = sbr.rel (%p121) target = $region20
      $region19: #{resnet_cifar_forward.10} parent=11 // pred_region
        _
      $region20: #{resnet_cifar_forward.10} parent=11 // pred_fallthru
        _
    $region12: #{resnet_cifar_forward.10} parent=5 // pred_fallthru
      _
    %p124 = scmp.lt.s32.totalorder %s9, 4
    // Predicated region
    $region21: #{resnet_cifar_forward.10} parent=5 // pred_check
      %p125 = pneg %p124
    $region22: #{resnet_cifar_forward.10} parent=5 // pred_check_branch
      %127 = sbr.rel (%p125) target = $region24
    $region23: #{resnet_cifar_forward.10} parent=5 // pred_region
      // Predicated region
      $region25: #{resnet_cifar_forward.10} parent=23 // pred_check
        %p128 = pneg %p29
      $region26: #{resnet_cifar_forward.10} parent=23 // pred_check_branch
        %130 = sbr.rel (%p128) target = $region28
      $region27: #{resnet_cifar_forward.10} parent=23 // pred_region
        %s131 = smul.u32 64, %s9
        %p132 = scmp.lt.s32.totalorder %s131, 255
        %s133 = scalar_select %p132, %s131, 255
        %s134 = smul.addr %s133, 4
        %s135 = scalar_lea.vmem %s0, %s134
        %s136 = smul.u32 64, %s9
      $region28: #{resnet_cifar_forward.10} parent=23 // pred_fallthru
        _
    $region24: #{resnet_cifar_forward.10} parent=5 // pred_fallthru
      _
    %p137 = scmp.le.s32.totalorder 1, %s9
    %p138 = scmp.lt.s32.totalorder %s9, 5
    %p139 = pnand %p137, %p138
    %p140 = pneg %p139
    // Predicated region
    $region29: #{resnet_cifar_forward.10} parent=5 // pred_check
      _
    $region30: #{resnet_cifar_forward.10} parent=5 // pred_check_branch
      %142 = sbr.rel (%p139) target = $region32
    $region31: #{resnet_cifar_forward.10} parent=5 // pred_region
      %s143 = ssub.s32 %s9, 1
      %s144 = smul.u32 64, %s14
      %p145 = scmp.lt.s32.totalorder %s144, 255
      %s146 = scalar_select %p145, %s144, 255
      %s147 = smul.addr %s146, 4
      %s148 = scalar_lea.vmem %s0, %s147
      %p149 = pneg %p35
      %p150 = pneg %p32
      %p151 = pneg %p56
      %p152 = pneg %p53
      %p153 = pneg %p77
      %p154 = pneg %p74
      %p155 = pneg %p103
      %p156 = pneg %p100
      %s157 = smul.u32 64, %s14
      %p158 = scmp.lt.s32.totalorder %s157, 255
      %s159 = scalar_select %p158, %s157, 255
      %s160 = smul.addr %s159, 8
      %s161 = scalar_lea.vmem %s3, %s160
      %s162 = smul.u32 64, %s14
      %p163 = scmp.lt.s32.totalorder %s162, 255
      %s164 = scalar_select %p163, %s162, 255
      %s165 = smul.addr %s164, 4
      %s166 = scalar_lea.vmem %s0, %s165
      %s167 = smul.u32 64, %s14
      %s168 = smul.u32 64, %s14
      %p169 = scmp.lt.s32.totalorder %s168, 255
      %s170 = scalar_select %p169, %s168, 255
      %s171 = smul.addr %s170, 8
      %s172 = scalar_lea.vmem %s3, %s171
      %s173 = smul.u32 64, %s14
      %v175 = vld [vmem:[%s166] sm:$0xf]
      %v176 = vld [vmem:[%s166 + $0x4] sm:$0xf]
      %v177 = vld [vmem:[%s166 + $0x8] sm:$0xf]
      %v178 = vld [vmem:[%s166 + $0xc] sm:$0xf]
      %v179 = vld [vmem:[%s166 + $0x10] sm:$0xf]
      %v180 = vld [vmem:[%s166 + $0x14] sm:$0xf]
      %v181 = vld [vmem:[%s166 + $0x18] sm:$0xf]
      %v182 = vld [vmem:[%s166 + $0x1c] sm:$0xf]
      %v183 = vld [vmem:[%s166 + $0x20] sm:$0xf]
      %v184 = vld [vmem:[%s166 + $0x24] sm:$0xf]
      %v185 = vld [vmem:[%s166 + $0x28] sm:$0xf]
      %v186 = vld [vmem:[%s166 + $0x2c] sm:$0xf]
      %v187 = vld [vmem:[%s166 + $0x30] sm:$0xf]
      %v188 = vld [vmem:[%s166 + $0x34] sm:$0xf]
      %v189 = vld [vmem:[%s166 + $0x38] sm:$0xf]
      %v190 = vld [vmem:[%s166 + $0x3c] sm:$0xf]
      %v191 = vld [vmem:[%s166 + $0x40] sm:$0xf]
      %v192 = vld [vmem:[%s166 + $0x44] sm:$0xf]
      %v193 = vld [vmem:[%s166 + $0x48] sm:$0xf]
      %v194 = vld [vmem:[%s166 + $0x4c] sm:$0xf]
      %v195 = vld [vmem:[%s166 + $0x50] sm:$0xf]
      %v196 = vld [vmem:[%s166 + $0x54] sm:$0xf]
      %v197 = vld [vmem:[%s166 + $0x58] sm:$0xf]
      %v198 = vld [vmem:[%s166 + $0x5c] sm:$0xf]
      %v199 = vld [vmem:[%s166 + $0x60] sm:$0xf]
      %v200 = vld [vmem:[%s166 + $0x64] sm:$0xf]
      %v201 = vld [vmem:[%s166 + $0x68] sm:$0xf]
      %v202 = vld [vmem:[%s166 + $0x6c] sm:$0xf]
      %v203 = vld [vmem:[%s166 + $0x70] sm:$0xf]
      %v204 = vld [vmem:[%s166 + $0x74] sm:$0xf]
      %v205 = vld [vmem:[%s166 + $0x78] sm:$0xf]
      %v206 = vld [vmem:[%s166 + $0x7c] sm:$0xf]
      %v207 = vld [vmem:[%s166 + $0x80] sm:$0xf]
      %v208 = vld [vmem:[%s166 + $0x84] sm:$0xf]
      %v209 = vld [vmem:[%s166 + $0x88] sm:$0xf]
      %v210 = vld [vmem:[%s166 + $0x8c] sm:$0xf]
      %v211 = vld [vmem:[%s166 + $0x90] sm:$0xf]
      %v212 = vld [vmem:[%s166 + $0x94] sm:$0xf]
      %v213 = vld [vmem:[%s166 + $0x98] sm:$0xf]
      %v214 = vld [vmem:[%s166 + $0x9c] sm:$0xf]
      %v215 = vld [vmem:[%s166 + $0xa0] sm:$0xf]
      %v216 = vld [vmem:[%s166 + $0xa4] sm:$0xf]
      %v217 = vld [vmem:[%s166 + $0xa8] sm:$0xf]
      %v218 = vld [vmem:[%s166 + $0xac] sm:$0xf]
      %v219 = vld [vmem:[%s166 + $0xb0] sm:$0xf]
      %v220 = vld [vmem:[%s166 + $0xb4] sm:$0xf]
      %v221 = vld [vmem:[%s166 + $0xb8] sm:$0xf]
      %v222 = vld [vmem:[%s166 + $0xbc] sm:$0xf]
      %v223 = vld [vmem:[%s166 + $0xc0] sm:$0xf]
      %v224 = vld [vmem:[%s166 + $0xc4] sm:$0xf]
      %v225 = vld [vmem:[%s166 + $0xc8] sm:$0xf]
      %v226 = vld [vmem:[%s166 + $0xcc] sm:$0xf]
      %v227 = vld [vmem:[%s166 + $0xd0] sm:$0xf]
      %v228 = vld [vmem:[%s166 + $0xd4] sm:$0xf]
      %v229 = vld [vmem:[%s166 + $0xd8] sm:$0xf]
      %v230 = vld [vmem:[%s166 + $0xdc] sm:$0xf]
      %v231 = vld [vmem:[%s166 + $0xe0] sm:$0xf]
      %v232 = vld [vmem:[%s166 + $0xe4] sm:$0xf]
      %v233 = vld [vmem:[%s166 + $0xe8] sm:$0xf]
      %v234 = vld [vmem:[%s166 + $0xec] sm:$0xf]
      %v235 = vld [vmem:[%s166 + $0xf0] sm:$0xf]
      %v236 = vld [vmem:[%s166 + $0xf4] sm:$0xf]
      %v237 = vld [vmem:[%s166 + $0xf8] sm:$0xf]
      %v238 = vld [vmem:[%s166 + $0xfc] sm:$0xf]
      %v239 = vld [vmem:[%s1] sm:$0xf]
      %v240 = vld [vmem:[%s1 + $0x4] sm:$0xf]
      %v241 = vld [vmem:[%s1 + $0x8] sm:$0xf]
      %v242 = vld [vmem:[%s1 + $0xc] sm:$0xf]
      %v243 = vld [vmem:[%s1 + $0x10] sm:$0xf]
      %v244 = vld [vmem:[%s1 + $0x14] sm:$0xf]
      %v245 = vld [vmem:[%s1 + $0x18] sm:$0xf]
      %v246 = vld [vmem:[%s1 + $0x1c] sm:$0xf]
      %v247 = vld [vmem:[%s1 + $0x20] sm:$0xf]
      %v248 = vld [vmem:[%s2] sm:$0x1]
      %v250 = vlaneseq
      %v251 = vshrl.u32 %v250, 7
      %v252 = vsub.s32 0, %v251
      %v253 = vrot.slane %v248, %v252
      %v319 = vunpack.c.l.b16 %v175
      %v320 = vunpack.c.l.b16 %v176
      %v321 = vunpack.c.l.b16 %v177
      %v322 = vunpack.c.l.b16 %v178
      %v323 = vunpack.c.l.b16 %v179
      %v324 = vunpack.c.l.b16 %v180
      %v325 = vunpack.c.l.b16 %v181
      %v326 = vunpack.c.l.b16 %v182
      %v327 = vunpack.c.l.b16 %v183
      %v328 = vunpack.c.l.b16 %v184
      %v329 = vunpack.c.l.b16 %v185
      %v330 = vunpack.c.l.b16 %v186
      %v331 = vunpack.c.l.b16 %v187
      %v332 = vunpack.c.l.b16 %v188
      %v333 = vunpack.c.l.b16 %v189
      %v334 = vunpack.c.l.b16 %v190
      %v335 = vunpack.c.l.b16 %v191
      %v336 = vunpack.c.l.b16 %v192
      %v337 = vunpack.c.l.b16 %v193
      %v338 = vunpack.c.l.b16 %v194
      %v339 = vunpack.c.l.b16 %v195
      %v340 = vunpack.c.l.b16 %v196
      %v341 = vunpack.c.l.b16 %v197
      %v342 = vunpack.c.l.b16 %v198
      %v343 = vunpack.c.l.b16 %v199
      %v344 = vunpack.c.l.b16 %v200
      %v345 = vunpack.c.l.b16 %v201
      %v346 = vunpack.c.l.b16 %v202
      %v347 = vunpack.c.l.b16 %v203
      %v348 = vunpack.c.l.b16 %v204
      %v349 = vunpack.c.l.b16 %v205
      %v350 = vunpack.c.l.b16 %v206
      %v351 = vunpack.c.l.b16 %v207
      %v352 = vunpack.c.l.b16 %v208
      %v353 = vunpack.c.l.b16 %v209
      %v354 = vunpack.c.l.b16 %v210
      %v355 = vunpack.c.l.b16 %v211
      %v356 = vunpack.c.l.b16 %v212
      %v357 = vunpack.c.l.b16 %v213
      %v358 = vunpack.c.l.b16 %v214
      %v359 = vunpack.c.l.b16 %v215
      %v360 = vunpack.c.l.b16 %v216
      %v361 = vunpack.c.l.b16 %v217
      %v362 = vunpack.c.l.b16 %v218
      %v363 = vunpack.c.l.b16 %v219
      %v364 = vunpack.c.l.b16 %v220
      %v365 = vunpack.c.l.b16 %v221
      %v366 = vunpack.c.l.b16 %v222
      %v367 = vunpack.c.l.b16 %v223
      %v368 = vunpack.c.l.b16 %v224
      %v369 = vunpack.c.l.b16 %v225
      %v370 = vunpack.c.l.b16 %v226
      %v371 = vunpack.c.l.b16 %v227
      %v372 = vunpack.c.l.b16 %v228
      %v373 = vunpack.c.l.b16 %v229
      %v374 = vunpack.c.l.b16 %v230
      %v375 = vunpack.c.l.b16 %v231
      %v376 = vunpack.c.l.b16 %v232
      %v377 = vunpack.c.l.b16 %v233
      %v378 = vunpack.c.l.b16 %v234
      %v379 = vunpack.c.l.b16 %v235
      %v380 = vunpack.c.l.b16 %v236
      %v381 = vunpack.c.l.b16 %v237
      %v382 = vunpack.c.l.b16 %v238
      %v383 = vpack.c.b16 %v320, %v319
      %v384 = vpack.c.b16 %v322, %v321
      %v385 = vpack.c.b16 %v324, %v323
      %v386 = vpack.c.b16 %v326, %v325
      %v387 = vpack.c.b16 %v328, %v327
      %v388 = vpack.c.b16 %v330, %v329
      %v389 = vpack.c.b16 %v332, %v331
      %v390 = vpack.c.b16 %v334, %v333
      %v391 = vpack.c.b16 %v336, %v335
      %v392 = vpack.c.b16 %v338, %v337
      %v393 = vpack.c.b16 %v340, %v339
      %v394 = vpack.c.b16 %v342, %v341
      %v395 = vpack.c.b16 %v344, %v343
      %v396 = vpack.c.b16 %v346, %v345
      %v397 = vpack.c.b16 %v348, %v347
      %v398 = vpack.c.b16 %v350, %v349
      %v399 = vpack.c.b16 %v352, %v351
      %v400 = vpack.c.b16 %v354, %v353
      %v401 = vpack.c.b16 %v356, %v355
      %v402 = vpack.c.b16 %v358, %v357
      %v403 = vpack.c.b16 %v360, %v359
      %v404 = vpack.c.b16 %v362, %v361
      %v405 = vpack.c.b16 %v364, %v363
      %v406 = vpack.c.b16 %v366, %v365
      %v407 = vpack.c.b16 %v368, %v367
      %v408 = vpack.c.b16 %v370, %v369
      %v409 = vpack.c.b16 %v372, %v371
      %v410 = vpack.c.b16 %v374, %v373
      %v411 = vpack.c.b16 %v376, %v375
      %v412 = vpack.c.b16 %v378, %v377
      %v413 = vpack.c.b16 %v380, %v379
      %v414 = vpack.c.b16 %v382, %v381
      %v424 = vunpack.c.l.b16 %v239
      %v425 = vunpack.c.l.b16 %v240
      %v426 = vunpack.c.l.b16 %v241
      %v427 = vunpack.c.l.b16 %v242
      %v428 = vunpack.c.l.b16 %v243
      %v429 = vunpack.c.l.b16 %v244
      %v430 = vunpack.c.l.b16 %v245
      %v431 = vunpack.c.l.b16 %v246
      %v432 = vunpack.c.l.b16 %v247
      %v433 = vpack.c.b16 %v425, %v424
      %v434 = vpack.c.b16 %v427, %v426
      %v435 = vpack.c.b16 %v429, %v428
      %v436 = vpack.c.b16 %v431, %v430
      %v437 = vpack.c.b16 %v432, %v432
      %vm442 = vcmask 588800
      %v444 = vsel %vm442, %v383, 0
      %v447 = vsel %vm442, %v384, 0
      %v450 = vsel %vm442, %v385, 0
      %v453 = vsel %vm442, %v386, 0
      %v456 = vsel %vm442, %v387, 0
      %v459 = vsel %vm442, %v388, 0
      %v462 = vsel %vm442, %v389, 0
      %v465 = vsel %vm442, %v390, 0
      %v468 = vsel %vm442, %v391, 0
      %v471 = vsel %vm442, %v392, 0
      %v474 = vsel %vm442, %v393, 0
      %v477 = vsel %vm442, %v394, 0
      %v480 = vsel %vm442, %v395, 0
      %v483 = vsel %vm442, %v396, 0
      %v486 = vsel %vm442, %v397, 0
      %v489 = vsel %vm442, %v398, 0
      %v492 = vsel %vm442, %v399, 0
      %v495 = vsel %vm442, %v400, 0
      %v498 = vsel %vm442, %v401, 0
      %v501 = vsel %vm442, %v402, 0
      %v504 = vsel %vm442, %v403, 0
      %v507 = vsel %vm442, %v404, 0
      %v510 = vsel %vm442, %v405, 0
      %v513 = vsel %vm442, %v406, 0
      %v516 = vsel %vm442, %v407, 0
      %v519 = vsel %vm442, %v408, 0
      %v522 = vsel %vm442, %v409, 0
      %v525 = vsel %vm442, %v410, 0
      %v528 = vsel %vm442, %v411, 0
      %v531 = vsel %vm442, %v412, 0
      %v534 = vsel %vm442, %v413, 0
      %v537 = vsel %vm442, %v414, 0
      %vm539 = vcmask 1043456
      %v541 = vsel %vm539, %v437, 0
      %543 = vmatprep.subr.bf16.mxu0 0
      %544 = vmatpush1.bf16.msra.mxu0 %v433
      %545 = vmatprep.subr.bf16.mxu0 0
      %546 = vmatpush1.bf16.msra.mxu0 %v434
      %547 = vmatprep.subr.bf16.mxu0 0
      %548 = vmatpush1.bf16.msra.mxu0 %v435
      %549 = vmatprep.subr.bf16.mxu0 0
      %550 = vmatpush1.bf16.msra.mxu0 %v436
      %551 = vmatprep.subr.bf16.mxu0 0
      %552 = vmatpush1.bf16.msra.mxu0 %v541
      %553 = vmatprep.subr.bf16.mxu0 0
      %554 = vmatpush1.bf16.msra.mxu0 0
      %555 = vmatprep.subr.bf16.mxu0 0
      %556 = vmatpush1.bf16.msra.mxu0 0
      %557 = vmatprep.subr.bf16.mxu0 0
      %558 = vmatpush1.bf16.msra.mxu0 0
      %559 = vmatprep.subr.bf16.mxu0 0
      %560 = vmatpush1.bf16.msra.mxu0 0
      %561 = vmatprep.subr.bf16.mxu0 0
      %562 = vmatpush1.bf16.msra.mxu0 0
      %563 = vmatprep.subr.bf16.mxu0 0
      %564 = vmatpush1.bf16.msra.mxu0 0
      %565 = vmatprep.subr.bf16.mxu0 0
      %566 = vmatpush1.bf16.msra.mxu0 0
      %567 = vmatprep.subr.bf16.mxu0 0
      %568 = vmatpush1.bf16.msra.mxu0 0
      %569 = vmatprep.subr.bf16.mxu0 0
      %570 = vmatpush1.bf16.msra.mxu0 0
      %571 = vmatprep.subr.bf16.mxu0 0
      %572 = vmatpush1.bf16.msra.mxu0 0
      %573 = vmatprep.subr.bf16.mxu0 0
      %574 = vmatpush1.bf16.msra.mxu0 0
      %575 = vmatprep.mubr.bf16.mxu0 0
      %576 = vmatmul.mubr.bf16.gmra.mrb[0].mxu0 %v444
      %v577 = vpop.f32.mrb[0].mxu0
      %v578 = vadd.f32 %v253, %v577
      %v579 = vpop.f32.mrb[0].mxu0
      %v580 = vpop.f32.mrb[0].mxu0
      %v581 = vadd.f32 %v253, %v580
      %v582 = vpop.f32.mrb[0].mxu0
      %583 = vmatprep.mubr.bf16.mxu0 0
      %584 = vmatmul.mubr.bf16.gmra.mrb[0].mxu0 %v447
      %v585 = vpop.f32.mrb[0].mxu0
      %v586 = vadd.f32 %v253, %v585
      %v587 = vpop.f32.mrb[0].mxu0
      %v588 = vpop.f32.mrb[0].mxu0
      %v589 = vadd.f32 %v253, %v588
      %v590 = vpop.f32.mrb[0].mxu0
      %591 = vmatprep.mubr.bf16.mxu0 0
      %592 = vmatmul.mubr.bf16.gmra.mrb[0].mxu0 %v450
      %v593 = vpop.f32.mrb[0].mxu0
      %v594 = vadd.f32 %v253, %v593
      %v595 = vpop.f32.mrb[0].mxu0
      %v596 = vpop.f32.mrb[0].mxu0
      %v597 = vadd.f32 %v253, %v596
      %v598 = vpop.f32.mrb[0].mxu0
      %599 = vmatprep.mubr.bf16.mxu0 0
      %600 = vmatmul.mubr.bf16.gmra.mrb[0].mxu0 %v453
      %v601 = vpop.f32.mrb[0].mxu0
      %v602 = vadd.f32 %v253, %v601
      %v603 = vpop.f32.mrb[0].mxu0
      %v604 = vpop.f32.mrb[0].mxu0
      %v605 = vadd.f32 %v253, %v604
      %v606 = vpop.f32.mrb[0].mxu0
      %607 = vmatprep.mubr.bf16.mxu0 0
      %608 = vmatmul.mubr.bf16.gmra.mrb[0].mxu0 %v456
      %v609 = vpop.f32.mrb[0].mxu0
      %v610 = vadd.f32 %v253, %v609
      %v611 = vpop.f32.mrb[0].mxu0
      %v612 = vpop.f32.mrb[0].mxu0
      %v613 = vadd.f32 %v253, %v612
      %v614 = vpop.f32.mrb[0].mxu0
      %615 = vmatprep.mubr.bf16.mxu0 0
      %616 = vmatmul.mubr.bf16.gmra.mrb[0].mxu0 %v459
      %v617 = vpop.f32.mrb[0].mxu0
      %v618 = vadd.f32 %v253, %v617
      %v619 = vpop.f32.mrb[0].mxu0
      %v620 = vpop.f32.mrb[0].mxu0
      %v621 = vadd.f32 %v253, %v620
      %v622 = vpop.f32.mrb[0].mxu0
      %623 = vmatprep.mubr.bf16.mxu0 0
      %624 = vmatmul.mubr.bf16.gmra.mrb[0].mxu0 %v462
      %v625 = vpop.f32.mrb[0].mxu0
      %v626 = vadd.f32 %v253, %v625
      %v627 = vpop.f32.mrb[0].mxu0
      %v628 = vpop.f32.mrb[0].mxu0
      %v629 = vadd.f32 %v253, %v628
      %v630 = vpop.f32.mrb[0].mxu0
      %631 = vmatprep.mubr.bf16.mxu0 0
      %632 = vmatmul.mubr.bf16.gmra.mrb[0].mxu0 %v465
      %v633 = vpop.f32.mrb[0].mxu0
      %v634 = vadd.f32 %v253, %v633
      %v635 = vpop.f32.mrb[0].mxu0
      %v636 = vpop.f32.mrb[0].mxu0
      %v637 = vadd.f32 %v253, %v636
      %v638 = vpop.f32.mrb[0].mxu0
      %639 = vmatprep.mubr.bf16.mxu0 0
      %640 = vmatmul.mubr.bf16.gmra.mrb[0].mxu0 %v468
      %v641 = vpop.f32.mrb[0].mxu0
      %v642 = vadd.f32 %v253, %v641
      %v643 = vpop.f32.mrb[0].mxu0
      %v644 = vpop.f32.mrb[0].mxu0
      %v645 = vadd.f32 %v253, %v644
      %v646 = vpop.f32.mrb[0].mxu0
      %647 = vmatprep.mubr.bf16.mxu0 0
      %648 = vmatmul.mubr.bf16.gmra.mrb[0].mxu0 %v471
      %v649 = vpop.f32.mrb[0].mxu0
      %v650 = vadd.f32 %v253, %v649
      %v651 = vpop.f32.mrb[0].mxu0
      %v652 = vpop.f32.mrb[0].mxu0
      %v653 = vadd.f32 %v253, %v652
      %v654 = vpop.f32.mrb[0].mxu0
      %655 = vmatprep.mubr.bf16.mxu0 0
      %656 = vmatmul.mubr.bf16.gmra.mrb[0].mxu0 %v474
      %v657 = vpop.f32.mrb[0].mxu0
      %v658 = vadd.f32 %v253, %v657
      %v659 = vpop.f32.mrb[0].mxu0
      %v660 = vpop.f32.mrb[0].mxu0
      %v661 = vadd.f32 %v253, %v660
      %v662 = vpop.f32.mrb[0].mxu0
      %663 = vmatprep.mubr.bf16.mxu0 0
      %664 = vmatmul.mubr.bf16.gmra.mrb[0].mxu0 %v477
      %v665 = vpop.f32.mrb[0].mxu0
      %v666 = vadd.f32 %v253, %v665
      %v667 = vpop.f32.mrb[0].mxu0
      %v668 = vpop.f32.mrb[0].mxu0
      %v669 = vadd.f32 %v253, %v668
      %v670 = vpop.f32.mrb[0].mxu0
      %671 = vmatprep.mubr.bf16.mxu0 0
      %672 = vmatmul.mubr.bf16.gmra.mrb[0].mxu0 %v480
      %v673 = vpop.f32.mrb[0].mxu0
      %v674 = vadd.f32 %v253, %v673
      %v675 = vpop.f32.mrb[0].mxu0
      %v676 = vpop.f32.mrb[0].mxu0
      %v677 = vadd.f32 %v253, %v676
      %v678 = vpop.f32.mrb[0].mxu0
      %679 = vmatprep.mubr.bf16.mxu0 0
      %680 = vmatmul.mubr.bf16.gmra.mrb[0].mxu0 %v483
      %v681 = vpop.f32.mrb[0].mxu0
      %v682 = vadd.f32 %v253, %v681
      %v683 = vpop.f32.mrb[0].mxu0
      %v684 = vpop.f32.mrb[0].mxu0
      %v685 = vadd.f32 %v253, %v684
      %v686 = vpop.f32.mrb[0].mxu0
      %687 = vmatprep.mubr.bf16.mxu0 0
      %688 = vmatmul.mubr.bf16.gmra.mrb[0].mxu0 %v486
      %v689 = vpop.f32.mrb[0].mxu0
      %v690 = vadd.f32 %v253, %v689
      %v691 = vpop.f32.mrb[0].mxu0
      %v692 = vpop.f32.mrb[0].mxu0
      %v693 = vadd.f32 %v253, %v692
      %v694 = vpop.f32.mrb[0].mxu0
      %695 = vmatprep.mubr.bf16.mxu0 0
      %696 = vmatmul.mubr.bf16.gmra.mrb[0].mxu0 %v489
      %v697 = vpop.f32.mrb[0].mxu0
      %v698 = vadd.f32 %v253, %v697
      %v699 = vpop.f32.mrb[0].mxu0
      %v700 = vpop.f32.mrb[0].mxu0
      %v701 = vadd.f32 %v253, %v700
      %v702 = vpop.f32.mrb[0].mxu0
      %703 = vmatprep.mubr.bf16.mxu0 0
      %704 = vmatmul.mubr.bf16.gmra.mrb[0].mxu0 %v492
      %v705 = vpop.f32.mrb[0].mxu0
      %v706 = vadd.f32 %v253, %v705
      %v707 = vpop.f32.mrb[0].mxu0
      %v708 = vpop.f32.mrb[0].mxu0
      %v709 = vadd.f32 %v253, %v708
      %v710 = vpop.f32.mrb[0].mxu0
      %711 = vmatprep.mubr.bf16.mxu0 0
      %712 = vmatmul.mubr.bf16.gmra.mrb[0].mxu0 %v495
      %v713 = vpop.f32.mrb[0].mxu0
      %v714 = vadd.f32 %v253, %v713
      %v715 = vpop.f32.mrb[0].mxu0
      %v716 = vpop.f32.mrb[0].mxu0
      %v717 = vadd.f32 %v253, %v716
      %v718 = vpop.f32.mrb[0].mxu0
      %719 = vmatprep.mubr.bf16.mxu0 0
      %720 = vmatmul.mubr.bf16.gmra.mrb[0].mxu0 %v498
      %v721 = vpop.f32.mrb[0].mxu0
      %v722 = vadd.f32 %v253, %v721
      %v723 = vpop.f32.mrb[0].mxu0
      %v724 = vpop.f32.mrb[0].mxu0
      %v725 = vadd.f32 %v253, %v724
      %v726 = vpop.f32.mrb[0].mxu0
      %727 = vmatprep.mubr.bf16.mxu0 0
      %728 = vmatmul.mubr.bf16.gmra.mrb[0].mxu0 %v501
      %v729 = vpop.f32.mrb[0].mxu0
      %v730 = vadd.f32 %v253, %v729
      %v731 = vpop.f32.mrb[0].mxu0
      %v732 = vpop.f32.mrb[0].mxu0
      %v733 = vadd.f32 %v253, %v732
      %v734 = vpop.f32.mrb[0].mxu0
      %735 = vmatprep.mubr.bf16.mxu0 0
      %736 = vmatmul.mubr.bf16.gmra.mrb[0].mxu0 %v504
      %v737 = vpop.f32.mrb[0].mxu0
      %v738 = vadd.f32 %v253, %v737
      %v739 = vpop.f32.mrb[0].mxu0
      %v740 = vpop.f32.mrb[0].mxu0
      %v741 = vadd.f32 %v253, %v740
      %v742 = vpop.f32.mrb[0].mxu0
      %743 = vmatprep.mubr.bf16.mxu0 0
      %744 = vmatmul.mubr.bf16.gmra.mrb[0].mxu0 %v507
      %v745 = vpop.f32.mrb[0].mxu0
      %v746 = vadd.f32 %v253, %v745
      %v747 = vpop.f32.mrb[0].mxu0
      %v748 = vpop.f32.mrb[0].mxu0
      %v749 = vadd.f32 %v253, %v748
      %v750 = vpop.f32.mrb[0].mxu0
      %751 = vmatprep.mubr.bf16.mxu0 0
      %752 = vmatmul.mubr.bf16.gmra.mrb[0].mxu0 %v510
      %v753 = vpop.f32.mrb[0].mxu0
      %v754 = vadd.f32 %v253, %v753
      %v755 = vpop.f32.mrb[0].mxu0
      %v756 = vpop.f32.mrb[0].mxu0
      %v757 = vadd.f32 %v253, %v756
      %v758 = vpop.f32.mrb[0].mxu0
      %759 = vmatprep.mubr.bf16.mxu0 0
      %760 = vmatmul.mubr.bf16.gmra.mrb[0].mxu0 %v513
      %v761 = vpop.f32.mrb[0].mxu0
      %v762 = vadd.f32 %v253, %v761
      %v763 = vpop.f32.mrb[0].mxu0
      %v764 = vpop.f32.mrb[0].mxu0
      %v765 = vadd.f32 %v253, %v764
      %v766 = vpop.f32.mrb[0].mxu0
      %767 = vmatprep.mubr.bf16.mxu0 0
      %768 = vmatmul.mubr.bf16.gmra.mrb[0].mxu0 %v516
      %v769 = vpop.f32.mrb[0].mxu0
      %v770 = vadd.f32 %v253, %v769
      %v771 = vpop.f32.mrb[0].mxu0
      %v772 = vpop.f32.mrb[0].mxu0
      %v773 = vadd.f32 %v253, %v772
      %v774 = vpop.f32.mrb[0].mxu0
      %775 = vmatprep.mubr.bf16.mxu0 0
      %776 = vmatmul.mubr.bf16.gmra.mrb[0].mxu0 %v519
      %v777 = vpop.f32.mrb[0].mxu0
      %v778 = vadd.f32 %v253, %v777
      %v779 = vpop.f32.mrb[0].mxu0
      %v780 = vpop.f32.mrb[0].mxu0
      %v781 = vadd.f32 %v253, %v780
      %v782 = vpop.f32.mrb[0].mxu0
      %783 = vmatprep.mubr.bf16.mxu0 0
      %784 = vmatmul.mubr.bf16.gmra.mrb[0].mxu0 %v522
      %v785 = vpop.f32.mrb[0].mxu0
      %v786 = vadd.f32 %v253, %v785
      %v787 = vpop.f32.mrb[0].mxu0
      %v788 = vpop.f32.mrb[0].mxu0
      %v789 = vadd.f32 %v253, %v788
      %v790 = vpop.f32.mrb[0].mxu0
      %791 = vmatprep.mubr.bf16.mxu0 0
      %792 = vmatmul.mubr.bf16.gmra.mrb[0].mxu0 %v525
      %v793 = vpop.f32.mrb[0].mxu0
      %v794 = vadd.f32 %v253, %v793
      %v795 = vpop.f32.mrb[0].mxu0
      %v796 = vpop.f32.mrb[0].mxu0
      %v797 = vadd.f32 %v253, %v796
      %v798 = vpop.f32.mrb[0].mxu0
      %799 = vmatprep.mubr.bf16.mxu0 0
      %800 = vmatmul.mubr.bf16.gmra.mrb[0].mxu0 %v528
      %v801 = vpop.f32.mrb[0].mxu0
      %v802 = vadd.f32 %v253, %v801
      %v803 = vpop.f32.mrb[0].mxu0
      %v804 = vpop.f32.mrb[0].mxu0
      %v805 = vadd.f32 %v253, %v804
      %v806 = vpop.f32.mrb[0].mxu0
      %807 = vmatprep.mubr.bf16.mxu0 0
      %808 = vmatmul.mubr.bf16.gmra.mrb[0].mxu0 %v531
      %v809 = vpop.f32.mrb[0].mxu0
      %v810 = vadd.f32 %v253, %v809
      %v811 = vpop.f32.mrb[0].mxu0
      %v812 = vpop.f32.mrb[0].mxu0
      %v813 = vadd.f32 %v253, %v812
      %v814 = vpop.f32.mrb[0].mxu0
      %815 = vmatprep.mubr.bf16.mxu0 0
      %816 = vmatmul.mubr.bf16.gmra.mrb[0].mxu0 %v534
      %v817 = vpop.f32.mrb[0].mxu0
      %v818 = vadd.f32 %v253, %v817
      %v819 = vpop.f32.mrb[0].mxu0
      %v820 = vpop.f32.mrb[0].mxu0
      %v821 = vadd.f32 %v253, %v820
      %v822 = vpop.f32.mrb[0].mxu0
      %823 = vmatprep.mubr.bf16.mxu0 0
      %824 = vmatmul.mubr.bf16.gmra.mrb[0].mxu0 %v537
      %v825 = vpop.f32.mrb[0].mxu0
      %v826 = vadd.f32 %v253, %v825
      %v827 = vpop.f32.mrb[0].mxu0
      %v828 = vpop.f32.mrb[0].mxu0
      %v829 = vadd.f32 %v253, %v828
      %v830 = vpop.f32.mrb[0].mxu0
      %831 = vdwg.mxu0
      %v832 = vmax.f32 %v578, 0.0
      %v833 = vmax.f32 %v581, 0.0
      %v834 = vmax.f32 %v586, 0.0
      %v835 = vmax.f32 %v589, 0.0
      %v836 = vmax.f32 %v594, 0.0
      %v837 = vmax.f32 %v597, 0.0
      %v838 = vmax.f32 %v602, 0.0
      %v839 = vmax.f32 %v605, 0.0
      %v840 = vmax.f32 %v610, 0.0
      %v841 = vmax.f32 %v613, 0.0
      %v842 = vmax.f32 %v618, 0.0
      %v843 = vmax.f32 %v621, 0.0
      %v844 = vmax.f32 %v626, 0.0
      %v845 = vmax.f32 %v629, 0.0
      %v846 = vmax.f32 %v634, 0.0
      %v847 = vmax.f32 %v637, 0.0
      %v848 = vmax.f32 %v642, 0.0
      %v849 = vmax.f32 %v645, 0.0
      %v850 = vmax.f32 %v650, 0.0
      %v851 = vmax.f32 %v653, 0.0
      %v852 = vmax.f32 %v658, 0.0
      %v853 = vmax.f32 %v661, 0.0
      %v854 = vmax.f32 %v666, 0.0
      %v855 = vmax.f32 %v669, 0.0
      %v856 = vmax.f32 %v674, 0.0
      %v857 = vmax.f32 %v677, 0.0
      %v858 = vmax.f32 %v682, 0.0
      %v859 = vmax.f32 %v685, 0.0
      %v860 = vmax.f32 %v690, 0.0
      %v861 = vmax.f32 %v693, 0.0
      %v862 = vmax.f32 %v698, 0.0
      %v863 = vmax.f32 %v701, 0.0
      %v864 = vmax.f32 %v706, 0.0
      %v865 = vmax.f32 %v709, 0.0
      %v866 = vmax.f32 %v714, 0.0
      %v867 = vmax.f32 %v717, 0.0
      %v868 = vmax.f32 %v722, 0.0
      %v869 = vmax.f32 %v725, 0.0
      %v870 = vmax.f32 %v730, 0.0
      %v871 = vmax.f32 %v733, 0.0
      %v872 = vmax.f32 %v738, 0.0
      %v873 = vmax.f32 %v741, 0.0
      %v874 = vmax.f32 %v746, 0.0
      %v875 = vmax.f32 %v749, 0.0
      %v876 = vmax.f32 %v754, 0.0
      %v877 = vmax.f32 %v757, 0.0
      %v878 = vmax.f32 %v762, 0.0
      %v879 = vmax.f32 %v765, 0.0
      %v880 = vmax.f32 %v770, 0.0
      %v881 = vmax.f32 %v773, 0.0
      %v882 = vmax.f32 %v778, 0.0
      %v883 = vmax.f32 %v781, 0.0
      %v884 = vmax.f32 %v786, 0.0
      %v885 = vmax.f32 %v789, 0.0
      %v886 = vmax.f32 %v794, 0.0
      %v887 = vmax.f32 %v797, 0.0
      %v888 = vmax.f32 %v802, 0.0
      %v889 = vmax.f32 %v805, 0.0
      %v890 = vmax.f32 %v810, 0.0
      %v891 = vmax.f32 %v813, 0.0
      %v892 = vmax.f32 %v818, 0.0
      %v893 = vmax.f32 %v821, 0.0
      %v894 = vmax.f32 %v826, 0.0
      %v895 = vmax.f32 %v829, 0.0
      %896 = vst [vmem:[%s172] sm:$0xff] %v832
      %897 = vst [vmem:[%s172 + $0x8] sm:$0xff] %v833
      %898 = vst [vmem:[%s172 + $0x10] sm:$0xff] %v834
      %899 = vst [vmem:[%s172 + $0x18] sm:$0xff] %v835
      %900 = vst [vmem:[%s172 + $0x20] sm:$0xff] %v836
      %901 = vst [vmem:[%s172 + $0x28] sm:$0xff] %v837
      %902 = vst [vmem:[%s172 + $0x30] sm:$0xff] %v838
      %903 = vst [vmem:[%s172 + $0x38] sm:$0xff] %v839
      %904 = vst [vmem:[%s172 + $0x40] sm:$0xff] %v840
      %905 = vst [vmem:[%s172 + $0x48] sm:$0xff] %v841
      %906 = vst [vmem:[%s172 + $0x50] sm:$0xff] %v842
      %907 = vst [vmem:[%s172 + $0x58] sm:$0xff] %v843
      %908 = vst [vmem:[%s172 + $0x60] sm:$0xff] %v844
      %909 = vst [vmem:[%s172 + $0x68] sm:$0xff] %v845
      %910 = vst [vmem:[%s172 + $0x70] sm:$0xff] %v846
      %911 = vst [vmem:[%s172 + $0x78] sm:$0xff] %v847
      %912 = vst [vmem:[%s172 + $0x80] sm:$0xff] %v848
      %913 = vst [vmem:[%s172 + $0x88] sm:$0xff] %v849
      %914 = vst [vmem:[%s172 + $0x90] sm:$0xff] %v850
      %915 = vst [vmem:[%s172 + $0x98] sm:$0xff] %v851
      %916 = vst [vmem:[%s172 + $0xa0] sm:$0xff] %v852
      %917 = vst [vmem:[%s172 + $0xa8] sm:$0xff] %v853
      %918 = vst [vmem:[%s172 + $0xb0] sm:$0xff] %v854
      %919 = vst [vmem:[%s172 + $0xb8] sm:$0xff] %v855
      %920 = vst [vmem:[%s172 + $0xc0] sm:$0xff] %v856
      %921 = vst [vmem:[%s172 + $0xc8] sm:$0xff] %v857
      %922 = vst [vmem:[%s172 + $0xd0] sm:$0xff] %v858
      %923 = vst [vmem:[%s172 + $0xd8] sm:$0xff] %v859
      %924 = vst [vmem:[%s172 + $0xe0] sm:$0xff] %v860
      %925 = vst [vmem:[%s172 + $0xe8] sm:$0xff] %v861
      %926 = vst [vmem:[%s172 + $0xf0] sm:$0xff] %v862
      %927 = vst [vmem:[%s172 + $0xf8] sm:$0xff] %v863
      %928 = vst [vmem:[%s172 + $0x100] sm:$0xff] %v864
      %929 = vst [vmem:[%s172 + $0x108] sm:$0xff] %v865
      %930 = vst [vmem:[%s172 + $0x110] sm:$0xff] %v866
      %931 = vst [vmem:[%s172 + $0x118] sm:$0xff] %v867
      %932 = vst [vmem:[%s172 + $0x120] sm:$0xff] %v868
      %933 = vst [vmem:[%s172 + $0x128] sm:$0xff] %v869
      %934 = vst [vmem:[%s172 + $0x130] sm:$0xff] %v870
      %935 = vst [vmem:[%s172 + $0x138] sm:$0xff] %v871
      %936 = vst [vmem:[%s172 + $0x140] sm:$0xff] %v872
      %937 = vst [vmem:[%s172 + $0x148] sm:$0xff] %v873
      %938 = vst [vmem:[%s172 + $0x150] sm:$0xff] %v874
      %939 = vst [vmem:[%s172 + $0x158] sm:$0xff] %v875
      %940 = vst [vmem:[%s172 + $0x160] sm:$0xff] %v876
      %941 = vst [vmem:[%s172 + $0x168] sm:$0xff] %v877
      %942 = vst [vmem:[%s172 + $0x170] sm:$0xff] %v878
      %943 = vst [vmem:[%s172 + $0x178] sm:$0xff] %v879
      %944 = vst [vmem:[%s172 + $0x180] sm:$0xff] %v880
      %945 = vst [vmem:[%s172 + $0x188] sm:$0xff] %v881
      %946 = vst [vmem:[%s172 + $0x190] sm:$0xff] %v882
      %947 = vst [vmem:[%s172 + $0x198] sm:$0xff] %v883
      %948 = vst [vmem:[%s172 + $0x1a0] sm:$0xff] %v884
      %949 = vst [vmem:[%s172 + $0x1a8] sm:$0xff] %v885
      %950 = vst [vmem:[%s172 + $0x1b0] sm:$0xff] %v886
      %951 = vst [vmem:[%s172 + $0x1b8] sm:$0xff] %v887
      %952 = vst [vmem:[%s172 + $0x1c0] sm:$0xff] %v888
      %953 = vst [vmem:[%s172 + $0x1c8] sm:$0xff] %v889
      %954 = vst [vmem:[%s172 + $0x1d0] sm:$0xff] %v890
      %955 = vst [vmem:[%s172 + $0x1d8] sm:$0xff] %v891
      %956 = vst [vmem:[%s172 + $0x1e0] sm:$0xff] %v892
      %957 = vst [vmem:[%s172 + $0x1e8] sm:$0xff] %v893
      %958 = vst [vmem:[%s172 + $0x1f0] sm:$0xff] %v894
      %959 = vst [vmem:[%s172 + $0x1f8] sm:$0xff] %v895
      %s960 = smul.u32 64, %s14
      %p961 = scmp.lt.s32.totalorder %s960, 255
      %s962 = scalar_select %p961, %s960, 255
      %s963 = smul.addr %s962, 8
      %s964 = scalar_lea.vmem %s3, %s963
      // Predicated region
      $region33: #{resnet_cifar_forward.10} parent=31 // pred_check
        %p965 = pneg %p100
      $region34: #{resnet_cifar_forward.10} parent=31 // pred_check_branch
        %967 = sbr.rel (%p965) target = $region36
      $region35: #{resnet_cifar_forward.10} parent=31 // pred_region
        %s968 = smul.u32 64, %s14
      $region36: #{resnet_cifar_forward.10} parent=31 // pred_fallthru
        _
    $region32: #{resnet_cifar_forward.10} parent=5 // pred_fallthru
      _
    %p969 = scmp.le.s32.totalorder 2, %s9
    // Predicated region
    $region37: #{resnet_cifar_forward.10} parent=5 // pred_check
      %p970 = pneg %p969
    $region38: #{resnet_cifar_forward.10} parent=5 // pred_check_branch
      %972 = sbr.rel (%p970) target = $region40
    $region39: #{resnet_cifar_forward.10} parent=5 // pred_region
      %s973 = ssub.s32 %s9, 2
      // Predicated region
      $region41: #{resnet_cifar_forward.10} parent=39 // pred_check
        %p974 = pneg %p106
      $region42: #{resnet_cifar_forward.10} parent=39 // pred_check_branch
        %976 = sbr.rel (%p974) target = $region44
      $region43: #{resnet_cifar_forward.10} parent=39 // pred_region
        %s977 = smul.u32 64, %s15
        %p978 = scmp.lt.s32.totalorder %s977, 255
        %s979 = scalar_select %p978, %s977, 255
        %s980 = smul.addr %s979, 8
        %s981 = scalar_lea.vmem %s3, %s980
      $region44: #{resnet_cifar_forward.10} parent=39 // pred_fallthru
        _
    $region40: #{resnet_cifar_forward.10} parent=5 // pred_fallthru
      _
  $region6: #{resnet_cifar_forward.10} parent=0 // loop_footer
    %s13 = sadd.s32 1, %s9
  $region7: #{resnet_cifar_forward.10} parent=0 // loop_footer_branch
    %8 = sbr.rel target = $region3
  $region8: #{resnet_cifar_forward.10} parent=0 // loop_exit
    _

// kernel: resnet_cifar_forward.11
$region0: #{resnet_cifar_forward.11}
  #allocation0 [shape = 'u32[]', space=smem, size = 0x4, offset = 0x4, fixed_abs, tag = 'smem constant byte address 0x4 - core index']
  #allocation1 [shape = 'u32[144,128]{1,0:T(1,128)}', space=vmem, size = 0x12000, scoped, tag = 'internal scratch']
  %s0 = inlined_call_operand.vmem [shape: bf16[2048,144], index: 0, kind: input, shape index: {}]
  %s1 = inlined_call_operand.vmem [shape: bf16[144,128], index: 1, kind: input, shape index: {}]
  %s2 = inlined_call_operand.vmem [shape: f32[1,128], index: 2, kind: input, shape index: {}]
  %s3 = inlined_call_operand.vmem [shape: f32[2048,128], index: 3, kind: output, shape index: {}]
  %s4 = sld [smem:[#allocation0]]
  $region45: #{resnet_cifar_forward.11} parent=0
    _
  %s6 = ssub.s32 1, %s4
  %s7 = scalar_select 0, %s6, %s4
  loop: start=0, step=1, limit=6
  $region2: #{resnet_cifar_forward.11} parent=0 // loop_pre_header
    _
  $region3: #{resnet_cifar_forward.11} parent=0 // loop_header
    %s9 = sphi 0, %s13
    %p10 = scmp.ge.s32.totalorder %s9, 6
    %s19 = sphi 0, %s21
    %s22 = sphi 0, %s19
    %s23 = sphi 0, %s22
    %s39 = sphi 0, %s23
    %s43 = sphi 0, %s43
    %s45 = sphi 0, %s43
    %s46 = sphi 0, %s45
    %s60 = sphi 0, %s46
    %s64 = sphi 0, %s64
    %s66 = sphi 0, %s64
    %s67 = sphi 0, %s66
    %s81 = sphi 0, %s67
    %s87 = sphi 0, %s89
    %s90 = sphi 0, %s87
    %s91 = sphi 0, %s90
    %s107 = sphi 0, %s91
  $region4: #{resnet_cifar_forward.11} parent=0 // loop_header_branch
    %12 = sbr.rel (%p10) target = $region8
  $region5: #{resnet_cifar_forward.11} parent=0 // loop_body
    %s14 = ssub.s32 %s9, 1
    %s15 = ssub.s32 %s9, 2
    %s16 = sadd.s32 %s9, 1
    %s17 = ssub.s32 %s9, %s16
    %p18 = scmp.eq.s32.totalorder %s17, 0
    %s20 = sadd.s32 %s19, 1
    %s21 = scalar_select %p18, %s19, %s20
    %p24 = pneg %p18
    %p25 = scmp.eq.s32.totalorder %s9, 3
    %p26 = por %p24, %p25
    %p27 = scmp.ne.s32.totalorder %s19, %s22
    %p28 = scmp.eq.s32.totalorder %s9, 0
    %p29 = por %p27, %p28
    %p30 = scmp.ne.s32.totalorder %s19, %s22
    %p31 = scmp.eq.s32.totalorder %s14, 3
    %p32 = por %p30, %p31
    %p33 = scmp.ne.s32.totalorder %s22, %s23
    %p34 = scmp.eq.s32.totalorder %s14, 0
    %p35 = por %p33, %p34
    %p36 = scmp.ne.s32.totalorder %s22, %s23
    %p37 = scmp.eq.s32.totalorder %s15, 3
    %p38 = por %p36, %p37
    %p40 = scmp.ne.s32.totalorder %s23, %s39
    %p41 = scmp.eq.s32.totalorder %s15, 0
    %p42 = por %p40, %p41
    %s44 = sadd.s32 %s43, 1
    %p47 = scmp.eq.s32.totalorder %s9, 3
    %p48 = scmp.ne.s32.totalorder %s43, %s45
    %p49 = scmp.eq.s32.totalorder %s9, 0
    %p50 = por %p48, %p49
    %p51 = scmp.ne.s32.totalorder %s43, %s45
    %p52 = scmp.eq.s32.totalorder %s14, 3
    %p53 = por %p51, %p52
    %p54 = scmp.ne.s32.totalorder %s45, %s46
    %p55 = scmp.eq.s32.totalorder %s14, 0
    %p56 = por %p54, %p55
    %p57 = scmp.ne.s32.totalorder %s45, %s46
    %p58 = scmp.eq.s32.totalorder %s15, 3
    %p59 = por %p57, %p58
    %p61 = scmp.ne.s32.totalorder %s46, %s60
    %p62 = scmp.eq.s32.totalorder %s15, 0
    %p63 = por %p61, %p62
    %s65 = sadd.s32 %s64, 1
    %p68 = scmp.eq.s32.totalorder %s9, 3
    %p69 = scmp.ne.s32.totalorder %s64, %s66
    %p70 = scmp.eq.s32.totalorder %s9, 0
    %p71 = por %p69, %p70
    %p72 = scmp.ne.s32.totalorder %s64, %s66
    %p73 = scmp.eq.s32.totalorder %s14, 3
    %p74 = por %p72, %p73
    %p75 = scmp.ne.s32.totalorder %s66, %s67
    %p76 = scmp.eq.s32.totalorder %s14, 0
    %p77 = por %p75, %p76
    %p78 = scmp.ne.s32.totalorder %s66, %s67
    %p79 = scmp.eq.s32.totalorder %s15, 3
    %p80 = por %p78, %p79
    %p82 = scmp.ne.s32.totalorder %s67, %s81
    %p83 = scmp.eq.s32.totalorder %s15, 0
    %p84 = por %p82, %p83
    %s85 = ssub.s32 %s9, %s16
    %p86 = scmp.eq.s32.totalorder %s85, 0
    %s88 = sadd.s32 %s87, 1
    %s89 = scalar_select %p86, %s87, %s88
    %p92 = pneg %p86
    %p93 = scmp.eq.s32.totalorder %s9, 3
    %p94 = por %p92, %p93
    %p95 = scmp.ne.s32.totalorder %s87, %s90
    %p96 = scmp.eq.s32.totalorder %s9, 0
    %p97 = por %p95, %p96
    %p98 = scmp.ne.s32.totalorder %s87, %s90
    %p99 = scmp.eq.s32.totalorder %s14, 3
    %p100 = por %p98, %p99
    %p101 = scmp.ne.s32.totalorder %s90, %s91
    %p102 = scmp.eq.s32.totalorder %s14, 0
    %p103 = por %p101, %p102
    %p104 = scmp.ne.s32.totalorder %s90, %s91
    %p105 = scmp.eq.s32.totalorder %s15, 3
    %p106 = por %p104, %p105
    %p108 = scmp.ne.s32.totalorder %s91, %s107
    %p109 = scmp.eq.s32.totalorder %s15, 0
    %p110 = por %p108, %p109
    %p111 = scmp.le.s32.totalorder 1, %s9
    %p112 = scmp.lt.s32.totalorder %s9, 5
    %p113 = pnand %p111, %p112
    %p114 = pneg %p113
    // Predicated region
    $region9: #{resnet_cifar_forward.11} parent=5 // pred_check
      _
    $region10: #{resnet_cifar_forward.11} parent=5 // pred_check_branch
      %116 = sbr.rel (%p113) target = $region12
    $region11: #{resnet_cifar_forward.11} parent=5 // pred_region
      %s117 = ssub.s32 %s9, 1
      // Predicated region
      $region13: #{resnet_cifar_forward.11} parent=11 // pred_check
        %p118 = pneg %p56
      $region14: #{resnet_cifar_forward.11} parent=11 // pred_check_branch
        %120 = sbr.rel (%p118) target = $region16
      $region15: #{resnet_cifar_forward.11} parent=11 // pred_region
        _
      $region16: #{resnet_cifar_forward.11} parent=11 // pred_fallthru
        _
      // Predicated region
      $region17: #{resnet_cifar_forward.11} parent=11 // pred_check
        %p121 = pneg %p77
      $region18: #{resnet_cifar_forward.11} parent=11 // pred_check_branch
        %123 = sbr.rel (%p121) target = $region20
      $region19: #{resnet_cifar_forward.11} parent=11 // pred_region
        _
      $region20: #{resnet_cifar_forward.11} parent=11 // pred_fallthru
        _
    $region12: #{resnet_cifar_forward.11} parent=5 // pred_fallthru
      _
    %p124 = scmp.lt.s32.totalorder %s9, 4
    // Predicated region
    $region21: #{resnet_cifar_forward.11} parent=5 // pred_check
      %p125 = pneg %p124
    $region22: #{resnet_cifar_forward.11} parent=5 // pred_check_branch
      %127 = sbr.rel (%p125) target = $region24
    $region23: #{resnet_cifar_forward.11} parent=5 // pred_region
      // Predicated region
      $region25: #{resnet_cifar_forward.11} parent=23 // pred_check
        %p128 = pneg %p29
      $region26: #{resnet_cifar_forward.11} parent=23 // pred_check_branch
        %130 = sbr.rel (%p128) target = $region28
      $region27: #{resnet_cifar_forward.11} parent=23 // pred_region
        %s131 = smul.u32 64, %s9
        %p132 = scmp.lt.s32.totalorder %s131, 255
        %s133 = scalar_select %p132, %s131, 255
        %s134 = smul.addr %s133, 2
        %s135 = smul.addr %s134, 4
        %s136 = scalar_lea.vmem %s0, %s135
        %s137 = smul.u32 64, %s9
      $region28: #{resnet_cifar_forward.11} parent=23 // pred_fallthru
        _
    $region24: #{resnet_cifar_forward.11} parent=5 // pred_fallthru
      _
    %p138 = scmp.le.s32.totalorder 1, %s9
    %p139 = scmp.lt.s32.totalorder %s9, 5
    %p140 = pnand %p138, %p139
    %p141 = pneg %p140
    // Predicated region
    $region29: #{resnet_cifar_forward.11} parent=5 // pred_check
      _
    $region30: #{resnet_cifar_forward.11} parent=5 // pred_check_branch
      %143 = sbr.rel (%p140) target = $region32
    $region31: #{resnet_cifar_forward.11} parent=5 // pred_region
      %s144 = ssub.s32 %s9, 1
      %s145 = smul.u32 64, %s14
      %p146 = scmp.lt.s32.totalorder %s145, 255
      %s147 = scalar_select %p146, %s145, 255
      %s148 = smul.addr %s147, 2
      %s149 = smul.addr %s148, 4
      %s150 = scalar_lea.vmem %s0, %s149
      %p151 = pneg %p35
      %p152 = pneg %p32
      %p153 = pneg %p56
      %p154 = pneg %p53
      %p155 = pneg %p77
      %p156 = pneg %p74
      %p157 = pneg %p103
      %p158 = pneg %p100
      %s159 = smul.u32 64, %s14
      %p160 = scmp.lt.s32.totalorder %s159, 255
      %s161 = scalar_select %p160, %s159, 255
      %s162 = smul.addr %s161, 8
      %s163 = scalar_lea.vmem %s3, %s162
      %s164 = smul.u32 64, %s14
      %p165 = scmp.lt.s32.totalorder %s164, 255
      %s166 = scalar_select %p165, %s164, 255
      %s167 = smul.addr %s166, 2
      %s168 = smul.addr %s167, 4
      %s169 = scalar_lea.vmem %s0, %s168
      %s170 = smul.u32 64, %s14
      %s171 = smul.u32 64, %s14
      %p172 = scmp.lt.s32.totalorder %s171, 255
      %s173 = scalar_select %p172, %s171, 255
      %s174 = smul.addr %s173, 8
      %s175 = scalar_lea.vmem %s3, %s174
      %s176 = smul.u32 64, %s14
      %v178 = vld [vmem:[%s169] sm:$0xff]
      %v179 = vld [vmem:[%s169 + $0x8] sm:$0xff]
      %v180 = vld [vmem:[%s169 + $0x10] sm:$0xff]
      %v181 = vld [vmem:[%s169 + $0x18] sm:$0xff]
      %v182 = vld [vmem:[%s169 + $0x20] sm:$0xff]
      %v183 = vld [vmem:[%s169 + $0x28] sm:$0xff]
      %v184 = vld [vmem:[%s169 + $0x30] sm:$0xff]
      %v185 = vld [vmem:[%s169 + $0x38] sm:$0xff]
      %v186 = vld [vmem:[%s169 + $0x40] sm:$0xff]
      %v187 = vld [vmem:[%s169 + $0x48] sm:$0xff]
      %v188 = vld [vmem:[%s169 + $0x50] sm:$0xff]
      %v189 = vld [vmem:[%s169 + $0x58] sm:$0xff]
      %v190 = vld [vmem:[%s169 + $0x60] sm:$0xff]
      %v191 = vld [vmem:[%s169 + $0x68] sm:$0xff]
      %v192 = vld [vmem:[%s169 + $0x70] sm:$0xff]
      %v193 = vld [vmem:[%s169 + $0x78] sm:$0xff]
      %v194 = vld [vmem:[%s169 + $0x80] sm:$0xff]
      %v195 = vld [vmem:[%s169 + $0x88] sm:$0xff]
      %v196 = vld [vmem:[%s169 + $0x90] sm:$0xff]
      %v197 = vld [vmem:[%s169 + $0x98] sm:$0xff]
      %v198 = vld [vmem:[%s169 + $0xa0] sm:$0xff]
      %v199 = vld [vmem:[%s169 + $0xa8] sm:$0xff]
      %v200 = vld [vmem:[%s169 + $0xb0] sm:$0xff]
      %v201 = vld [vmem:[%s169 + $0xb8] sm:$0xff]
      %v202 = vld [vmem:[%s169 + $0xc0] sm:$0xff]
      %v203 = vld [vmem:[%s169 + $0xc8] sm:$0xff]
      %v204 = vld [vmem:[%s169 + $0xd0] sm:$0xff]
      %v205 = vld [vmem:[%s169 + $0xd8] sm:$0xff]
      %v206 = vld [vmem:[%s169 + $0xe0] sm:$0xff]
      %v207 = vld [vmem:[%s169 + $0xe8] sm:$0xff]
      %v208 = vld [vmem:[%s169 + $0xf0] sm:$0xff]
      %v209 = vld [vmem:[%s169 + $0xf8] sm:$0xff]
      %v210 = vld [vmem:[%s169 + $0x100] sm:$0xff]
      %v211 = vld [vmem:[%s169 + $0x108] sm:$0xff]
      %v212 = vld [vmem:[%s169 + $0x110] sm:$0xff]
      %v213 = vld [vmem:[%s169 + $0x118] sm:$0xff]
      %v214 = vld [vmem:[%s169 + $0x120] sm:$0xff]
      %v215 = vld [vmem:[%s169 + $0x128] sm:$0xff]
      %v216 = vld [vmem:[%s169 + $0x130] sm:$0xff]
      %v217 = vld [vmem:[%s169 + $0x138] sm:$0xff]
      %v218 = vld [vmem:[%s169 + $0x140] sm:$0xff]
      %v219 = vld [vmem:[%s169 + $0x148] sm:$0xff]
      %v220 = vld [vmem:[%s169 + $0x150] sm:$0xff]
      %v221 = vld [vmem:[%s169 + $0x158] sm:$0xff]
      %v222 = vld [vmem:[%s169 + $0x160] sm:$0xff]
      %v223 = vld [vmem:[%s169 + $0x168] sm:$0xff]
      %v224 = vld [vmem:[%s169 + $0x170] sm:$0xff]
      %v225 = vld [vmem:[%s169 + $0x178] sm:$0xff]
      %v226 = vld [vmem:[%s169 + $0x180] sm:$0xff]
      %v227 = vld [vmem:[%s169 + $0x188] sm:$0xff]
      %v228 = vld [vmem:[%s169 + $0x190] sm:$0xff]
      %v229 = vld [vmem:[%s169 + $0x198] sm:$0xff]
      %v230 = vld [vmem:[%s169 + $0x1a0] sm:$0xff]
      %v231 = vld [vmem:[%s169 + $0x1a8] sm:$0xff]
      %v232 = vld [vmem:[%s169 + $0x1b0] sm:$0xff]
      %v233 = vld [vmem:[%s169 + $0x1b8] sm:$0xff]
      %v234 = vld [vmem:[%s169 + $0x1c0] sm:$0xff]
      %v235 = vld [vmem:[%s169 + $0x1c8] sm:$0xff]
      %v236 = vld [vmem:[%s169 + $0x1d0] sm:$0xff]
      %v237 = vld [vmem:[%s169 + $0x1d8] sm:$0xff]
      %v238 = vld [vmem:[%s169 + $0x1e0] sm:$0xff]
      %v239 = vld [vmem:[%s169 + $0x1e8] sm:$0xff]
      %v240 = vld [vmem:[%s169 + $0x1f0] sm:$0xff]
      %v241 = vld [vmem:[%s169 + $0x1f8] sm:$0xff]
      %v242 = vld [vmem:[%s1] sm:$0xf]
      %v243 = vld [vmem:[%s1 + $0x4] sm:$0xf]
      %v244 = vld [vmem:[%s1 + $0x8] sm:$0xf]
      %v245 = vld [vmem:[%s1 + $0xc] sm:$0xf]
      %v246 = vld [vmem:[%s1 + $0x10] sm:$0xf]
      %v247 = vld [vmem:[%s1 + $0x14] sm:$0xf]
      %v248 = vld [vmem:[%s1 + $0x18] sm:$0xf]
      %v249 = vld [vmem:[%s1 + $0x1c] sm:$0xf]
      %v250 = vld [vmem:[%s1 + $0x20] sm:$0xf]
      %v251 = vld [vmem:[%s1 + $0x24] sm:$0xf]
      %v252 = vld [vmem:[%s1 + $0x28] sm:$0xf]
      %v253 = vld [vmem:[%s1 + $0x2c] sm:$0xf]
      %v254 = vld [vmem:[%s1 + $0x30] sm:$0xf]
      %v255 = vld [vmem:[%s1 + $0x34] sm:$0xf]
      %v256 = vld [vmem:[%s1 + $0x38] sm:$0xf]
      %v257 = vld [vmem:[%s1 + $0x3c] sm:$0xf]
      %v258 = vld [vmem:[%s1 + $0x40] sm:$0xf]
      %v259 = vld [vmem:[%s1 + $0x44] sm:$0xf]
      %v260 = vld [vmem:[%s2] sm:$0x1]
      %v262 = vlaneseq
      %v263 = vshrl.u32 %v262, 7
      %v264 = vsub.s32 0, %v263
      %v265 = vrot.slane %v260, %v264
      %v331 = vunpack.c.l.b16 %v178
      %v332 = vunpack.c.h.b16 %v178
      %v333 = vunpack.c.l.b16 %v179
      %v334 = vunpack.c.h.b16 %v179
      %v335 = vunpack.c.l.b16 %v180
      %v336 = vunpack.c.h.b16 %v180
      %v337 = vunpack.c.l.b16 %v181
      %v338 = vunpack.c.h.b16 %v181
      %v339 = vunpack.c.l.b16 %v182
      %v340 = vunpack.c.h.b16 %v182
      %v341 = vunpack.c.l.b16 %v183
      %v342 = vunpack.c.h.b16 %v183
      %v343 = vunpack.c.l.b16 %v184
      %v344 = vunpack.c.h.b16 %v184
      %v345 = vunpack.c.l.b16 %v185
      %v346 = vunpack.c.h.b16 %v185
      %v347 = vunpack.c.l.b16 %v186
      %v348 = vunpack.c.h.b16 %v186
      %v349 = vunpack.c.l.b16 %v187
      %v350 = vunpack.c.h.b16 %v187
      %v351 = vunpack.c.l.b16 %v188
      %v352 = vunpack.c.h.b16 %v188
      %v353 = vunpack.c.l.b16 %v189
      %v354 = vunpack.c.h.b16 %v189
      %v355 = vunpack.c.l.b16 %v190
      %v356 = vunpack.c.h.b16 %v190
      %v357 = vunpack.c.l.b16 %v191
      %v358 = vunpack.c.h.b16 %v191
      %v359 = vunpack.c.l.b16 %v192
      %v360 = vunpack.c.h.b16 %v192
      %v361 = vunpack.c.l.b16 %v193
      %v362 = vunpack.c.h.b16 %v193
      %v363 = vunpack.c.l.b16 %v194
      %v364 = vunpack.c.h.b16 %v194
      %v365 = vunpack.c.l.b16 %v195
      %v366 = vunpack.c.h.b16 %v195
      %v367 = vunpack.c.l.b16 %v196
      %v368 = vunpack.c.h.b16 %v196
      %v369 = vunpack.c.l.b16 %v197
      %v370 = vunpack.c.h.b16 %v197
      %v371 = vunpack.c.l.b16 %v198
      %v372 = vunpack.c.h.b16 %v198
      %v373 = vunpack.c.l.b16 %v199
      %v374 = vunpack.c.h.b16 %v199
      %v375 = vunpack.c.l.b16 %v200
      %v376 = vunpack.c.h.b16 %v200
      %v377 = vunpack.c.l.b16 %v201
      %v378 = vunpack.c.h.b16 %v201
      %v379 = vunpack.c.l.b16 %v202
      %v380 = vunpack.c.h.b16 %v202
      %v381 = vunpack.c.l.b16 %v203
      %v382 = vunpack.c.h.b16 %v203
      %v383 = vunpack.c.l.b16 %v204
      %v384 = vunpack.c.h.b16 %v204
      %v385 = vunpack.c.l.b16 %v205
      %v386 = vunpack.c.h.b16 %v205
      %v387 = vunpack.c.l.b16 %v206
      %v388 = vunpack.c.h.b16 %v206
      %v389 = vunpack.c.l.b16 %v207
      %v390 = vunpack.c.h.b16 %v207
      %v391 = vunpack.c.l.b16 %v208
      %v392 = vunpack.c.h.b16 %v208
      %v393 = vunpack.c.l.b16 %v209
      %v394 = vunpack.c.h.b16 %v209
      %v395 = vunpack.c.l.b16 %v210
      %v396 = vunpack.c.h.b16 %v210
      %v397 = vunpack.c.l.b16 %v211
      %v398 = vunpack.c.h.b16 %v211
      %v399 = vunpack.c.l.b16 %v212
      %v400 = vunpack.c.h.b16 %v212
      %v401 = vunpack.c.l.b16 %v213
      %v402 = vunpack.c.h.b16 %v213
      %v403 = vunpack.c.l.b16 %v214
      %v404 = vunpack.c.h.b16 %v214
      %v405 = vunpack.c.l.b16 %v215
      %v406 = vunpack.c.h.b16 %v215
      %v407 = vunpack.c.l.b16 %v216
      %v408 = vunpack.c.h.b16 %v216
      %v409 = vunpack.c.l.b16 %v217
      %v410 = vunpack.c.h.b16 %v217
      %v411 = vunpack.c.l.b16 %v218
      %v412 = vunpack.c.h.b16 %v218
      %v413 = vunpack.c.l.b16 %v219
      %v414 = vunpack.c.h.b16 %v219
      %v415 = vunpack.c.l.b16 %v220
      %v416 = vunpack.c.h.b16 %v220
      %v417 = vunpack.c.l.b16 %v221
      %v418 = vunpack.c.h.b16 %v221
      %v419 = vunpack.c.l.b16 %v222
      %v420 = vunpack.c.h.b16 %v222
      %v421 = vunpack.c.l.b16 %v223
      %v422 = vunpack.c.h.b16 %v223
      %v423 = vunpack.c.l.b16 %v224
      %v424 = vunpack.c.h.b16 %v224
      %v425 = vunpack.c.l.b16 %v225
      %v426 = vunpack.c.h.b16 %v225
      %v427 = vunpack.c.l.b16 %v226
      %v428 = vunpack.c.h.b16 %v226
      %v429 = vunpack.c.l.b16 %v227
      %v430 = vunpack.c.h.b16 %v227
      %v431 = vunpack.c.l.b16 %v228
      %v432 = vunpack.c.h.b16 %v228
      %v433 = vunpack.c.l.b16 %v229
      %v434 = vunpack.c.h.b16 %v229
      %v435 = vunpack.c.l.b16 %v230
      %v436 = vunpack.c.h.b16 %v230
      %v437 = vunpack.c.l.b16 %v231
      %v438 = vunpack.c.h.b16 %v231
      %v439 = vunpack.c.l.b16 %v232
      %v440 = vunpack.c.h.b16 %v232
      %v441 = vunpack.c.l.b16 %v233
      %v442 = vunpack.c.h.b16 %v233
      %v443 = vunpack.c.l.b16 %v234
      %v444 = vunpack.c.h.b16 %v234
      %v445 = vunpack.c.l.b16 %v235
      %v446 = vunpack.c.h.b16 %v235
      %v447 = vunpack.c.l.b16 %v236
      %v448 = vunpack.c.h.b16 %v236
      %v449 = vunpack.c.l.b16 %v237
      %v450 = vunpack.c.h.b16 %v237
      %v451 = vunpack.c.l.b16 %v238
      %v452 = vunpack.c.h.b16 %v238
      %v453 = vunpack.c.l.b16 %v239
      %v454 = vunpack.c.h.b16 %v239
      %v455 = vunpack.c.l.b16 %v240
      %v456 = vunpack.c.h.b16 %v240
      %v457 = vunpack.c.l.b16 %v241
      %v458 = vunpack.c.h.b16 %v241
      %v459 = vpack.c.b16 %v333, %v331
      %v460 = vpack.c.b16 %v334, %v332
      %v461 = vpack.c.b16 %v337, %v335
      %v462 = vpack.c.b16 %v338, %v336
      %v463 = vpack.c.b16 %v341, %v339
      %v464 = vpack.c.b16 %v342, %v340
      %v465 = vpack.c.b16 %v345, %v343
      %v466 = vpack.c.b16 %v346, %v344
      %v467 = vpack.c.b16 %v349, %v347
      %v468 = vpack.c.b16 %v350, %v348
      %v469 = vpack.c.b16 %v353, %v351
      %v470 = vpack.c.b16 %v354, %v352
      %v471 = vpack.c.b16 %v357, %v355
      %v472 = vpack.c.b16 %v358, %v356
      %v473 = vpack.c.b16 %v361, %v359
      %v474 = vpack.c.b16 %v362, %v360
      %v475 = vpack.c.b16 %v365, %v363
      %v476 = vpack.c.b16 %v366, %v364
      %v477 = vpack.c.b16 %v369, %v367
      %v478 = vpack.c.b16 %v370, %v368
      %v479 = vpack.c.b16 %v373, %v371
      %v480 = vpack.c.b16 %v374, %v372
      %v481 = vpack.c.b16 %v377, %v375
      %v482 = vpack.c.b16 %v378, %v376
      %v483 = vpack.c.b16 %v381, %v379
      %v484 = vpack.c.b16 %v382, %v380
      %v485 = vpack.c.b16 %v385, %v383
      %v486 = vpack.c.b16 %v386, %v384
      %v487 = vpack.c.b16 %v389, %v387
      %v488 = vpack.c.b16 %v390, %v388
      %v489 = vpack.c.b16 %v393, %v391
      %v490 = vpack.c.b16 %v394, %v392
      %v491 = vpack.c.b16 %v397, %v395
      %v492 = vpack.c.b16 %v398, %v396
      %v493 = vpack.c.b16 %v401, %v399
      %v494 = vpack.c.b16 %v402, %v400
      %v495 = vpack.c.b16 %v405, %v403
      %v496 = vpack.c.b16 %v406, %v404
      %v497 = vpack.c.b16 %v409, %v407
      %v498 = vpack.c.b16 %v410, %v408
      %v499 = vpack.c.b16 %v413, %v411
      %v500 = vpack.c.b16 %v414, %v412
      %v501 = vpack.c.b16 %v417, %v415
      %v502 = vpack.c.b16 %v418, %v416
      %v503 = vpack.c.b16 %v421, %v419
      %v504 = vpack.c.b16 %v422, %v420
      %v505 = vpack.c.b16 %v425, %v423
      %v506 = vpack.c.b16 %v426, %v424
      %v507 = vpack.c.b16 %v429, %v427
      %v508 = vpack.c.b16 %v430, %v428
      %v509 = vpack.c.b16 %v433, %v431
      %v510 = vpack.c.b16 %v434, %v432
      %v511 = vpack.c.b16 %v437, %v435
      %v512 = vpack.c.b16 %v438, %v436
      %v513 = vpack.c.b16 %v441, %v439
      %v514 = vpack.c.b16 %v442, %v440
      %v515 = vpack.c.b16 %v445, %v443
      %v516 = vpack.c.b16 %v446, %v444
      %v517 = vpack.c.b16 %v449, %v447
      %v518 = vpack.c.b16 %v450, %v448
      %v519 = vpack.c.b16 %v453, %v451
      %v520 = vpack.c.b16 %v454, %v452
      %v521 = vpack.c.b16 %v457, %v455
      %v522 = vpack.c.b16 %v458, %v456
      %v573 = vunpack.c.l.b16 %v242
      %v574 = vunpack.c.l.b16 %v243
      %v575 = vunpack.c.l.b16 %v244
      %v576 = vunpack.c.l.b16 %v245
      %v577 = vunpack.c.l.b16 %v246
      %v578 = vunpack.c.l.b16 %v247
      %v579 = vunpack.c.l.b16 %v248
      %v580 = vunpack.c.l.b16 %v249
      %v581 = vunpack.c.l.b16 %v250
      %v582 = vunpack.c.l.b16 %v251
      %v583 = vunpack.c.l.b16 %v252
      %v584 = vunpack.c.l.b16 %v253
      %v585 = vunpack.c.l.b16 %v254
      %v586 = vunpack.c.l.b16 %v255
      %v587 = vunpack.c.l.b16 %v256
      %v588 = vunpack.c.l.b16 %v257
      %v589 = vunpack.c.l.b16 %v258
      %v590 = vunpack.c.l.b16 %v259
      %v591 = vpack.c.b16 %v574, %v573
      %v592 = vpack.c.b16 %v576, %v575
      %v593 = vpack.c.b16 %v578, %v577
      %v594 = vpack.c.b16 %v580, %v579
      %v595 = vpack.c.b16 %v582, %v581
      %v596 = vpack.c.b16 %v584, %v583
      %v597 = vpack.c.b16 %v586, %v585
      %v598 = vpack.c.b16 %v588, %v587
      %v599 = vpack.c.b16 %v590, %v589
      %vm609 = vcmask 130048
      %v611 = vsel %vm609, %v460, 0
      %v614 = vsel %vm609, %v462, 0
      %v617 = vsel %vm609, %v464, 0
      %v620 = vsel %vm609, %v466, 0
      %v623 = vsel %vm609, %v468, 0
      %v626 = vsel %vm609, %v470, 0
      %v629 = vsel %vm609, %v472, 0
      %v632 = vsel %vm609, %v474, 0
      %v635 = vsel %vm609, %v476, 0
      %v638 = vsel %vm609, %v478, 0
      %v641 = vsel %vm609, %v480, 0
      %v644 = vsel %vm609, %v482, 0
      %v647 = vsel %vm609, %v484, 0
      %v650 = vsel %vm609, %v486, 0
      %v653 = vsel %vm609, %v488, 0
      %v656 = vsel %vm609, %v490, 0
      %v659 = vsel %vm609, %v492, 0
      %v662 = vsel %vm609, %v494, 0
      %v665 = vsel %vm609, %v496, 0
      %v668 = vsel %vm609, %v498, 0
      %v671 = vsel %vm609, %v500, 0
      %v674 = vsel %vm609, %v502, 0
      %v677 = vsel %vm609, %v504, 0
      %v680 = vsel %vm609, %v506, 0
      %v683 = vsel %vm609, %v508, 0
      %v686 = vsel %vm609, %v510, 0
      %v689 = vsel %vm609, %v512, 0
      %v692 = vsel %vm609, %v514, 0
      %v695 = vsel %vm609, %v516, 0
      %v698 = vsel %vm609, %v518, 0
      %v701 = vsel %vm609, %v520, 0
      %v704 = vsel %vm609, %v522, 0
      %706 = vmatprep.subr.bf16.mxu0 0
      %707 = vmatpush1.bf16.msra.mxu0 %v591
      %708 = vmatprep.subr.bf16.mxu0 0
      %709 = vmatpush1.bf16.msra.mxu0 %v592
      %710 = vmatprep.subr.bf16.mxu0 0
      %711 = vmatpush1.bf16.msra.mxu0 %v593
      %712 = vmatprep.subr.bf16.mxu0 0
      %713 = vmatpush1.bf16.msra.mxu0 %v594
      %714 = vmatprep.subr.bf16.mxu0 0
      %715 = vmatpush1.bf16.msra.mxu0 %v595
      %716 = vmatprep.subr.bf16.mxu0 0
      %717 = vmatpush1.bf16.msra.mxu0 %v596
      %718 = vmatprep.subr.bf16.mxu0 0
      %719 = vmatpush1.bf16.msra.mxu0 %v597
      %720 = vmatprep.subr.bf16.mxu0 0
      %721 = vmatpush1.bf16.msra.mxu0 %v598
      %722 = vmatprep.subr.bf16.mxu0 0
      %723 = vmatpush1.bf16.msra.mxu0 %v599
      %724 = vmatprep.subr.bf16.mxu0 0
      %725 = vmatpush1.bf16.msra.mxu0 0
      %726 = vmatprep.subr.bf16.mxu0 0
      %727 = vmatpush1.bf16.msra.mxu0 0
      %728 = vmatprep.subr.bf16.mxu0 0
      %729 = vmatpush1.bf16.msra.mxu0 0
      %730 = vmatprep.subr.bf16.mxu0 0
      %731 = vmatpush1.bf16.msra.mxu0 0
      %732 = vmatprep.subr.bf16.mxu0 0
      %733 = vmatpush1.bf16.msra.mxu0 0
      %734 = vmatprep.subr.bf16.mxu0 0
      %735 = vmatpush1.bf16.msra.mxu0 0
      %736 = vmatprep.subr.bf16.mxu0 0
      %737 = vmatpush1.bf16.msra.mxu0 0
      %738 = vmatprep.mubr.bf16.mxu0 %v611
      %739 = vmatmul.mubr.bf16.gmra.mrb[0].mxu0 %v459
      %v740 = vpop.f32.mrb[0].mxu0
      %v741 = vadd.f32 %v265, %v740
      %v742 = vpop.f32.mrb[0].mxu0
      %v743 = vpop.f32.mrb[0].mxu0
      %v744 = vadd.f32 %v265, %v743
      %v745 = vpop.f32.mrb[0].mxu0
      %746 = vmatprep.mubr.bf16.mxu0 %v614
      %747 = vmatmul.mubr.bf16.gmra.mrb[0].mxu0 %v461
      %v748 = vpop.f32.mrb[0].mxu0
      %v749 = vadd.f32 %v265, %v748
      %v750 = vpop.f32.mrb[0].mxu0
      %v751 = vpop.f32.mrb[0].mxu0
      %v752 = vadd.f32 %v265, %v751
      %v753 = vpop.f32.mrb[0].mxu0
      %754 = vmatprep.mubr.bf16.mxu0 %v617
      %755 = vmatmul.mubr.bf16.gmra.mrb[0].mxu0 %v463
      %v756 = vpop.f32.mrb[0].mxu0
      %v757 = vadd.f32 %v265, %v756
      %v758 = vpop.f32.mrb[0].mxu0
      %v759 = vpop.f32.mrb[0].mxu0
      %v760 = vadd.f32 %v265, %v759
      %v761 = vpop.f32.mrb[0].mxu0
      %762 = vmatprep.mubr.bf16.mxu0 %v620
      %763 = vmatmul.mubr.bf16.gmra.mrb[0].mxu0 %v465
      %v764 = vpop.f32.mrb[0].mxu0
      %v765 = vadd.f32 %v265, %v764
      %v766 = vpop.f32.mrb[0].mxu0
      %v767 = vpop.f32.mrb[0].mxu0
      %v768 = vadd.f32 %v265, %v767
      %v769 = vpop.f32.mrb[0].mxu0
      %770 = vmatprep.mubr.bf16.mxu0 %v623
      %771 = vmatmul.mubr.bf16.gmra.mrb[0].mxu0 %v467
      %v772 = vpop.f32.mrb[0].mxu0
      %v773 = vadd.f32 %v265, %v772
      %v774 = vpop.f32.mrb[0].mxu0
      %v775 = vpop.f32.mrb[0].mxu0
      %v776 = vadd.f32 %v265, %v775
      %v777 = vpop.f32.mrb[0].mxu0
      %778 = vmatprep.mubr.bf16.mxu0 %v626
      %779 = vmatmul.mubr.bf16.gmra.mrb[0].mxu0 %v469
      %v780 = vpop.f32.mrb[0].mxu0
      %v781 = vadd.f32 %v265, %v780
      %v782 = vpop.f32.mrb[0].mxu0
      %v783 = vpop.f32.mrb[0].mxu0
      %v784 = vadd.f32 %v265, %v783
      %v785 = vpop.f32.mrb[0].mxu0
      %786 = vmatprep.mubr.bf16.mxu0 %v629
      %787 = vmatmul.mubr.bf16.gmra.mrb[0].mxu0 %v471
      %v788 = vpop.f32.mrb[0].mxu0
      %v789 = vadd.f32 %v265, %v788
      %v790 = vpop.f32.mrb[0].mxu0
      %v791 = vpop.f32.mrb[0].mxu0
      %v792 = vadd.f32 %v265, %v791
      %v793 = vpop.f32.mrb[0].mxu0
      %794 = vmatprep.mubr.bf16.mxu0 %v632
      %795 = vmatmul.mubr.bf16.gmra.mrb[0].mxu0 %v473
      %v796 = vpop.f32.mrb[0].mxu0
      %v797 = vadd.f32 %v265, %v796
      %v798 = vpop.f32.mrb[0].mxu0
      %v799 = vpop.f32.mrb[0].mxu0
      %v800 = vadd.f32 %v265, %v799
      %v801 = vpop.f32.mrb[0].mxu0
      %802 = vmatprep.mubr.bf16.mxu0 %v635
      %803 = vmatmul.mubr.bf16.gmra.mrb[0].mxu0 %v475
      %v804 = vpop.f32.mrb[0].mxu0
      %v805 = vadd.f32 %v265, %v804
      %v806 = vpop.f32.mrb[0].mxu0
      %v807 = vpop.f32.mrb[0].mxu0
      %v808 = vadd.f32 %v265, %v807
      %v809 = vpop.f32.mrb[0].mxu0
      %810 = vmatprep.mubr.bf16.mxu0 %v638
      %811 = vmatmul.mubr.bf16.gmra.mrb[0].mxu0 %v477
      %v812 = vpop.f32.mrb[0].mxu0
      %v813 = vadd.f32 %v265, %v812
      %v814 = vpop.f32.mrb[0].mxu0
      %v815 = vpop.f32.mrb[0].mxu0
      %v816 = vadd.f32 %v265, %v815
      %v817 = vpop.f32.mrb[0].mxu0
      %818 = vmatprep.mubr.bf16.mxu0 %v641
      %819 = vmatmul.mubr.bf16.gmra.mrb[0].mxu0 %v479
      %v820 = vpop.f32.mrb[0].mxu0
      %v821 = vadd.f32 %v265, %v820
      %v822 = vpop.f32.mrb[0].mxu0
      %v823 = vpop.f32.mrb[0].mxu0
      %v824 = vadd.f32 %v265, %v823
      %v825 = vpop.f32.mrb[0].mxu0
      %826 = vmatprep.mubr.bf16.mxu0 %v644
      %827 = vmatmul.mubr.bf16.gmra.mrb[0].mxu0 %v481
      %v828 = vpop.f32.mrb[0].mxu0
      %v829 = vadd.f32 %v265, %v828
      %v830 = vpop.f32.mrb[0].mxu0
      %v831 = vpop.f32.mrb[0].mxu0
      %v832 = vadd.f32 %v265, %v831
      %v833 = vpop.f32.mrb[0].mxu0
      %834 = vmatprep.mubr.bf16.mxu0 %v647
      %835 = vmatmul.mubr.bf16.gmra.mrb[0].mxu0 %v483
      %v836 = vpop.f32.mrb[0].mxu0
      %v837 = vadd.f32 %v265, %v836
      %v838 = vpop.f32.mrb[0].mxu0
      %v839 = vpop.f32.mrb[0].mxu0
      %v840 = vadd.f32 %v265, %v839
      %v841 = vpop.f32.mrb[0].mxu0
      %842 = vmatprep.mubr.bf16.mxu0 %v650
      %843 = vmatmul.mubr.bf16.gmra.mrb[0].mxu0 %v485
      %v844 = vpop.f32.mrb[0].mxu0
      %v845 = vadd.f32 %v265, %v844
      %v846 = vpop.f32.mrb[0].mxu0
      %v847 = vpop.f32.mrb[0].mxu0
      %v848 = vadd.f32 %v265, %v847
      %v849 = vpop.f32.mrb[0].mxu0
      %850 = vmatprep.mubr.bf16.mxu0 %v653
      %851 = vmatmul.mubr.bf16.gmra.mrb[0].mxu0 %v487
      %v852 = vpop.f32.mrb[0].mxu0
      %v853 = vadd.f32 %v265, %v852
      %v854 = vpop.f32.mrb[0].mxu0
      %v855 = vpop.f32.mrb[0].mxu0
      %v856 = vadd.f32 %v265, %v855
      %v857 = vpop.f32.mrb[0].mxu0
      %858 = vmatprep.mubr.bf16.mxu0 %v656
      %859 = vmatmul.mubr.bf16.gmra.mrb[0].mxu0 %v489
      %v860 = vpop.f32.mrb[0].mxu0
      %v861 = vadd.f32 %v265, %v860
      %v862 = vpop.f32.mrb[0].mxu0
      %v863 = vpop.f32.mrb[0].mxu0
      %v864 = vadd.f32 %v265, %v863
      %v865 = vpop.f32.mrb[0].mxu0
      %866 = vmatprep.mubr.bf16.mxu0 %v659
      %867 = vmatmul.mubr.bf16.gmra.mrb[0].mxu0 %v491
      %v868 = vpop.f32.mrb[0].mxu0
      %v869 = vadd.f32 %v265, %v868
      %v870 = vpop.f32.mrb[0].mxu0
      %v871 = vpop.f32.mrb[0].mxu0
      %v872 = vadd.f32 %v265, %v871
      %v873 = vpop.f32.mrb[0].mxu0
      %874 = vmatprep.mubr.bf16.mxu0 %v662
      %875 = vmatmul.mubr.bf16.gmra.mrb[0].mxu0 %v493
      %v876 = vpop.f32.mrb[0].mxu0
      %v877 = vadd.f32 %v265, %v876
      %v878 = vpop.f32.mrb[0].mxu0
      %v879 = vpop.f32.mrb[0].mxu0
      %v880 = vadd.f32 %v265, %v879
      %v881 = vpop.f32.mrb[0].mxu0
      %882 = vmatprep.mubr.bf16.mxu0 %v665
      %883 = vmatmul.mubr.bf16.gmra.mrb[0].mxu0 %v495
      %v884 = vpop.f32.mrb[0].mxu0
      %v885 = vadd.f32 %v265, %v884
      %v886 = vpop.f32.mrb[0].mxu0
      %v887 = vpop.f32.mrb[0].mxu0
      %v888 = vadd.f32 %v265, %v887
      %v889 = vpop.f32.mrb[0].mxu0
      %890 = vmatprep.mubr.bf16.mxu0 %v668
      %891 = vmatmul.mubr.bf16.gmra.mrb[0].mxu0 %v497
      %v892 = vpop.f32.mrb[0].mxu0
      %v893 = vadd.f32 %v265, %v892
      %v894 = vpop.f32.mrb[0].mxu0
      %v895 = vpop.f32.mrb[0].mxu0
      %v896 = vadd.f32 %v265, %v895
      %v897 = vpop.f32.mrb[0].mxu0
      %898 = vmatprep.mubr.bf16.mxu0 %v671
      %899 = vmatmul.mubr.bf16.gmra.mrb[0].mxu0 %v499
      %v900 = vpop.f32.mrb[0].mxu0
      %v901 = vadd.f32 %v265, %v900
      %v902 = vpop.f32.mrb[0].mxu0
      %v903 = vpop.f32.mrb[0].mxu0
      %v904 = vadd.f32 %v265, %v903
      %v905 = vpop.f32.mrb[0].mxu0
      %906 = vmatprep.mubr.bf16.mxu0 %v674
      %907 = vmatmul.mubr.bf16.gmra.mrb[0].mxu0 %v501
      %v908 = vpop.f32.mrb[0].mxu0
      %v909 = vadd.f32 %v265, %v908
      %v910 = vpop.f32.mrb[0].mxu0
      %v911 = vpop.f32.mrb[0].mxu0
      %v912 = vadd.f32 %v265, %v911
      %v913 = vpop.f32.mrb[0].mxu0
      %914 = vmatprep.mubr.bf16.mxu0 %v677
      %915 = vmatmul.mubr.bf16.gmra.mrb[0].mxu0 %v503
      %v916 = vpop.f32.mrb[0].mxu0
      %v917 = vadd.f32 %v265, %v916
      %v918 = vpop.f32.mrb[0].mxu0
      %v919 = vpop.f32.mrb[0].mxu0
      %v920 = vadd.f32 %v265, %v919
      %v921 = vpop.f32.mrb[0].mxu0
      %922 = vmatprep.mubr.bf16.mxu0 %v680
      %923 = vmatmul.mubr.bf16.gmra.mrb[0].mxu0 %v505
      %v924 = vpop.f32.mrb[0].mxu0
      %v925 = vadd.f32 %v265, %v924
      %v926 = vpop.f32.mrb[0].mxu0
      %v927 = vpop.f32.mrb[0].mxu0
      %v928 = vadd.f32 %v265, %v927
      %v929 = vpop.f32.mrb[0].mxu0
      %930 = vmatprep.mubr.bf16.mxu0 %v683
      %931 = vmatmul.mubr.bf16.gmra.mrb[0].mxu0 %v507
      %v932 = vpop.f32.mrb[0].mxu0
      %v933 = vadd.f32 %v265, %v932
      %v934 = vpop.f32.mrb[0].mxu0
      %v935 = vpop.f32.mrb[0].mxu0
      %v936 = vadd.f32 %v265, %v935
      %v937 = vpop.f32.mrb[0].mxu0
      %938 = vmatprep.mubr.bf16.mxu0 %v686
      %939 = vmatmul.mubr.bf16.gmra.mrb[0].mxu0 %v509
      %v940 = vpop.f32.mrb[0].mxu0
      %v941 = vadd.f32 %v265, %v940
      %v942 = vpop.f32.mrb[0].mxu0
      %v943 = vpop.f32.mrb[0].mxu0
      %v944 = vadd.f32 %v265, %v943
      %v945 = vpop.f32.mrb[0].mxu0
      %946 = vmatprep.mubr.bf16.mxu0 %v689
      %947 = vmatmul.mubr.bf16.gmra.mrb[0].mxu0 %v511
      %v948 = vpop.f32.mrb[0].mxu0
      %v949 = vadd.f32 %v265, %v948
      %v950 = vpop.f32.mrb[0].mxu0
      %v951 = vpop.f32.mrb[0].mxu0
      %v952 = vadd.f32 %v265, %v951
      %v953 = vpop.f32.mrb[0].mxu0
      %954 = vmatprep.mubr.bf16.mxu0 %v692
      %955 = vmatmul.mubr.bf16.gmra.mrb[0].mxu0 %v513
      %v956 = vpop.f32.mrb[0].mxu0
      %v957 = vadd.f32 %v265, %v956
      %v958 = vpop.f32.mrb[0].mxu0
      %v959 = vpop.f32.mrb[0].mxu0
      %v960 = vadd.f32 %v265, %v959
      %v961 = vpop.f32.mrb[0].mxu0
      %962 = vmatprep.mubr.bf16.mxu0 %v695
      %963 = vmatmul.mubr.bf16.gmra.mrb[0].mxu0 %v515
      %v964 = vpop.f32.mrb[0].mxu0
      %v965 = vadd.f32 %v265, %v964
      %v966 = vpop.f32.mrb[0].mxu0
      %v967 = vpop.f32.mrb[0].mxu0
      %v968 = vadd.f32 %v265, %v967
      %v969 = vpop.f32.mrb[0].mxu0
      %970 = vmatprep.mubr.bf16.mxu0 %v698
      %971 = vmatmul.mubr.bf16.gmra.mrb[0].mxu0 %v517
      %v972 = vpop.f32.mrb[0].mxu0
      %v973 = vadd.f32 %v265, %v972
      %v974 = vpop.f32.mrb[0].mxu0
      %v975 = vpop.f32.mrb[0].mxu0
      %v976 = vadd.f32 %v265, %v975
      %v977 = vpop.f32.mrb[0].mxu0
      %978 = vmatprep.mubr.bf16.mxu0 %v701
      %979 = vmatmul.mubr.bf16.gmra.mrb[0].mxu0 %v519
      %v980 = vpop.f32.mrb[0].mxu0
      %v981 = vadd.f32 %v265, %v980
      %v982 = vpop.f32.mrb[0].mxu0
      %v983 = vpop.f32.mrb[0].mxu0
      %v984 = vadd.f32 %v265, %v983
      %v985 = vpop.f32.mrb[0].mxu0
      %986 = vmatprep.mubr.bf16.mxu0 %v704
      %987 = vmatmul.mubr.bf16.gmra.mrb[0].mxu0 %v521
      %v988 = vpop.f32.mrb[0].mxu0
      %v989 = vadd.f32 %v265, %v988
      %v990 = vpop.f32.mrb[0].mxu0
      %v991 = vpop.f32.mrb[0].mxu0
      %v992 = vadd.f32 %v265, %v991
      %v993 = vpop.f32.mrb[0].mxu0
      %994 = vdwg.mxu0
      %v995 = vmax.f32 %v741, 0.0
      %v996 = vmax.f32 %v744, 0.0
      %v997 = vmax.f32 %v749, 0.0
      %v998 = vmax.f32 %v752, 0.0
      %v999 = vmax.f32 %v757, 0.0
      %v1000 = vmax.f32 %v760, 0.0
      %v1001 = vmax.f32 %v765, 0.0
      %v1002 = vmax.f32 %v768, 0.0
      %v1003 = vmax.f32 %v773, 0.0
      %v1004 = vmax.f32 %v776, 0.0
      %v1005 = vmax.f32 %v781, 0.0
      %v1006 = vmax.f32 %v784, 0.0
      %v1007 = vmax.f32 %v789, 0.0
      %v1008 = vmax.f32 %v792, 0.0
      %v1009 = vmax.f32 %v797, 0.0
      %v1010 = vmax.f32 %v800, 0.0
      %v1011 = vmax.f32 %v805, 0.0
      %v1012 = vmax.f32 %v808, 0.0
      %v1013 = vmax.f32 %v813, 0.0
      %v1014 = vmax.f32 %v816, 0.0
      %v1015 = vmax.f32 %v821, 0.0
      %v1016 = vmax.f32 %v824, 0.0
      %v1017 = vmax.f32 %v829, 0.0
      %v1018 = vmax.f32 %v832, 0.0
      %v1019 = vmax.f32 %v837, 0.0
      %v1020 = vmax.f32 %v840, 0.0
      %v1021 = vmax.f32 %v845, 0.0
      %v1022 = vmax.f32 %v848, 0.0
      %v1023 = vmax.f32 %v853, 0.0
      %v1024 = vmax.f32 %v856, 0.0
      %v1025 = vmax.f32 %v861, 0.0
      %v1026 = vmax.f32 %v864, 0.0
      %v1027 = vmax.f32 %v869, 0.0
      %v1028 = vmax.f32 %v872, 0.0
      %v1029 = vmax.f32 %v877, 0.0
      %v1030 = vmax.f32 %v880, 0.0
      %v1031 = vmax.f32 %v885, 0.0
      %v1032 = vmax.f32 %v888, 0.0
      %v1033 = vmax.f32 %v893, 0.0
      %v1034 = vmax.f32 %v896, 0.0
      %v1035 = vmax.f32 %v901, 0.0
      %v1036 = vmax.f32 %v904, 0.0
      %v1037 = vmax.f32 %v909, 0.0
      %v1038 = vmax.f32 %v912, 0.0
      %v1039 = vmax.f32 %v917, 0.0
      %v1040 = vmax.f32 %v920, 0.0
      %v1041 = vmax.f32 %v925, 0.0
      %v1042 = vmax.f32 %v928, 0.0
      %v1043 = vmax.f32 %v933, 0.0
      %v1044 = vmax.f32 %v936, 0.0
      %v1045 = vmax.f32 %v941, 0.0
      %v1046 = vmax.f32 %v944, 0.0
      %v1047 = vmax.f32 %v949, 0.0
      %v1048 = vmax.f32 %v952, 0.0
      %v1049 = vmax.f32 %v957, 0.0
      %v1050 = vmax.f32 %v960, 0.0
      %v1051 = vmax.f32 %v965, 0.0
      %v1052 = vmax.f32 %v968, 0.0
      %v1053 = vmax.f32 %v973, 0.0
      %v1054 = vmax.f32 %v976, 0.0
      %v1055 = vmax.f32 %v981, 0.0
      %v1056 = vmax.f32 %v984, 0.0
      %v1057 = vmax.f32 %v989, 0.0
      %v1058 = vmax.f32 %v992, 0.0
      %1059 = vst [vmem:[%s175] sm:$0xff] %v995
      %1060 = vst [vmem:[%s175 + $0x8] sm:$0xff] %v996
      %1061 = vst [vmem:[%s175 + $0x10] sm:$0xff] %v997
      %1062 = vst [vmem:[%s175 + $0x18] sm:$0xff] %v998
      %1063 = vst [vmem:[%s175 + $0x20] sm:$0xff] %v999
      %1064 = vst [vmem:[%s175 + $0x28] sm:$0xff] %v1000
      %1065 = vst [vmem:[%s175 + $0x30] sm:$0xff] %v1001
      %1066 = vst [vmem:[%s175 + $0x38] sm:$0xff] %v1002
      %1067 = vst [vmem:[%s175 + $0x40] sm:$0xff] %v1003
      %1068 = vst [vmem:[%s175 + $0x48] sm:$0xff] %v1004
      %1069 = vst [vmem:[%s175 + $0x50] sm:$0xff] %v1005
      %1070 = vst [vmem:[%s175 + $0x58] sm:$0xff] %v1006
      %1071 = vst [vmem:[%s175 + $0x60] sm:$0xff] %v1007
      %1072 = vst [vmem:[%s175 + $0x68] sm:$0xff] %v1008
      %1073 = vst [vmem:[%s175 + $0x70] sm:$0xff] %v1009
      %1074 = vst [vmem:[%s175 + $0x78] sm:$0xff] %v1010
      %1075 = vst [vmem:[%s175 + $0x80] sm:$0xff] %v1011
      %1076 = vst [vmem:[%s175 + $0x88] sm:$0xff] %v1012
      %1077 = vst [vmem:[%s175 + $0x90] sm:$0xff] %v1013
      %1078 = vst [vmem:[%s175 + $0x98] sm:$0xff] %v1014
      %1079 = vst [vmem:[%s175 + $0xa0] sm:$0xff] %v1015
      %1080 = vst [vmem:[%s175 + $0xa8] sm:$0xff] %v1016
      %1081 = vst [vmem:[%s175 + $0xb0] sm:$0xff] %v1017
      %1082 = vst [vmem:[%s175 + $0xb8] sm:$0xff] %v1018
      %1083 = vst [vmem:[%s175 + $0xc0] sm:$0xff] %v1019
      %1084 = vst [vmem:[%s175 + $0xc8] sm:$0xff] %v1020
      %1085 = vst [vmem:[%s175 + $0xd0] sm:$0xff] %v1021
      %1086 = vst [vmem:[%s175 + $0xd8] sm:$0xff] %v1022
      %1087 = vst [vmem:[%s175 + $0xe0] sm:$0xff] %v1023
      %1088 = vst [vmem:[%s175 + $0xe8] sm:$0xff] %v1024
      %1089 = vst [vmem:[%s175 + $0xf0] sm:$0xff] %v1025
      %1090 = vst [vmem:[%s175 + $0xf8] sm:$0xff] %v1026
      %1091 = vst [vmem:[%s175 + $0x100] sm:$0xff] %v1027
      %1092 = vst [vmem:[%s175 + $0x108] sm:$0xff] %v1028
      %1093 = vst [vmem:[%s175 + $0x110] sm:$0xff] %v1029
      %1094 = vst [vmem:[%s175 + $0x118] sm:$0xff] %v1030
      %1095 = vst [vmem:[%s175 + $0x120] sm:$0xff] %v1031
      %1096 = vst [vmem:[%s175 + $0x128] sm:$0xff] %v1032
      %1097 = vst [vmem:[%s175 + $0x130] sm:$0xff] %v1033
      %1098 = vst [vmem:[%s175 + $0x138] sm:$0xff] %v1034
      %1099 = vst [vmem:[%s175 + $0x140] sm:$0xff] %v1035
      %1100 = vst [vmem:[%s175 + $0x148] sm:$0xff] %v1036
      %1101 = vst [vmem:[%s175 + $0x150] sm:$0xff] %v1037
      %1102 = vst [vmem:[%s175 + $0x158] sm:$0xff] %v1038
      %1103 = vst [vmem:[%s175 + $0x160] sm:$0xff] %v1039
      %1104 = vst [vmem:[%s175 + $0x168] sm:$0xff] %v1040
      %1105 = vst [vmem:[%s175 + $0x170] sm:$0xff] %v1041
      %1106 = vst [vmem:[%s175 + $0x178] sm:$0xff] %v1042
      %1107 = vst [vmem:[%s175 + $0x180] sm:$0xff] %v1043
      %1108 = vst [vmem:[%s175 + $0x188] sm:$0xff] %v1044
      %1109 = vst [vmem:[%s175 + $0x190] sm:$0xff] %v1045
      %1110 = vst [vmem:[%s175 + $0x198] sm:$0xff] %v1046
      %1111 = vst [vmem:[%s175 + $0x1a0] sm:$0xff] %v1047
      %1112 = vst [vmem:[%s175 + $0x1a8] sm:$0xff] %v1048
      %1113 = vst [vmem:[%s175 + $0x1b0] sm:$0xff] %v1049
      %1114 = vst [vmem:[%s175 + $0x1b8] sm:$0xff] %v1050
      %1115 = vst [vmem:[%s175 + $0x1c0] sm:$0xff] %v1051
      %1116 = vst [vmem:[%s175 + $0x1c8] sm:$0xff] %v1052
      %1117 = vst [vmem:[%s175 + $0x1d0] sm:$0xff] %v1053
      %1118 = vst [vmem:[%s175 + $0x1d8] sm:$0xff] %v1054
      %1119 = vst [vmem:[%s175 + $0x1e0] sm:$0xff] %v1055
      %1120 = vst [vmem:[%s175 + $0x1e8] sm:$0xff] %v1056
      %1121 = vst [vmem:[%s175 + $0x1f0] sm:$0xff] %v1057
      %1122 = vst [vmem:[%s175 + $0x1f8] sm:$0xff] %v1058
      %s1123 = smul.u32 64, %s14
      %p1124 = scmp.lt.s32.totalorder %s1123, 255
      %s1125 = scalar_select %p1124, %s1123, 255
      %s1126 = smul.addr %s1125, 8
      %s1127 = scalar_lea.vmem %s3, %s1126
      // Predicated region
      $region33: #{resnet_cifar_forward.11} parent=31 // pred_check
        %p1128 = pneg %p100
      $region34: #{resnet_cifar_forward.11} parent=31 // pred_check_branch
        %1130 = sbr.rel (%p1128) target = $region36
      $region35: #{resnet_cifar_forward.11} parent=31 // pred_region
        %s1131 = smul.u32 64, %s14
      $region36: #{resnet_cifar_forward.11} parent=31 // pred_fallthru
        _
    $region32: #{resnet_cifar_forward.11} parent=5 // pred_fallthru
      _
    %p1132 = scmp.le.s32.totalorder 2, %s9
    // Predicated region
    $region37: #{resnet_cifar_forward.11} parent=5 // pred_check
      %p1133 = pneg %p1132
    $region38: #{resnet_cifar_forward.11} parent=5 // pred_check_branch
      %1135 = sbr.rel (%p1133) target = $region40
    $region39: #{resnet_cifar_forward.11} parent=5 // pred_region
      %s1136 = ssub.s32 %s9, 2
      // Predicated region
      $region41: #{resnet_cifar_forward.11} parent=39 // pred_check
        %p1137 = pneg %p106
      $region42: #{resnet_cifar_forward.11} parent=39 // pred_check_branch
        %1139 = sbr.rel (%p1137) target = $region44
      $region43: #{resnet_cifar_forward.11} parent=39 // pred_region
        %s1140 = smul.u32 64, %s15
        %p1141 = scmp.lt.s32.totalorder %s1140, 255
        %s1142 = scalar_select %p1141, %s1140, 255
        %s1143 = smul.addr %s1142, 8
        %s1144 = scalar_lea.vmem %s3, %s1143
      $region44: #{resnet_cifar_forward.11} parent=39 // pred_fallthru
        _
    $region40: #{resnet_cifar_forward.11} parent=5 // pred_fallthru
      _
  $region6: #{resnet_cifar_forward.11} parent=0 // loop_footer
    %s13 = sadd.s32 1, %s9
  $region7: #{resnet_cifar_forward.11} parent=0 // loop_footer_branch
    %8 = sbr.rel target = $region3
  $region8: #{resnet_cifar_forward.11} parent=0 // loop_exit
    _

// kernel: resnet_cifar_forward.12
$region0: #{resnet_cifar_forward.12}
  #allocation0 [shape = 'u32[]', space=smem, size = 0x4, offset = 0x4, fixed_abs, tag = 'smem constant byte address 0x4 - core index']
  #allocation1 [shape = 'u32[144,128]{1,0:T(1,128)}', space=vmem, size = 0x12000, scoped, tag = 'internal scratch']
  %s0 = inlined_call_operand.vmem [shape: bf16[2048,144], index: 0, kind: input, shape index: {}]
  %s1 = inlined_call_operand.vmem [shape: bf16[144,128], index: 1, kind: input, shape index: {}]
  %s2 = inlined_call_operand.vmem [shape: f32[1,128], index: 2, kind: input, shape index: {}]
  %s3 = inlined_call_operand.vmem [shape: f32[2048,128], index: 3, kind: input, shape index: {}]
  %s4 = inlined_call_operand.vmem [shape: f32[2048,128], index: 4, kind: output, shape index: {}]
  %s5 = sld [smem:[#allocation0]]
  $region49: #{resnet_cifar_forward.12} parent=0
    _
  %s7 = ssub.s32 1, %s5
  %s8 = scalar_select 0, %s7, %s5
  loop: start=0, step=1, limit=6
  $region2: #{resnet_cifar_forward.12} parent=0 // loop_pre_header
    _
  $region3: #{resnet_cifar_forward.12} parent=0 // loop_header
    %s10 = sphi 0, %s14
    %p11 = scmp.ge.s32.totalorder %s10, 6
    %s20 = sphi 0, %s22
    %s23 = sphi 0, %s20
    %s24 = sphi 0, %s23
    %s40 = sphi 0, %s24
    %s44 = sphi 0, %s44
    %s46 = sphi 0, %s44
    %s47 = sphi 0, %s46
    %s61 = sphi 0, %s47
    %s65 = sphi 0, %s65
    %s67 = sphi 0, %s65
    %s68 = sphi 0, %s67
    %s82 = sphi 0, %s68
    %s88 = sphi 0, %s90
    %s91 = sphi 0, %s88
    %s92 = sphi 0, %s91
    %s108 = sphi 0, %s92
    %s114 = sphi 0, %s116
    %s117 = sphi 0, %s114
    %s118 = sphi 0, %s117
    %s134 = sphi 0, %s118
  $region4: #{resnet_cifar_forward.12} parent=0 // loop_header_branch
    %13 = sbr.rel (%p11) target = $region8
  $region5: #{resnet_cifar_forward.12} parent=0 // loop_body
    %s15 = ssub.s32 %s10, 1
    %s16 = ssub.s32 %s10, 2
    %s17 = sadd.s32 %s10, 1
    %s18 = ssub.s32 %s10, %s17
    %p19 = scmp.eq.s32.totalorder %s18, 0
    %s21 = sadd.s32 %s20, 1
    %s22 = scalar_select %p19, %s20, %s21
    %p25 = pneg %p19
    %p26 = scmp.eq.s32.totalorder %s10, 3
    %p27 = por %p25, %p26
    %p28 = scmp.ne.s32.totalorder %s20, %s23
    %p29 = scmp.eq.s32.totalorder %s10, 0
    %p30 = por %p28, %p29
    %p31 = scmp.ne.s32.totalorder %s20, %s23
    %p32 = scmp.eq.s32.totalorder %s15, 3
    %p33 = por %p31, %p32
    %p34 = scmp.ne.s32.totalorder %s23, %s24
    %p35 = scmp.eq.s32.totalorder %s15, 0
    %p36 = por %p34, %p35
    %p37 = scmp.ne.s32.totalorder %s23, %s24
    %p38 = scmp.eq.s32.totalorder %s16, 3
    %p39 = por %p37, %p38
    %p41 = scmp.ne.s32.totalorder %s24, %s40
    %p42 = scmp.eq.s32.totalorder %s16, 0
    %p43 = por %p41, %p42
    %s45 = sadd.s32 %s44, 1
    %p48 = scmp.eq.s32.totalorder %s10, 3
    %p49 = scmp.ne.s32.totalorder %s44, %s46
    %p50 = scmp.eq.s32.totalorder %s10, 0
    %p51 = por %p49, %p50
    %p52 = scmp.ne.s32.totalorder %s44, %s46
    %p53 = scmp.eq.s32.totalorder %s15, 3
    %p54 = por %p52, %p53
    %p55 = scmp.ne.s32.totalorder %s46, %s47
    %p56 = scmp.eq.s32.totalorder %s15, 0
    %p57 = por %p55, %p56
    %p58 = scmp.ne.s32.totalorder %s46, %s47
    %p59 = scmp.eq.s32.totalorder %s16, 3
    %p60 = por %p58, %p59
    %p62 = scmp.ne.s32.totalorder %s47, %s61
    %p63 = scmp.eq.s32.totalorder %s16, 0
    %p64 = por %p62, %p63
    %s66 = sadd.s32 %s65, 1
    %p69 = scmp.eq.s32.totalorder %s10, 3
    %p70 = scmp.ne.s32.totalorder %s65, %s67
    %p71 = scmp.eq.s32.totalorder %s10, 0
    %p72 = por %p70, %p71
    %p73 = scmp.ne.s32.totalorder %s65, %s67
    %p74 = scmp.eq.s32.totalorder %s15, 3
    %p75 = por %p73, %p74
    %p76 = scmp.ne.s32.totalorder %s67, %s68
    %p77 = scmp.eq.s32.totalorder %s15, 0
    %p78 = por %p76, %p77
    %p79 = scmp.ne.s32.totalorder %s67, %s68
    %p80 = scmp.eq.s32.totalorder %s16, 3
    %p81 = por %p79, %p80
    %p83 = scmp.ne.s32.totalorder %s68, %s82
    %p84 = scmp.eq.s32.totalorder %s16, 0
    %p85 = por %p83, %p84
    %s86 = ssub.s32 %s10, %s17
    %p87 = scmp.eq.s32.totalorder %s86, 0
    %s89 = sadd.s32 %s88, 1
    %s90 = scalar_select %p87, %s88, %s89
    %p93 = pneg %p87
    %p94 = scmp.eq.s32.totalorder %s10, 3
    %p95 = por %p93, %p94
    %p96 = scmp.ne.s32.totalorder %s88, %s91
    %p97 = scmp.eq.s32.totalorder %s10, 0
    %p98 = por %p96, %p97
    %p99 = scmp.ne.s32.totalorder %s88, %s91
    %p100 = scmp.eq.s32.totalorder %s15, 3
    %p101 = por %p99, %p100
    %p102 = scmp.ne.s32.totalorder %s91, %s92
    %p103 = scmp.eq.s32.totalorder %s15, 0
    %p104 = por %p102, %p103
    %p105 = scmp.ne.s32.totalorder %s91, %s92
    %p106 = scmp.eq.s32.totalorder %s16, 3
    %p107 = por %p105, %p106
    %p109 = scmp.ne.s32.totalorder %s92, %s108
    %p110 = scmp.eq.s32.totalorder %s16, 0
    %p111 = por %p109, %p110
    %s112 = ssub.s32 %s10, %s17
    %p113 = scmp.eq.s32.totalorder %s112, 0
    %s115 = sadd.s32 %s114, 1
    %s116 = scalar_select %p113, %s114, %s115
    %p119 = pneg %p113
    %p120 = scmp.eq.s32.totalorder %s10, 3
    %p121 = por %p119, %p120
    %p122 = scmp.ne.s32.totalorder %s114, %s117
    %p123 = scmp.eq.s32.totalorder %s10, 0
    %p124 = por %p122, %p123
    %p125 = scmp.ne.s32.totalorder %s114, %s117
    %p126 = scmp.eq.s32.totalorder %s15, 3
    %p127 = por %p125, %p126
    %p128 = scmp.ne.s32.totalorder %s117, %s118
    %p129 = scmp.eq.s32.totalorder %s15, 0
    %p130 = por %p128, %p129
    %p131 = scmp.ne.s32.totalorder %s117, %s118
    %p132 = scmp.eq.s32.totalorder %s16, 3
    %p133 = por %p131, %p132
    %p135 = scmp.ne.s32.totalorder %s118, %s134
    %p136 = scmp.eq.s32.totalorder %s16, 0
    %p137 = por %p135, %p136
    %p138 = scmp.le.s32.totalorder 1, %s10
    %p139 = scmp.lt.s32.totalorder %s10, 5
    %p140 = pnand %p138, %p139
    %p141 = pneg %p140
    // Predicated region
    $region9: #{resnet_cifar_forward.12} parent=5 // pred_check
      _
    $region10: #{resnet_cifar_forward.12} parent=5 // pred_check_branch
      %143 = sbr.rel (%p140) target = $region12
    $region11: #{resnet_cifar_forward.12} parent=5 // pred_region
      %s144 = ssub.s32 %s10, 1
      // Predicated region
      $region13: #{resnet_cifar_forward.12} parent=11 // pred_check
        %p145 = pneg %p57
      $region14: #{resnet_cifar_forward.12} parent=11 // pred_check_branch
        %147 = sbr.rel (%p145) target = $region16
      $region15: #{resnet_cifar_forward.12} parent=11 // pred_region
        _
      $region16: #{resnet_cifar_forward.12} parent=11 // pred_fallthru
        _
      // Predicated region
      $region17: #{resnet_cifar_forward.12} parent=11 // pred_check
        %p148 = pneg %p78
      $region18: #{resnet_cifar_forward.12} parent=11 // pred_check_branch
        %150 = sbr.rel (%p148) target = $region20
      $region19: #{resnet_cifar_forward.12} parent=11 // pred_region
        _
      $region20: #{resnet_cifar_forward.12} parent=11 // pred_fallthru
        _
    $region12: #{resnet_cifar_forward.12} parent=5 // pred_fallthru
      _
    %p151 = scmp.lt.s32.totalorder %s10, 4
    // Predicated region
    $region21: #{resnet_cifar_forward.12} parent=5 // pred_check
      %p152 = pneg %p151
    $region22: #{resnet_cifar_forward.12} parent=5 // pred_check_branch
      %154 = sbr.rel (%p152) target = $region24
    $region23: #{resnet_cifar_forward.12} parent=5 // pred_region
      // Predicated region
      $region25: #{resnet_cifar_forward.12} parent=23 // pred_check
        %p155 = pneg %p30
      $region26: #{resnet_cifar_forward.12} parent=23 // pred_check_branch
        %157 = sbr.rel (%p155) target = $region28
      $region27: #{resnet_cifar_forward.12} parent=23 // pred_region
        %s158 = smul.u32 64, %s10
        %p159 = scmp.lt.s32.totalorder %s158, 255
        %s160 = scalar_select %p159, %s158, 255
        %s161 = smul.addr %s160, 2
        %s162 = smul.addr %s161, 4
        %s163 = scalar_lea.vmem %s0, %s162
        %s164 = smul.u32 64, %s10
      $region28: #{resnet_cifar_forward.12} parent=23 // pred_fallthru
        _
      // Predicated region
      $region29: #{resnet_cifar_forward.12} parent=23 // pred_check
        %p165 = pneg %p98
      $region30: #{resnet_cifar_forward.12} parent=23 // pred_check_branch
        %167 = sbr.rel (%p165) target = $region32
      $region31: #{resnet_cifar_forward.12} parent=23 // pred_region
        %s168 = smul.u32 64, %s10
        %p169 = scmp.lt.s32.totalorder %s168, 255
        %s170 = scalar_select %p169, %s168, 255
        %s171 = smul.addr %s170, 8
        %s172 = scalar_lea.vmem %s3, %s171
        %s173 = smul.u32 64, %s10
      $region32: #{resnet_cifar_forward.12} parent=23 // pred_fallthru
        _
    $region24: #{resnet_cifar_forward.12} parent=5 // pred_fallthru
      _
    %p174 = scmp.le.s32.totalorder 1, %s10
    %p175 = scmp.lt.s32.totalorder %s10, 5
    %p176 = pnand %p174, %p175
    %p177 = pneg %p176
    // Predicated region
    $region33: #{resnet_cifar_forward.12} parent=5 // pred_check
      _
    $region34: #{resnet_cifar_forward.12} parent=5 // pred_check_branch
      %179 = sbr.rel (%p176) target = $region36
    $region35: #{resnet_cifar_forward.12} parent=5 // pred_region
      %s180 = ssub.s32 %s10, 1
      %s181 = smul.u32 64, %s15
      %p182 = scmp.lt.s32.totalorder %s181, 255
      %s183 = scalar_select %p182, %s181, 255
      %s184 = smul.addr %s183, 2
      %s185 = smul.addr %s184, 4
      %s186 = scalar_lea.vmem %s0, %s185
      %p187 = pneg %p36
      %p188 = pneg %p33
      %p189 = pneg %p57
      %p190 = pneg %p54
      %p191 = pneg %p78
      %p192 = pneg %p75
      %s193 = smul.u32 64, %s15
      %p194 = scmp.lt.s32.totalorder %s193, 255
      %s195 = scalar_select %p194, %s193, 255
      %s196 = smul.addr %s195, 8
      %s197 = scalar_lea.vmem %s3, %s196
      %p198 = pneg %p104
      %p199 = pneg %p101
      %p200 = pneg %p130
      %p201 = pneg %p127
      %s202 = smul.u32 64, %s15
      %p203 = scmp.lt.s32.totalorder %s202, 255
      %s204 = scalar_select %p203, %s202, 255
      %s205 = smul.addr %s204, 8
      %s206 = scalar_lea.vmem %s4, %s205
      %s207 = smul.u32 64, %s15
      %p208 = scmp.lt.s32.totalorder %s207, 255
      %s209 = scalar_select %p208, %s207, 255
      %s210 = smul.addr %s209, 2
      %s211 = smul.addr %s210, 4
      %s212 = scalar_lea.vmem %s0, %s211
      %s213 = smul.u32 64, %s15
      %s214 = smul.u32 64, %s15
      %p215 = scmp.lt.s32.totalorder %s214, 255
      %s216 = scalar_select %p215, %s214, 255
      %s217 = smul.addr %s216, 8
      %s218 = scalar_lea.vmem %s3, %s217
      %s219 = smul.u32 64, %s15
      %s220 = smul.u32 64, %s15
      %p221 = scmp.lt.s32.totalorder %s220, 255
      %s222 = scalar_select %p221, %s220, 255
      %s223 = smul.addr %s222, 8
      %s224 = scalar_lea.vmem %s4, %s223
      %s225 = smul.u32 64, %s15
      %v227 = vld [vmem:[%s212] sm:$0xff]
      %v228 = vld [vmem:[%s212 + $0x8] sm:$0xff]
      %v229 = vld [vmem:[%s212 + $0x10] sm:$0xff]
      %v230 = vld [vmem:[%s212 + $0x18] sm:$0xff]
      %v231 = vld [vmem:[%s212 + $0x20] sm:$0xff]
      %v232 = vld [vmem:[%s212 + $0x28] sm:$0xff]
      %v233 = vld [vmem:[%s212 + $0x30] sm:$0xff]
      %v234 = vld [vmem:[%s212 + $0x38] sm:$0xff]
      %v235 = vld [vmem:[%s212 + $0x40] sm:$0xff]
      %v236 = vld [vmem:[%s212 + $0x48] sm:$0xff]
      %v237 = vld [vmem:[%s212 + $0x50] sm:$0xff]
      %v238 = vld [vmem:[%s212 + $0x58] sm:$0xff]
      %v239 = vld [vmem:[%s212 + $0x60] sm:$0xff]
      %v240 = vld [vmem:[%s212 + $0x68] sm:$0xff]
      %v241 = vld [vmem:[%s212 + $0x70] sm:$0xff]
      %v242 = vld [vmem:[%s212 + $0x78] sm:$0xff]
      %v243 = vld [vmem:[%s212 + $0x80] sm:$0xff]
      %v244 = vld [vmem:[%s212 + $0x88] sm:$0xff]
      %v245 = vld [vmem:[%s212 + $0x90] sm:$0xff]
      %v246 = vld [vmem:[%s212 + $0x98] sm:$0xff]
      %v247 = vld [vmem:[%s212 + $0xa0] sm:$0xff]
      %v248 = vld [vmem:[%s212 + $0xa8] sm:$0xff]
      %v249 = vld [vmem:[%s212 + $0xb0] sm:$0xff]
      %v250 = vld [vmem:[%s212 + $0xb8] sm:$0xff]
      %v251 = vld [vmem:[%s212 + $0xc0] sm:$0xff]
      %v252 = vld [vmem:[%s212 + $0xc8] sm:$0xff]
      %v253 = vld [vmem:[%s212 + $0xd0] sm:$0xff]
      %v254 = vld [vmem:[%s212 + $0xd8] sm:$0xff]
      %v255 = vld [vmem:[%s212 + $0xe0] sm:$0xff]
      %v256 = vld [vmem:[%s212 + $0xe8] sm:$0xff]
      %v257 = vld [vmem:[%s212 + $0xf0] sm:$0xff]
      %v258 = vld [vmem:[%s212 + $0xf8] sm:$0xff]
      %v259 = vld [vmem:[%s212 + $0x100] sm:$0xff]
      %v260 = vld [vmem:[%s212 + $0x108] sm:$0xff]
      %v261 = vld [vmem:[%s212 + $0x110] sm:$0xff]
      %v262 = vld [vmem:[%s212 + $0x118] sm:$0xff]
      %v263 = vld [vmem:[%s212 + $0x120] sm:$0xff]
      %v264 = vld [vmem:[%s212 + $0x128] sm:$0xff]
      %v265 = vld [vmem:[%s212 + $0x130] sm:$0xff]
      %v266 = vld [vmem:[%s212 + $0x138] sm:$0xff]
      %v267 = vld [vmem:[%s212 + $0x140] sm:$0xff]
      %v268 = vld [vmem:[%s212 + $0x148] sm:$0xff]
      %v269 = vld [vmem:[%s212 + $0x150] sm:$0xff]
      %v270 = vld [vmem:[%s212 + $0x158] sm:$0xff]
      %v271 = vld [vmem:[%s212 + $0x160] sm:$0xff]
      %v272 = vld [vmem:[%s212 + $0x168] sm:$0xff]
      %v273 = vld [vmem:[%s212 + $0x170] sm:$0xff]
      %v274 = vld [vmem:[%s212 + $0x178] sm:$0xff]
      %v275 = vld [vmem:[%s212 + $0x180] sm:$0xff]
      %v276 = vld [vmem:[%s212 + $0x188] sm:$0xff]
      %v277 = vld [vmem:[%s212 + $0x190] sm:$0xff]
      %v278 = vld [vmem:[%s212 + $0x198] sm:$0xff]
      %v279 = vld [vmem:[%s212 + $0x1a0] sm:$0xff]
      %v280 = vld [vmem:[%s212 + $0x1a8] sm:$0xff]
      %v281 = vld [vmem:[%s212 + $0x1b0] sm:$0xff]
      %v282 = vld [vmem:[%s212 + $0x1b8] sm:$0xff]
      %v283 = vld [vmem:[%s212 + $0x1c0] sm:$0xff]
      %v284 = vld [vmem:[%s212 + $0x1c8] sm:$0xff]
      %v285 = vld [vmem:[%s212 + $0x1d0] sm:$0xff]
      %v286 = vld [vmem:[%s212 + $0x1d8] sm:$0xff]
      %v287 = vld [vmem:[%s212 + $0x1e0] sm:$0xff]
      %v288 = vld [vmem:[%s212 + $0x1e8] sm:$0xff]
      %v289 = vld [vmem:[%s212 + $0x1f0] sm:$0xff]
      %v290 = vld [vmem:[%s212 + $0x1f8] sm:$0xff]
      %v291 = vld [vmem:[%s1] sm:$0xf]
      %v292 = vld [vmem:[%s1 + $0x4] sm:$0xf]
      %v293 = vld [vmem:[%s1 + $0x8] sm:$0xf]
      %v294 = vld [vmem:[%s1 + $0xc] sm:$0xf]
      %v295 = vld [vmem:[%s1 + $0x10] sm:$0xf]
      %v296 = vld [vmem:[%s1 + $0x14] sm:$0xf]
      %v297 = vld [vmem:[%s1 + $0x18] sm:$0xf]
      %v298 = vld [vmem:[%s1 + $0x1c] sm:$0xf]
      %v299 = vld [vmem:[%s1 + $0x20] sm:$0xf]
      %v300 = vld [vmem:[%s1 + $0x24] sm:$0xf]
      %v301 = vld [vmem:[%s1 + $0x28] sm:$0xf]
      %v302 = vld [vmem:[%s1 + $0x2c] sm:$0xf]
      %v303 = vld [vmem:[%s1 + $0x30] sm:$0xf]
      %v304 = vld [vmem:[%s1 + $0x34] sm:$0xf]
      %v305 = vld [vmem:[%s1 + $0x38] sm:$0xf]
      %v306 = vld [vmem:[%s1 + $0x3c] sm:$0xf]
      %v307 = vld [vmem:[%s1 + $0x40] sm:$0xf]
      %v308 = vld [vmem:[%s1 + $0x44] sm:$0xf]
      %v309 = vld [vmem:[%s2] sm:$0x1]
      %v311 = vlaneseq
      %v312 = vshrl.u32 %v311, 7
      %v313 = vsub.s32 0, %v312
      %v314 = vrot.slane %v309, %v313
      %v380 = vunpack.c.l.b16 %v227
      %v381 = vunpack.c.h.b16 %v227
      %v382 = vunpack.c.l.b16 %v228
      %v383 = vunpack.c.h.b16 %v228
      %v384 = vunpack.c.l.b16 %v229
      %v385 = vunpack.c.h.b16 %v229
      %v386 = vunpack.c.l.b16 %v230
      %v387 = vunpack.c.h.b16 %v230
      %v388 = vunpack.c.l.b16 %v231
      %v389 = vunpack.c.h.b16 %v231
      %v390 = vunpack.c.l.b16 %v232
      %v391 = vunpack.c.h.b16 %v232
      %v392 = vunpack.c.l.b16 %v233
      %v393 = vunpack.c.h.b16 %v233
      %v394 = vunpack.c.l.b16 %v234
      %v395 = vunpack.c.h.b16 %v234
      %v396 = vunpack.c.l.b16 %v235
      %v397 = vunpack.c.h.b16 %v235
      %v398 = vunpack.c.l.b16 %v236
      %v399 = vunpack.c.h.b16 %v236
      %v400 = vunpack.c.l.b16 %v237
      %v401 = vunpack.c.h.b16 %v237
      %v402 = vunpack.c.l.b16 %v238
      %v403 = vunpack.c.h.b16 %v238
      %v404 = vunpack.c.l.b16 %v239
      %v405 = vunpack.c.h.b16 %v239
      %v406 = vunpack.c.l.b16 %v240
      %v407 = vunpack.c.h.b16 %v240
      %v408 = vunpack.c.l.b16 %v241
      %v409 = vunpack.c.h.b16 %v241
      %v410 = vunpack.c.l.b16 %v242
      %v411 = vunpack.c.h.b16 %v242
      %v412 = vunpack.c.l.b16 %v243
      %v413 = vunpack.c.h.b16 %v243
      %v414 = vunpack.c.l.b16 %v244
      %v415 = vunpack.c.h.b16 %v244
      %v416 = vunpack.c.l.b16 %v245
      %v417 = vunpack.c.h.b16 %v245
      %v418 = vunpack.c.l.b16 %v246
      %v419 = vunpack.c.h.b16 %v246
      %v420 = vunpack.c.l.b16 %v247
      %v421 = vunpack.c.h.b16 %v247
      %v422 = vunpack.c.l.b16 %v248
      %v423 = vunpack.c.h.b16 %v248
      %v424 = vunpack.c.l.b16 %v249
      %v425 = vunpack.c.h.b16 %v249
      %v426 = vunpack.c.l.b16 %v250
      %v427 = vunpack.c.h.b16 %v250
      %v428 = vunpack.c.l.b16 %v251
      %v429 = vunpack.c.h.b16 %v251
      %v430 = vunpack.c.l.b16 %v252
      %v431 = vunpack.c.h.b16 %v252
      %v432 = vunpack.c.l.b16 %v253
      %v433 = vunpack.c.h.b16 %v253
      %v434 = vunpack.c.l.b16 %v254
      %v435 = vunpack.c.h.b16 %v254
      %v436 = vunpack.c.l.b16 %v255
      %v437 = vunpack.c.h.b16 %v255
      %v438 = vunpack.c.l.b16 %v256
      %v439 = vunpack.c.h.b16 %v256
      %v440 = vunpack.c.l.b16 %v257
      %v441 = vunpack.c.h.b16 %v257
      %v442 = vunpack.c.l.b16 %v258
      %v443 = vunpack.c.h.b16 %v258
      %v444 = vunpack.c.l.b16 %v259
      %v445 = vunpack.c.h.b16 %v259
      %v446 = vunpack.c.l.b16 %v260
      %v447 = vunpack.c.h.b16 %v260
      %v448 = vunpack.c.l.b16 %v261
      %v449 = vunpack.c.h.b16 %v261
      %v450 = vunpack.c.l.b16 %v262
      %v451 = vunpack.c.h.b16 %v262
      %v452 = vunpack.c.l.b16 %v263
      %v453 = vunpack.c.h.b16 %v263
      %v454 = vunpack.c.l.b16 %v264
      %v455 = vunpack.c.h.b16 %v264
      %v456 = vunpack.c.l.b16 %v265
      %v457 = vunpack.c.h.b16 %v265
      %v458 = vunpack.c.l.b16 %v266
      %v459 = vunpack.c.h.b16 %v266
      %v460 = vunpack.c.l.b16 %v267
      %v461 = vunpack.c.h.b16 %v267
      %v462 = vunpack.c.l.b16 %v268
      %v463 = vunpack.c.h.b16 %v268
      %v464 = vunpack.c.l.b16 %v269
      %v465 = vunpack.c.h.b16 %v269
      %v466 = vunpack.c.l.b16 %v270
      %v467 = vunpack.c.h.b16 %v270
      %v468 = vunpack.c.l.b16 %v271
      %v469 = vunpack.c.h.b16 %v271
      %v470 = vunpack.c.l.b16 %v272
      %v471 = vunpack.c.h.b16 %v272
      %v472 = vunpack.c.l.b16 %v273
      %v473 = vunpack.c.h.b16 %v273
      %v474 = vunpack.c.l.b16 %v274
      %v475 = vunpack.c.h.b16 %v274
      %v476 = vunpack.c.l.b16 %v275
      %v477 = vunpack.c.h.b16 %v275
      %v478 = vunpack.c.l.b16 %v276
      %v479 = vunpack.c.h.b16 %v276
      %v480 = vunpack.c.l.b16 %v277
      %v481 = vunpack.c.h.b16 %v277
      %v482 = vunpack.c.l.b16 %v278
      %v483 = vunpack.c.h.b16 %v278
      %v484 = vunpack.c.l.b16 %v279
      %v485 = vunpack.c.h.b16 %v279
      %v486 = vunpack.c.l.b16 %v280
      %v487 = vunpack.c.h.b16 %v280
      %v488 = vunpack.c.l.b16 %v281
      %v489 = vunpack.c.h.b16 %v281
      %v490 = vunpack.c.l.b16 %v282
      %v491 = vunpack.c.h.b16 %v282
      %v492 = vunpack.c.l.b16 %v283
      %v493 = vunpack.c.h.b16 %v283
      %v494 = vunpack.c.l.b16 %v284
      %v495 = vunpack.c.h.b16 %v284
      %v496 = vunpack.c.l.b16 %v285
      %v497 = vunpack.c.h.b16 %v285
      %v498 = vunpack.c.l.b16 %v286
      %v499 = vunpack.c.h.b16 %v286
      %v500 = vunpack.c.l.b16 %v287
      %v501 = vunpack.c.h.b16 %v287
      %v502 = vunpack.c.l.b16 %v288
      %v503 = vunpack.c.h.b16 %v288
      %v504 = vunpack.c.l.b16 %v289
      %v505 = vunpack.c.h.b16 %v289
      %v506 = vunpack.c.l.b16 %v290
      %v507 = vunpack.c.h.b16 %v290
      %v508 = vpack.c.b16 %v382, %v380
      %v509 = vpack.c.b16 %v383, %v381
      %v510 = vpack.c.b16 %v386, %v384
      %v511 = vpack.c.b16 %v387, %v385
      %v512 = vpack.c.b16 %v390, %v388
      %v513 = vpack.c.b16 %v391, %v389
      %v514 = vpack.c.b16 %v394, %v392
      %v515 = vpack.c.b16 %v395, %v393
      %v516 = vpack.c.b16 %v398, %v396
      %v517 = vpack.c.b16 %v399, %v397
      %v518 = vpack.c.b16 %v402, %v400
      %v519 = vpack.c.b16 %v403, %v401
      %v520 = vpack.c.b16 %v406, %v404
      %v521 = vpack.c.b16 %v407, %v405
      %v522 = vpack.c.b16 %v410, %v408
      %v523 = vpack.c.b16 %v411, %v409
      %v524 = vpack.c.b16 %v414, %v412
      %v525 = vpack.c.b16 %v415, %v413
      %v526 = vpack.c.b16 %v418, %v416
      %v527 = vpack.c.b16 %v419, %v417
      %v528 = vpack.c.b16 %v422, %v420
      %v529 = vpack.c.b16 %v423, %v421
      %v530 = vpack.c.b16 %v426, %v424
      %v531 = vpack.c.b16 %v427, %v425
      %v532 = vpack.c.b16 %v430, %v428
      %v533 = vpack.c.b16 %v431, %v429
      %v534 = vpack.c.b16 %v434, %v432
      %v535 = vpack.c.b16 %v435, %v433
      %v536 = vpack.c.b16 %v438, %v436
      %v537 = vpack.c.b16 %v439, %v437
      %v538 = vpack.c.b16 %v442, %v440
      %v539 = vpack.c.b16 %v443, %v441
      %v540 = vpack.c.b16 %v446, %v444
      %v541 = vpack.c.b16 %v447, %v445
      %v542 = vpack.c.b16 %v450, %v448
      %v543 = vpack.c.b16 %v451, %v449
      %v544 = vpack.c.b16 %v454, %v452
      %v545 = vpack.c.b16 %v455, %v453
      %v546 = vpack.c.b16 %v458, %v456
      %v547 = vpack.c.b16 %v459, %v457
      %v548 = vpack.c.b16 %v462, %v460
      %v549 = vpack.c.b16 %v463, %v461
      %v550 = vpack.c.b16 %v466, %v464
      %v551 = vpack.c.b16 %v467, %v465
      %v552 = vpack.c.b16 %v470, %v468
      %v553 = vpack.c.b16 %v471, %v469
      %v554 = vpack.c.b16 %v474, %v472
      %v555 = vpack.c.b16 %v475, %v473
      %v556 = vpack.c.b16 %v478, %v476
      %v557 = vpack.c.b16 %v479, %v477
      %v558 = vpack.c.b16 %v482, %v480
      %v559 = vpack.c.b16 %v483, %v481
      %v560 = vpack.c.b16 %v486, %v484
      %v561 = vpack.c.b16 %v487, %v485
      %v562 = vpack.c.b16 %v490, %v488
      %v563 = vpack.c.b16 %v491, %v489
      %v564 = vpack.c.b16 %v494, %v492
      %v565 = vpack.c.b16 %v495, %v493
      %v566 = vpack.c.b16 %v498, %v496
      %v567 = vpack.c.b16 %v499, %v497
      %v568 = vpack.c.b16 %v502, %v500
      %v569 = vpack.c.b16 %v503, %v501
      %v570 = vpack.c.b16 %v506, %v504
      %v571 = vpack.c.b16 %v507, %v505
      %v622 = vunpack.c.l.b16 %v291
      %v623 = vunpack.c.l.b16 %v292
      %v624 = vunpack.c.l.b16 %v293
      %v625 = vunpack.c.l.b16 %v294
      %v626 = vunpack.c.l.b16 %v295
      %v627 = vunpack.c.l.b16 %v296
      %v628 = vunpack.c.l.b16 %v297
      %v629 = vunpack.c.l.b16 %v298
      %v630 = vunpack.c.l.b16 %v299
      %v631 = vunpack.c.l.b16 %v300
      %v632 = vunpack.c.l.b16 %v301
      %v633 = vunpack.c.l.b16 %v302
      %v634 = vunpack.c.l.b16 %v303
      %v635 = vunpack.c.l.b16 %v304
      %v636 = vunpack.c.l.b16 %v305
      %v637 = vunpack.c.l.b16 %v306
      %v638 = vunpack.c.l.b16 %v307
      %v639 = vunpack.c.l.b16 %v308
      %v640 = vpack.c.b16 %v623, %v622
      %v641 = vpack.c.b16 %v625, %v624
      %v642 = vpack.c.b16 %v627, %v626
      %v643 = vpack.c.b16 %v629, %v628
      %v644 = vpack.c.b16 %v631, %v630
      %v645 = vpack.c.b16 %v633, %v632
      %v646 = vpack.c.b16 %v635, %v634
      %v647 = vpack.c.b16 %v637, %v636
      %v648 = vpack.c.b16 %v639, %v638
      %vm658 = vcmask 130048
      %v660 = vsel %vm658, %v509, 0
      %v663 = vsel %vm658, %v511, 0
      %v666 = vsel %vm658, %v513, 0
      %v669 = vsel %vm658, %v515, 0
      %v672 = vsel %vm658, %v517, 0
      %v675 = vsel %vm658, %v519, 0
      %v678 = vsel %vm658, %v521, 0
      %v681 = vsel %vm658, %v523, 0
      %v684 = vsel %vm658, %v525, 0
      %v687 = vsel %vm658, %v527, 0
      %v690 = vsel %vm658, %v529, 0
      %v693 = vsel %vm658, %v531, 0
      %v696 = vsel %vm658, %v533, 0
      %v699 = vsel %vm658, %v535, 0
      %v702 = vsel %vm658, %v537, 0
      %v705 = vsel %vm658, %v539, 0
      %v708 = vsel %vm658, %v541, 0
      %v711 = vsel %vm658, %v543, 0
      %v714 = vsel %vm658, %v545, 0
      %v717 = vsel %vm658, %v547, 0
      %v720 = vsel %vm658, %v549, 0
      %v723 = vsel %vm658, %v551, 0
      %v726 = vsel %vm658, %v553, 0
      %v729 = vsel %vm658, %v555, 0
      %v732 = vsel %vm658, %v557, 0
      %v735 = vsel %vm658, %v559, 0
      %v738 = vsel %vm658, %v561, 0
      %v741 = vsel %vm658, %v563, 0
      %v744 = vsel %vm658, %v565, 0
      %v747 = vsel %vm658, %v567, 0
      %v750 = vsel %vm658, %v569, 0
      %v753 = vsel %vm658, %v571, 0
      %755 = vmatprep.subr.bf16.mxu0 0
      %756 = vmatpush1.bf16.msra.mxu0 %v640
      %757 = vmatprep.subr.bf16.mxu0 0
      %758 = vmatpush1.bf16.msra.mxu0 %v641
      %759 = vmatprep.subr.bf16.mxu0 0
      %760 = vmatpush1.bf16.msra.mxu0 %v642
      %761 = vmatprep.subr.bf16.mxu0 0
      %762 = vmatpush1.bf16.msra.mxu0 %v643
      %763 = vmatprep.subr.bf16.mxu0 0
      %764 = vmatpush1.bf16.msra.mxu0 %v644
      %765 = vmatprep.subr.bf16.mxu0 0
      %766 = vmatpush1.bf16.msra.mxu0 %v645
      %767 = vmatprep.subr.bf16.mxu0 0
      %768 = vmatpush1.bf16.msra.mxu0 %v646
      %769 = vmatprep.subr.bf16.mxu0 0
      %770 = vmatpush1.bf16.msra.mxu0 %v647
      %771 = vmatprep.subr.bf16.mxu0 0
      %772 = vmatpush1.bf16.msra.mxu0 %v648
      %773 = vmatprep.subr.bf16.mxu0 0
      %774 = vmatpush1.bf16.msra.mxu0 0
      %775 = vmatprep.subr.bf16.mxu0 0
      %776 = vmatpush1.bf16.msra.mxu0 0
      %777 = vmatprep.subr.bf16.mxu0 0
      %778 = vmatpush1.bf16.msra.mxu0 0
      %779 = vmatprep.subr.bf16.mxu0 0
      %780 = vmatpush1.bf16.msra.mxu0 0
      %781 = vmatprep.subr.bf16.mxu0 0
      %782 = vmatpush1.bf16.msra.mxu0 0
      %783 = vmatprep.subr.bf16.mxu0 0
      %784 = vmatpush1.bf16.msra.mxu0 0
      %785 = vmatprep.subr.bf16.mxu0 0
      %786 = vmatpush1.bf16.msra.mxu0 0
      %787 = vmatprep.mubr.bf16.mxu0 %v660
      %788 = vmatmul.mubr.bf16.gmra.mrb[0].mxu0 %v508
      %v789 = vpop.f32.mrb[0].mxu0
      %v790 = vadd.f32 %v314, %v789
      %v791 = vpop.f32.mrb[0].mxu0
      %v792 = vpop.f32.mrb[0].mxu0
      %v793 = vadd.f32 %v314, %v792
      %v794 = vpop.f32.mrb[0].mxu0
      %795 = vmatprep.mubr.bf16.mxu0 %v663
      %796 = vmatmul.mubr.bf16.gmra.mrb[0].mxu0 %v510
      %v797 = vpop.f32.mrb[0].mxu0
      %v798 = vadd.f32 %v314, %v797
      %v799 = vpop.f32.mrb[0].mxu0
      %v800 = vpop.f32.mrb[0].mxu0
      %v801 = vadd.f32 %v314, %v800
      %v802 = vpop.f32.mrb[0].mxu0
      %803 = vmatprep.mubr.bf16.mxu0 %v666
      %804 = vmatmul.mubr.bf16.gmra.mrb[0].mxu0 %v512
      %v805 = vpop.f32.mrb[0].mxu0
      %v806 = vadd.f32 %v314, %v805
      %v807 = vpop.f32.mrb[0].mxu0
      %v808 = vpop.f32.mrb[0].mxu0
      %v809 = vadd.f32 %v314, %v808
      %v810 = vpop.f32.mrb[0].mxu0
      %811 = vmatprep.mubr.bf16.mxu0 %v669
      %812 = vmatmul.mubr.bf16.gmra.mrb[0].mxu0 %v514
      %v813 = vpop.f32.mrb[0].mxu0
      %v814 = vadd.f32 %v314, %v813
      %v815 = vpop.f32.mrb[0].mxu0
      %v816 = vpop.f32.mrb[0].mxu0
      %v817 = vadd.f32 %v314, %v816
      %v818 = vpop.f32.mrb[0].mxu0
      %819 = vmatprep.mubr.bf16.mxu0 %v672
      %820 = vmatmul.mubr.bf16.gmra.mrb[0].mxu0 %v516
      %v821 = vpop.f32.mrb[0].mxu0
      %v822 = vadd.f32 %v314, %v821
      %v823 = vpop.f32.mrb[0].mxu0
      %v824 = vpop.f32.mrb[0].mxu0
      %v825 = vadd.f32 %v314, %v824
      %v826 = vpop.f32.mrb[0].mxu0
      %827 = vmatprep.mubr.bf16.mxu0 %v675
      %828 = vmatmul.mubr.bf16.gmra.mrb[0].mxu0 %v518
      %v829 = vpop.f32.mrb[0].mxu0
      %v830 = vadd.f32 %v314, %v829
      %v831 = vpop.f32.mrb[0].mxu0
      %v832 = vpop.f32.mrb[0].mxu0
      %v833 = vadd.f32 %v314, %v832
      %v834 = vpop.f32.mrb[0].mxu0
      %835 = vmatprep.mubr.bf16.mxu0 %v678
      %836 = vmatmul.mubr.bf16.gmra.mrb[0].mxu0 %v520
      %v837 = vpop.f32.mrb[0].mxu0
      %v838 = vadd.f32 %v314, %v837
      %v839 = vpop.f32.mrb[0].mxu0
      %v840 = vpop.f32.mrb[0].mxu0
      %v841 = vadd.f32 %v314, %v840
      %v842 = vpop.f32.mrb[0].mxu0
      %843 = vmatprep.mubr.bf16.mxu0 %v681
      %844 = vmatmul.mubr.bf16.gmra.mrb[0].mxu0 %v522
      %v845 = vpop.f32.mrb[0].mxu0
      %v846 = vadd.f32 %v314, %v845
      %v847 = vpop.f32.mrb[0].mxu0
      %v848 = vpop.f32.mrb[0].mxu0
      %v849 = vadd.f32 %v314, %v848
      %v850 = vpop.f32.mrb[0].mxu0
      %851 = vmatprep.mubr.bf16.mxu0 %v684
      %852 = vmatmul.mubr.bf16.gmra.mrb[0].mxu0 %v524
      %v853 = vpop.f32.mrb[0].mxu0
      %v854 = vadd.f32 %v314, %v853
      %v855 = vpop.f32.mrb[0].mxu0
      %v856 = vpop.f32.mrb[0].mxu0
      %v857 = vadd.f32 %v314, %v856
      %v858 = vpop.f32.mrb[0].mxu0
      %859 = vmatprep.mubr.bf16.mxu0 %v687
      %860 = vmatmul.mubr.bf16.gmra.mrb[0].mxu0 %v526
      %v861 = vpop.f32.mrb[0].mxu0
      %v862 = vadd.f32 %v314, %v861
      %v863 = vpop.f32.mrb[0].mxu0
      %v864 = vpop.f32.mrb[0].mxu0
      %v865 = vadd.f32 %v314, %v864
      %v866 = vpop.f32.mrb[0].mxu0
      %867 = vmatprep.mubr.bf16.mxu0 %v690
      %868 = vmatmul.mubr.bf16.gmra.mrb[0].mxu0 %v528
      %v869 = vpop.f32.mrb[0].mxu0
      %v870 = vadd.f32 %v314, %v869
      %v871 = vpop.f32.mrb[0].mxu0
      %v872 = vpop.f32.mrb[0].mxu0
      %v873 = vadd.f32 %v314, %v872
      %v874 = vpop.f32.mrb[0].mxu0
      %875 = vmatprep.mubr.bf16.mxu0 %v693
      %876 = vmatmul.mubr.bf16.gmra.mrb[0].mxu0 %v530
      %v877 = vpop.f32.mrb[0].mxu0
      %v878 = vadd.f32 %v314, %v877
      %v879 = vpop.f32.mrb[0].mxu0
      %v880 = vpop.f32.mrb[0].mxu0
      %v881 = vadd.f32 %v314, %v880
      %v882 = vpop.f32.mrb[0].mxu0
      %883 = vmatprep.mubr.bf16.mxu0 %v696
      %884 = vmatmul.mubr.bf16.gmra.mrb[0].mxu0 %v532
      %v885 = vpop.f32.mrb[0].mxu0
      %v886 = vadd.f32 %v314, %v885
      %v887 = vpop.f32.mrb[0].mxu0
      %v888 = vpop.f32.mrb[0].mxu0
      %v889 = vadd.f32 %v314, %v888
      %v890 = vpop.f32.mrb[0].mxu0
      %891 = vmatprep.mubr.bf16.mxu0 %v699
      %892 = vmatmul.mubr.bf16.gmra.mrb[0].mxu0 %v534
      %v893 = vpop.f32.mrb[0].mxu0
      %v894 = vadd.f32 %v314, %v893
      %v895 = vpop.f32.mrb[0].mxu0
      %v896 = vpop.f32.mrb[0].mxu0
      %v897 = vadd.f32 %v314, %v896
      %v898 = vpop.f32.mrb[0].mxu0
      %899 = vmatprep.mubr.bf16.mxu0 %v702
      %900 = vmatmul.mubr.bf16.gmra.mrb[0].mxu0 %v536
      %v901 = vpop.f32.mrb[0].mxu0
      %v902 = vadd.f32 %v314, %v901
      %v903 = vpop.f32.mrb[0].mxu0
      %v904 = vpop.f32.mrb[0].mxu0
      %v905 = vadd.f32 %v314, %v904
      %v906 = vpop.f32.mrb[0].mxu0
      %907 = vmatprep.mubr.bf16.mxu0 %v705
      %908 = vmatmul.mubr.bf16.gmra.mrb[0].mxu0 %v538
      %v909 = vpop.f32.mrb[0].mxu0
      %v910 = vadd.f32 %v314, %v909
      %v911 = vpop.f32.mrb[0].mxu0
      %v912 = vpop.f32.mrb[0].mxu0
      %v913 = vadd.f32 %v314, %v912
      %v914 = vpop.f32.mrb[0].mxu0
      %915 = vmatprep.mubr.bf16.mxu0 %v708
      %916 = vmatmul.mubr.bf16.gmra.mrb[0].mxu0 %v540
      %v917 = vpop.f32.mrb[0].mxu0
      %v918 = vadd.f32 %v314, %v917
      %v919 = vpop.f32.mrb[0].mxu0
      %v920 = vpop.f32.mrb[0].mxu0
      %v921 = vadd.f32 %v314, %v920
      %v922 = vpop.f32.mrb[0].mxu0
      %923 = vmatprep.mubr.bf16.mxu0 %v711
      %924 = vmatmul.mubr.bf16.gmra.mrb[0].mxu0 %v542
      %v925 = vpop.f32.mrb[0].mxu0
      %v926 = vadd.f32 %v314, %v925
      %v927 = vpop.f32.mrb[0].mxu0
      %v928 = vpop.f32.mrb[0].mxu0
      %v929 = vadd.f32 %v314, %v928
      %v930 = vpop.f32.mrb[0].mxu0
      %931 = vmatprep.mubr.bf16.mxu0 %v714
      %932 = vmatmul.mubr.bf16.gmra.mrb[0].mxu0 %v544
      %v933 = vpop.f32.mrb[0].mxu0
      %v934 = vadd.f32 %v314, %v933
      %v935 = vpop.f32.mrb[0].mxu0
      %v936 = vpop.f32.mrb[0].mxu0
      %v937 = vadd.f32 %v314, %v936
      %v938 = vpop.f32.mrb[0].mxu0
      %939 = vmatprep.mubr.bf16.mxu0 %v717
      %940 = vmatmul.mubr.bf16.gmra.mrb[0].mxu0 %v546
      %v941 = vpop.f32.mrb[0].mxu0
      %v942 = vadd.f32 %v314, %v941
      %v943 = vpop.f32.mrb[0].mxu0
      %v944 = vpop.f32.mrb[0].mxu0
      %v945 = vadd.f32 %v314, %v944
      %v946 = vpop.f32.mrb[0].mxu0
      %947 = vmatprep.mubr.bf16.mxu0 %v720
      %948 = vmatmul.mubr.bf16.gmra.mrb[0].mxu0 %v548
      %v949 = vpop.f32.mrb[0].mxu0
      %v950 = vadd.f32 %v314, %v949
      %v951 = vpop.f32.mrb[0].mxu0
      %v952 = vpop.f32.mrb[0].mxu0
      %v953 = vadd.f32 %v314, %v952
      %v954 = vpop.f32.mrb[0].mxu0
      %955 = vmatprep.mubr.bf16.mxu0 %v723
      %956 = vmatmul.mubr.bf16.gmra.mrb[0].mxu0 %v550
      %v957 = vpop.f32.mrb[0].mxu0
      %v958 = vadd.f32 %v314, %v957
      %v959 = vpop.f32.mrb[0].mxu0
      %v960 = vpop.f32.mrb[0].mxu0
      %v961 = vadd.f32 %v314, %v960
      %v962 = vpop.f32.mrb[0].mxu0
      %963 = vmatprep.mubr.bf16.mxu0 %v726
      %964 = vmatmul.mubr.bf16.gmra.mrb[0].mxu0 %v552
      %v965 = vpop.f32.mrb[0].mxu0
      %v966 = vadd.f32 %v314, %v965
      %v967 = vpop.f32.mrb[0].mxu0
      %v968 = vpop.f32.mrb[0].mxu0
      %v969 = vadd.f32 %v314, %v968
      %v970 = vpop.f32.mrb[0].mxu0
      %971 = vmatprep.mubr.bf16.mxu0 %v729
      %972 = vmatmul.mubr.bf16.gmra.mrb[0].mxu0 %v554
      %v973 = vpop.f32.mrb[0].mxu0
      %v974 = vadd.f32 %v314, %v973
      %v975 = vpop.f32.mrb[0].mxu0
      %v976 = vpop.f32.mrb[0].mxu0
      %v977 = vadd.f32 %v314, %v976
      %v978 = vpop.f32.mrb[0].mxu0
      %979 = vmatprep.mubr.bf16.mxu0 %v732
      %980 = vmatmul.mubr.bf16.gmra.mrb[0].mxu0 %v556
      %v981 = vpop.f32.mrb[0].mxu0
      %v982 = vadd.f32 %v314, %v981
      %v983 = vpop.f32.mrb[0].mxu0
      %v984 = vpop.f32.mrb[0].mxu0
      %v985 = vadd.f32 %v314, %v984
      %v986 = vpop.f32.mrb[0].mxu0
      %987 = vmatprep.mubr.bf16.mxu0 %v735
      %988 = vmatmul.mubr.bf16.gmra.mrb[0].mxu0 %v558
      %v989 = vpop.f32.mrb[0].mxu0
      %v990 = vadd.f32 %v314, %v989
      %v991 = vpop.f32.mrb[0].mxu0
      %v992 = vpop.f32.mrb[0].mxu0
      %v993 = vadd.f32 %v314, %v992
      %v994 = vpop.f32.mrb[0].mxu0
      %995 = vmatprep.mubr.bf16.mxu0 %v738
      %996 = vmatmul.mubr.bf16.gmra.mrb[0].mxu0 %v560
      %v997 = vpop.f32.mrb[0].mxu0
      %v998 = vadd.f32 %v314, %v997
      %v999 = vpop.f32.mrb[0].mxu0
      %v1000 = vpop.f32.mrb[0].mxu0
      %v1001 = vadd.f32 %v314, %v1000
      %v1002 = vpop.f32.mrb[0].mxu0
      %1003 = vmatprep.mubr.bf16.mxu0 %v741
      %1004 = vmatmul.mubr.bf16.gmra.mrb[0].mxu0 %v562
      %v1005 = vpop.f32.mrb[0].mxu0
      %v1006 = vadd.f32 %v314, %v1005
      %v1007 = vpop.f32.mrb[0].mxu0
      %v1008 = vpop.f32.mrb[0].mxu0
      %v1009 = vadd.f32 %v314, %v1008
      %v1010 = vpop.f32.mrb[0].mxu0
      %1011 = vmatprep.mubr.bf16.mxu0 %v744
      %1012 = vmatmul.mubr.bf16.gmra.mrb[0].mxu0 %v564
      %v1013 = vpop.f32.mrb[0].mxu0
      %v1014 = vadd.f32 %v314, %v1013
      %v1015 = vpop.f32.mrb[0].mxu0
      %v1016 = vpop.f32.mrb[0].mxu0
      %v1017 = vadd.f32 %v314, %v1016
      %v1018 = vpop.f32.mrb[0].mxu0
      %1019 = vmatprep.mubr.bf16.mxu0 %v747
      %1020 = vmatmul.mubr.bf16.gmra.mrb[0].mxu0 %v566
      %v1021 = vpop.f32.mrb[0].mxu0
      %v1022 = vadd.f32 %v314, %v1021
      %v1023 = vpop.f32.mrb[0].mxu0
      %v1024 = vpop.f32.mrb[0].mxu0
      %v1025 = vadd.f32 %v314, %v1024
      %v1026 = vpop.f32.mrb[0].mxu0
      %1027 = vmatprep.mubr.bf16.mxu0 %v750
      %1028 = vmatmul.mubr.bf16.gmra.mrb[0].mxu0 %v568
      %v1029 = vpop.f32.mrb[0].mxu0
      %v1030 = vadd.f32 %v314, %v1029
      %v1031 = vpop.f32.mrb[0].mxu0
      %v1032 = vpop.f32.mrb[0].mxu0
      %v1033 = vadd.f32 %v314, %v1032
      %v1034 = vpop.f32.mrb[0].mxu0
      %1035 = vmatprep.mubr.bf16.mxu0 %v753
      %1036 = vmatmul.mubr.bf16.gmra.mrb[0].mxu0 %v570
      %v1037 = vpop.f32.mrb[0].mxu0
      %v1038 = vadd.f32 %v314, %v1037
      %v1039 = vpop.f32.mrb[0].mxu0
      %v1040 = vpop.f32.mrb[0].mxu0
      %v1041 = vadd.f32 %v314, %v1040
      %v1042 = vpop.f32.mrb[0].mxu0
      %1043 = vdwg.mxu0
      %v1044 = vld [vmem:[%s218] sm:$0xff]
      %v1045 = vld [vmem:[%s218 + $0x8] sm:$0xff]
      %v1046 = vld [vmem:[%s218 + $0x10] sm:$0xff]
      %v1047 = vld [vmem:[%s218 + $0x18] sm:$0xff]
      %v1048 = vld [vmem:[%s218 + $0x20] sm:$0xff]
      %v1049 = vld [vmem:[%s218 + $0x28] sm:$0xff]
      %v1050 = vld [vmem:[%s218 + $0x30] sm:$0xff]
      %v1051 = vld [vmem:[%s218 + $0x38] sm:$0xff]
      %v1052 = vld [vmem:[%s218 + $0x40] sm:$0xff]
      %v1053 = vld [vmem:[%s218 + $0x48] sm:$0xff]
      %v1054 = vld [vmem:[%s218 + $0x50] sm:$0xff]
      %v1055 = vld [vmem:[%s218 + $0x58] sm:$0xff]
      %v1056 = vld [vmem:[%s218 + $0x60] sm:$0xff]
      %v1057 = vld [vmem:[%s218 + $0x68] sm:$0xff]
      %v1058 = vld [vmem:[%s218 + $0x70] sm:$0xff]
      %v1059 = vld [vmem:[%s218 + $0x78] sm:$0xff]
      %v1060 = vld [vmem:[%s218 + $0x80] sm:$0xff]
      %v1061 = vld [vmem:[%s218 + $0x88] sm:$0xff]
      %v1062 = vld [vmem:[%s218 + $0x90] sm:$0xff]
      %v1063 = vld [vmem:[%s218 + $0x98] sm:$0xff]
      %v1064 = vld [vmem:[%s218 + $0xa0] sm:$0xff]
      %v1065 = vld [vmem:[%s218 + $0xa8] sm:$0xff]
      %v1066 = vld [vmem:[%s218 + $0xb0] sm:$0xff]
      %v1067 = vld [vmem:[%s218 + $0xb8] sm:$0xff]
      %v1068 = vld [vmem:[%s218 + $0xc0] sm:$0xff]
      %v1069 = vld [vmem:[%s218 + $0xc8] sm:$0xff]
      %v1070 = vld [vmem:[%s218 + $0xd0] sm:$0xff]
      %v1071 = vld [vmem:[%s218 + $0xd8] sm:$0xff]
      %v1072 = vld [vmem:[%s218 + $0xe0] sm:$0xff]
      %v1073 = vld [vmem:[%s218 + $0xe8] sm:$0xff]
      %v1074 = vld [vmem:[%s218 + $0xf0] sm:$0xff]
      %v1075 = vld [vmem:[%s218 + $0xf8] sm:$0xff]
      %v1076 = vld [vmem:[%s218 + $0x100] sm:$0xff]
      %v1077 = vld [vmem:[%s218 + $0x108] sm:$0xff]
      %v1078 = vld [vmem:[%s218 + $0x110] sm:$0xff]
      %v1079 = vld [vmem:[%s218 + $0x118] sm:$0xff]
      %v1080 = vld [vmem:[%s218 + $0x120] sm:$0xff]
      %v1081 = vld [vmem:[%s218 + $0x128] sm:$0xff]
      %v1082 = vld [vmem:[%s218 + $0x130] sm:$0xff]
      %v1083 = vld [vmem:[%s218 + $0x138] sm:$0xff]
      %v1084 = vld [vmem:[%s218 + $0x140] sm:$0xff]
      %v1085 = vld [vmem:[%s218 + $0x148] sm:$0xff]
      %v1086 = vld [vmem:[%s218 + $0x150] sm:$0xff]
      %v1087 = vld [vmem:[%s218 + $0x158] sm:$0xff]
      %v1088 = vld [vmem:[%s218 + $0x160] sm:$0xff]
      %v1089 = vld [vmem:[%s218 + $0x168] sm:$0xff]
      %v1090 = vld [vmem:[%s218 + $0x170] sm:$0xff]
      %v1091 = vld [vmem:[%s218 + $0x178] sm:$0xff]
      %v1092 = vld [vmem:[%s218 + $0x180] sm:$0xff]
      %v1093 = vld [vmem:[%s218 + $0x188] sm:$0xff]
      %v1094 = vld [vmem:[%s218 + $0x190] sm:$0xff]
      %v1095 = vld [vmem:[%s218 + $0x198] sm:$0xff]
      %v1096 = vld [vmem:[%s218 + $0x1a0] sm:$0xff]
      %v1097 = vld [vmem:[%s218 + $0x1a8] sm:$0xff]
      %v1098 = vld [vmem:[%s218 + $0x1b0] sm:$0xff]
      %v1099 = vld [vmem:[%s218 + $0x1b8] sm:$0xff]
      %v1100 = vld [vmem:[%s218 + $0x1c0] sm:$0xff]
      %v1101 = vld [vmem:[%s218 + $0x1c8] sm:$0xff]
      %v1102 = vld [vmem:[%s218 + $0x1d0] sm:$0xff]
      %v1103 = vld [vmem:[%s218 + $0x1d8] sm:$0xff]
      %v1104 = vld [vmem:[%s218 + $0x1e0] sm:$0xff]
      %v1105 = vld [vmem:[%s218 + $0x1e8] sm:$0xff]
      %v1106 = vld [vmem:[%s218 + $0x1f0] sm:$0xff]
      %v1107 = vld [vmem:[%s218 + $0x1f8] sm:$0xff]
      %v1108 = vadd.f32 %v790, %v1044
      %v1109 = vadd.f32 %v793, %v1045
      %v1110 = vadd.f32 %v798, %v1046
      %v1111 = vadd.f32 %v801, %v1047
      %v1112 = vadd.f32 %v806, %v1048
      %v1113 = vadd.f32 %v809, %v1049
      %v1114 = vadd.f32 %v814, %v1050
      %v1115 = vadd.f32 %v817, %v1051
      %v1116 = vadd.f32 %v822, %v1052
      %v1117 = vadd.f32 %v825, %v1053
      %v1118 = vadd.f32 %v830, %v1054
      %v1119 = vadd.f32 %v833, %v1055
      %v1120 = vadd.f32 %v838, %v1056
      %v1121 = vadd.f32 %v841, %v1057
      %v1122 = vadd.f32 %v846, %v1058
      %v1123 = vadd.f32 %v849, %v1059
      %v1124 = vadd.f32 %v854, %v1060
      %v1125 = vadd.f32 %v857, %v1061
      %v1126 = vadd.f32 %v862, %v1062
      %v1127 = vadd.f32 %v865, %v1063
      %v1128 = vadd.f32 %v870, %v1064
      %v1129 = vadd.f32 %v873, %v1065
      %v1130 = vadd.f32 %v878, %v1066
      %v1131 = vadd.f32 %v881, %v1067
      %v1132 = vadd.f32 %v886, %v1068
      %v1133 = vadd.f32 %v889, %v1069
      %v1134 = vadd.f32 %v894, %v1070
      %v1135 = vadd.f32 %v897, %v1071
      %v1136 = vadd.f32 %v902, %v1072
      %v1137 = vadd.f32 %v905, %v1073
      %v1138 = vadd.f32 %v910, %v1074
      %v1139 = vadd.f32 %v913, %v1075
      %v1140 = vadd.f32 %v918, %v1076
      %v1141 = vadd.f32 %v921, %v1077
      %v1142 = vadd.f32 %v926, %v1078
      %v1143 = vadd.f32 %v929, %v1079
      %v1144 = vadd.f32 %v934, %v1080
      %v1145 = vadd.f32 %v937, %v1081
      %v1146 = vadd.f32 %v942, %v1082
      %v1147 = vadd.f32 %v945, %v1083
      %v1148 = vadd.f32 %v950, %v1084
      %v1149 = vadd.f32 %v953, %v1085
      %v1150 = vadd.f32 %v958, %v1086
      %v1151 = vadd.f32 %v961, %v1087
      %v1152 = vadd.f32 %v966, %v1088
      %v1153 = vadd.f32 %v969, %v1089
      %v1154 = vadd.f32 %v974, %v1090
      %v1155 = vadd.f32 %v977, %v1091
      %v1156 = vadd.f32 %v982, %v1092
      %v1157 = vadd.f32 %v985, %v1093
      %v1158 = vadd.f32 %v990, %v1094
      %v1159 = vadd.f32 %v993, %v1095
      %v1160 = vadd.f32 %v998, %v1096
      %v1161 = vadd.f32 %v1001, %v1097
      %v1162 = vadd.f32 %v1006, %v1098
      %v1163 = vadd.f32 %v1009, %v1099
      %v1164 = vadd.f32 %v1014, %v1100
      %v1165 = vadd.f32 %v1017, %v1101
      %v1166 = vadd.f32 %v1022, %v1102
      %v1167 = vadd.f32 %v1025, %v1103
      %v1168 = vadd.f32 %v1030, %v1104
      %v1169 = vadd.f32 %v1033, %v1105
      %v1170 = vadd.f32 %v1038, %v1106
      %v1171 = vadd.f32 %v1041, %v1107
      %v1172 = vmax.f32 %v1108, 0.0
      %v1173 = vmax.f32 %v1109, 0.0
      %v1174 = vmax.f32 %v1110, 0.0
      %v1175 = vmax.f32 %v1111, 0.0
      %v1176 = vmax.f32 %v1112, 0.0
      %v1177 = vmax.f32 %v1113, 0.0
      %v1178 = vmax.f32 %v1114, 0.0
      %v1179 = vmax.f32 %v1115, 0.0
      %v1180 = vmax.f32 %v1116, 0.0
      %v1181 = vmax.f32 %v1117, 0.0
      %v1182 = vmax.f32 %v1118, 0.0
      %v1183 = vmax.f32 %v1119, 0.0
      %v1184 = vmax.f32 %v1120, 0.0
      %v1185 = vmax.f32 %v1121, 0.0
      %v1186 = vmax.f32 %v1122, 0.0
      %v1187 = vmax.f32 %v1123, 0.0
      %v1188 = vmax.f32 %v1124, 0.0
      %v1189 = vmax.f32 %v1125, 0.0
      %v1190 = vmax.f32 %v1126, 0.0
      %v1191 = vmax.f32 %v1127, 0.0
      %v1192 = vmax.f32 %v1128, 0.0
      %v1193 = vmax.f32 %v1129, 0.0
      %v1194 = vmax.f32 %v1130, 0.0
      %v1195 = vmax.f32 %v1131, 0.0
      %v1196 = vmax.f32 %v1132, 0.0
      %v1197 = vmax.f32 %v1133, 0.0
      %v1198 = vmax.f32 %v1134, 0.0
      %v1199 = vmax.f32 %v1135, 0.0
      %v1200 = vmax.f32 %v1136, 0.0
      %v1201 = vmax.f32 %v1137, 0.0
      %v1202 = vmax.f32 %v1138, 0.0
      %v1203 = vmax.f32 %v1139, 0.0
      %v1204 = vmax.f32 %v1140, 0.0
      %v1205 = vmax.f32 %v1141, 0.0
      %v1206 = vmax.f32 %v1142, 0.0
      %v1207 = vmax.f32 %v1143, 0.0
      %v1208 = vmax.f32 %v1144, 0.0
      %v1209 = vmax.f32 %v1145, 0.0
      %v1210 = vmax.f32 %v1146, 0.0
      %v1211 = vmax.f32 %v1147, 0.0
      %v1212 = vmax.f32 %v1148, 0.0
      %v1213 = vmax.f32 %v1149, 0.0
      %v1214 = vmax.f32 %v1150, 0.0
      %v1215 = vmax.f32 %v1151, 0.0
      %v1216 = vmax.f32 %v1152, 0.0
      %v1217 = vmax.f32 %v1153, 0.0
      %v1218 = vmax.f32 %v1154, 0.0
      %v1219 = vmax.f32 %v1155, 0.0
      %v1220 = vmax.f32 %v1156, 0.0
      %v1221 = vmax.f32 %v1157, 0.0
      %v1222 = vmax.f32 %v1158, 0.0
      %v1223 = vmax.f32 %v1159, 0.0
      %v1224 = vmax.f32 %v1160, 0.0
      %v1225 = vmax.f32 %v1161, 0.0
      %v1226 = vmax.f32 %v1162, 0.0
      %v1227 = vmax.f32 %v1163, 0.0
      %v1228 = vmax.f32 %v1164, 0.0
      %v1229 = vmax.f32 %v1165, 0.0
      %v1230 = vmax.f32 %v1166, 0.0
      %v1231 = vmax.f32 %v1167, 0.0
      %v1232 = vmax.f32 %v1168, 0.0
      %v1233 = vmax.f32 %v1169, 0.0
      %v1234 = vmax.f32 %v1170, 0.0
      %v1235 = vmax.f32 %v1171, 0.0
      %1236 = vst [vmem:[%s224] sm:$0xff] %v1172
      %1237 = vst [vmem:[%s224 + $0x8] sm:$0xff] %v1173
      %1238 = vst [vmem:[%s224 + $0x10] sm:$0xff] %v1174
      %1239 = vst [vmem:[%s224 + $0x18] sm:$0xff] %v1175
      %1240 = vst [vmem:[%s224 + $0x20] sm:$0xff] %v1176
      %1241 = vst [vmem:[%s224 + $0x28] sm:$0xff] %v1177
      %1242 = vst [vmem:[%s224 + $0x30] sm:$0xff] %v1178
      %1243 = vst [vmem:[%s224 + $0x38] sm:$0xff] %v1179
      %1244 = vst [vmem:[%s224 + $0x40] sm:$0xff] %v1180
      %1245 = vst [vmem:[%s224 + $0x48] sm:$0xff] %v1181
      %1246 = vst [vmem:[%s224 + $0x50] sm:$0xff] %v1182
      %1247 = vst [vmem:[%s224 + $0x58] sm:$0xff] %v1183
      %1248 = vst [vmem:[%s224 + $0x60] sm:$0xff] %v1184
      %1249 = vst [vmem:[%s224 + $0x68] sm:$0xff] %v1185
      %1250 = vst [vmem:[%s224 + $0x70] sm:$0xff] %v1186
      %1251 = vst [vmem:[%s224 + $0x78] sm:$0xff] %v1187
      %1252 = vst [vmem:[%s224 + $0x80] sm:$0xff] %v1188
      %1253 = vst [vmem:[%s224 + $0x88] sm:$0xff] %v1189
      %1254 = vst [vmem:[%s224 + $0x90] sm:$0xff] %v1190
      %1255 = vst [vmem:[%s224 + $0x98] sm:$0xff] %v1191
      %1256 = vst [vmem:[%s224 + $0xa0] sm:$0xff] %v1192
      %1257 = vst [vmem:[%s224 + $0xa8] sm:$0xff] %v1193
      %1258 = vst [vmem:[%s224 + $0xb0] sm:$0xff] %v1194
      %1259 = vst [vmem:[%s224 + $0xb8] sm:$0xff] %v1195
      %1260 = vst [vmem:[%s224 + $0xc0] sm:$0xff] %v1196
      %1261 = vst [vmem:[%s224 + $0xc8] sm:$0xff] %v1197
      %1262 = vst [vmem:[%s224 + $0xd0] sm:$0xff] %v1198
      %1263 = vst [vmem:[%s224 + $0xd8] sm:$0xff] %v1199
      %1264 = vst [vmem:[%s224 + $0xe0] sm:$0xff] %v1200
      %1265 = vst [vmem:[%s224 + $0xe8] sm:$0xff] %v1201
      %1266 = vst [vmem:[%s224 + $0xf0] sm:$0xff] %v1202
      %1267 = vst [vmem:[%s224 + $0xf8] sm:$0xff] %v1203
      %1268 = vst [vmem:[%s224 + $0x100] sm:$0xff] %v1204
      %1269 = vst [vmem:[%s224 + $0x108] sm:$0xff] %v1205
      %1270 = vst [vmem:[%s224 + $0x110] sm:$0xff] %v1206
      %1271 = vst [vmem:[%s224 + $0x118] sm:$0xff] %v1207
      %1272 = vst [vmem:[%s224 + $0x120] sm:$0xff] %v1208
      %1273 = vst [vmem:[%s224 + $0x128] sm:$0xff] %v1209
      %1274 = vst [vmem:[%s224 + $0x130] sm:$0xff] %v1210
      %1275 = vst [vmem:[%s224 + $0x138] sm:$0xff] %v1211
      %1276 = vst [vmem:[%s224 + $0x140] sm:$0xff] %v1212
      %1277 = vst [vmem:[%s224 + $0x148] sm:$0xff] %v1213
      %1278 = vst [vmem:[%s224 + $0x150] sm:$0xff] %v1214
      %1279 = vst [vmem:[%s224 + $0x158] sm:$0xff] %v1215
      %1280 = vst [vmem:[%s224 + $0x160] sm:$0xff] %v1216
      %1281 = vst [vmem:[%s224 + $0x168] sm:$0xff] %v1217
      %1282 = vst [vmem:[%s224 + $0x170] sm:$0xff] %v1218
      %1283 = vst [vmem:[%s224 + $0x178] sm:$0xff] %v1219
      %1284 = vst [vmem:[%s224 + $0x180] sm:$0xff] %v1220
      %1285 = vst [vmem:[%s224 + $0x188] sm:$0xff] %v1221
      %1286 = vst [vmem:[%s224 + $0x190] sm:$0xff] %v1222
      %1287 = vst [vmem:[%s224 + $0x198] sm:$0xff] %v1223
      %1288 = vst [vmem:[%s224 + $0x1a0] sm:$0xff] %v1224
      %1289 = vst [vmem:[%s224 + $0x1a8] sm:$0xff] %v1225
      %1290 = vst [vmem:[%s224 + $0x1b0] sm:$0xff] %v1226
      %1291 = vst [vmem:[%s224 + $0x1b8] sm:$0xff] %v1227
      %1292 = vst [vmem:[%s224 + $0x1c0] sm:$0xff] %v1228
      %1293 = vst [vmem:[%s224 + $0x1c8] sm:$0xff] %v1229
      %1294 = vst [vmem:[%s224 + $0x1d0] sm:$0xff] %v1230
      %1295 = vst [vmem:[%s224 + $0x1d8] sm:$0xff] %v1231
      %1296 = vst [vmem:[%s224 + $0x1e0] sm:$0xff] %v1232
      %1297 = vst [vmem:[%s224 + $0x1e8] sm:$0xff] %v1233
      %1298 = vst [vmem:[%s224 + $0x1f0] sm:$0xff] %v1234
      %1299 = vst [vmem:[%s224 + $0x1f8] sm:$0xff] %v1235
      %s1300 = smul.u32 64, %s15
      %p1301 = scmp.lt.s32.totalorder %s1300, 255
      %s1302 = scalar_select %p1301, %s1300, 255
      %s1303 = smul.addr %s1302, 8
      %s1304 = scalar_lea.vmem %s4, %s1303
      // Predicated region
      $region37: #{resnet_cifar_forward.12} parent=35 // pred_check
        %p1305 = pneg %p127
      $region38: #{resnet_cifar_forward.12} parent=35 // pred_check_branch
        %1307 = sbr.rel (%p1305) target = $region40
      $region39: #{resnet_cifar_forward.12} parent=35 // pred_region
        %s1308 = smul.u32 64, %s15
      $region40: #{resnet_cifar_forward.12} parent=35 // pred_fallthru
        _
    $region36: #{resnet_cifar_forward.12} parent=5 // pred_fallthru
      _
    %p1309 = scmp.le.s32.totalorder 2, %s10
    // Predicated region
    $region41: #{resnet_cifar_forward.12} parent=5 // pred_check
      %p1310 = pneg %p1309
    $region42: #{resnet_cifar_forward.12} parent=5 // pred_check_branch
      %1312 = sbr.rel (%p1310) target = $region44
    $region43: #{resnet_cifar_forward.12} parent=5 // pred_region
      %s1313 = ssub.s32 %s10, 2
      // Predicated region
      $region45: #{resnet_cifar_forward.12} parent=43 // pred_check
        %p1314 = pneg %p133
      $region46: #{resnet_cifar_forward.12} parent=43 // pred_check_branch
        %1316 = sbr.rel (%p1314) target = $region48
      $region47: #{resnet_cifar_forward.12} parent=43 // pred_region
        %s1317 = smul.u32 64, %s16
        %p1318 = scmp.lt.s32.totalorder %s1317, 255
        %s1319 = scalar_select %p1318, %s1317, 255
        %s1320 = smul.addr %s1319, 8
        %s1321 = scalar_lea.vmem %s4, %s1320
      $region48: #{resnet_cifar_forward.12} parent=43 // pred_fallthru
        _
    $region44: #{resnet_cifar_forward.12} parent=5 // pred_fallthru
      _
  $region6: #{resnet_cifar_forward.12} parent=0 // loop_footer
    %s14 = sadd.s32 1, %s10
  $region7: #{resnet_cifar_forward.12} parent=0 // loop_footer_branch
    %9 = sbr.rel target = $region3
  $region8: #{resnet_cifar_forward.12} parent=0 // loop_exit
    _

// kernel: resnet_cifar_forward.14
$region0: #{resnet_cifar_forward.14}
  #allocation0 [shape = 'u32[]', space=smem, size = 0x4, offset = 0x4, fixed_abs, tag = 'smem constant byte address 0x4 - core index']
  #allocation1 [shape = 'u32[144,128]{1,0:T(1,128)}', space=vmem, size = 0x12000, scoped, tag = 'internal scratch']
  %s0 = inlined_call_operand.vmem [shape: bf16[512,16], index: 0, kind: input, shape index: {}]
  %s1 = inlined_call_operand.vmem [shape: bf16[16,128], index: 1, kind: input, shape index: {}]
  %s2 = inlined_call_operand.vmem [shape: f32[1,128], index: 2, kind: input, shape index: {}]
  %s3 = inlined_call_operand.vmem [shape: f32[512,128], index: 3, kind: output, shape index: {}]
  %s4 = sld [smem:[#allocation0]]
  $region45: #{resnet_cifar_forward.14} parent=0
    _
  %s6 = ssub.s32 1, %s4
  %s7 = scalar_select 0, %s6, %s4
  loop: start=0, step=1, limit=4
  $region2: #{resnet_cifar_forward.14} parent=0 // loop_pre_header
    _
  $region3: #{resnet_cifar_forward.14} parent=0 // loop_header
    %s9 = sphi 0, %s13
    %p10 = scmp.ge.s32.totalorder %s9, 4
    %s19 = sphi 0, %s21
    %s22 = sphi 0, %s19
    %s23 = sphi 0, %s22
    %s39 = sphi 0, %s23
    %s43 = sphi 0, %s43
    %s45 = sphi 0, %s43
    %s46 = sphi 0, %s45
    %s60 = sphi 0, %s46
    %s64 = sphi 0, %s64
    %s66 = sphi 0, %s64
    %s67 = sphi 0, %s66
    %s81 = sphi 0, %s67
    %s87 = sphi 0, %s89
    %s90 = sphi 0, %s87
    %s91 = sphi 0, %s90
    %s107 = sphi 0, %s91
  $region4: #{resnet_cifar_forward.14} parent=0 // loop_header_branch
    %12 = sbr.rel (%p10) target = $region8
  $region5: #{resnet_cifar_forward.14} parent=0 // loop_body
    %s14 = ssub.s32 %s9, 1
    %s15 = ssub.s32 %s9, 2
    %s16 = sadd.s32 %s9, 1
    %s17 = ssub.s32 %s9, %s16
    %p18 = scmp.eq.s32.totalorder %s17, 0
    %s20 = sadd.s32 %s19, 1
    %s21 = scalar_select %p18, %s19, %s20
    %p24 = pneg %p18
    %p25 = scmp.eq.s32.totalorder %s9, 1
    %p26 = por %p24, %p25
    %p27 = scmp.ne.s32.totalorder %s19, %s22
    %p28 = scmp.eq.s32.totalorder %s9, 0
    %p29 = por %p27, %p28
    %p30 = scmp.ne.s32.totalorder %s19, %s22
    %p31 = scmp.eq.s32.totalorder %s14, 1
    %p32 = por %p30, %p31
    %p33 = scmp.ne.s32.totalorder %s22, %s23
    %p34 = scmp.eq.s32.totalorder %s14, 0
    %p35 = por %p33, %p34
    %p36 = scmp.ne.s32.totalorder %s22, %s23
    %p37 = scmp.eq.s32.totalorder %s15, 1
    %p38 = por %p36, %p37
    %p40 = scmp.ne.s32.totalorder %s23, %s39
    %p41 = scmp.eq.s32.totalorder %s15, 0
    %p42 = por %p40, %p41
    %s44 = sadd.s32 %s43, 1
    %p47 = scmp.eq.s32.totalorder %s9, 1
    %p48 = scmp.ne.s32.totalorder %s43, %s45
    %p49 = scmp.eq.s32.totalorder %s9, 0
    %p50 = por %p48, %p49
    %p51 = scmp.ne.s32.totalorder %s43, %s45
    %p52 = scmp.eq.s32.totalorder %s14, 1
    %p53 = por %p51, %p52
    %p54 = scmp.ne.s32.totalorder %s45, %s46
    %p55 = scmp.eq.s32.totalorder %s14, 0
    %p56 = por %p54, %p55
    %p57 = scmp.ne.s32.totalorder %s45, %s46
    %p58 = scmp.eq.s32.totalorder %s15, 1
    %p59 = por %p57, %p58
    %p61 = scmp.ne.s32.totalorder %s46, %s60
    %p62 = scmp.eq.s32.totalorder %s15, 0
    %p63 = por %p61, %p62
    %s65 = sadd.s32 %s64, 1
    %p68 = scmp.eq.s32.totalorder %s9, 1
    %p69 = scmp.ne.s32.totalorder %s64, %s66
    %p70 = scmp.eq.s32.totalorder %s9, 0
    %p71 = por %p69, %p70
    %p72 = scmp.ne.s32.totalorder %s64, %s66
    %p73 = scmp.eq.s32.totalorder %s14, 1
    %p74 = por %p72, %p73
    %p75 = scmp.ne.s32.totalorder %s66, %s67
    %p76 = scmp.eq.s32.totalorder %s14, 0
    %p77 = por %p75, %p76
    %p78 = scmp.ne.s32.totalorder %s66, %s67
    %p79 = scmp.eq.s32.totalorder %s15, 1
    %p80 = por %p78, %p79
    %p82 = scmp.ne.s32.totalorder %s67, %s81
    %p83 = scmp.eq.s32.totalorder %s15, 0
    %p84 = por %p82, %p83
    %s85 = ssub.s32 %s9, %s16
    %p86 = scmp.eq.s32.totalorder %s85, 0
    %s88 = sadd.s32 %s87, 1
    %s89 = scalar_select %p86, %s87, %s88
    %p92 = pneg %p86
    %p93 = scmp.eq.s32.totalorder %s9, 1
    %p94 = por %p92, %p93
    %p95 = scmp.ne.s32.totalorder %s87, %s90
    %p96 = scmp.eq.s32.totalorder %s9, 0
    %p97 = por %p95, %p96
    %p98 = scmp.ne.s32.totalorder %s87, %s90
    %p99 = scmp.eq.s32.totalorder %s14, 1
    %p100 = por %p98, %p99
    %p101 = scmp.ne.s32.totalorder %s90, %s91
    %p102 = scmp.eq.s32.totalorder %s14, 0
    %p103 = por %p101, %p102
    %p104 = scmp.ne.s32.totalorder %s90, %s91
    %p105 = scmp.eq.s32.totalorder %s15, 1
    %p106 = por %p104, %p105
    %p108 = scmp.ne.s32.totalorder %s91, %s107
    %p109 = scmp.eq.s32.totalorder %s15, 0
    %p110 = por %p108, %p109
    %p111 = scmp.le.s32.totalorder 1, %s9
    %p112 = scmp.lt.s32.totalorder %s9, 3
    %p113 = pnand %p111, %p112
    %p114 = pneg %p113
    // Predicated region
    $region9: #{resnet_cifar_forward.14} parent=5 // pred_check
      _
    $region10: #{resnet_cifar_forward.14} parent=5 // pred_check_branch
      %116 = sbr.rel (%p113) target = $region12
    $region11: #{resnet_cifar_forward.14} parent=5 // pred_region
      %s117 = ssub.s32 %s9, 1
      // Predicated region
      $region13: #{resnet_cifar_forward.14} parent=11 // pred_check
        %p118 = pneg %p56
      $region14: #{resnet_cifar_forward.14} parent=11 // pred_check_branch
        %120 = sbr.rel (%p118) target = $region16
      $region15: #{resnet_cifar_forward.14} parent=11 // pred_region
        _
      $region16: #{resnet_cifar_forward.14} parent=11 // pred_fallthru
        _
      // Predicated region
      $region17: #{resnet_cifar_forward.14} parent=11 // pred_check
        %p121 = pneg %p77
      $region18: #{resnet_cifar_forward.14} parent=11 // pred_check_branch
        %123 = sbr.rel (%p121) target = $region20
      $region19: #{resnet_cifar_forward.14} parent=11 // pred_region
        _
      $region20: #{resnet_cifar_forward.14} parent=11 // pred_fallthru
        _
    $region12: #{resnet_cifar_forward.14} parent=5 // pred_fallthru
      _
    %p124 = scmp.lt.s32.totalorder %s9, 2
    // Predicated region
    $region21: #{resnet_cifar_forward.14} parent=5 // pred_check
      %p125 = pneg %p124
    $region22: #{resnet_cifar_forward.14} parent=5 // pred_check_branch
      %127 = sbr.rel (%p125) target = $region24
    $region23: #{resnet_cifar_forward.14} parent=5 // pred_region
      // Predicated region
      $region25: #{resnet_cifar_forward.14} parent=23 // pred_check
        %p128 = pneg %p29
      $region26: #{resnet_cifar_forward.14} parent=23 // pred_check_branch
        %130 = sbr.rel (%p128) target = $region28
      $region27: #{resnet_cifar_forward.14} parent=23 // pred_region
        %s131 = smul.u32 32, %s9
        %p132 = scmp.lt.s32.totalorder %s131, 63
        %s133 = scalar_select %p132, %s131, 63
        %s134 = smul.addr %s133, 4
        %s135 = scalar_lea.vmem %s0, %s134
        %s136 = smul.u32 32, %s9
      $region28: #{resnet_cifar_forward.14} parent=23 // pred_fallthru
        _
    $region24: #{resnet_cifar_forward.14} parent=5 // pred_fallthru
      _
    %p137 = scmp.le.s32.totalorder 1, %s9
    %p138 = scmp.lt.s32.totalorder %s9, 3
    %p139 = pnand %p137, %p138
    %p140 = pneg %p139
    // Predicated region
    $region29: #{resnet_cifar_forward.14} parent=5 // pred_check
      _
    $region30: #{resnet_cifar_forward.14} parent=5 // pred_check_branch
      %142 = sbr.rel (%p139) target = $region32
    $region31: #{resnet_cifar_forward.14} parent=5 // pred_region
      %s143 = ssub.s32 %s9, 1
      %s144 = smul.u32 32, %s14
      %p145 = scmp.lt.s32.totalorder %s144, 63
      %s146 = scalar_select %p145, %s144, 63
      %s147 = smul.addr %s146, 4
      %s148 = scalar_lea.vmem %s0, %s147
      %p149 = pneg %p35
      %p150 = pneg %p32
      %p151 = pneg %p56
      %p152 = pneg %p53
      %p153 = pneg %p77
      %p154 = pneg %p74
      %p155 = pneg %p103
      %p156 = pneg %p100
      %s157 = smul.u32 32, %s14
      %p158 = scmp.lt.s32.totalorder %s157, 63
      %s159 = scalar_select %p158, %s157, 63
      %s160 = smul.addr %s159, 8
      %s161 = scalar_lea.vmem %s3, %s160
      %s162 = smul.u32 32, %s14
      %p163 = scmp.lt.s32.totalorder %s162, 63
      %s164 = scalar_select %p163, %s162, 63
      %s165 = smul.addr %s164, 4
      %s166 = scalar_lea.vmem %s0, %s165
      %s167 = smul.u32 32, %s14
      %s168 = smul.u32 32, %s14
      %p169 = scmp.lt.s32.totalorder %s168, 63
      %s170 = scalar_select %p169, %s168, 63
      %s171 = smul.addr %s170, 8
      %s172 = scalar_lea.vmem %s3, %s171
      %s173 = smul.u32 32, %s14
      %v175 = vld [vmem:[%s166] sm:$0xf]
      %v176 = vld [vmem:[%s166 + $0x4] sm:$0xf]
      %v177 = vld [vmem:[%s166 + $0x8] sm:$0xf]
      %v178 = vld [vmem:[%s166 + $0xc] sm:$0xf]
      %v179 = vld [vmem:[%s166 + $0x10] sm:$0xf]
      %v180 = vld [vmem:[%s166 + $0x14] sm:$0xf]
      %v181 = vld [vmem:[%s166 + $0x18] sm:$0xf]
      %v182 = vld [vmem:[%s166 + $0x1c] sm:$0xf]
      %v183 = vld [vmem:[%s166 + $0x20] sm:$0xf]
      %v184 = vld [vmem:[%s166 + $0x24] sm:$0xf]
      %v185 = vld [vmem:[%s166 + $0x28] sm:$0xf]
      %v186 = vld [vmem:[%s166 + $0x2c] sm:$0xf]
      %v187 = vld [vmem:[%s166 + $0x30] sm:$0xf]
      %v188 = vld [vmem:[%s166 + $0x34] sm:$0xf]
      %v189 = vld [vmem:[%s166 + $0x38] sm:$0xf]
      %v190 = vld [vmem:[%s166 + $0x3c] sm:$0xf]
      %v191 = vld [vmem:[%s166 + $0x40] sm:$0xf]
      %v192 = vld [vmem:[%s166 + $0x44] sm:$0xf]
      %v193 = vld [vmem:[%s166 + $0x48] sm:$0xf]
      %v194 = vld [vmem:[%s166 + $0x4c] sm:$0xf]
      %v195 = vld [vmem:[%s166 + $0x50] sm:$0xf]
      %v196 = vld [vmem:[%s166 + $0x54] sm:$0xf]
      %v197 = vld [vmem:[%s166 + $0x58] sm:$0xf]
      %v198 = vld [vmem:[%s166 + $0x5c] sm:$0xf]
      %v199 = vld [vmem:[%s166 + $0x60] sm:$0xf]
      %v200 = vld [vmem:[%s166 + $0x64] sm:$0xf]
      %v201 = vld [vmem:[%s166 + $0x68] sm:$0xf]
      %v202 = vld [vmem:[%s166 + $0x6c] sm:$0xf]
      %v203 = vld [vmem:[%s166 + $0x70] sm:$0xf]
      %v204 = vld [vmem:[%s166 + $0x74] sm:$0xf]
      %v205 = vld [vmem:[%s166 + $0x78] sm:$0xf]
      %v206 = vld [vmem:[%s166 + $0x7c] sm:$0xf]
      %v207 = vld [vmem:[%s1] sm:$0xf]
      %v208 = vld [vmem:[%s1 + $0x4] sm:$0xf]
      %v209 = vld [vmem:[%s2] sm:$0x1]
      %v211 = vlaneseq
      %v212 = vshrl.u32 %v211, 7
      %v213 = vsub.s32 0, %v212
      %v214 = vrot.slane %v209, %v213
      %v248 = vunpack.c.l.b16 %v175
      %v249 = vunpack.c.l.b16 %v176
      %v250 = vunpack.c.l.b16 %v177
      %v251 = vunpack.c.l.b16 %v178
      %v252 = vunpack.c.l.b16 %v179
      %v253 = vunpack.c.l.b16 %v180
      %v254 = vunpack.c.l.b16 %v181
      %v255 = vunpack.c.l.b16 %v182
      %v256 = vunpack.c.l.b16 %v183
      %v257 = vunpack.c.l.b16 %v184
      %v258 = vunpack.c.l.b16 %v185
      %v259 = vunpack.c.l.b16 %v186
      %v260 = vunpack.c.l.b16 %v187
      %v261 = vunpack.c.l.b16 %v188
      %v262 = vunpack.c.l.b16 %v189
      %v263 = vunpack.c.l.b16 %v190
      %v264 = vunpack.c.l.b16 %v191
      %v265 = vunpack.c.l.b16 %v192
      %v266 = vunpack.c.l.b16 %v193
      %v267 = vunpack.c.l.b16 %v194
      %v268 = vunpack.c.l.b16 %v195
      %v269 = vunpack.c.l.b16 %v196
      %v270 = vunpack.c.l.b16 %v197
      %v271 = vunpack.c.l.b16 %v198
      %v272 = vunpack.c.l.b16 %v199
      %v273 = vunpack.c.l.b16 %v200
      %v274 = vunpack.c.l.b16 %v201
      %v275 = vunpack.c.l.b16 %v202
      %v276 = vunpack.c.l.b16 %v203
      %v277 = vunpack.c.l.b16 %v204
      %v278 = vunpack.c.l.b16 %v205
      %v279 = vunpack.c.l.b16 %v206
      %v280 = vpack.c.b16 %v249, %v248
      %v281 = vpack.c.b16 %v251, %v250
      %v282 = vpack.c.b16 %v253, %v252
      %v283 = vpack.c.b16 %v255, %v254
      %v284 = vpack.c.b16 %v257, %v256
      %v285 = vpack.c.b16 %v259, %v258
      %v286 = vpack.c.b16 %v261, %v260
      %v287 = vpack.c.b16 %v263, %v262
      %v288 = vpack.c.b16 %v265, %v264
      %v289 = vpack.c.b16 %v267, %v266
      %v290 = vpack.c.b16 %v269, %v268
      %v291 = vpack.c.b16 %v271, %v270
      %v292 = vpack.c.b16 %v273, %v272
      %v293 = vpack.c.b16 %v275, %v274
      %v294 = vpack.c.b16 %v277, %v276
      %v295 = vpack.c.b16 %v279, %v278
      %v298 = vunpack.c.l.b16 %v207
      %v299 = vunpack.c.l.b16 %v208
      %v300 = vpack.c.b16 %v299, %v298
      %vm302 = vcmask 130048
      %v304 = vsel %vm302, %v280, 0
      %v307 = vsel %vm302, %v281, 0
      %v310 = vsel %vm302, %v282, 0
      %v313 = vsel %vm302, %v283, 0
      %v316 = vsel %vm302, %v284, 0
      %v319 = vsel %vm302, %v285, 0
      %v322 = vsel %vm302, %v286, 0
      %v325 = vsel %vm302, %v287, 0
      %v328 = vsel %vm302, %v288, 0
      %v331 = vsel %vm302, %v289, 0
      %v334 = vsel %vm302, %v290, 0
      %v337 = vsel %vm302, %v291, 0
      %v340 = vsel %vm302, %v292, 0
      %v343 = vsel %vm302, %v293, 0
      %v346 = vsel %vm302, %v294, 0
      %v349 = vsel %vm302, %v295, 0
      %351 = vmatprep.subr.bf16.mxu0 0
      %352 = vmatpush1.bf16.msra.mxu0 %v300
      %353 = vmatprep.subr.bf16.mxu0 0
      %354 = vmatpush1.bf16.msra.mxu0 0
      %355 = vmatprep.subr.bf16.mxu0 0
      %356 = vmatpush1.bf16.msra.mxu0 0
      %357 = vmatprep.subr.bf16.mxu0 0
      %358 = vmatpush1.bf16.msra.mxu0 0
      %359 = vmatprep.subr.bf16.mxu0 0
      %360 = vmatpush1.bf16.msra.mxu0 0
      %361 = vmatprep.subr.bf16.mxu0 0
      %362 = vmatpush1.bf16.msra.mxu0 0
      %363 = vmatprep.subr.bf16.mxu0 0
      %364 = vmatpush1.bf16.msra.mxu0 0
      %365 = vmatprep.subr.bf16.mxu0 0
      %366 = vmatpush1.bf16.msra.mxu0 0
      %367 = vmatprep.subr.bf16.mxu0 0
      %368 = vmatpush1.bf16.msra.mxu0 0
      %369 = vmatprep.subr.bf16.mxu0 0
      %370 = vmatpush1.bf16.msra.mxu0 0
      %371 = vmatprep.subr.bf16.mxu0 0
      %372 = vmatpush1.bf16.msra.mxu0 0
      %373 = vmatprep.subr.bf16.mxu0 0
      %374 = vmatpush1.bf16.msra.mxu0 0
      %375 = vmatprep.subr.bf16.mxu0 0
      %376 = vmatpush1.bf16.msra.mxu0 0
      %377 = vmatprep.subr.bf16.mxu0 0
      %378 = vmatpush1.bf16.msra.mxu0 0
      %379 = vmatprep.subr.bf16.mxu0 0
      %380 = vmatpush1.bf16.msra.mxu0 0
      %381 = vmatprep.subr.bf16.mxu0 0
      %382 = vmatpush1.bf16.msra.mxu0 0
      %383 = vmatprep.mubr.bf16.mxu0 0
      %384 = vmatmul.mubr.bf16.gmra.mrb[0].mxu0 %v304
      %v385 = vpop.f32.mrb[0].mxu0
      %v386 = vadd.f32 %v214, %v385
      %v387 = vpop.f32.mrb[0].mxu0
      %v388 = vpop.f32.mrb[0].mxu0
      %v389 = vadd.f32 %v214, %v388
      %v390 = vpop.f32.mrb[0].mxu0
      %391 = vmatprep.mubr.bf16.mxu0 0
      %392 = vmatmul.mubr.bf16.gmra.mrb[0].mxu0 %v307
      %v393 = vpop.f32.mrb[0].mxu0
      %v394 = vadd.f32 %v214, %v393
      %v395 = vpop.f32.mrb[0].mxu0
      %v396 = vpop.f32.mrb[0].mxu0
      %v397 = vadd.f32 %v214, %v396
      %v398 = vpop.f32.mrb[0].mxu0
      %399 = vmatprep.mubr.bf16.mxu0 0
      %400 = vmatmul.mubr.bf16.gmra.mrb[0].mxu0 %v310
      %v401 = vpop.f32.mrb[0].mxu0
      %v402 = vadd.f32 %v214, %v401
      %v403 = vpop.f32.mrb[0].mxu0
      %v404 = vpop.f32.mrb[0].mxu0
      %v405 = vadd.f32 %v214, %v404
      %v406 = vpop.f32.mrb[0].mxu0
      %407 = vmatprep.mubr.bf16.mxu0 0
      %408 = vmatmul.mubr.bf16.gmra.mrb[0].mxu0 %v313
      %v409 = vpop.f32.mrb[0].mxu0
      %v410 = vadd.f32 %v214, %v409
      %v411 = vpop.f32.mrb[0].mxu0
      %v412 = vpop.f32.mrb[0].mxu0
      %v413 = vadd.f32 %v214, %v412
      %v414 = vpop.f32.mrb[0].mxu0
      %415 = vmatprep.mubr.bf16.mxu0 0
      %416 = vmatmul.mubr.bf16.gmra.mrb[0].mxu0 %v316
      %v417 = vpop.f32.mrb[0].mxu0
      %v418 = vadd.f32 %v214, %v417
      %v419 = vpop.f32.mrb[0].mxu0
      %v420 = vpop.f32.mrb[0].mxu0
      %v421 = vadd.f32 %v214, %v420
      %v422 = vpop.f32.mrb[0].mxu0
      %423 = vmatprep.mubr.bf16.mxu0 0
      %424 = vmatmul.mubr.bf16.gmra.mrb[0].mxu0 %v319
      %v425 = vpop.f32.mrb[0].mxu0
      %v426 = vadd.f32 %v214, %v425
      %v427 = vpop.f32.mrb[0].mxu0
      %v428 = vpop.f32.mrb[0].mxu0
      %v429 = vadd.f32 %v214, %v428
      %v430 = vpop.f32.mrb[0].mxu0
      %431 = vmatprep.mubr.bf16.mxu0 0
      %432 = vmatmul.mubr.bf16.gmra.mrb[0].mxu0 %v322
      %v433 = vpop.f32.mrb[0].mxu0
      %v434 = vadd.f32 %v214, %v433
      %v435 = vpop.f32.mrb[0].mxu0
      %v436 = vpop.f32.mrb[0].mxu0
      %v437 = vadd.f32 %v214, %v436
      %v438 = vpop.f32.mrb[0].mxu0
      %439 = vmatprep.mubr.bf16.mxu0 0
      %440 = vmatmul.mubr.bf16.gmra.mrb[0].mxu0 %v325
      %v441 = vpop.f32.mrb[0].mxu0
      %v442 = vadd.f32 %v214, %v441
      %v443 = vpop.f32.mrb[0].mxu0
      %v444 = vpop.f32.mrb[0].mxu0
      %v445 = vadd.f32 %v214, %v444
      %v446 = vpop.f32.mrb[0].mxu0
      %447 = vmatprep.mubr.bf16.mxu0 0
      %448 = vmatmul.mubr.bf16.gmra.mrb[0].mxu0 %v328
      %v449 = vpop.f32.mrb[0].mxu0
      %v450 = vadd.f32 %v214, %v449
      %v451 = vpop.f32.mrb[0].mxu0
      %v452 = vpop.f32.mrb[0].mxu0
      %v453 = vadd.f32 %v214, %v452
      %v454 = vpop.f32.mrb[0].mxu0
      %455 = vmatprep.mubr.bf16.mxu0 0
      %456 = vmatmul.mubr.bf16.gmra.mrb[0].mxu0 %v331
      %v457 = vpop.f32.mrb[0].mxu0
      %v458 = vadd.f32 %v214, %v457
      %v459 = vpop.f32.mrb[0].mxu0
      %v460 = vpop.f32.mrb[0].mxu0
      %v461 = vadd.f32 %v214, %v460
      %v462 = vpop.f32.mrb[0].mxu0
      %463 = vmatprep.mubr.bf16.mxu0 0
      %464 = vmatmul.mubr.bf16.gmra.mrb[0].mxu0 %v334
      %v465 = vpop.f32.mrb[0].mxu0
      %v466 = vadd.f32 %v214, %v465
      %v467 = vpop.f32.mrb[0].mxu0
      %v468 = vpop.f32.mrb[0].mxu0
      %v469 = vadd.f32 %v214, %v468
      %v470 = vpop.f32.mrb[0].mxu0
      %471 = vmatprep.mubr.bf16.mxu0 0
      %472 = vmatmul.mubr.bf16.gmra.mrb[0].mxu0 %v337
      %v473 = vpop.f32.mrb[0].mxu0
      %v474 = vadd.f32 %v214, %v473
      %v475 = vpop.f32.mrb[0].mxu0
      %v476 = vpop.f32.mrb[0].mxu0
      %v477 = vadd.f32 %v214, %v476
      %v478 = vpop.f32.mrb[0].mxu0
      %479 = vmatprep.mubr.bf16.mxu0 0
      %480 = vmatmul.mubr.bf16.gmra.mrb[0].mxu0 %v340
      %v481 = vpop.f32.mrb[0].mxu0
      %v482 = vadd.f32 %v214, %v481
      %v483 = vpop.f32.mrb[0].mxu0
      %v484 = vpop.f32.mrb[0].mxu0
      %v485 = vadd.f32 %v214, %v484
      %v486 = vpop.f32.mrb[0].mxu0
      %487 = vmatprep.mubr.bf16.mxu0 0
      %488 = vmatmul.mubr.bf16.gmra.mrb[0].mxu0 %v343
      %v489 = vpop.f32.mrb[0].mxu0
      %v490 = vadd.f32 %v214, %v489
      %v491 = vpop.f32.mrb[0].mxu0
      %v492 = vpop.f32.mrb[0].mxu0
      %v493 = vadd.f32 %v214, %v492
      %v494 = vpop.f32.mrb[0].mxu0
      %495 = vmatprep.mubr.bf16.mxu0 0
      %496 = vmatmul.mubr.bf16.gmra.mrb[0].mxu0 %v346
      %v497 = vpop.f32.mrb[0].mxu0
      %v498 = vadd.f32 %v214, %v497
      %v499 = vpop.f32.mrb[0].mxu0
      %v500 = vpop.f32.mrb[0].mxu0
      %v501 = vadd.f32 %v214, %v500
      %v502 = vpop.f32.mrb[0].mxu0
      %503 = vmatprep.mubr.bf16.mxu0 0
      %504 = vmatmul.mubr.bf16.gmra.mrb[0].mxu0 %v349
      %v505 = vpop.f32.mrb[0].mxu0
      %v506 = vadd.f32 %v214, %v505
      %v507 = vpop.f32.mrb[0].mxu0
      %v508 = vpop.f32.mrb[0].mxu0
      %v509 = vadd.f32 %v214, %v508
      %v510 = vpop.f32.mrb[0].mxu0
      %511 = vdwg.mxu0
      %512 = vst [vmem:[%s172] sm:$0xff] %v386
      %513 = vst [vmem:[%s172 + $0x8] sm:$0xff] %v389
      %514 = vst [vmem:[%s172 + $0x10] sm:$0xff] %v394
      %515 = vst [vmem:[%s172 + $0x18] sm:$0xff] %v397
      %516 = vst [vmem:[%s172 + $0x20] sm:$0xff] %v402
      %517 = vst [vmem:[%s172 + $0x28] sm:$0xff] %v405
      %518 = vst [vmem:[%s172 + $0x30] sm:$0xff] %v410
      %519 = vst [vmem:[%s172 + $0x38] sm:$0xff] %v413
      %520 = vst [vmem:[%s172 + $0x40] sm:$0xff] %v418
      %521 = vst [vmem:[%s172 + $0x48] sm:$0xff] %v421
      %522 = vst [vmem:[%s172 + $0x50] sm:$0xff] %v426
      %523 = vst [vmem:[%s172 + $0x58] sm:$0xff] %v429
      %524 = vst [vmem:[%s172 + $0x60] sm:$0xff] %v434
      %525 = vst [vmem:[%s172 + $0x68] sm:$0xff] %v437
      %526 = vst [vmem:[%s172 + $0x70] sm:$0xff] %v442
      %527 = vst [vmem:[%s172 + $0x78] sm:$0xff] %v445
      %528 = vst [vmem:[%s172 + $0x80] sm:$0xff] %v450
      %529 = vst [vmem:[%s172 + $0x88] sm:$0xff] %v453
      %530 = vst [vmem:[%s172 + $0x90] sm:$0xff] %v458
      %531 = vst [vmem:[%s172 + $0x98] sm:$0xff] %v461
      %532 = vst [vmem:[%s172 + $0xa0] sm:$0xff] %v466
      %533 = vst [vmem:[%s172 + $0xa8] sm:$0xff] %v469
      %534 = vst [vmem:[%s172 + $0xb0] sm:$0xff] %v474
      %535 = vst [vmem:[%s172 + $0xb8] sm:$0xff] %v477
      %536 = vst [vmem:[%s172 + $0xc0] sm:$0xff] %v482
      %537 = vst [vmem:[%s172 + $0xc8] sm:$0xff] %v485
      %538 = vst [vmem:[%s172 + $0xd0] sm:$0xff] %v490
      %539 = vst [vmem:[%s172 + $0xd8] sm:$0xff] %v493
      %540 = vst [vmem:[%s172 + $0xe0] sm:$0xff] %v498
      %541 = vst [vmem:[%s172 + $0xe8] sm:$0xff] %v501
      %542 = vst [vmem:[%s172 + $0xf0] sm:$0xff] %v506
      %543 = vst [vmem:[%s172 + $0xf8] sm:$0xff] %v509
      %s544 = smul.u32 32, %s14
      %p545 = scmp.lt.s32.totalorder %s544, 63
      %s546 = scalar_select %p545, %s544, 63
      %s547 = smul.addr %s546, 8
      %s548 = scalar_lea.vmem %s3, %s547
      // Predicated region
      $region33: #{resnet_cifar_forward.14} parent=31 // pred_check
        %p549 = pneg %p100
      $region34: #{resnet_cifar_forward.14} parent=31 // pred_check_branch
        %551 = sbr.rel (%p549) target = $region36
      $region35: #{resnet_cifar_forward.14} parent=31 // pred_region
        %s552 = smul.u32 32, %s14
      $region36: #{resnet_cifar_forward.14} parent=31 // pred_fallthru
        _
    $region32: #{resnet_cifar_forward.14} parent=5 // pred_fallthru
      _
    %p553 = scmp.le.s32.totalorder 2, %s9
    // Predicated region
    $region37: #{resnet_cifar_forward.14} parent=5 // pred_check
      %p554 = pneg %p553
    $region38: #{resnet_cifar_forward.14} parent=5 // pred_check_branch
      %556 = sbr.rel (%p554) target = $region40
    $region39: #{resnet_cifar_forward.14} parent=5 // pred_region
      %s557 = ssub.s32 %s9, 2
      // Predicated region
      $region41: #{resnet_cifar_forward.14} parent=39 // pred_check
        %p558 = pneg %p106
      $region42: #{resnet_cifar_forward.14} parent=39 // pred_check_branch
        %560 = sbr.rel (%p558) target = $region44
      $region43: #{resnet_cifar_forward.14} parent=39 // pred_region
        %s561 = smul.u32 32, %s15
        %p562 = scmp.lt.s32.totalorder %s561, 63
        %s563 = scalar_select %p562, %s561, 63
        %s564 = smul.addr %s563, 8
        %s565 = scalar_lea.vmem %s3, %s564
      $region44: #{resnet_cifar_forward.14} parent=39 // pred_fallthru
        _
    $region40: #{resnet_cifar_forward.14} parent=5 // pred_fallthru
      _
  $region6: #{resnet_cifar_forward.14} parent=0 // loop_footer
    %s13 = sadd.s32 1, %s9
  $region7: #{resnet_cifar_forward.14} parent=0 // loop_footer_branch
    %8 = sbr.rel target = $region3
  $region8: #{resnet_cifar_forward.14} parent=0 // loop_exit
    _

// kernel: resnet_cifar_forward.13
$region0: #{resnet_cifar_forward.13}
  #allocation0 [shape = 'u32[]', space=smem, size = 0x4, offset = 0x4, fixed_abs, tag = 'smem constant byte address 0x4 - core index']
  #allocation1 [shape = 'u32[144,128]{1,0:T(1,128)}', space=vmem, size = 0x12000, scoped, tag = 'internal scratch']
  %s0 = inlined_call_operand.vmem [shape: bf16[512,144], index: 0, kind: input, shape index: {}]
  %s1 = inlined_call_operand.vmem [shape: bf16[144,128], index: 1, kind: input, shape index: {}]
  %s2 = inlined_call_operand.vmem [shape: f32[1,128], index: 2, kind: input, shape index: {}]
  %s3 = inlined_call_operand.vmem [shape: f32[512,128], index: 3, kind: output, shape index: {}]
  %s4 = sld [smem:[#allocation0]]
  $region45: #{resnet_cifar_forward.13} parent=0
    _
  %s6 = ssub.s32 1, %s4
  %s7 = scalar_select 0, %s6, %s4
  loop: start=0, step=1, limit=4
  $region2: #{resnet_cifar_forward.13} parent=0 // loop_pre_header
    _
  $region3: #{resnet_cifar_forward.13} parent=0 // loop_header
    %s9 = sphi 0, %s13
    %p10 = scmp.ge.s32.totalorder %s9, 4
    %s19 = sphi 0, %s21
    %s22 = sphi 0, %s19
    %s23 = sphi 0, %s22
    %s39 = sphi 0, %s23
    %s43 = sphi 0, %s43
    %s45 = sphi 0, %s43
    %s46 = sphi 0, %s45
    %s60 = sphi 0, %s46
    %s64 = sphi 0, %s64
    %s66 = sphi 0, %s64
    %s67 = sphi 0, %s66
    %s81 = sphi 0, %s67
    %s87 = sphi 0, %s89
    %s90 = sphi 0, %s87
    %s91 = sphi 0, %s90
    %s107 = sphi 0, %s91
  $region4: #{resnet_cifar_forward.13} parent=0 // loop_header_branch
    %12 = sbr.rel (%p10) target = $region8
  $region5: #{resnet_cifar_forward.13} parent=0 // loop_body
    %s14 = ssub.s32 %s9, 1
    %s15 = ssub.s32 %s9, 2
    %s16 = sadd.s32 %s9, 1
    %s17 = ssub.s32 %s9, %s16
    %p18 = scmp.eq.s32.totalorder %s17, 0
    %s20 = sadd.s32 %s19, 1
    %s21 = scalar_select %p18, %s19, %s20
    %p24 = pneg %p18
    %p25 = scmp.eq.s32.totalorder %s9, 1
    %p26 = por %p24, %p25
    %p27 = scmp.ne.s32.totalorder %s19, %s22
    %p28 = scmp.eq.s32.totalorder %s9, 0
    %p29 = por %p27, %p28
    %p30 = scmp.ne.s32.totalorder %s19, %s22
    %p31 = scmp.eq.s32.totalorder %s14, 1
    %p32 = por %p30, %p31
    %p33 = scmp.ne.s32.totalorder %s22, %s23
    %p34 = scmp.eq.s32.totalorder %s14, 0
    %p35 = por %p33, %p34
    %p36 = scmp.ne.s32.totalorder %s22, %s23
    %p37 = scmp.eq.s32.totalorder %s15, 1
    %p38 = por %p36, %p37
    %p40 = scmp.ne.s32.totalorder %s23, %s39
    %p41 = scmp.eq.s32.totalorder %s15, 0
    %p42 = por %p40, %p41
    %s44 = sadd.s32 %s43, 1
    %p47 = scmp.eq.s32.totalorder %s9, 1
    %p48 = scmp.ne.s32.totalorder %s43, %s45
    %p49 = scmp.eq.s32.totalorder %s9, 0
    %p50 = por %p48, %p49
    %p51 = scmp.ne.s32.totalorder %s43, %s45
    %p52 = scmp.eq.s32.totalorder %s14, 1
    %p53 = por %p51, %p52
    %p54 = scmp.ne.s32.totalorder %s45, %s46
    %p55 = scmp.eq.s32.totalorder %s14, 0
    %p56 = por %p54, %p55
    %p57 = scmp.ne.s32.totalorder %s45, %s46
    %p58 = scmp.eq.s32.totalorder %s15, 1
    %p59 = por %p57, %p58
    %p61 = scmp.ne.s32.totalorder %s46, %s60
    %p62 = scmp.eq.s32.totalorder %s15, 0
    %p63 = por %p61, %p62
    %s65 = sadd.s32 %s64, 1
    %p68 = scmp.eq.s32.totalorder %s9, 1
    %p69 = scmp.ne.s32.totalorder %s64, %s66
    %p70 = scmp.eq.s32.totalorder %s9, 0
    %p71 = por %p69, %p70
    %p72 = scmp.ne.s32.totalorder %s64, %s66
    %p73 = scmp.eq.s32.totalorder %s14, 1
    %p74 = por %p72, %p73
    %p75 = scmp.ne.s32.totalorder %s66, %s67
    %p76 = scmp.eq.s32.totalorder %s14, 0
    %p77 = por %p75, %p76
    %p78 = scmp.ne.s32.totalorder %s66, %s67
    %p79 = scmp.eq.s32.totalorder %s15, 1
    %p80 = por %p78, %p79
    %p82 = scmp.ne.s32.totalorder %s67, %s81
    %p83 = scmp.eq.s32.totalorder %s15, 0
    %p84 = por %p82, %p83
    %s85 = ssub.s32 %s9, %s16
    %p86 = scmp.eq.s32.totalorder %s85, 0
    %s88 = sadd.s32 %s87, 1
    %s89 = scalar_select %p86, %s87, %s88
    %p92 = pneg %p86
    %p93 = scmp.eq.s32.totalorder %s9, 1
    %p94 = por %p92, %p93
    %p95 = scmp.ne.s32.totalorder %s87, %s90
    %p96 = scmp.eq.s32.totalorder %s9, 0
    %p97 = por %p95, %p96
    %p98 = scmp.ne.s32.totalorder %s87, %s90
    %p99 = scmp.eq.s32.totalorder %s14, 1
    %p100 = por %p98, %p99
    %p101 = scmp.ne.s32.totalorder %s90, %s91
    %p102 = scmp.eq.s32.totalorder %s14, 0
    %p103 = por %p101, %p102
    %p104 = scmp.ne.s32.totalorder %s90, %s91
    %p105 = scmp.eq.s32.totalorder %s15, 1
    %p106 = por %p104, %p105
    %p108 = scmp.ne.s32.totalorder %s91, %s107
    %p109 = scmp.eq.s32.totalorder %s15, 0
    %p110 = por %p108, %p109
    %p111 = scmp.le.s32.totalorder 1, %s9
    %p112 = scmp.lt.s32.totalorder %s9, 3
    %p113 = pnand %p111, %p112
    %p114 = pneg %p113
    // Predicated region
    $region9: #{resnet_cifar_forward.13} parent=5 // pred_check
      _
    $region10: #{resnet_cifar_forward.13} parent=5 // pred_check_branch
      %116 = sbr.rel (%p113) target = $region12
    $region11: #{resnet_cifar_forward.13} parent=5 // pred_region
      %s117 = ssub.s32 %s9, 1
      // Predicated region
      $region13: #{resnet_cifar_forward.13} parent=11 // pred_check
        %p118 = pneg %p56
      $region14: #{resnet_cifar_forward.13} parent=11 // pred_check_branch
        %120 = sbr.rel (%p118) target = $region16
      $region15: #{resnet_cifar_forward.13} parent=11 // pred_region
        _
      $region16: #{resnet_cifar_forward.13} parent=11 // pred_fallthru
        _
      // Predicated region
      $region17: #{resnet_cifar_forward.13} parent=11 // pred_check
        %p121 = pneg %p77
      $region18: #{resnet_cifar_forward.13} parent=11 // pred_check_branch
        %123 = sbr.rel (%p121) target = $region20
      $region19: #{resnet_cifar_forward.13} parent=11 // pred_region
        _
      $region20: #{resnet_cifar_forward.13} parent=11 // pred_fallthru
        _
    $region12: #{resnet_cifar_forward.13} parent=5 // pred_fallthru
      _
    %p124 = scmp.lt.s32.totalorder %s9, 2
    // Predicated region
    $region21: #{resnet_cifar_forward.13} parent=5 // pred_check
      %p125 = pneg %p124
    $region22: #{resnet_cifar_forward.13} parent=5 // pred_check_branch
      %127 = sbr.rel (%p125) target = $region24
    $region23: #{resnet_cifar_forward.13} parent=5 // pred_region
      // Predicated region
      $region25: #{resnet_cifar_forward.13} parent=23 // pred_check
        %p128 = pneg %p29
      $region26: #{resnet_cifar_forward.13} parent=23 // pred_check_branch
        %130 = sbr.rel (%p128) target = $region28
      $region27: #{resnet_cifar_forward.13} parent=23 // pred_region
        %s131 = smul.u32 32, %s9
        %p132 = scmp.lt.s32.totalorder %s131, 63
        %s133 = scalar_select %p132, %s131, 63
        %s134 = smul.addr %s133, 2
        %s135 = smul.addr %s134, 4
        %s136 = scalar_lea.vmem %s0, %s135
        %s137 = smul.u32 32, %s9
      $region28: #{resnet_cifar_forward.13} parent=23 // pred_fallthru
        _
    $region24: #{resnet_cifar_forward.13} parent=5 // pred_fallthru
      _
    %p138 = scmp.le.s32.totalorder 1, %s9
    %p139 = scmp.lt.s32.totalorder %s9, 3
    %p140 = pnand %p138, %p139
    %p141 = pneg %p140
    // Predicated region
    $region29: #{resnet_cifar_forward.13} parent=5 // pred_check
      _
    $region30: #{resnet_cifar_forward.13} parent=5 // pred_check_branch
      %143 = sbr.rel (%p140) target = $region32
    $region31: #{resnet_cifar_forward.13} parent=5 // pred_region
      %s144 = ssub.s32 %s9, 1
      %s145 = smul.u32 32, %s14
      %p146 = scmp.lt.s32.totalorder %s145, 63
      %s147 = scalar_select %p146, %s145, 63
      %s148 = smul.addr %s147, 2
      %s149 = smul.addr %s148, 4
      %s150 = scalar_lea.vmem %s0, %s149
      %p151 = pneg %p35
      %p152 = pneg %p32
      %p153 = pneg %p56
      %p154 = pneg %p53
      %p155 = pneg %p77
      %p156 = pneg %p74
      %p157 = pneg %p103
      %p158 = pneg %p100
      %s159 = smul.u32 32, %s14
      %p160 = scmp.lt.s32.totalorder %s159, 63
      %s161 = scalar_select %p160, %s159, 63
      %s162 = smul.addr %s161, 8
      %s163 = scalar_lea.vmem %s3, %s162
      %s164 = smul.u32 32, %s14
      %p165 = scmp.lt.s32.totalorder %s164, 63
      %s166 = scalar_select %p165, %s164, 63
      %s167 = smul.addr %s166, 2
      %s168 = smul.addr %s167, 4
      %s169 = scalar_lea.vmem %s0, %s168
      %s170 = smul.u32 32, %s14
      %s171 = smul.u32 32, %s14
      %p172 = scmp.lt.s32.totalorder %s171, 63
      %s173 = scalar_select %p172, %s171, 63
      %s174 = smul.addr %s173, 8
      %s175 = scalar_lea.vmem %s3, %s174
      %s176 = smul.u32 32, %s14
      %v178 = vld [vmem:[%s169] sm:$0xff]
      %v179 = vld [vmem:[%s169 + $0x8] sm:$0xff]
      %v180 = vld [vmem:[%s169 + $0x10] sm:$0xff]
      %v181 = vld [vmem:[%s169 + $0x18] sm:$0xff]
      %v182 = vld [vmem:[%s169 + $0x20] sm:$0xff]
      %v183 = vld [vmem:[%s169 + $0x28] sm:$0xff]
      %v184 = vld [vmem:[%s169 + $0x30] sm:$0xff]
      %v185 = vld [vmem:[%s169 + $0x38] sm:$0xff]
      %v186 = vld [vmem:[%s169 + $0x40] sm:$0xff]
      %v187 = vld [vmem:[%s169 + $0x48] sm:$0xff]
      %v188 = vld [vmem:[%s169 + $0x50] sm:$0xff]
      %v189 = vld [vmem:[%s169 + $0x58] sm:$0xff]
      %v190 = vld [vmem:[%s169 + $0x60] sm:$0xff]
      %v191 = vld [vmem:[%s169 + $0x68] sm:$0xff]
      %v192 = vld [vmem:[%s169 + $0x70] sm:$0xff]
      %v193 = vld [vmem:[%s169 + $0x78] sm:$0xff]
      %v194 = vld [vmem:[%s169 + $0x80] sm:$0xff]
      %v195 = vld [vmem:[%s169 + $0x88] sm:$0xff]
      %v196 = vld [vmem:[%s169 + $0x90] sm:$0xff]
      %v197 = vld [vmem:[%s169 + $0x98] sm:$0xff]
      %v198 = vld [vmem:[%s169 + $0xa0] sm:$0xff]
      %v199 = vld [vmem:[%s169 + $0xa8] sm:$0xff]
      %v200 = vld [vmem:[%s169 + $0xb0] sm:$0xff]
      %v201 = vld [vmem:[%s169 + $0xb8] sm:$0xff]
      %v202 = vld [vmem:[%s169 + $0xc0] sm:$0xff]
      %v203 = vld [vmem:[%s169 + $0xc8] sm:$0xff]
      %v204 = vld [vmem:[%s169 + $0xd0] sm:$0xff]
      %v205 = vld [vmem:[%s169 + $0xd8] sm:$0xff]
      %v206 = vld [vmem:[%s169 + $0xe0] sm:$0xff]
      %v207 = vld [vmem:[%s169 + $0xe8] sm:$0xff]
      %v208 = vld [vmem:[%s169 + $0xf0] sm:$0xff]
      %v209 = vld [vmem:[%s169 + $0xf8] sm:$0xff]
      %v210 = vld [vmem:[%s1] sm:$0xf]
      %v211 = vld [vmem:[%s1 + $0x4] sm:$0xf]
      %v212 = vld [vmem:[%s1 + $0x8] sm:$0xf]
      %v213 = vld [vmem:[%s1 + $0xc] sm:$0xf]
      %v214 = vld [vmem:[%s1 + $0x10] sm:$0xf]
      %v215 = vld [vmem:[%s1 + $0x14] sm:$0xf]
      %v216 = vld [vmem:[%s1 + $0x18] sm:$0xf]
      %v217 = vld [vmem:[%s1 + $0x1c] sm:$0xf]
      %v218 = vld [vmem:[%s1 + $0x20] sm:$0xf]
      %v219 = vld [vmem:[%s1 + $0x24] sm:$0xf]
      %v220 = vld [vmem:[%s1 + $0x28] sm:$0xf]
      %v221 = vld [vmem:[%s1 + $0x2c] sm:$0xf]
      %v222 = vld [vmem:[%s1 + $0x30] sm:$0xf]
      %v223 = vld [vmem:[%s1 + $0x34] sm:$0xf]
      %v224 = vld [vmem:[%s1 + $0x38] sm:$0xf]
      %v225 = vld [vmem:[%s1 + $0x3c] sm:$0xf]
      %v226 = vld [vmem:[%s1 + $0x40] sm:$0xf]
      %v227 = vld [vmem:[%s1 + $0x44] sm:$0xf]
      %v228 = vld [vmem:[%s2] sm:$0x1]
      %v230 = vlaneseq
      %v231 = vshrl.u32 %v230, 7
      %v232 = vsub.s32 0, %v231
      %v233 = vrot.slane %v228, %v232
      %v267 = vunpack.c.l.b16 %v178
      %v268 = vunpack.c.h.b16 %v178
      %v269 = vunpack.c.l.b16 %v179
      %v270 = vunpack.c.h.b16 %v179
      %v271 = vunpack.c.l.b16 %v180
      %v272 = vunpack.c.h.b16 %v180
      %v273 = vunpack.c.l.b16 %v181
      %v274 = vunpack.c.h.b16 %v181
      %v275 = vunpack.c.l.b16 %v182
      %v276 = vunpack.c.h.b16 %v182
      %v277 = vunpack.c.l.b16 %v183
      %v278 = vunpack.c.h.b16 %v183
      %v279 = vunpack.c.l.b16 %v184
      %v280 = vunpack.c.h.b16 %v184
      %v281 = vunpack.c.l.b16 %v185
      %v282 = vunpack.c.h.b16 %v185
      %v283 = vunpack.c.l.b16 %v186
      %v284 = vunpack.c.h.b16 %v186
      %v285 = vunpack.c.l.b16 %v187
      %v286 = vunpack.c.h.b16 %v187
      %v287 = vunpack.c.l.b16 %v188
      %v288 = vunpack.c.h.b16 %v188
      %v289 = vunpack.c.l.b16 %v189
      %v290 = vunpack.c.h.b16 %v189
      %v291 = vunpack.c.l.b16 %v190
      %v292 = vunpack.c.h.b16 %v190
      %v293 = vunpack.c.l.b16 %v191
      %v294 = vunpack.c.h.b16 %v191
      %v295 = vunpack.c.l.b16 %v192
      %v296 = vunpack.c.h.b16 %v192
      %v297 = vunpack.c.l.b16 %v193
      %v298 = vunpack.c.h.b16 %v193
      %v299 = vunpack.c.l.b16 %v194
      %v300 = vunpack.c.h.b16 %v194
      %v301 = vunpack.c.l.b16 %v195
      %v302 = vunpack.c.h.b16 %v195
      %v303 = vunpack.c.l.b16 %v196
      %v304 = vunpack.c.h.b16 %v196
      %v305 = vunpack.c.l.b16 %v197
      %v306 = vunpack.c.h.b16 %v197
      %v307 = vunpack.c.l.b16 %v198
      %v308 = vunpack.c.h.b16 %v198
      %v309 = vunpack.c.l.b16 %v199
      %v310 = vunpack.c.h.b16 %v199
      %v311 = vunpack.c.l.b16 %v200
      %v312 = vunpack.c.h.b16 %v200
      %v313 = vunpack.c.l.b16 %v201
      %v314 = vunpack.c.h.b16 %v201
      %v315 = vunpack.c.l.b16 %v202
      %v316 = vunpack.c.h.b16 %v202
      %v317 = vunpack.c.l.b16 %v203
      %v318 = vunpack.c.h.b16 %v203
      %v319 = vunpack.c.l.b16 %v204
      %v320 = vunpack.c.h.b16 %v204
      %v321 = vunpack.c.l.b16 %v205
      %v322 = vunpack.c.h.b16 %v205
      %v323 = vunpack.c.l.b16 %v206
      %v324 = vunpack.c.h.b16 %v206
      %v325 = vunpack.c.l.b16 %v207
      %v326 = vunpack.c.h.b16 %v207
      %v327 = vunpack.c.l.b16 %v208
      %v328 = vunpack.c.h.b16 %v208
      %v329 = vunpack.c.l.b16 %v209
      %v330 = vunpack.c.h.b16 %v209
      %v331 = vpack.c.b16 %v269, %v267
      %v332 = vpack.c.b16 %v270, %v268
      %v333 = vpack.c.b16 %v273, %v271
      %v334 = vpack.c.b16 %v274, %v272
      %v335 = vpack.c.b16 %v277, %v275
      %v336 = vpack.c.b16 %v278, %v276
      %v337 = vpack.c.b16 %v281, %v279
      %v338 = vpack.c.b16 %v282, %v280
      %v339 = vpack.c.b16 %v285, %v283
      %v340 = vpack.c.b16 %v286, %v284
      %v341 = vpack.c.b16 %v289, %v287
      %v342 = vpack.c.b16 %v290, %v288
      %v343 = vpack.c.b16 %v293, %v291
      %v344 = vpack.c.b16 %v294, %v292
      %v345 = vpack.c.b16 %v297, %v295
      %v346 = vpack.c.b16 %v298, %v296
      %v347 = vpack.c.b16 %v301, %v299
      %v348 = vpack.c.b16 %v302, %v300
      %v349 = vpack.c.b16 %v305, %v303
      %v350 = vpack.c.b16 %v306, %v304
      %v351 = vpack.c.b16 %v309, %v307
      %v352 = vpack.c.b16 %v310, %v308
      %v353 = vpack.c.b16 %v313, %v311
      %v354 = vpack.c.b16 %v314, %v312
      %v355 = vpack.c.b16 %v317, %v315
      %v356 = vpack.c.b16 %v318, %v316
      %v357 = vpack.c.b16 %v321, %v319
      %v358 = vpack.c.b16 %v322, %v320
      %v359 = vpack.c.b16 %v325, %v323
      %v360 = vpack.c.b16 %v326, %v324
      %v361 = vpack.c.b16 %v329, %v327
      %v362 = vpack.c.b16 %v330, %v328
      %v397 = vunpack.c.l.b16 %v210
      %v398 = vunpack.c.l.b16 %v211
      %v399 = vunpack.c.l.b16 %v212
      %v400 = vunpack.c.l.b16 %v213
      %v401 = vunpack.c.l.b16 %v214
      %v402 = vunpack.c.l.b16 %v215
      %v403 = vunpack.c.l.b16 %v216
      %v404 = vunpack.c.l.b16 %v217
      %v405 = vunpack.c.l.b16 %v218
      %v406 = vunpack.c.l.b16 %v219
      %v407 = vunpack.c.l.b16 %v220
      %v408 = vunpack.c.l.b16 %v221
      %v409 = vunpack.c.l.b16 %v222
      %v410 = vunpack.c.l.b16 %v223
      %v411 = vunpack.c.l.b16 %v224
      %v412 = vunpack.c.l.b16 %v225
      %v413 = vunpack.c.l.b16 %v226
      %v414 = vunpack.c.l.b16 %v227
      %v415 = vpack.c.b16 %v398, %v397
      %v416 = vpack.c.b16 %v400, %v399
      %v417 = vpack.c.b16 %v402, %v401
      %v418 = vpack.c.b16 %v404, %v403
      %v419 = vpack.c.b16 %v406, %v405
      %v420 = vpack.c.b16 %v408, %v407
      %v421 = vpack.c.b16 %v410, %v409
      %v422 = vpack.c.b16 %v412, %v411
      %v423 = vpack.c.b16 %v414, %v413
      %vm433 = vcmask 130048
      %v435 = vsel %vm433, %v332, 0
      %v438 = vsel %vm433, %v334, 0
      %v441 = vsel %vm433, %v336, 0
      %v444 = vsel %vm433, %v338, 0
      %v447 = vsel %vm433, %v340, 0
      %v450 = vsel %vm433, %v342, 0
      %v453 = vsel %vm433, %v344, 0
      %v456 = vsel %vm433, %v346, 0
      %v459 = vsel %vm433, %v348, 0
      %v462 = vsel %vm433, %v350, 0
      %v465 = vsel %vm433, %v352, 0
      %v468 = vsel %vm433, %v354, 0
      %v471 = vsel %vm433, %v356, 0
      %v474 = vsel %vm433, %v358, 0
      %v477 = vsel %vm433, %v360, 0
      %v480 = vsel %vm433, %v362, 0
      %482 = vmatprep.subr.bf16.mxu0 0
      %483 = vmatpush1.bf16.msra.mxu0 %v415
      %484 = vmatprep.subr.bf16.mxu0 0
      %485 = vmatpush1.bf16.msra.mxu0 %v416
      %486 = vmatprep.subr.bf16.mxu0 0
      %487 = vmatpush1.bf16.msra.mxu0 %v417
      %488 = vmatprep.subr.bf16.mxu0 0
      %489 = vmatpush1.bf16.msra.mxu0 %v418
      %490 = vmatprep.subr.bf16.mxu0 0
      %491 = vmatpush1.bf16.msra.mxu0 %v419
      %492 = vmatprep.subr.bf16.mxu0 0
      %493 = vmatpush1.bf16.msra.mxu0 %v420
      %494 = vmatprep.subr.bf16.mxu0 0
      %495 = vmatpush1.bf16.msra.mxu0 %v421
      %496 = vmatprep.subr.bf16.mxu0 0
      %497 = vmatpush1.bf16.msra.mxu0 %v422
      %498 = vmatprep.subr.bf16.mxu0 0
      %499 = vmatpush1.bf16.msra.mxu0 %v423
      %500 = vmatprep.subr.bf16.mxu0 0
      %501 = vmatpush1.bf16.msra.mxu0 0
      %502 = vmatprep.subr.bf16.mxu0 0
      %503 = vmatpush1.bf16.msra.mxu0 0
      %504 = vmatprep.subr.bf16.mxu0 0
      %505 = vmatpush1.bf16.msra.mxu0 0
      %506 = vmatprep.subr.bf16.mxu0 0
      %507 = vmatpush1.bf16.msra.mxu0 0
      %508 = vmatprep.subr.bf16.mxu0 0
      %509 = vmatpush1.bf16.msra.mxu0 0
      %510 = vmatprep.subr.bf16.mxu0 0
      %511 = vmatpush1.bf16.msra.mxu0 0
      %512 = vmatprep.subr.bf16.mxu0 0
      %513 = vmatpush1.bf16.msra.mxu0 0
      %514 = vmatprep.mubr.bf16.mxu0 %v435
      %515 = vmatmul.mubr.bf16.gmra.mrb[0].mxu0 %v331
      %v516 = vpop.f32.mrb[0].mxu0
      %v517 = vadd.f32 %v233, %v516
      %v518 = vpop.f32.mrb[0].mxu0
      %v519 = vpop.f32.mrb[0].mxu0
      %v520 = vadd.f32 %v233, %v519
      %v521 = vpop.f32.mrb[0].mxu0
      %522 = vmatprep.mubr.bf16.mxu0 %v438
      %523 = vmatmul.mubr.bf16.gmra.mrb[0].mxu0 %v333
      %v524 = vpop.f32.mrb[0].mxu0
      %v525 = vadd.f32 %v233, %v524
      %v526 = vpop.f32.mrb[0].mxu0
      %v527 = vpop.f32.mrb[0].mxu0
      %v528 = vadd.f32 %v233, %v527
      %v529 = vpop.f32.mrb[0].mxu0
      %530 = vmatprep.mubr.bf16.mxu0 %v441
      %531 = vmatmul.mubr.bf16.gmra.mrb[0].mxu0 %v335
      %v532 = vpop.f32.mrb[0].mxu0
      %v533 = vadd.f32 %v233, %v532
      %v534 = vpop.f32.mrb[0].mxu0
      %v535 = vpop.f32.mrb[0].mxu0
      %v536 = vadd.f32 %v233, %v535
      %v537 = vpop.f32.mrb[0].mxu0
      %538 = vmatprep.mubr.bf16.mxu0 %v444
      %539 = vmatmul.mubr.bf16.gmra.mrb[0].mxu0 %v337
      %v540 = vpop.f32.mrb[0].mxu0
      %v541 = vadd.f32 %v233, %v540
      %v542 = vpop.f32.mrb[0].mxu0
      %v543 = vpop.f32.mrb[0].mxu0
      %v544 = vadd.f32 %v233, %v543
      %v545 = vpop.f32.mrb[0].mxu0
      %546 = vmatprep.mubr.bf16.mxu0 %v447
      %547 = vmatmul.mubr.bf16.gmra.mrb[0].mxu0 %v339
      %v548 = vpop.f32.mrb[0].mxu0
      %v549 = vadd.f32 %v233, %v548
      %v550 = vpop.f32.mrb[0].mxu0
      %v551 = vpop.f32.mrb[0].mxu0
      %v552 = vadd.f32 %v233, %v551
      %v553 = vpop.f32.mrb[0].mxu0
      %554 = vmatprep.mubr.bf16.mxu0 %v450
      %555 = vmatmul.mubr.bf16.gmra.mrb[0].mxu0 %v341
      %v556 = vpop.f32.mrb[0].mxu0
      %v557 = vadd.f32 %v233, %v556
      %v558 = vpop.f32.mrb[0].mxu0
      %v559 = vpop.f32.mrb[0].mxu0
      %v560 = vadd.f32 %v233, %v559
      %v561 = vpop.f32.mrb[0].mxu0
      %562 = vmatprep.mubr.bf16.mxu0 %v453
      %563 = vmatmul.mubr.bf16.gmra.mrb[0].mxu0 %v343
      %v564 = vpop.f32.mrb[0].mxu0
      %v565 = vadd.f32 %v233, %v564
      %v566 = vpop.f32.mrb[0].mxu0
      %v567 = vpop.f32.mrb[0].mxu0
      %v568 = vadd.f32 %v233, %v567
      %v569 = vpop.f32.mrb[0].mxu0
      %570 = vmatprep.mubr.bf16.mxu0 %v456
      %571 = vmatmul.mubr.bf16.gmra.mrb[0].mxu0 %v345
      %v572 = vpop.f32.mrb[0].mxu0
      %v573 = vadd.f32 %v233, %v572
      %v574 = vpop.f32.mrb[0].mxu0
      %v575 = vpop.f32.mrb[0].mxu0
      %v576 = vadd.f32 %v233, %v575
      %v577 = vpop.f32.mrb[0].mxu0
      %578 = vmatprep.mubr.bf16.mxu0 %v459
      %579 = vmatmul.mubr.bf16.gmra.mrb[0].mxu0 %v347
      %v580 = vpop.f32.mrb[0].mxu0
      %v581 = vadd.f32 %v233, %v580
      %v582 = vpop.f32.mrb[0].mxu0
      %v583 = vpop.f32.mrb[0].mxu0
      %v584 = vadd.f32 %v233, %v583
      %v585 = vpop.f32.mrb[0].mxu0
      %586 = vmatprep.mubr.bf16.mxu0 %v462
      %587 = vmatmul.mubr.bf16.gmra.mrb[0].mxu0 %v349
      %v588 = vpop.f32.mrb[0].mxu0
      %v589 = vadd.f32 %v233, %v588
      %v590 = vpop.f32.mrb[0].mxu0
      %v591 = vpop.f32.mrb[0].mxu0
      %v592 = vadd.f32 %v233, %v591
      %v593 = vpop.f32.mrb[0].mxu0
      %594 = vmatprep.mubr.bf16.mxu0 %v465
      %595 = vmatmul.mubr.bf16.gmra.mrb[0].mxu0 %v351
      %v596 = vpop.f32.mrb[0].mxu0
      %v597 = vadd.f32 %v233, %v596
      %v598 = vpop.f32.mrb[0].mxu0
      %v599 = vpop.f32.mrb[0].mxu0
      %v600 = vadd.f32 %v233, %v599
      %v601 = vpop.f32.mrb[0].mxu0
      %602 = vmatprep.mubr.bf16.mxu0 %v468
      %603 = vmatmul.mubr.bf16.gmra.mrb[0].mxu0 %v353
      %v604 = vpop.f32.mrb[0].mxu0
      %v605 = vadd.f32 %v233, %v604
      %v606 = vpop.f32.mrb[0].mxu0
      %v607 = vpop.f32.mrb[0].mxu0
      %v608 = vadd.f32 %v233, %v607
      %v609 = vpop.f32.mrb[0].mxu0
      %610 = vmatprep.mubr.bf16.mxu0 %v471
      %611 = vmatmul.mubr.bf16.gmra.mrb[0].mxu0 %v355
      %v612 = vpop.f32.mrb[0].mxu0
      %v613 = vadd.f32 %v233, %v612
      %v614 = vpop.f32.mrb[0].mxu0
      %v615 = vpop.f32.mrb[0].mxu0
      %v616 = vadd.f32 %v233, %v615
      %v617 = vpop.f32.mrb[0].mxu0
      %618 = vmatprep.mubr.bf16.mxu0 %v474
      %619 = vmatmul.mubr.bf16.gmra.mrb[0].mxu0 %v357
      %v620 = vpop.f32.mrb[0].mxu0
      %v621 = vadd.f32 %v233, %v620
      %v622 = vpop.f32.mrb[0].mxu0
      %v623 = vpop.f32.mrb[0].mxu0
      %v624 = vadd.f32 %v233, %v623
      %v625 = vpop.f32.mrb[0].mxu0
      %626 = vmatprep.mubr.bf16.mxu0 %v477
      %627 = vmatmul.mubr.bf16.gmra.mrb[0].mxu0 %v359
      %v628 = vpop.f32.mrb[0].mxu0
      %v629 = vadd.f32 %v233, %v628
      %v630 = vpop.f32.mrb[0].mxu0
      %v631 = vpop.f32.mrb[0].mxu0
      %v632 = vadd.f32 %v233, %v631
      %v633 = vpop.f32.mrb[0].mxu0
      %634 = vmatprep.mubr.bf16.mxu0 %v480
      %635 = vmatmul.mubr.bf16.gmra.mrb[0].mxu0 %v361
      %v636 = vpop.f32.mrb[0].mxu0
      %v637 = vadd.f32 %v233, %v636
      %v638 = vpop.f32.mrb[0].mxu0
      %v639 = vpop.f32.mrb[0].mxu0
      %v640 = vadd.f32 %v233, %v639
      %v641 = vpop.f32.mrb[0].mxu0
      %642 = vdwg.mxu0
      %v643 = vmax.f32 %v517, 0.0
      %v644 = vmax.f32 %v520, 0.0
      %v645 = vmax.f32 %v525, 0.0
      %v646 = vmax.f32 %v528, 0.0
      %v647 = vmax.f32 %v533, 0.0
      %v648 = vmax.f32 %v536, 0.0
      %v649 = vmax.f32 %v541, 0.0
      %v650 = vmax.f32 %v544, 0.0
      %v651 = vmax.f32 %v549, 0.0
      %v652 = vmax.f32 %v552, 0.0
      %v653 = vmax.f32 %v557, 0.0
      %v654 = vmax.f32 %v560, 0.0
      %v655 = vmax.f32 %v565, 0.0
      %v656 = vmax.f32 %v568, 0.0
      %v657 = vmax.f32 %v573, 0.0
      %v658 = vmax.f32 %v576, 0.0
      %v659 = vmax.f32 %v581, 0.0
      %v660 = vmax.f32 %v584, 0.0
      %v661 = vmax.f32 %v589, 0.0
      %v662 = vmax.f32 %v592, 0.0
      %v663 = vmax.f32 %v597, 0.0
      %v664 = vmax.f32 %v600, 0.0
      %v665 = vmax.f32 %v605, 0.0
      %v666 = vmax.f32 %v608, 0.0
      %v667 = vmax.f32 %v613, 0.0
      %v668 = vmax.f32 %v616, 0.0
      %v669 = vmax.f32 %v621, 0.0
      %v670 = vmax.f32 %v624, 0.0
      %v671 = vmax.f32 %v629, 0.0
      %v672 = vmax.f32 %v632, 0.0
      %v673 = vmax.f32 %v637, 0.0
      %v674 = vmax.f32 %v640, 0.0
      %675 = vst [vmem:[%s175] sm:$0xff] %v643
      %676 = vst [vmem:[%s175 + $0x8] sm:$0xff] %v644
      %677 = vst [vmem:[%s175 + $0x10] sm:$0xff] %v645
      %678 = vst [vmem:[%s175 + $0x18] sm:$0xff] %v646
      %679 = vst [vmem:[%s175 + $0x20] sm:$0xff] %v647
      %680 = vst [vmem:[%s175 + $0x28] sm:$0xff] %v648
      %681 = vst [vmem:[%s175 + $0x30] sm:$0xff] %v649
      %682 = vst [vmem:[%s175 + $0x38] sm:$0xff] %v650
      %683 = vst [vmem:[%s175 + $0x40] sm:$0xff] %v651
      %684 = vst [vmem:[%s175 + $0x48] sm:$0xff] %v652
      %685 = vst [vmem:[%s175 + $0x50] sm:$0xff] %v653
      %686 = vst [vmem:[%s175 + $0x58] sm:$0xff] %v654
      %687 = vst [vmem:[%s175 + $0x60] sm:$0xff] %v655
      %688 = vst [vmem:[%s175 + $0x68] sm:$0xff] %v656
      %689 = vst [vmem:[%s175 + $0x70] sm:$0xff] %v657
      %690 = vst [vmem:[%s175 + $0x78] sm:$0xff] %v658
      %691 = vst [vmem:[%s175 + $0x80] sm:$0xff] %v659
      %692 = vst [vmem:[%s175 + $0x88] sm:$0xff] %v660
      %693 = vst [vmem:[%s175 + $0x90] sm:$0xff] %v661
      %694 = vst [vmem:[%s175 + $0x98] sm:$0xff] %v662
      %695 = vst [vmem:[%s175 + $0xa0] sm:$0xff] %v663
      %696 = vst [vmem:[%s175 + $0xa8] sm:$0xff] %v664
      %697 = vst [vmem:[%s175 + $0xb0] sm:$0xff] %v665
      %698 = vst [vmem:[%s175 + $0xb8] sm:$0xff] %v666
      %699 = vst [vmem:[%s175 + $0xc0] sm:$0xff] %v667
      %700 = vst [vmem:[%s175 + $0xc8] sm:$0xff] %v668
      %701 = vst [vmem:[%s175 + $0xd0] sm:$0xff] %v669
      %702 = vst [vmem:[%s175 + $0xd8] sm:$0xff] %v670
      %703 = vst [vmem:[%s175 + $0xe0] sm:$0xff] %v671
      %704 = vst [vmem:[%s175 + $0xe8] sm:$0xff] %v672
      %705 = vst [vmem:[%s175 + $0xf0] sm:$0xff] %v673
      %706 = vst [vmem:[%s175 + $0xf8] sm:$0xff] %v674
      %s707 = smul.u32 32, %s14
      %p708 = scmp.lt.s32.totalorder %s707, 63
      %s709 = scalar_select %p708, %s707, 63
      %s710 = smul.addr %s709, 8
      %s711 = scalar_lea.vmem %s3, %s710
      // Predicated region
      $region33: #{resnet_cifar_forward.13} parent=31 // pred_check
        %p712 = pneg %p100
      $region34: #{resnet_cifar_forward.13} parent=31 // pred_check_branch
        %714 = sbr.rel (%p712) target = $region36
      $region35: #{resnet_cifar_forward.13} parent=31 // pred_region
        %s715 = smul.u32 32, %s14
      $region36: #{resnet_cifar_forward.13} parent=31 // pred_fallthru
        _
    $region32: #{resnet_cifar_forward.13} parent=5 // pred_fallthru
      _
    %p716 = scmp.le.s32.totalorder 2, %s9
    // Predicated region
    $region37: #{resnet_cifar_forward.13} parent=5 // pred_check
      %p717 = pneg %p716
    $region38: #{resnet_cifar_forward.13} parent=5 // pred_check_branch
      %719 = sbr.rel (%p717) target = $region40
    $region39: #{resnet_cifar_forward.13} parent=5 // pred_region
      %s720 = ssub.s32 %s9, 2
      // Predicated region
      $region41: #{resnet_cifar_forward.13} parent=39 // pred_check
        %p721 = pneg %p106
      $region42: #{resnet_cifar_forward.13} parent=39 // pred_check_branch
        %723 = sbr.rel (%p721) target = $region44
      $region43: #{resnet_cifar_forward.13} parent=39 // pred_region
        %s724 = smul.u32 32, %s15
        %p725 = scmp.lt.s32.totalorder %s724, 63
        %s726 = scalar_select %p725, %s724, 63
        %s727 = smul.addr %s726, 8
        %s728 = scalar_lea.vmem %s3, %s727
      $region44: #{resnet_cifar_forward.13} parent=39 // pred_fallthru
        _
    $region40: #{resnet_cifar_forward.13} parent=5 // pred_fallthru
      _
  $region6: #{resnet_cifar_forward.13} parent=0 // loop_footer
    %s13 = sadd.s32 1, %s9
  $region7: #{resnet_cifar_forward.13} parent=0 // loop_footer_branch
    %8 = sbr.rel target = $region3
  $region8: #{resnet_cifar_forward.13} parent=0 // loop_exit
    _

// kernel: resnet_cifar_forward.15
$region0: #{resnet_cifar_forward.15}
  #allocation0 [shape = 'u32[]', space=smem, size = 0x4, offset = 0x4, fixed_abs, tag = 'smem constant byte address 0x4 - core index']
  #allocation1 [shape = 'u32[144,128]{1,0:T(1,128)}', space=vmem, size = 0x12000, scoped, tag = 'internal scratch']
  %s0 = inlined_call_operand.vmem [shape: bf16[512,288], index: 0, kind: input, shape index: {}]
  %s1 = inlined_call_operand.vmem [shape: bf16[288,128], index: 1, kind: input, shape index: {}]
  %s2 = inlined_call_operand.vmem [shape: f32[1,128], index: 2, kind: input, shape index: {}]
  %s3 = inlined_call_operand.vmem [shape: f32[512,128], index: 3, kind: input, shape index: {}]
  %s4 = inlined_call_operand.vmem [shape: f32[512,128], index: 4, kind: output, shape index: {}]
  %s5 = sld [smem:[#allocation0]]
  $region49: #{resnet_cifar_forward.15} parent=0
    _
  %s7 = ssub.s32 1, %s5
  %s8 = scalar_select 0, %s7, %s5
  loop: start=0, step=1, limit=4
  $region2: #{resnet_cifar_forward.15} parent=0 // loop_pre_header
    _
  $region3: #{resnet_cifar_forward.15} parent=0 // loop_header
    %s10 = sphi 0, %s14
    %p11 = scmp.ge.s32.totalorder %s10, 4
    %s20 = sphi 0, %s22
    %s23 = sphi 0, %s20
    %s24 = sphi 0, %s23
    %s40 = sphi 0, %s24
    %s44 = sphi 0, %s44
    %s46 = sphi 0, %s44
    %s47 = sphi 0, %s46
    %s61 = sphi 0, %s47
    %s65 = sphi 0, %s65
    %s67 = sphi 0, %s65
    %s68 = sphi 0, %s67
    %s82 = sphi 0, %s68
    %s88 = sphi 0, %s90
    %s91 = sphi 0, %s88
    %s92 = sphi 0, %s91
    %s108 = sphi 0, %s92
    %s114 = sphi 0, %s116
    %s117 = sphi 0, %s114
    %s118 = sphi 0, %s117
    %s134 = sphi 0, %s118
  $region4: #{resnet_cifar_forward.15} parent=0 // loop_header_branch
    %13 = sbr.rel (%p11) target = $region8
  $region5: #{resnet_cifar_forward.15} parent=0 // loop_body
    %s15 = ssub.s32 %s10, 1
    %s16 = ssub.s32 %s10, 2
    %s17 = sadd.s32 %s10, 1
    %s18 = ssub.s32 %s10, %s17
    %p19 = scmp.eq.s32.totalorder %s18, 0
    %s21 = sadd.s32 %s20, 1
    %s22 = scalar_select %p19, %s20, %s21
    %p25 = pneg %p19
    %p26 = scmp.eq.s32.totalorder %s10, 1
    %p27 = por %p25, %p26
    %p28 = scmp.ne.s32.totalorder %s20, %s23
    %p29 = scmp.eq.s32.totalorder %s10, 0
    %p30 = por %p28, %p29
    %p31 = scmp.ne.s32.totalorder %s20, %s23
    %p32 = scmp.eq.s32.totalorder %s15, 1
    %p33 = por %p31, %p32
    %p34 = scmp.ne.s32.totalorder %s23, %s24
    %p35 = scmp.eq.s32.totalorder %s15, 0
    %p36 = por %p34, %p35
    %p37 = scmp.ne.s32.totalorder %s23, %s24
    %p38 = scmp.eq.s32.totalorder %s16, 1
    %p39 = por %p37, %p38
    %p41 = scmp.ne.s32.totalorder %s24, %s40
    %p42 = scmp.eq.s32.totalorder %s16, 0
    %p43 = por %p41, %p42
    %s45 = sadd.s32 %s44, 1
    %p48 = scmp.eq.s32.totalorder %s10, 1
    %p49 = scmp.ne.s32.totalorder %s44, %s46
    %p50 = scmp.eq.s32.totalorder %s10, 0
    %p51 = por %p49, %p50
    %p52 = scmp.ne.s32.totalorder %s44, %s46
    %p53 = scmp.eq.s32.totalorder %s15, 1
    %p54 = por %p52, %p53
    %p55 = scmp.ne.s32.totalorder %s46, %s47
    %p56 = scmp.eq.s32.totalorder %s15, 0
    %p57 = por %p55, %p56
    %p58 = scmp.ne.s32.totalorder %s46, %s47
    %p59 = scmp.eq.s32.totalorder %s16, 1
    %p60 = por %p58, %p59
    %p62 = scmp.ne.s32.totalorder %s47, %s61
    %p63 = scmp.eq.s32.totalorder %s16, 0
    %p64 = por %p62, %p63
    %s66 = sadd.s32 %s65, 1
    %p69 = scmp.eq.s32.totalorder %s10, 1
    %p70 = scmp.ne.s32.totalorder %s65, %s67
    %p71 = scmp.eq.s32.totalorder %s10, 0
    %p72 = por %p70, %p71
    %p73 = scmp.ne.s32.totalorder %s65, %s67
    %p74 = scmp.eq.s32.totalorder %s15, 1
    %p75 = por %p73, %p74
    %p76 = scmp.ne.s32.totalorder %s67, %s68
    %p77 = scmp.eq.s32.totalorder %s15, 0
    %p78 = por %p76, %p77
    %p79 = scmp.ne.s32.totalorder %s67, %s68
    %p80 = scmp.eq.s32.totalorder %s16, 1
    %p81 = por %p79, %p80
    %p83 = scmp.ne.s32.totalorder %s68, %s82
    %p84 = scmp.eq.s32.totalorder %s16, 0
    %p85 = por %p83, %p84
    %s86 = ssub.s32 %s10, %s17
    %p87 = scmp.eq.s32.totalorder %s86, 0
    %s89 = sadd.s32 %s88, 1
    %s90 = scalar_select %p87, %s88, %s89
    %p93 = pneg %p87
    %p94 = scmp.eq.s32.totalorder %s10, 1
    %p95 = por %p93, %p94
    %p96 = scmp.ne.s32.totalorder %s88, %s91
    %p97 = scmp.eq.s32.totalorder %s10, 0
    %p98 = por %p96, %p97
    %p99 = scmp.ne.s32.totalorder %s88, %s91
    %p100 = scmp.eq.s32.totalorder %s15, 1
    %p101 = por %p99, %p100
    %p102 = scmp.ne.s32.totalorder %s91, %s92
    %p103 = scmp.eq.s32.totalorder %s15, 0
    %p104 = por %p102, %p103
    %p105 = scmp.ne.s32.totalorder %s91, %s92
    %p106 = scmp.eq.s32.totalorder %s16, 1
    %p107 = por %p105, %p106
    %p109 = scmp.ne.s32.totalorder %s92, %s108
    %p110 = scmp.eq.s32.totalorder %s16, 0
    %p111 = por %p109, %p110
    %s112 = ssub.s32 %s10, %s17
    %p113 = scmp.eq.s32.totalorder %s112, 0
    %s115 = sadd.s32 %s114, 1
    %s116 = scalar_select %p113, %s114, %s115
    %p119 = pneg %p113
    %p120 = scmp.eq.s32.totalorder %s10, 1
    %p121 = por %p119, %p120
    %p122 = scmp.ne.s32.totalorder %s114, %s117
    %p123 = scmp.eq.s32.totalorder %s10, 0
    %p124 = por %p122, %p123
    %p125 = scmp.ne.s32.totalorder %s114, %s117
    %p126 = scmp.eq.s32.totalorder %s15, 1
    %p127 = por %p125, %p126
    %p128 = scmp.ne.s32.totalorder %s117, %s118
    %p129 = scmp.eq.s32.totalorder %s15, 0
    %p130 = por %p128, %p129
    %p131 = scmp.ne.s32.totalorder %s117, %s118
    %p132 = scmp.eq.s32.totalorder %s16, 1
    %p133 = por %p131, %p132
    %p135 = scmp.ne.s32.totalorder %s118, %s134
    %p136 = scmp.eq.s32.totalorder %s16, 0
    %p137 = por %p135, %p136
    %p138 = scmp.le.s32.totalorder 1, %s10
    %p139 = scmp.lt.s32.totalorder %s10, 3
    %p140 = pnand %p138, %p139
    %p141 = pneg %p140
    // Predicated region
    $region9: #{resnet_cifar_forward.15} parent=5 // pred_check
      _
    $region10: #{resnet_cifar_forward.15} parent=5 // pred_check_branch
      %143 = sbr.rel (%p140) target = $region12
    $region11: #{resnet_cifar_forward.15} parent=5 // pred_region
      %s144 = ssub.s32 %s10, 1
      // Predicated region
      $region13: #{resnet_cifar_forward.15} parent=11 // pred_check
        %p145 = pneg %p57
      $region14: #{resnet_cifar_forward.15} parent=11 // pred_check_branch
        %147 = sbr.rel (%p145) target = $region16
      $region15: #{resnet_cifar_forward.15} parent=11 // pred_region
        _
      $region16: #{resnet_cifar_forward.15} parent=11 // pred_fallthru
        _
      // Predicated region
      $region17: #{resnet_cifar_forward.15} parent=11 // pred_check
        %p148 = pneg %p78
      $region18: #{resnet_cifar_forward.15} parent=11 // pred_check_branch
        %150 = sbr.rel (%p148) target = $region20
      $region19: #{resnet_cifar_forward.15} parent=11 // pred_region
        _
      $region20: #{resnet_cifar_forward.15} parent=11 // pred_fallthru
        _
    $region12: #{resnet_cifar_forward.15} parent=5 // pred_fallthru
      _
    %p151 = scmp.lt.s32.totalorder %s10, 2
    // Predicated region
    $region21: #{resnet_cifar_forward.15} parent=5 // pred_check
      %p152 = pneg %p151
    $region22: #{resnet_cifar_forward.15} parent=5 // pred_check_branch
      %154 = sbr.rel (%p152) target = $region24
    $region23: #{resnet_cifar_forward.15} parent=5 // pred_region
      // Predicated region
      $region25: #{resnet_cifar_forward.15} parent=23 // pred_check
        %p155 = pneg %p30
      $region26: #{resnet_cifar_forward.15} parent=23 // pred_check_branch
        %157 = sbr.rel (%p155) target = $region28
      $region27: #{resnet_cifar_forward.15} parent=23 // pred_region
        %s158 = smul.u32 32, %s10
        %p159 = scmp.lt.s32.totalorder %s158, 63
        %s160 = scalar_select %p159, %s158, 63
        %s161 = smul.addr %s160, 3
        %s162 = smul.addr %s161, 4
        %s163 = scalar_lea.vmem %s0, %s162
        %s164 = smul.u32 32, %s10
      $region28: #{resnet_cifar_forward.15} parent=23 // pred_fallthru
        _
      // Predicated region
      $region29: #{resnet_cifar_forward.15} parent=23 // pred_check
        %p165 = pneg %p98
      $region30: #{resnet_cifar_forward.15} parent=23 // pred_check_branch
        %167 = sbr.rel (%p165) target = $region32
      $region31: #{resnet_cifar_forward.15} parent=23 // pred_region
        %s168 = smul.u32 32, %s10
        %p169 = scmp.lt.s32.totalorder %s168, 63
        %s170 = scalar_select %p169, %s168, 63
        %s171 = smul.addr %s170, 8
        %s172 = scalar_lea.vmem %s3, %s171
        %s173 = smul.u32 32, %s10
      $region32: #{resnet_cifar_forward.15} parent=23 // pred_fallthru
        _
    $region24: #{resnet_cifar_forward.15} parent=5 // pred_fallthru
      _
    %p174 = scmp.le.s32.totalorder 1, %s10
    %p175 = scmp.lt.s32.totalorder %s10, 3
    %p176 = pnand %p174, %p175
    %p177 = pneg %p176
    // Predicated region
    $region33: #{resnet_cifar_forward.15} parent=5 // pred_check
      _
    $region34: #{resnet_cifar_forward.15} parent=5 // pred_check_branch
      %179 = sbr.rel (%p176) target = $region36
    $region35: #{resnet_cifar_forward.15} parent=5 // pred_region
      %s180 = ssub.s32 %s10, 1
      %s181 = smul.u32 32, %s15
      %p182 = scmp.lt.s32.totalorder %s181, 63
      %s183 = scalar_select %p182, %s181, 63
      %s184 = smul.addr %s183, 3
      %s185 = smul.addr %s184, 4
      %s186 = scalar_lea.vmem %s0, %s185
      %p187 = pneg %p36
      %p188 = pneg %p33
      %p189 = pneg %p57
      %p190 = pneg %p54
      %p191 = pneg %p78
      %p192 = pneg %p75
      %s193 = smul.u32 32, %s15
      %p194 = scmp.lt.s32.totalorder %s193, 63
      %s195 = scalar_select %p194, %s193, 63
      %s196 = smul.addr %s195, 8
      %s197 = scalar_lea.vmem %s3, %s196
      %p198 = pneg %p104
      %p199 = pneg %p101
      %p200 = pneg %p130
      %p201 = pneg %p127
      %s202 = smul.u32 32, %s15
      %p203 = scmp.lt.s32.totalorder %s202, 63
      %s204 = scalar_select %p203, %s202, 63
      %s205 = smul.addr %s204, 8
      %s206 = scalar_lea.vmem %s4, %s205
      %s207 = smul.u32 32, %s15
      %p208 = scmp.lt.s32.totalorder %s207, 63
      %s209 = scalar_select %p208, %s207, 63
      %s210 = smul.addr %s209, 3
      %s211 = smul.addr %s210, 4
      %s212 = scalar_lea.vmem %s0, %s211
      %s213 = smul.u32 32, %s15
      %s214 = smul.u32 32, %s15
      %p215 = scmp.lt.s32.totalorder %s214, 63
      %s216 = scalar_select %p215, %s214, 63
      %s217 = smul.addr %s216, 8
      %s218 = scalar_lea.vmem %s3, %s217
      %s219 = smul.u32 32, %s15
      %s220 = smul.u32 32, %s15
      %p221 = scmp.lt.s32.totalorder %s220, 63
      %s222 = scalar_select %p221, %s220, 63
      %s223 = smul.addr %s222, 8
      %s224 = scalar_lea.vmem %s4, %s223
      %s225 = smul.u32 32, %s15
      %v227 = vld [vmem:[%s212] sm:$0xff]
      %v228 = vld [vmem:[%s212 + $0x8] sm:$0xf]
      %v229 = vld [vmem:[%s212 + $0xc] sm:$0xff]
      %v230 = vld [vmem:[%s212 + $0x14] sm:$0xf]
      %v231 = vld [vmem:[%s212 + $0x18] sm:$0xff]
      %v232 = vld [vmem:[%s212 + $0x20] sm:$0xf]
      %v233 = vld [vmem:[%s212 + $0x24] sm:$0xff]
      %v234 = vld [vmem:[%s212 + $0x2c] sm:$0xf]
      %v235 = vld [vmem:[%s212 + $0x30] sm:$0xff]
      %v236 = vld [vmem:[%s212 + $0x38] sm:$0xf]
      %v237 = vld [vmem:[%s212 + $0x3c] sm:$0xff]
      %v238 = vld [vmem:[%s212 + $0x44] sm:$0xf]
      %v239 = vld [vmem:[%s212 + $0x48] sm:$0xff]
      %v240 = vld [vmem:[%s212 + $0x50] sm:$0xf]
      %v241 = vld [vmem:[%s212 + $0x54] sm:$0xff]
      %v242 = vld [vmem:[%s212 + $0x5c] sm:$0xf]
      %v243 = vld [vmem:[%s212 + $0x60] sm:$0xff]
      %v244 = vld [vmem:[%s212 + $0x68] sm:$0xf]
      %v245 = vld [vmem:[%s212 + $0x6c] sm:$0xff]
      %v246 = vld [vmem:[%s212 + $0x74] sm:$0xf]
      %v247 = vld [vmem:[%s212 + $0x78] sm:$0xff]
      %v248 = vld [vmem:[%s212 + $0x80] sm:$0xf]
      %v249 = vld [vmem:[%s212 + $0x84] sm:$0xff]
      %v250 = vld [vmem:[%s212 + $0x8c] sm:$0xf]
      %v251 = vld [vmem:[%s212 + $0x90] sm:$0xff]
      %v252 = vld [vmem:[%s212 + $0x98] sm:$0xf]
      %v253 = vld [vmem:[%s212 + $0x9c] sm:$0xff]
      %v254 = vld [vmem:[%s212 + $0xa4] sm:$0xf]
      %v255 = vld [vmem:[%s212 + $0xa8] sm:$0xff]
      %v256 = vld [vmem:[%s212 + $0xb0] sm:$0xf]
      %v257 = vld [vmem:[%s212 + $0xb4] sm:$0xff]
      %v258 = vld [vmem:[%s212 + $0xbc] sm:$0xf]
      %v259 = vld [vmem:[%s212 + $0xc0] sm:$0xff]
      %v260 = vld [vmem:[%s212 + $0xc8] sm:$0xf]
      %v261 = vld [vmem:[%s212 + $0xcc] sm:$0xff]
      %v262 = vld [vmem:[%s212 + $0xd4] sm:$0xf]
      %v263 = vld [vmem:[%s212 + $0xd8] sm:$0xff]
      %v264 = vld [vmem:[%s212 + $0xe0] sm:$0xf]
      %v265 = vld [vmem:[%s212 + $0xe4] sm:$0xff]
      %v266 = vld [vmem:[%s212 + $0xec] sm:$0xf]
      %v267 = vld [vmem:[%s212 + $0xf0] sm:$0xff]
      %v268 = vld [vmem:[%s212 + $0xf8] sm:$0xf]
      %v269 = vld [vmem:[%s212 + $0xfc] sm:$0xff]
      %v270 = vld [vmem:[%s212 + $0x104] sm:$0xf]
      %v271 = vld [vmem:[%s212 + $0x108] sm:$0xff]
      %v272 = vld [vmem:[%s212 + $0x110] sm:$0xf]
      %v273 = vld [vmem:[%s212 + $0x114] sm:$0xff]
      %v274 = vld [vmem:[%s212 + $0x11c] sm:$0xf]
      %v275 = vld [vmem:[%s212 + $0x120] sm:$0xff]
      %v276 = vld [vmem:[%s212 + $0x128] sm:$0xf]
      %v277 = vld [vmem:[%s212 + $0x12c] sm:$0xff]
      %v278 = vld [vmem:[%s212 + $0x134] sm:$0xf]
      %v279 = vld [vmem:[%s212 + $0x138] sm:$0xff]
      %v280 = vld [vmem:[%s212 + $0x140] sm:$0xf]
      %v281 = vld [vmem:[%s212 + $0x144] sm:$0xff]
      %v282 = vld [vmem:[%s212 + $0x14c] sm:$0xf]
      %v283 = vld [vmem:[%s212 + $0x150] sm:$0xff]
      %v284 = vld [vmem:[%s212 + $0x158] sm:$0xf]
      %v285 = vld [vmem:[%s212 + $0x15c] sm:$0xff]
      %v286 = vld [vmem:[%s212 + $0x164] sm:$0xf]
      %v287 = vld [vmem:[%s212 + $0x168] sm:$0xff]
      %v288 = vld [vmem:[%s212 + $0x170] sm:$0xf]
      %v289 = vld [vmem:[%s212 + $0x174] sm:$0xff]
      %v290 = vld [vmem:[%s212 + $0x17c] sm:$0xf]
      %v291 = vld [vmem:[%s1] sm:$0xf]
      %v292 = vld [vmem:[%s1 + $0x4] sm:$0xf]
      %v293 = vld [vmem:[%s1 + $0x8] sm:$0xf]
      %v294 = vld [vmem:[%s1 + $0xc] sm:$0xf]
      %v295 = vld [vmem:[%s1 + $0x10] sm:$0xf]
      %v296 = vld [vmem:[%s1 + $0x14] sm:$0xf]
      %v297 = vld [vmem:[%s1 + $0x18] sm:$0xf]
      %v298 = vld [vmem:[%s1 + $0x1c] sm:$0xf]
      %v299 = vld [vmem:[%s1 + $0x20] sm:$0xf]
      %v300 = vld [vmem:[%s1 + $0x24] sm:$0xf]
      %v301 = vld [vmem:[%s1 + $0x28] sm:$0xf]
      %v302 = vld [vmem:[%s1 + $0x2c] sm:$0xf]
      %v303 = vld [vmem:[%s1 + $0x30] sm:$0xf]
      %v304 = vld [vmem:[%s1 + $0x34] sm:$0xf]
      %v305 = vld [vmem:[%s1 + $0x38] sm:$0xf]
      %v306 = vld [vmem:[%s1 + $0x3c] sm:$0xf]
      %v307 = vld [vmem:[%s1 + $0x40] sm:$0xf]
      %v308 = vld [vmem:[%s1 + $0x44] sm:$0xf]
      %v309 = vld [vmem:[%s1 + $0x48] sm:$0xf]
      %v310 = vld [vmem:[%s1 + $0x4c] sm:$0xf]
      %v311 = vld [vmem:[%s1 + $0x50] sm:$0xf]
      %v312 = vld [vmem:[%s1 + $0x54] sm:$0xf]
      %v313 = vld [vmem:[%s1 + $0x58] sm:$0xf]
      %v314 = vld [vmem:[%s1 + $0x5c] sm:$0xf]
      %v315 = vld [vmem:[%s1 + $0x60] sm:$0xf]
      %v316 = vld [vmem:[%s1 + $0x64] sm:$0xf]
      %v317 = vld [vmem:[%s1 + $0x68] sm:$0xf]
      %v318 = vld [vmem:[%s1 + $0x6c] sm:$0xf]
      %v319 = vld [vmem:[%s1 + $0x70] sm:$0xf]
      %v320 = vld [vmem:[%s1 + $0x74] sm:$0xf]
      %v321 = vld [vmem:[%s1 + $0x78] sm:$0xf]
      %v322 = vld [vmem:[%s1 + $0x7c] sm:$0xf]
      %v323 = vld [vmem:[%s1 + $0x80] sm:$0xf]
      %v324 = vld [vmem:[%s1 + $0x84] sm:$0xf]
      %v325 = vld [vmem:[%s1 + $0x88] sm:$0xf]
      %v326 = vld [vmem:[%s1 + $0x8c] sm:$0xf]
      %v327 = vld [vmem:[%s2] sm:$0x1]
      %v329 = vlaneseq
      %v330 = vshrl.u32 %v329, 7
      %v331 = vsub.s32 0, %v330
      %v332 = vrot.slane %v327, %v331
      %v398 = vunpack.c.l.b16 %v227
      %v399 = vunpack.c.h.b16 %v227
      %v400 = vunpack.c.l.b16 %v228
      %v401 = vunpack.c.l.b16 %v229
      %v402 = vunpack.c.h.b16 %v229
      %v403 = vunpack.c.l.b16 %v230
      %v404 = vunpack.c.l.b16 %v231
      %v405 = vunpack.c.h.b16 %v231
      %v406 = vunpack.c.l.b16 %v232
      %v407 = vunpack.c.l.b16 %v233
      %v408 = vunpack.c.h.b16 %v233
      %v409 = vunpack.c.l.b16 %v234
      %v410 = vunpack.c.l.b16 %v235
      %v411 = vunpack.c.h.b16 %v235
      %v412 = vunpack.c.l.b16 %v236
      %v413 = vunpack.c.l.b16 %v237
      %v414 = vunpack.c.h.b16 %v237
      %v415 = vunpack.c.l.b16 %v238
      %v416 = vunpack.c.l.b16 %v239
      %v417 = vunpack.c.h.b16 %v239
      %v418 = vunpack.c.l.b16 %v240
      %v419 = vunpack.c.l.b16 %v241
      %v420 = vunpack.c.h.b16 %v241
      %v421 = vunpack.c.l.b16 %v242
      %v422 = vunpack.c.l.b16 %v243
      %v423 = vunpack.c.h.b16 %v243
      %v424 = vunpack.c.l.b16 %v244
      %v425 = vunpack.c.l.b16 %v245
      %v426 = vunpack.c.h.b16 %v245
      %v427 = vunpack.c.l.b16 %v246
      %v428 = vunpack.c.l.b16 %v247
      %v429 = vunpack.c.h.b16 %v247
      %v430 = vunpack.c.l.b16 %v248
      %v431 = vunpack.c.l.b16 %v249
      %v432 = vunpack.c.h.b16 %v249
      %v433 = vunpack.c.l.b16 %v250
      %v434 = vunpack.c.l.b16 %v251
      %v435 = vunpack.c.h.b16 %v251
      %v436 = vunpack.c.l.b16 %v252
      %v437 = vunpack.c.l.b16 %v253
      %v438 = vunpack.c.h.b16 %v253
      %v439 = vunpack.c.l.b16 %v254
      %v440 = vunpack.c.l.b16 %v255
      %v441 = vunpack.c.h.b16 %v255
      %v442 = vunpack.c.l.b16 %v256
      %v443 = vunpack.c.l.b16 %v257
      %v444 = vunpack.c.h.b16 %v257
      %v445 = vunpack.c.l.b16 %v258
      %v446 = vunpack.c.l.b16 %v259
      %v447 = vunpack.c.h.b16 %v259
      %v448 = vunpack.c.l.b16 %v260
      %v449 = vunpack.c.l.b16 %v261
      %v450 = vunpack.c.h.b16 %v261
      %v451 = vunpack.c.l.b16 %v262
      %v452 = vunpack.c.l.b16 %v263
      %v453 = vunpack.c.h.b16 %v263
      %v454 = vunpack.c.l.b16 %v264
      %v455 = vunpack.c.l.b16 %v265
      %v456 = vunpack.c.h.b16 %v265
      %v457 = vunpack.c.l.b16 %v266
      %v458 = vunpack.c.l.b16 %v267
      %v459 = vunpack.c.h.b16 %v267
      %v460 = vunpack.c.l.b16 %v268
      %v461 = vunpack.c.l.b16 %v269
      %v462 = vunpack.c.h.b16 %v269
      %v463 = vunpack.c.l.b16 %v270
      %v464 = vunpack.c.l.b16 %v271
      %v465 = vunpack.c.h.b16 %v271
      %v466 = vunpack.c.l.b16 %v272
      %v467 = vunpack.c.l.b16 %v273
      %v468 = vunpack.c.h.b16 %v273
      %v469 = vunpack.c.l.b16 %v274
      %v470 = vunpack.c.l.b16 %v275
      %v471 = vunpack.c.h.b16 %v275
      %v472 = vunpack.c.l.b16 %v276
      %v473 = vunpack.c.l.b16 %v277
      %v474 = vunpack.c.h.b16 %v277
      %v475 = vunpack.c.l.b16 %v278
      %v476 = vunpack.c.l.b16 %v279
      %v477 = vunpack.c.h.b16 %v279
      %v478 = vunpack.c.l.b16 %v280
      %v479 = vunpack.c.l.b16 %v281
      %v480 = vunpack.c.h.b16 %v281
      %v481 = vunpack.c.l.b16 %v282
      %v482 = vunpack.c.l.b16 %v283
      %v483 = vunpack.c.h.b16 %v283
      %v484 = vunpack.c.l.b16 %v284
      %v485 = vunpack.c.l.b16 %v285
      %v486 = vunpack.c.h.b16 %v285
      %v487 = vunpack.c.l.b16 %v286
      %v488 = vunpack.c.l.b16 %v287
      %v489 = vunpack.c.h.b16 %v287
      %v490 = vunpack.c.l.b16 %v288
      %v491 = vunpack.c.l.b16 %v289
      %v492 = vunpack.c.h.b16 %v289
      %v493 = vunpack.c.l.b16 %v290
      %v494 = vpack.c.b16 %v401, %v398
      %v495 = vpack.c.b16 %v402, %v399
      %v496 = vpack.c.b16 %v403, %v400
      %v497 = vpack.c.b16 %v407, %v404
      %v498 = vpack.c.b16 %v408, %v405
      %v499 = vpack.c.b16 %v409, %v406
      %v500 = vpack.c.b16 %v413, %v410
      %v501 = vpack.c.b16 %v414, %v411
      %v502 = vpack.c.b16 %v415, %v412
      %v503 = vpack.c.b16 %v419, %v416
      %v504 = vpack.c.b16 %v420, %v417
      %v505 = vpack.c.b16 %v421, %v418
      %v506 = vpack.c.b16 %v425, %v422
      %v507 = vpack.c.b16 %v426, %v423
      %v508 = vpack.c.b16 %v427, %v424
      %v509 = vpack.c.b16 %v431, %v428
      %v510 = vpack.c.b16 %v432, %v429
      %v511 = vpack.c.b16 %v433, %v430
      %v512 = vpack.c.b16 %v437, %v434
      %v513 = vpack.c.b16 %v438, %v435
      %v514 = vpack.c.b16 %v439, %v436
      %v515 = vpack.c.b16 %v443, %v440
      %v516 = vpack.c.b16 %v444, %v441
      %v517 = vpack.c.b16 %v445, %v442
      %v518 = vpack.c.b16 %v449, %v446
      %v519 = vpack.c.b16 %v450, %v447
      %v520 = vpack.c.b16 %v451, %v448
      %v521 = vpack.c.b16 %v455, %v452
      %v522 = vpack.c.b16 %v456, %v453
      %v523 = vpack.c.b16 %v457, %v454
      %v524 = vpack.c.b16 %v461, %v458
      %v525 = vpack.c.b16 %v462, %v459
      %v526 = vpack.c.b16 %v463, %v460
      %v527 = vpack.c.b16 %v467, %v464
      %v528 = vpack.c.b16 %v468, %v465
      %v529 = vpack.c.b16 %v469, %v466
      %v530 = vpack.c.b16 %v473, %v470
      %v531 = vpack.c.b16 %v474, %v471
      %v532 = vpack.c.b16 %v475, %v472
      %v533 = vpack.c.b16 %v479, %v476
      %v534 = vpack.c.b16 %v480, %v477
      %v535 = vpack.c.b16 %v481, %v478
      %v536 = vpack.c.b16 %v485, %v482
      %v537 = vpack.c.b16 %v486, %v483
      %v538 = vpack.c.b16 %v487, %v484
      %v539 = vpack.c.b16 %v491, %v488
      %v540 = vpack.c.b16 %v492, %v489
      %v541 = vpack.c.b16 %v493, %v490
      %v610 = vunpack.c.l.b16 %v291
      %v611 = vunpack.c.l.b16 %v292
      %v612 = vunpack.c.l.b16 %v293
      %v613 = vunpack.c.l.b16 %v294
      %v614 = vunpack.c.l.b16 %v295
      %v615 = vunpack.c.l.b16 %v296
      %v616 = vunpack.c.l.b16 %v297
      %v617 = vunpack.c.l.b16 %v298
      %v618 = vunpack.c.l.b16 %v299
      %v619 = vunpack.c.l.b16 %v300
      %v620 = vunpack.c.l.b16 %v301
      %v621 = vunpack.c.l.b16 %v302
      %v622 = vunpack.c.l.b16 %v303
      %v623 = vunpack.c.l.b16 %v304
      %v624 = vunpack.c.l.b16 %v305
      %v625 = vunpack.c.l.b16 %v306
      %v626 = vunpack.c.l.b16 %v307
      %v627 = vunpack.c.l.b16 %v308
      %v628 = vunpack.c.l.b16 %v309
      %v629 = vunpack.c.l.b16 %v310
      %v630 = vunpack.c.l.b16 %v311
      %v631 = vunpack.c.l.b16 %v312
      %v632 = vunpack.c.l.b16 %v313
      %v633 = vunpack.c.l.b16 %v314
      %v634 = vunpack.c.l.b16 %v315
      %v635 = vunpack.c.l.b16 %v316
      %v636 = vunpack.c.l.b16 %v317
      %v637 = vunpack.c.l.b16 %v318
      %v638 = vunpack.c.l.b16 %v319
      %v639 = vunpack.c.l.b16 %v320
      %v640 = vunpack.c.l.b16 %v321
      %v641 = vunpack.c.l.b16 %v322
      %v642 = vunpack.c.l.b16 %v323
      %v643 = vunpack.c.l.b16 %v324
      %v644 = vunpack.c.l.b16 %v325
      %v645 = vunpack.c.l.b16 %v326
      %v646 = vpack.c.b16 %v611, %v610
      %v647 = vpack.c.b16 %v613, %v612
      %v648 = vpack.c.b16 %v615, %v614
      %v649 = vpack.c.b16 %v617, %v616
      %v650 = vpack.c.b16 %v619, %v618
      %v651 = vpack.c.b16 %v621, %v620
      %v652 = vpack.c.b16 %v623, %v622
      %v653 = vpack.c.b16 %v625, %v624
      %v654 = vpack.c.b16 %v627, %v626
      %v655 = vpack.c.b16 %v629, %v628
      %v656 = vpack.c.b16 %v631, %v630
      %v657 = vpack.c.b16 %v633, %v632
      %v658 = vpack.c.b16 %v635, %v634
      %v659 = vpack.c.b16 %v637, %v636
      %v660 = vpack.c.b16 %v639, %v638
      %v661 = vpack.c.b16 %v641, %v640
      %v662 = vpack.c.b16 %v643, %v642
      %v663 = vpack.c.b16 %v645, %v644
      %vm682 = vcmask 261120
      %v684 = vsel %vm682, %v496, 0
      %v687 = vsel %vm682, %v499, 0
      %v690 = vsel %vm682, %v502, 0
      %v693 = vsel %vm682, %v505, 0
      %v696 = vsel %vm682, %v508, 0
      %v699 = vsel %vm682, %v511, 0
      %v702 = vsel %vm682, %v514, 0
      %v705 = vsel %vm682, %v517, 0
      %v708 = vsel %vm682, %v520, 0
      %v711 = vsel %vm682, %v523, 0
      %v714 = vsel %vm682, %v526, 0
      %v717 = vsel %vm682, %v529, 0
      %v720 = vsel %vm682, %v532, 0
      %v723 = vsel %vm682, %v535, 0
      %v726 = vsel %vm682, %v538, 0
      %v729 = vsel %vm682, %v541, 0
      %731 = vmatprep.subr.bf16.mxu0 0
      %732 = vmatpush1.bf16.msra.mxu0 %v646
      %733 = vmatprep.subr.bf16.mxu0 0
      %734 = vmatpush1.bf16.msra.mxu0 %v647
      %735 = vmatprep.subr.bf16.mxu0 0
      %736 = vmatpush1.bf16.msra.mxu0 %v648
      %737 = vmatprep.subr.bf16.mxu0 0
      %738 = vmatpush1.bf16.msra.mxu0 %v649
      %739 = vmatprep.subr.bf16.mxu0 0
      %740 = vmatpush1.bf16.msra.mxu0 %v650
      %741 = vmatprep.subr.bf16.mxu0 0
      %742 = vmatpush1.bf16.msra.mxu0 %v651
      %743 = vmatprep.subr.bf16.mxu0 0
      %744 = vmatpush1.bf16.msra.mxu0 %v652
      %745 = vmatprep.subr.bf16.mxu0 0
      %746 = vmatpush1.bf16.msra.mxu0 %v653
      %747 = vmatprep.subr.bf16.mxu0 0
      %748 = vmatpush1.bf16.msra.mxu0 %v654
      %749 = vmatprep.subr.bf16.mxu0 0
      %750 = vmatpush1.bf16.msra.mxu0 %v655
      %751 = vmatprep.subr.bf16.mxu0 0
      %752 = vmatpush1.bf16.msra.mxu0 %v656
      %753 = vmatprep.subr.bf16.mxu0 0
      %754 = vmatpush1.bf16.msra.mxu0 %v657
      %755 = vmatprep.subr.bf16.mxu0 0
      %756 = vmatpush1.bf16.msra.mxu0 %v658
      %757 = vmatprep.subr.bf16.mxu0 0
      %758 = vmatpush1.bf16.msra.mxu0 %v659
      %759 = vmatprep.subr.bf16.mxu0 0
      %760 = vmatpush1.bf16.msra.mxu0 %v660
      %761 = vmatprep.subr.bf16.mxu0 0
      %762 = vmatpush1.bf16.msra.mxu0 %v661
      %763 = vmatprep.mubr.bf16.mxu0 %v495
      %764 = vmatmul.mubr.bf16.gmra.mrb[0].mxu0 %v494
      %v765 = vpop.f32.mrb[0].mxu0
      %v766 = vadd.f32 %v332, %v765
      %v767 = vpop.f32.mrb[0].mxu0
      %v768 = vpop.f32.mrb[0].mxu0
      %v769 = vadd.f32 %v332, %v768
      %v770 = vpop.f32.mrb[0].mxu0
      %771 = vmatprep.mubr.bf16.mxu0 %v498
      %772 = vmatmul.mubr.bf16.gmra.mrb[0].mxu0 %v497
      %v773 = vpop.f32.mrb[0].mxu0
      %v774 = vadd.f32 %v332, %v773
      %v775 = vpop.f32.mrb[0].mxu0
      %v776 = vpop.f32.mrb[0].mxu0
      %v777 = vadd.f32 %v332, %v776
      %v778 = vpop.f32.mrb[0].mxu0
      %779 = vmatprep.mubr.bf16.mxu0 %v501
      %780 = vmatmul.mubr.bf16.gmra.mrb[0].mxu0 %v500
      %v781 = vpop.f32.mrb[0].mxu0
      %v782 = vadd.f32 %v332, %v781
      %v783 = vpop.f32.mrb[0].mxu0
      %v784 = vpop.f32.mrb[0].mxu0
      %v785 = vadd.f32 %v332, %v784
      %v786 = vpop.f32.mrb[0].mxu0
      %787 = vmatprep.mubr.bf16.mxu0 %v504
      %788 = vmatmul.mubr.bf16.gmra.mrb[0].mxu0 %v503
      %v789 = vpop.f32.mrb[0].mxu0
      %v790 = vadd.f32 %v332, %v789
      %v791 = vpop.f32.mrb[0].mxu0
      %v792 = vpop.f32.mrb[0].mxu0
      %v793 = vadd.f32 %v332, %v792
      %v794 = vpop.f32.mrb[0].mxu0
      %795 = vmatprep.mubr.bf16.mxu0 %v507
      %796 = vmatmul.mubr.bf16.gmra.mrb[0].mxu0 %v506
      %v797 = vpop.f32.mrb[0].mxu0
      %v798 = vadd.f32 %v332, %v797
      %v799 = vpop.f32.mrb[0].mxu0
      %v800 = vpop.f32.mrb[0].mxu0
      %v801 = vadd.f32 %v332, %v800
      %v802 = vpop.f32.mrb[0].mxu0
      %803 = vmatprep.mubr.bf16.mxu0 %v510
      %804 = vmatmul.mubr.bf16.gmra.mrb[0].mxu0 %v509
      %v805 = vpop.f32.mrb[0].mxu0
      %v806 = vadd.f32 %v332, %v805
      %v807 = vpop.f32.mrb[0].mxu0
      %v808 = vpop.f32.mrb[0].mxu0
      %v809 = vadd.f32 %v332, %v808
      %v810 = vpop.f32.mrb[0].mxu0
      %811 = vmatprep.mubr.bf16.mxu0 %v513
      %812 = vmatmul.mubr.bf16.gmra.mrb[0].mxu0 %v512
      %v813 = vpop.f32.mrb[0].mxu0
      %v814 = vadd.f32 %v332, %v813
      %v815 = vpop.f32.mrb[0].mxu0
      %v816 = vpop.f32.mrb[0].mxu0
      %v817 = vadd.f32 %v332, %v816
      %v818 = vpop.f32.mrb[0].mxu0
      %819 = vmatprep.mubr.bf16.mxu0 %v516
      %820 = vmatmul.mubr.bf16.gmra.mrb[0].mxu0 %v515
      %v821 = vpop.f32.mrb[0].mxu0
      %v822 = vadd.f32 %v332, %v821
      %v823 = vpop.f32.mrb[0].mxu0
      %v824 = vpop.f32.mrb[0].mxu0
      %v825 = vadd.f32 %v332, %v824
      %v826 = vpop.f32.mrb[0].mxu0
      %827 = vmatprep.mubr.bf16.mxu0 %v519
      %828 = vmatmul.mubr.bf16.gmra.mrb[0].mxu0 %v518
      %v829 = vpop.f32.mrb[0].mxu0
      %v830 = vadd.f32 %v332, %v829
      %v831 = vpop.f32.mrb[0].mxu0
      %v832 = vpop.f32.mrb[0].mxu0
      %v833 = vadd.f32 %v332, %v832
      %v834 = vpop.f32.mrb[0].mxu0
      %835 = vmatprep.mubr.bf16.mxu0 %v522
      %836 = vmatmul.mubr.bf16.gmra.mrb[0].mxu0 %v521
      %v837 = vpop.f32.mrb[0].mxu0
      %v838 = vadd.f32 %v332, %v837
      %v839 = vpop.f32.mrb[0].mxu0
      %v840 = vpop.f32.mrb[0].mxu0
      %v841 = vadd.f32 %v332, %v840
      %v842 = vpop.f32.mrb[0].mxu0
      %843 = vmatprep.mubr.bf16.mxu0 %v525
      %844 = vmatmul.mubr.bf16.gmra.mrb[0].mxu0 %v524
      %v845 = vpop.f32.mrb[0].mxu0
      %v846 = vadd.f32 %v332, %v845
      %v847 = vpop.f32.mrb[0].mxu0
      %v848 = vpop.f32.mrb[0].mxu0
      %v849 = vadd.f32 %v332, %v848
      %v850 = vpop.f32.mrb[0].mxu0
      %851 = vmatprep.mubr.bf16.mxu0 %v528
      %852 = vmatmul.mubr.bf16.gmra.mrb[0].mxu0 %v527
      %v853 = vpop.f32.mrb[0].mxu0
      %v854 = vadd.f32 %v332, %v853
      %v855 = vpop.f32.mrb[0].mxu0
      %v856 = vpop.f32.mrb[0].mxu0
      %v857 = vadd.f32 %v332, %v856
      %v858 = vpop.f32.mrb[0].mxu0
      %859 = vmatprep.mubr.bf16.mxu0 %v531
      %860 = vmatmul.mubr.bf16.gmra.mrb[0].mxu0 %v530
      %v861 = vpop.f32.mrb[0].mxu0
      %v862 = vadd.f32 %v332, %v861
      %v863 = vpop.f32.mrb[0].mxu0
      %v864 = vpop.f32.mrb[0].mxu0
      %v865 = vadd.f32 %v332, %v864
      %v866 = vpop.f32.mrb[0].mxu0
      %867 = vmatprep.mubr.bf16.mxu0 %v534
      %868 = vmatmul.mubr.bf16.gmra.mrb[0].mxu0 %v533
      %v869 = vpop.f32.mrb[0].mxu0
      %v870 = vadd.f32 %v332, %v869
      %v871 = vpop.f32.mrb[0].mxu0
      %v872 = vpop.f32.mrb[0].mxu0
      %v873 = vadd.f32 %v332, %v872
      %v874 = vpop.f32.mrb[0].mxu0
      %875 = vmatprep.mubr.bf16.mxu0 %v537
      %876 = vmatmul.mubr.bf16.gmra.mrb[0].mxu0 %v536
      %v877 = vpop.f32.mrb[0].mxu0
      %v878 = vadd.f32 %v332, %v877
      %v879 = vpop.f32.mrb[0].mxu0
      %v880 = vpop.f32.mrb[0].mxu0
      %v881 = vadd.f32 %v332, %v880
      %v882 = vpop.f32.mrb[0].mxu0
      %883 = vmatprep.mubr.bf16.mxu0 %v540
      %884 = vmatmul.mubr.bf16.gmra.mrb[0].mxu0 %v539
      %v885 = vpop.f32.mrb[0].mxu0
      %v886 = vadd.f32 %v332, %v885
      %v887 = vpop.f32.mrb[0].mxu0
      %v888 = vpop.f32.mrb[0].mxu0
      %v889 = vadd.f32 %v332, %v888
      %v890 = vpop.f32.mrb[0].mxu0
      %891 = vdwg.mxu0
      %892 = vmatprep.subr.bf16.mxu0 0
      %893 = vmatpush1.bf16.msra.mxu0 %v662
      %894 = vmatprep.subr.bf16.mxu0 0
      %895 = vmatpush1.bf16.msra.mxu0 %v663
      %896 = vmatprep.subr.bf16.mxu0 0
      %897 = vmatpush1.bf16.msra.mxu0 0
      %898 = vmatprep.subr.bf16.mxu0 0
      %899 = vmatpush1.bf16.msra.mxu0 0
      %900 = vmatprep.subr.bf16.mxu0 0
      %901 = vmatpush1.bf16.msra.mxu0 0
      %902 = vmatprep.subr.bf16.mxu0 0
      %903 = vmatpush1.bf16.msra.mxu0 0
      %904 = vmatprep.subr.bf16.mxu0 0
      %905 = vmatpush1.bf16.msra.mxu0 0
      %906 = vmatprep.subr.bf16.mxu0 0
      %907 = vmatpush1.bf16.msra.mxu0 0
      %908 = vmatprep.subr.bf16.mxu0 0
      %909 = vmatpush1.bf16.msra.mxu0 0
      %910 = vmatprep.subr.bf16.mxu0 0
      %911 = vmatpush1.bf16.msra.mxu0 0
      %912 = vmatprep.subr.bf16.mxu0 0
      %913 = vmatpush1.bf16.msra.mxu0 0
      %914 = vmatprep.subr.bf16.mxu0 0
      %915 = vmatpush1.bf16.msra.mxu0 0
      %916 = vmatprep.subr.bf16.mxu0 0
      %917 = vmatpush1.bf16.msra.mxu0 0
      %918 = vmatprep.subr.bf16.mxu0 0
      %919 = vmatpush1.bf16.msra.mxu0 0
      %920 = vmatprep.subr.bf16.mxu0 0
      %921 = vmatpush1.bf16.msra.mxu0 0
      %922 = vmatprep.subr.bf16.mxu0 0
      %923 = vmatpush1.bf16.msra.mxu0 0
      %924 = vmatprep.mubr.bf16.mxu0 0
      %925 = vmatmul.mubr.bf16.gmra.mrb[0].mxu0 %v684
      %v926 = vpop.f32.mrb[0].mxu0
      %v927 = vadd.f32 %v766, %v926
      %v928 = vpop.f32.mrb[0].mxu0
      %v929 = vpop.f32.mrb[0].mxu0
      %v930 = vadd.f32 %v769, %v929
      %v931 = vpop.f32.mrb[0].mxu0
      %932 = vmatprep.mubr.bf16.mxu0 0
      %933 = vmatmul.mubr.bf16.gmra.mrb[0].mxu0 %v687
      %v934 = vpop.f32.mrb[0].mxu0
      %v935 = vadd.f32 %v774, %v934
      %v936 = vpop.f32.mrb[0].mxu0
      %v937 = vpop.f32.mrb[0].mxu0
      %v938 = vadd.f32 %v777, %v937
      %v939 = vpop.f32.mrb[0].mxu0
      %940 = vmatprep.mubr.bf16.mxu0 0
      %941 = vmatmul.mubr.bf16.gmra.mrb[0].mxu0 %v690
      %v942 = vpop.f32.mrb[0].mxu0
      %v943 = vadd.f32 %v782, %v942
      %v944 = vpop.f32.mrb[0].mxu0
      %v945 = vpop.f32.mrb[0].mxu0
      %v946 = vadd.f32 %v785, %v945
      %v947 = vpop.f32.mrb[0].mxu0
      %948 = vmatprep.mubr.bf16.mxu0 0
      %949 = vmatmul.mubr.bf16.gmra.mrb[0].mxu0 %v693
      %v950 = vpop.f32.mrb[0].mxu0
      %v951 = vadd.f32 %v790, %v950
      %v952 = vpop.f32.mrb[0].mxu0
      %v953 = vpop.f32.mrb[0].mxu0
      %v954 = vadd.f32 %v793, %v953
      %v955 = vpop.f32.mrb[0].mxu0
      %956 = vmatprep.mubr.bf16.mxu0 0
      %957 = vmatmul.mubr.bf16.gmra.mrb[0].mxu0 %v696
      %v958 = vpop.f32.mrb[0].mxu0
      %v959 = vadd.f32 %v798, %v958
      %v960 = vpop.f32.mrb[0].mxu0
      %v961 = vpop.f32.mrb[0].mxu0
      %v962 = vadd.f32 %v801, %v961
      %v963 = vpop.f32.mrb[0].mxu0
      %964 = vmatprep.mubr.bf16.mxu0 0
      %965 = vmatmul.mubr.bf16.gmra.mrb[0].mxu0 %v699
      %v966 = vpop.f32.mrb[0].mxu0
      %v967 = vadd.f32 %v806, %v966
      %v968 = vpop.f32.mrb[0].mxu0
      %v969 = vpop.f32.mrb[0].mxu0
      %v970 = vadd.f32 %v809, %v969
      %v971 = vpop.f32.mrb[0].mxu0
      %972 = vmatprep.mubr.bf16.mxu0 0
      %973 = vmatmul.mubr.bf16.gmra.mrb[0].mxu0 %v702
      %v974 = vpop.f32.mrb[0].mxu0
      %v975 = vadd.f32 %v814, %v974
      %v976 = vpop.f32.mrb[0].mxu0
      %v977 = vpop.f32.mrb[0].mxu0
      %v978 = vadd.f32 %v817, %v977
      %v979 = vpop.f32.mrb[0].mxu0
      %980 = vmatprep.mubr.bf16.mxu0 0
      %981 = vmatmul.mubr.bf16.gmra.mrb[0].mxu0 %v705
      %v982 = vpop.f32.mrb[0].mxu0
      %v983 = vadd.f32 %v822, %v982
      %v984 = vpop.f32.mrb[0].mxu0
      %v985 = vpop.f32.mrb[0].mxu0
      %v986 = vadd.f32 %v825, %v985
      %v987 = vpop.f32.mrb[0].mxu0
      %988 = vmatprep.mubr.bf16.mxu0 0
      %989 = vmatmul.mubr.bf16.gmra.mrb[0].mxu0 %v708
      %v990 = vpop.f32.mrb[0].mxu0
      %v991 = vadd.f32 %v830, %v990
      %v992 = vpop.f32.mrb[0].mxu0
      %v993 = vpop.f32.mrb[0].mxu0
      %v994 = vadd.f32 %v833, %v993
      %v995 = vpop.f32.mrb[0].mxu0
      %996 = vmatprep.mubr.bf16.mxu0 0
      %997 = vmatmul.mubr.bf16.gmra.mrb[0].mxu0 %v711
      %v998 = vpop.f32.mrb[0].mxu0
      %v999 = vadd.f32 %v838, %v998
      %v1000 = vpop.f32.mrb[0].mxu0
      %v1001 = vpop.f32.mrb[0].mxu0
      %v1002 = vadd.f32 %v841, %v1001
      %v1003 = vpop.f32.mrb[0].mxu0
      %1004 = vmatprep.mubr.bf16.mxu0 0
      %1005 = vmatmul.mubr.bf16.gmra.mrb[0].mxu0 %v714
      %v1006 = vpop.f32.mrb[0].mxu0
      %v1007 = vadd.f32 %v846, %v1006
      %v1008 = vpop.f32.mrb[0].mxu0
      %v1009 = vpop.f32.mrb[0].mxu0
      %v1010 = vadd.f32 %v849, %v1009
      %v1011 = vpop.f32.mrb[0].mxu0
      %1012 = vmatprep.mubr.bf16.mxu0 0
      %1013 = vmatmul.mubr.bf16.gmra.mrb[0].mxu0 %v717
      %v1014 = vpop.f32.mrb[0].mxu0
      %v1015 = vadd.f32 %v854, %v1014
      %v1016 = vpop.f32.mrb[0].mxu0
      %v1017 = vpop.f32.mrb[0].mxu0
      %v1018 = vadd.f32 %v857, %v1017
      %v1019 = vpop.f32.mrb[0].mxu0
      %1020 = vmatprep.mubr.bf16.mxu0 0
      %1021 = vmatmul.mubr.bf16.gmra.mrb[0].mxu0 %v720
      %v1022 = vpop.f32.mrb[0].mxu0
      %v1023 = vadd.f32 %v862, %v1022
      %v1024 = vpop.f32.mrb[0].mxu0
      %v1025 = vpop.f32.mrb[0].mxu0
      %v1026 = vadd.f32 %v865, %v1025
      %v1027 = vpop.f32.mrb[0].mxu0
      %1028 = vmatprep.mubr.bf16.mxu0 0
      %1029 = vmatmul.mubr.bf16.gmra.mrb[0].mxu0 %v723
      %v1030 = vpop.f32.mrb[0].mxu0
      %v1031 = vadd.f32 %v870, %v1030
      %v1032 = vpop.f32.mrb[0].mxu0
      %v1033 = vpop.f32.mrb[0].mxu0
      %v1034 = vadd.f32 %v873, %v1033
      %v1035 = vpop.f32.mrb[0].mxu0
      %1036 = vmatprep.mubr.bf16.mxu0 0
      %1037 = vmatmul.mubr.bf16.gmra.mrb[0].mxu0 %v726
      %v1038 = vpop.f32.mrb[0].mxu0
      %v1039 = vadd.f32 %v878, %v1038
      %v1040 = vpop.f32.mrb[0].mxu0
      %v1041 = vpop.f32.mrb[0].mxu0
      %v1042 = vadd.f32 %v881, %v1041
      %v1043 = vpop.f32.mrb[0].mxu0
      %1044 = vmatprep.mubr.bf16.mxu0 0
      %1045 = vmatmul.mubr.bf16.gmra.mrb[0].mxu0 %v729
      %v1046 = vpop.f32.mrb[0].mxu0
      %v1047 = vadd.f32 %v886, %v1046
      %v1048 = vpop.f32.mrb[0].mxu0
      %v1049 = vpop.f32.mrb[0].mxu0
      %v1050 = vadd.f32 %v889, %v1049
      %v1051 = vpop.f32.mrb[0].mxu0
      %1052 = vdwg.mxu0
      %v1053 = vld [vmem:[%s218] sm:$0xff]
      %v1054 = vld [vmem:[%s218 + $0x8] sm:$0xff]
      %v1055 = vld [vmem:[%s218 + $0x10] sm:$0xff]
      %v1056 = vld [vmem:[%s218 + $0x18] sm:$0xff]
      %v1057 = vld [vmem:[%s218 + $0x20] sm:$0xff]
      %v1058 = vld [vmem:[%s218 + $0x28] sm:$0xff]
      %v1059 = vld [vmem:[%s218 + $0x30] sm:$0xff]
      %v1060 = vld [vmem:[%s218 + $0x38] sm:$0xff]
      %v1061 = vld [vmem:[%s218 + $0x40] sm:$0xff]
      %v1062 = vld [vmem:[%s218 + $0x48] sm:$0xff]
      %v1063 = vld [vmem:[%s218 + $0x50] sm:$0xff]
      %v1064 = vld [vmem:[%s218 + $0x58] sm:$0xff]
      %v1065 = vld [vmem:[%s218 + $0x60] sm:$0xff]
      %v1066 = vld [vmem:[%s218 + $0x68] sm:$0xff]
      %v1067 = vld [vmem:[%s218 + $0x70] sm:$0xff]
      %v1068 = vld [vmem:[%s218 + $0x78] sm:$0xff]
      %v1069 = vld [vmem:[%s218 + $0x80] sm:$0xff]
      %v1070 = vld [vmem:[%s218 + $0x88] sm:$0xff]
      %v1071 = vld [vmem:[%s218 + $0x90] sm:$0xff]
      %v1072 = vld [vmem:[%s218 + $0x98] sm:$0xff]
      %v1073 = vld [vmem:[%s218 + $0xa0] sm:$0xff]
      %v1074 = vld [vmem:[%s218 + $0xa8] sm:$0xff]
      %v1075 = vld [vmem:[%s218 + $0xb0] sm:$0xff]
      %v1076 = vld [vmem:[%s218 + $0xb8] sm:$0xff]
      %v1077 = vld [vmem:[%s218 + $0xc0] sm:$0xff]
      %v1078 = vld [vmem:[%s218 + $0xc8] sm:$0xff]
      %v1079 = vld [vmem:[%s218 + $0xd0] sm:$0xff]
      %v1080 = vld [vmem:[%s218 + $0xd8] sm:$0xff]
      %v1081 = vld [vmem:[%s218 + $0xe0] sm:$0xff]
      %v1082 = vld [vmem:[%s218 + $0xe8] sm:$0xff]
      %v1083 = vld [vmem:[%s218 + $0xf0] sm:$0xff]
      %v1084 = vld [vmem:[%s218 + $0xf8] sm:$0xff]
      %v1085 = vadd.f32 %v927, %v1053
      %v1086 = vadd.f32 %v930, %v1054
      %v1087 = vadd.f32 %v935, %v1055
      %v1088 = vadd.f32 %v938, %v1056
      %v1089 = vadd.f32 %v943, %v1057
      %v1090 = vadd.f32 %v946, %v1058
      %v1091 = vadd.f32 %v951, %v1059
      %v1092 = vadd.f32 %v954, %v1060
      %v1093 = vadd.f32 %v959, %v1061
      %v1094 = vadd.f32 %v962, %v1062
      %v1095 = vadd.f32 %v967, %v1063
      %v1096 = vadd.f32 %v970, %v1064
      %v1097 = vadd.f32 %v975, %v1065
      %v1098 = vadd.f32 %v978, %v1066
      %v1099 = vadd.f32 %v983, %v1067
      %v1100 = vadd.f32 %v986, %v1068
      %v1101 = vadd.f32 %v991, %v1069
      %v1102 = vadd.f32 %v994, %v1070
      %v1103 = vadd.f32 %v999, %v1071
      %v1104 = vadd.f32 %v1002, %v1072
      %v1105 = vadd.f32 %v1007, %v1073
      %v1106 = vadd.f32 %v1010, %v1074
      %v1107 = vadd.f32 %v1015, %v1075
      %v1108 = vadd.f32 %v1018, %v1076
      %v1109 = vadd.f32 %v1023, %v1077
      %v1110 = vadd.f32 %v1026, %v1078
      %v1111 = vadd.f32 %v1031, %v1079
      %v1112 = vadd.f32 %v1034, %v1080
      %v1113 = vadd.f32 %v1039, %v1081
      %v1114 = vadd.f32 %v1042, %v1082
      %v1115 = vadd.f32 %v1047, %v1083
      %v1116 = vadd.f32 %v1050, %v1084
      %v1117 = vmax.f32 %v1085, 0.0
      %v1118 = vmax.f32 %v1086, 0.0
      %v1119 = vmax.f32 %v1087, 0.0
      %v1120 = vmax.f32 %v1088, 0.0
      %v1121 = vmax.f32 %v1089, 0.0
      %v1122 = vmax.f32 %v1090, 0.0
      %v1123 = vmax.f32 %v1091, 0.0
      %v1124 = vmax.f32 %v1092, 0.0
      %v1125 = vmax.f32 %v1093, 0.0
      %v1126 = vmax.f32 %v1094, 0.0
      %v1127 = vmax.f32 %v1095, 0.0
      %v1128 = vmax.f32 %v1096, 0.0
      %v1129 = vmax.f32 %v1097, 0.0
      %v1130 = vmax.f32 %v1098, 0.0
      %v1131 = vmax.f32 %v1099, 0.0
      %v1132 = vmax.f32 %v1100, 0.0
      %v1133 = vmax.f32 %v1101, 0.0
      %v1134 = vmax.f32 %v1102, 0.0
      %v1135 = vmax.f32 %v1103, 0.0
      %v1136 = vmax.f32 %v1104, 0.0
      %v1137 = vmax.f32 %v1105, 0.0
      %v1138 = vmax.f32 %v1106, 0.0
      %v1139 = vmax.f32 %v1107, 0.0
      %v1140 = vmax.f32 %v1108, 0.0
      %v1141 = vmax.f32 %v1109, 0.0
      %v1142 = vmax.f32 %v1110, 0.0
      %v1143 = vmax.f32 %v1111, 0.0
      %v1144 = vmax.f32 %v1112, 0.0
      %v1145 = vmax.f32 %v1113, 0.0
      %v1146 = vmax.f32 %v1114, 0.0
      %v1147 = vmax.f32 %v1115, 0.0
      %v1148 = vmax.f32 %v1116, 0.0
      %1149 = vst [vmem:[%s224] sm:$0xff] %v1117
      %1150 = vst [vmem:[%s224 + $0x8] sm:$0xff] %v1118
      %1151 = vst [vmem:[%s224 + $0x10] sm:$0xff] %v1119
      %1152 = vst [vmem:[%s224 + $0x18] sm:$0xff] %v1120
      %1153 = vst [vmem:[%s224 + $0x20] sm:$0xff] %v1121
      %1154 = vst [vmem:[%s224 + $0x28] sm:$0xff] %v1122
      %1155 = vst [vmem:[%s224 + $0x30] sm:$0xff] %v1123
      %1156 = vst [vmem:[%s224 + $0x38] sm:$0xff] %v1124
      %1157 = vst [vmem:[%s224 + $0x40] sm:$0xff] %v1125
      %1158 = vst [vmem:[%s224 + $0x48] sm:$0xff] %v1126
      %1159 = vst [vmem:[%s224 + $0x50] sm:$0xff] %v1127
      %1160 = vst [vmem:[%s224 + $0x58] sm:$0xff] %v1128
      %1161 = vst [vmem:[%s224 + $0x60] sm:$0xff] %v1129
      %1162 = vst [vmem:[%s224 + $0x68] sm:$0xff] %v1130
      %1163 = vst [vmem:[%s224 + $0x70] sm:$0xff] %v1131
      %1164 = vst [vmem:[%s224 + $0x78] sm:$0xff] %v1132
      %1165 = vst [vmem:[%s224 + $0x80] sm:$0xff] %v1133
      %1166 = vst [vmem:[%s224 + $0x88] sm:$0xff] %v1134
      %1167 = vst [vmem:[%s224 + $0x90] sm:$0xff] %v1135
      %1168 = vst [vmem:[%s224 + $0x98] sm:$0xff] %v1136
      %1169 = vst [vmem:[%s224 + $0xa0] sm:$0xff] %v1137
      %1170 = vst [vmem:[%s224 + $0xa8] sm:$0xff] %v1138
      %1171 = vst [vmem:[%s224 + $0xb0] sm:$0xff] %v1139
      %1172 = vst [vmem:[%s224 + $0xb8] sm:$0xff] %v1140
      %1173 = vst [vmem:[%s224 + $0xc0] sm:$0xff] %v1141
      %1174 = vst [vmem:[%s224 + $0xc8] sm:$0xff] %v1142
      %1175 = vst [vmem:[%s224 + $0xd0] sm:$0xff] %v1143
      %1176 = vst [vmem:[%s224 + $0xd8] sm:$0xff] %v1144
      %1177 = vst [vmem:[%s224 + $0xe0] sm:$0xff] %v1145
      %1178 = vst [vmem:[%s224 + $0xe8] sm:$0xff] %v1146
      %1179 = vst [vmem:[%s224 + $0xf0] sm:$0xff] %v1147
      %1180 = vst [vmem:[%s224 + $0xf8] sm:$0xff] %v1148
      %s1181 = smul.u32 32, %s15
      %p1182 = scmp.lt.s32.totalorder %s1181, 63
      %s1183 = scalar_select %p1182, %s1181, 63
      %s1184 = smul.addr %s1183, 8
      %s1185 = scalar_lea.vmem %s4, %s1184
      // Predicated region
      $region37: #{resnet_cifar_forward.15} parent=35 // pred_check
        %p1186 = pneg %p127
      $region38: #{resnet_cifar_forward.15} parent=35 // pred_check_branch
        %1188 = sbr.rel (%p1186) target = $region40
      $region39: #{resnet_cifar_forward.15} parent=35 // pred_region
        %s1189 = smul.u32 32, %s15
      $region40: #{resnet_cifar_forward.15} parent=35 // pred_fallthru
        _
    $region36: #{resnet_cifar_forward.15} parent=5 // pred_fallthru
      _
    %p1190 = scmp.le.s32.totalorder 2, %s10
    // Predicated region
    $region41: #{resnet_cifar_forward.15} parent=5 // pred_check
      %p1191 = pneg %p1190
    $region42: #{resnet_cifar_forward.15} parent=5 // pred_check_branch
      %1193 = sbr.rel (%p1191) target = $region44
    $region43: #{resnet_cifar_forward.15} parent=5 // pred_region
      %s1194 = ssub.s32 %s10, 2
      // Predicated region
      $region45: #{resnet_cifar_forward.15} parent=43 // pred_check
        %p1195 = pneg %p133
      $region46: #{resnet_cifar_forward.15} parent=43 // pred_check_branch
        %1197 = sbr.rel (%p1195) target = $region48
      $region47: #{resnet_cifar_forward.15} parent=43 // pred_region
        %s1198 = smul.u32 32, %s16
        %p1199 = scmp.lt.s32.totalorder %s1198, 63
        %s1200 = scalar_select %p1199, %s1198, 63
        %s1201 = smul.addr %s1200, 8
        %s1202 = scalar_lea.vmem %s4, %s1201
      $region48: #{resnet_cifar_forward.15} parent=43 // pred_fallthru
        _
    $region44: #{resnet_cifar_forward.15} parent=5 // pred_fallthru
      _
  $region6: #{resnet_cifar_forward.15} parent=0 // loop_footer
    %s14 = sadd.s32 1, %s10
  $region7: #{resnet_cifar_forward.15} parent=0 // loop_footer_branch
    %9 = sbr.rel target = $region3
  $region8: #{resnet_cifar_forward.15} parent=0 // loop_exit
    _

// kernel: resnet_cifar_forward.17
$region0: #{resnet_cifar_forward.17}
  #allocation0 [shape = 'u32[]', space=smem, size = 0x4, offset = 0x4, fixed_abs, tag = 'smem constant byte address 0x4 - core index']
  #allocation1 [shape = 'u32[144,128]{1,0:T(1,128)}', space=vmem, size = 0x12000, scoped, tag = 'internal scratch']
  %s0 = inlined_call_operand.vmem [shape: bf16[128,32], index: 0, kind: input, shape index: {}]
  %s1 = inlined_call_operand.vmem [shape: bf16[32,128], index: 1, kind: input, shape index: {}]
  %s2 = inlined_call_operand.vmem [shape: f32[1,128], index: 2, kind: input, shape index: {}]
  %s3 = inlined_call_operand.vmem [shape: f32[128,128], index: 3, kind: output, shape index: {}]
  %s4 = sld [smem:[#allocation0]]
  $region22: #{resnet_cifar_forward.17} parent=0
    _
  %s6 = ssub.s32 1, %s4
  %s7 = scalar_select 0, %s6, %s4
  // Predicated region
  $region2: #{resnet_cifar_forward.17} parent=0 // pred_check
    _
  $region3: #{resnet_cifar_forward.17} parent=0 // pred_check_branch
    %9 = sbr.rel (0) target = $region5
  $region4: #{resnet_cifar_forward.17} parent=0 // pred_region
    _
  $region5: #{resnet_cifar_forward.17} parent=0 // pred_fallthru
    _
  // Predicated region
  $region6: #{resnet_cifar_forward.17} parent=0 // pred_check
    _
  $region7: #{resnet_cifar_forward.17} parent=0 // pred_check_branch
    %11 = sbr.rel (0) target = $region9
  $region8: #{resnet_cifar_forward.17} parent=0 // pred_region
    _
  $region9: #{resnet_cifar_forward.17} parent=0 // pred_fallthru
    _
  // Predicated region
  $region10: #{resnet_cifar_forward.17} parent=0 // pred_check
    _
  $region11: #{resnet_cifar_forward.17} parent=0 // pred_check_branch
    %13 = sbr.rel (0) target = $region13
  $region12: #{resnet_cifar_forward.17} parent=0 // pred_region
    _
  $region13: #{resnet_cifar_forward.17} parent=0 // pred_fallthru
    _
  %v15 = vld [vmem:[%s0] sm:$0xf]
  %v16 = vld [vmem:[%s0 + $0x4] sm:$0xf]
  %v17 = vld [vmem:[%s0 + $0x8] sm:$0xf]
  %v18 = vld [vmem:[%s0 + $0xc] sm:$0xf]
  %v19 = vld [vmem:[%s0 + $0x10] sm:$0xf]
  %v20 = vld [vmem:[%s0 + $0x14] sm:$0xf]
  %v21 = vld [vmem:[%s0 + $0x18] sm:$0xf]
  %v22 = vld [vmem:[%s0 + $0x1c] sm:$0xf]
  %v23 = vld [vmem:[%s0 + $0x20] sm:$0xf]
  %v24 = vld [vmem:[%s0 + $0x24] sm:$0xf]
  %v25 = vld [vmem:[%s0 + $0x28] sm:$0xf]
  %v26 = vld [vmem:[%s0 + $0x2c] sm:$0xf]
  %v27 = vld [vmem:[%s0 + $0x30] sm:$0xf]
  %v28 = vld [vmem:[%s0 + $0x34] sm:$0xf]
  %v29 = vld [vmem:[%s0 + $0x38] sm:$0xf]
  %v30 = vld [vmem:[%s0 + $0x3c] sm:$0xf]
  %v31 = vld [vmem:[%s1] sm:$0xf]
  %v32 = vld [vmem:[%s1 + $0x4] sm:$0xf]
  %v33 = vld [vmem:[%s1 + $0x8] sm:$0xf]
  %v34 = vld [vmem:[%s1 + $0xc] sm:$0xf]
  %v35 = vld [vmem:[%s2] sm:$0x1]
  %v37 = vlaneseq
  %v38 = vshrl.u32 %v37, 7
  %v39 = vsub.s32 0, %v38
  %v40 = vrot.slane %v35, %v39
  %v58 = vunpack.c.l.b16 %v15
  %v59 = vunpack.c.l.b16 %v16
  %v60 = vunpack.c.l.b16 %v17
  %v61 = vunpack.c.l.b16 %v18
  %v62 = vunpack.c.l.b16 %v19
  %v63 = vunpack.c.l.b16 %v20
  %v64 = vunpack.c.l.b16 %v21
  %v65 = vunpack.c.l.b16 %v22
  %v66 = vunpack.c.l.b16 %v23
  %v67 = vunpack.c.l.b16 %v24
  %v68 = vunpack.c.l.b16 %v25
  %v69 = vunpack.c.l.b16 %v26
  %v70 = vunpack.c.l.b16 %v27
  %v71 = vunpack.c.l.b16 %v28
  %v72 = vunpack.c.l.b16 %v29
  %v73 = vunpack.c.l.b16 %v30
  %v74 = vpack.c.b16 %v59, %v58
  %v75 = vpack.c.b16 %v61, %v60
  %v76 = vpack.c.b16 %v63, %v62
  %v77 = vpack.c.b16 %v65, %v64
  %v78 = vpack.c.b16 %v67, %v66
  %v79 = vpack.c.b16 %v69, %v68
  %v80 = vpack.c.b16 %v71, %v70
  %v81 = vpack.c.b16 %v73, %v72
  %v86 = vunpack.c.l.b16 %v31
  %v87 = vunpack.c.l.b16 %v32
  %v88 = vunpack.c.l.b16 %v33
  %v89 = vunpack.c.l.b16 %v34
  %v90 = vpack.c.b16 %v87, %v86
  %v91 = vpack.c.b16 %v89, %v88
  %vm94 = vcmask 261120
  %v96 = vsel %vm94, %v74, 0
  %v99 = vsel %vm94, %v75, 0
  %v102 = vsel %vm94, %v76, 0
  %v105 = vsel %vm94, %v77, 0
  %v108 = vsel %vm94, %v78, 0
  %v111 = vsel %vm94, %v79, 0
  %v114 = vsel %vm94, %v80, 0
  %v117 = vsel %vm94, %v81, 0
  %119 = vmatprep.subr.bf16.mxu0 0
  %120 = vmatpush1.bf16.msra.mxu0 %v90
  %121 = vmatprep.subr.bf16.mxu0 0
  %122 = vmatpush1.bf16.msra.mxu0 %v91
  %123 = vmatprep.subr.bf16.mxu0 0
  %124 = vmatpush1.bf16.msra.mxu0 0
  %125 = vmatprep.subr.bf16.mxu0 0
  %126 = vmatpush1.bf16.msra.mxu0 0
  %127 = vmatprep.subr.bf16.mxu0 0
  %128 = vmatpush1.bf16.msra.mxu0 0
  %129 = vmatprep.subr.bf16.mxu0 0
  %130 = vmatpush1.bf16.msra.mxu0 0
  %131 = vmatprep.subr.bf16.mxu0 0
  %132 = vmatpush1.bf16.msra.mxu0 0
  %133 = vmatprep.subr.bf16.mxu0 0
  %134 = vmatpush1.bf16.msra.mxu0 0
  %135 = vmatprep.subr.bf16.mxu0 0
  %136 = vmatpush1.bf16.msra.mxu0 0
  %137 = vmatprep.subr.bf16.mxu0 0
  %138 = vmatpush1.bf16.msra.mxu0 0
  %139 = vmatprep.subr.bf16.mxu0 0
  %140 = vmatpush1.bf16.msra.mxu0 0
  %141 = vmatprep.subr.bf16.mxu0 0
  %142 = vmatpush1.bf16.msra.mxu0 0
  %143 = vmatprep.subr.bf16.mxu0 0
  %144 = vmatpush1.bf16.msra.mxu0 0
  %145 = vmatprep.subr.bf16.mxu0 0
  %146 = vmatpush1.bf16.msra.mxu0 0
  %147 = vmatprep.subr.bf16.mxu0 0
  %148 = vmatpush1.bf16.msra.mxu0 0
  %149 = vmatprep.subr.bf16.mxu0 0
  %150 = vmatpush1.bf16.msra.mxu0 0
  %151 = vmatprep.mubr.bf16.mxu0 0
  %152 = vmatmul.mubr.bf16.gmra.mrb[0].mxu0 %v96
  %v153 = vpop.f32.mrb[0].mxu0
  %v154 = vadd.f32 %v40, %v153
  %v155 = vpop.f32.mrb[0].mxu0
  %v156 = vpop.f32.mrb[0].mxu0
  %v157 = vadd.f32 %v40, %v156
  %v158 = vpop.f32.mrb[0].mxu0
  %159 = vmatprep.mubr.bf16.mxu0 0
  %160 = vmatmul.mubr.bf16.gmra.mrb[0].mxu0 %v99
  %v161 = vpop.f32.mrb[0].mxu0
  %v162 = vadd.f32 %v40, %v161
  %v163 = vpop.f32.mrb[0].mxu0
  %v164 = vpop.f32.mrb[0].mxu0
  %v165 = vadd.f32 %v40, %v164
  %v166 = vpop.f32.mrb[0].mxu0
  %167 = vmatprep.mubr.bf16.mxu0 0
  %168 = vmatmul.mubr.bf16.gmra.mrb[0].mxu0 %v102
  %v169 = vpop.f32.mrb[0].mxu0
  %v170 = vadd.f32 %v40, %v169
  %v171 = vpop.f32.mrb[0].mxu0
  %v172 = vpop.f32.mrb[0].mxu0
  %v173 = vadd.f32 %v40, %v172
  %v174 = vpop.f32.mrb[0].mxu0
  %175 = vmatprep.mubr.bf16.mxu0 0
  %176 = vmatmul.mubr.bf16.gmra.mrb[0].mxu0 %v105
  %v177 = vpop.f32.mrb[0].mxu0
  %v178 = vadd.f32 %v40, %v177
  %v179 = vpop.f32.mrb[0].mxu0
  %v180 = vpop.f32.mrb[0].mxu0
  %v181 = vadd.f32 %v40, %v180
  %v182 = vpop.f32.mrb[0].mxu0
  %183 = vmatprep.mubr.bf16.mxu0 0
  %184 = vmatmul.mubr.bf16.gmra.mrb[0].mxu0 %v108
  %v185 = vpop.f32.mrb[0].mxu0
  %v186 = vadd.f32 %v40, %v185
  %v187 = vpop.f32.mrb[0].mxu0
  %v188 = vpop.f32.mrb[0].mxu0
  %v189 = vadd.f32 %v40, %v188
  %v190 = vpop.f32.mrb[0].mxu0
  %191 = vmatprep.mubr.bf16.mxu0 0
  %192 = vmatmul.mubr.bf16.gmra.mrb[0].mxu0 %v111
  %v193 = vpop.f32.mrb[0].mxu0
  %v194 = vadd.f32 %v40, %v193
  %v195 = vpop.f32.mrb[0].mxu0
  %v196 = vpop.f32.mrb[0].mxu0
  %v197 = vadd.f32 %v40, %v196
  %v198 = vpop.f32.mrb[0].mxu0
  %199 = vmatprep.mubr.bf16.mxu0 0
  %200 = vmatmul.mubr.bf16.gmra.mrb[0].mxu0 %v114
  %v201 = vpop.f32.mrb[0].mxu0
  %v202 = vadd.f32 %v40, %v201
  %v203 = vpop.f32.mrb[0].mxu0
  %v204 = vpop.f32.mrb[0].mxu0
  %v205 = vadd.f32 %v40, %v204
  %v206 = vpop.f32.mrb[0].mxu0
  %207 = vmatprep.mubr.bf16.mxu0 0
  %208 = vmatmul.mubr.bf16.gmra.mrb[0].mxu0 %v117
  %v209 = vpop.f32.mrb[0].mxu0
  %v210 = vadd.f32 %v40, %v209
  %v211 = vpop.f32.mrb[0].mxu0
  %v212 = vpop.f32.mrb[0].mxu0
  %v213 = vadd.f32 %v40, %v212
  %v214 = vpop.f32.mrb[0].mxu0
  %215 = vdwg.mxu0
  %216 = vst [vmem:[%s3] sm:$0xff] %v154
  %217 = vst [vmem:[%s3 + $0x8] sm:$0xff] %v157
  %218 = vst [vmem:[%s3 + $0x10] sm:$0xff] %v162
  %219 = vst [vmem:[%s3 + $0x18] sm:$0xff] %v165
  %220 = vst [vmem:[%s3 + $0x20] sm:$0xff] %v170
  %221 = vst [vmem:[%s3 + $0x28] sm:$0xff] %v173
  %222 = vst [vmem:[%s3 + $0x30] sm:$0xff] %v178
  %223 = vst [vmem:[%s3 + $0x38] sm:$0xff] %v181
  %224 = vst [vmem:[%s3 + $0x40] sm:$0xff] %v186
  %225 = vst [vmem:[%s3 + $0x48] sm:$0xff] %v189
  %226 = vst [vmem:[%s3 + $0x50] sm:$0xff] %v194
  %227 = vst [vmem:[%s3 + $0x58] sm:$0xff] %v197
  %228 = vst [vmem:[%s3 + $0x60] sm:$0xff] %v202
  %229 = vst [vmem:[%s3 + $0x68] sm:$0xff] %v205
  %230 = vst [vmem:[%s3 + $0x70] sm:$0xff] %v210
  %231 = vst [vmem:[%s3 + $0x78] sm:$0xff] %v213
  // Predicated region
  $region14: #{resnet_cifar_forward.17} parent=0 // pred_check
    _
  $region15: #{resnet_cifar_forward.17} parent=0 // pred_check_branch
    %233 = sbr.rel (0) target = $region17
  $region16: #{resnet_cifar_forward.17} parent=0 // pred_region
    _
  $region17: #{resnet_cifar_forward.17} parent=0 // pred_fallthru
    _
  // Predicated region
  $region18: #{resnet_cifar_forward.17} parent=0 // pred_check
    _
  $region19: #{resnet_cifar_forward.17} parent=0 // pred_check_branch
    %235 = sbr.rel (0) target = $region21
  $region20: #{resnet_cifar_forward.17} parent=0 // pred_region
    _
  $region21: #{resnet_cifar_forward.17} parent=0 // pred_fallthru
    _

// kernel: resnet_cifar_forward.16
$region0: #{resnet_cifar_forward.16}
  #allocation0 [shape = 'u32[]', space=smem, size = 0x4, offset = 0x4, fixed_abs, tag = 'smem constant byte address 0x4 - core index']
  #allocation1 [shape = 'u32[144,128]{1,0:T(1,128)}', space=vmem, size = 0x12000, scoped, tag = 'internal scratch']
  %s0 = inlined_call_operand.vmem [shape: bf16[128,288], index: 0, kind: input, shape index: {}]
  %s1 = inlined_call_operand.vmem [shape: bf16[288,128], index: 1, kind: input, shape index: {}]
  %s2 = inlined_call_operand.vmem [shape: f32[1,128], index: 2, kind: input, shape index: {}]
  %s3 = inlined_call_operand.vmem [shape: f32[128,128], index: 3, kind: output, shape index: {}]
  %s4 = sld [smem:[#allocation0]]
  $region22: #{resnet_cifar_forward.16} parent=0
    _
  %s6 = ssub.s32 1, %s4
  %s7 = scalar_select 0, %s6, %s4
  // Predicated region
  $region2: #{resnet_cifar_forward.16} parent=0 // pred_check
    _
  $region3: #{resnet_cifar_forward.16} parent=0 // pred_check_branch
    %9 = sbr.rel (0) target = $region5
  $region4: #{resnet_cifar_forward.16} parent=0 // pred_region
    _
  $region5: #{resnet_cifar_forward.16} parent=0 // pred_fallthru
    _
  // Predicated region
  $region6: #{resnet_cifar_forward.16} parent=0 // pred_check
    _
  $region7: #{resnet_cifar_forward.16} parent=0 // pred_check_branch
    %11 = sbr.rel (0) target = $region9
  $region8: #{resnet_cifar_forward.16} parent=0 // pred_region
    _
  $region9: #{resnet_cifar_forward.16} parent=0 // pred_fallthru
    _
  // Predicated region
  $region10: #{resnet_cifar_forward.16} parent=0 // pred_check
    _
  $region11: #{resnet_cifar_forward.16} parent=0 // pred_check_branch
    %13 = sbr.rel (0) target = $region13
  $region12: #{resnet_cifar_forward.16} parent=0 // pred_region
    _
  $region13: #{resnet_cifar_forward.16} parent=0 // pred_fallthru
    _
  %v15 = vld [vmem:[%s0] sm:$0xff]
  %v16 = vld [vmem:[%s0 + $0x8] sm:$0xf]
  %v17 = vld [vmem:[%s0 + $0xc] sm:$0xff]
  %v18 = vld [vmem:[%s0 + $0x14] sm:$0xf]
  %v19 = vld [vmem:[%s0 + $0x18] sm:$0xff]
  %v20 = vld [vmem:[%s0 + $0x20] sm:$0xf]
  %v21 = vld [vmem:[%s0 + $0x24] sm:$0xff]
  %v22 = vld [vmem:[%s0 + $0x2c] sm:$0xf]
  %v23 = vld [vmem:[%s0 + $0x30] sm:$0xff]
  %v24 = vld [vmem:[%s0 + $0x38] sm:$0xf]
  %v25 = vld [vmem:[%s0 + $0x3c] sm:$0xff]
  %v26 = vld [vmem:[%s0 + $0x44] sm:$0xf]
  %v27 = vld [vmem:[%s0 + $0x48] sm:$0xff]
  %v28 = vld [vmem:[%s0 + $0x50] sm:$0xf]
  %v29 = vld [vmem:[%s0 + $0x54] sm:$0xff]
  %v30 = vld [vmem:[%s0 + $0x5c] sm:$0xf]
  %v31 = vld [vmem:[%s0 + $0x60] sm:$0xff]
  %v32 = vld [vmem:[%s0 + $0x68] sm:$0xf]
  %v33 = vld [vmem:[%s0 + $0x6c] sm:$0xff]
  %v34 = vld [vmem:[%s0 + $0x74] sm:$0xf]
  %v35 = vld [vmem:[%s0 + $0x78] sm:$0xff]
  %v36 = vld [vmem:[%s0 + $0x80] sm:$0xf]
  %v37 = vld [vmem:[%s0 + $0x84] sm:$0xff]
  %v38 = vld [vmem:[%s0 + $0x8c] sm:$0xf]
  %v39 = vld [vmem:[%s0 + $0x90] sm:$0xff]
  %v40 = vld [vmem:[%s0 + $0x98] sm:$0xf]
  %v41 = vld [vmem:[%s0 + $0x9c] sm:$0xff]
  %v42 = vld [vmem:[%s0 + $0xa4] sm:$0xf]
  %v43 = vld [vmem:[%s0 + $0xa8] sm:$0xff]
  %v44 = vld [vmem:[%s0 + $0xb0] sm:$0xf]
  %v45 = vld [vmem:[%s0 + $0xb4] sm:$0xff]
  %v46 = vld [vmem:[%s0 + $0xbc] sm:$0xf]
  %v47 = vld [vmem:[%s1] sm:$0xf]
  %v48 = vld [vmem:[%s1 + $0x4] sm:$0xf]
  %v49 = vld [vmem:[%s1 + $0x8] sm:$0xf]
  %v50 = vld [vmem:[%s1 + $0xc] sm:$0xf]
  %v51 = vld [vmem:[%s1 + $0x10] sm:$0xf]
  %v52 = vld [vmem:[%s1 + $0x14] sm:$0xf]
  %v53 = vld [vmem:[%s1 + $0x18] sm:$0xf]
  %v54 = vld [vmem:[%s1 + $0x1c] sm:$0xf]
  %v55 = vld [vmem:[%s1 + $0x20] sm:$0xf]
  %v56 = vld [vmem:[%s1 + $0x24] sm:$0xf]
  %v57 = vld [vmem:[%s1 + $0x28] sm:$0xf]
  %v58 = vld [vmem:[%s1 + $0x2c] sm:$0xf]
  %v59 = vld [vmem:[%s1 + $0x30] sm:$0xf]
  %v60 = vld [vmem:[%s1 + $0x34] sm:$0xf]
  %v61 = vld [vmem:[%s1 + $0x38] sm:$0xf]
  %v62 = vld [vmem:[%s1 + $0x3c] sm:$0xf]
  %v63 = vld [vmem:[%s1 + $0x40] sm:$0xf]
  %v64 = vld [vmem:[%s1 + $0x44] sm:$0xf]
  %v65 = vld [vmem:[%s1 + $0x48] sm:$0xf]
  %v66 = vld [vmem:[%s1 + $0x4c] sm:$0xf]
  %v67 = vld [vmem:[%s1 + $0x50] sm:$0xf]
  %v68 = vld [vmem:[%s1 + $0x54] sm:$0xf]
  %v69 = vld [vmem:[%s1 + $0x58] sm:$0xf]
  %v70 = vld [vmem:[%s1 + $0x5c] sm:$0xf]
  %v71 = vld [vmem:[%s1 + $0x60] sm:$0xf]
  %v72 = vld [vmem:[%s1 + $0x64] sm:$0xf]
  %v73 = vld [vmem:[%s1 + $0x68] sm:$0xf]
  %v74 = vld [vmem:[%s1 + $0x6c] sm:$0xf]
  %v75 = vld [vmem:[%s1 + $0x70] sm:$0xf]
  %v76 = vld [vmem:[%s1 + $0x74] sm:$0xf]
  %v77 = vld [vmem:[%s1 + $0x78] sm:$0xf]
  %v78 = vld [vmem:[%s1 + $0x7c] sm:$0xf]
  %v79 = vld [vmem:[%s1 + $0x80] sm:$0xf]
  %v80 = vld [vmem:[%s1 + $0x84] sm:$0xf]
  %v81 = vld [vmem:[%s1 + $0x88] sm:$0xf]
  %v82 = vld [vmem:[%s1 + $0x8c] sm:$0xf]
  %v83 = vld [vmem:[%s2] sm:$0x1]
  %v85 = vlaneseq
  %v86 = vshrl.u32 %v85, 7
  %v87 = vsub.s32 0, %v86
  %v88 = vrot.slane %v83, %v87
  %v122 = vunpack.c.l.b16 %v15
  %v123 = vunpack.c.h.b16 %v15
  %v124 = vunpack.c.l.b16 %v16
  %v125 = vunpack.c.l.b16 %v17
  %v126 = vunpack.c.h.b16 %v17
  %v127 = vunpack.c.l.b16 %v18
  %v128 = vunpack.c.l.b16 %v19
  %v129 = vunpack.c.h.b16 %v19
  %v130 = vunpack.c.l.b16 %v20
  %v131 = vunpack.c.l.b16 %v21
  %v132 = vunpack.c.h.b16 %v21
  %v133 = vunpack.c.l.b16 %v22
  %v134 = vunpack.c.l.b16 %v23
  %v135 = vunpack.c.h.b16 %v23
  %v136 = vunpack.c.l.b16 %v24
  %v137 = vunpack.c.l.b16 %v25
  %v138 = vunpack.c.h.b16 %v25
  %v139 = vunpack.c.l.b16 %v26
  %v140 = vunpack.c.l.b16 %v27
  %v141 = vunpack.c.h.b16 %v27
  %v142 = vunpack.c.l.b16 %v28
  %v143 = vunpack.c.l.b16 %v29
  %v144 = vunpack.c.h.b16 %v29
  %v145 = vunpack.c.l.b16 %v30
  %v146 = vunpack.c.l.b16 %v31
  %v147 = vunpack.c.h.b16 %v31
  %v148 = vunpack.c.l.b16 %v32
  %v149 = vunpack.c.l.b16 %v33
  %v150 = vunpack.c.h.b16 %v33
  %v151 = vunpack.c.l.b16 %v34
  %v152 = vunpack.c.l.b16 %v35
  %v153 = vunpack.c.h.b16 %v35
  %v154 = vunpack.c.l.b16 %v36
  %v155 = vunpack.c.l.b16 %v37
  %v156 = vunpack.c.h.b16 %v37
  %v157 = vunpack.c.l.b16 %v38
  %v158 = vunpack.c.l.b16 %v39
  %v159 = vunpack.c.h.b16 %v39
  %v160 = vunpack.c.l.b16 %v40
  %v161 = vunpack.c.l.b16 %v41
  %v162 = vunpack.c.h.b16 %v41
  %v163 = vunpack.c.l.b16 %v42
  %v164 = vunpack.c.l.b16 %v43
  %v165 = vunpack.c.h.b16 %v43
  %v166 = vunpack.c.l.b16 %v44
  %v167 = vunpack.c.l.b16 %v45
  %v168 = vunpack.c.h.b16 %v45
  %v169 = vunpack.c.l.b16 %v46
  %v170 = vpack.c.b16 %v125, %v122
  %v171 = vpack.c.b16 %v126, %v123
  %v172 = vpack.c.b16 %v127, %v124
  %v173 = vpack.c.b16 %v131, %v128
  %v174 = vpack.c.b16 %v132, %v129
  %v175 = vpack.c.b16 %v133, %v130
  %v176 = vpack.c.b16 %v137, %v134
  %v177 = vpack.c.b16 %v138, %v135
  %v178 = vpack.c.b16 %v139, %v136
  %v179 = vpack.c.b16 %v143, %v140
  %v180 = vpack.c.b16 %v144, %v141
  %v181 = vpack.c.b16 %v145, %v142
  %v182 = vpack.c.b16 %v149, %v146
  %v183 = vpack.c.b16 %v150, %v147
  %v184 = vpack.c.b16 %v151, %v148
  %v185 = vpack.c.b16 %v155, %v152
  %v186 = vpack.c.b16 %v156, %v153
  %v187 = vpack.c.b16 %v157, %v154
  %v188 = vpack.c.b16 %v161, %v158
  %v189 = vpack.c.b16 %v162, %v159
  %v190 = vpack.c.b16 %v163, %v160
  %v191 = vpack.c.b16 %v167, %v164
  %v192 = vpack.c.b16 %v168, %v165
  %v193 = vpack.c.b16 %v169, %v166
  %v246 = vunpack.c.l.b16 %v47
  %v247 = vunpack.c.l.b16 %v48
  %v248 = vunpack.c.l.b16 %v49
  %v249 = vunpack.c.l.b16 %v50
  %v250 = vunpack.c.l.b16 %v51
  %v251 = vunpack.c.l.b16 %v52
  %v252 = vunpack.c.l.b16 %v53
  %v253 = vunpack.c.l.b16 %v54
  %v254 = vunpack.c.l.b16 %v55
  %v255 = vunpack.c.l.b16 %v56
  %v256 = vunpack.c.l.b16 %v57
  %v257 = vunpack.c.l.b16 %v58
  %v258 = vunpack.c.l.b16 %v59
  %v259 = vunpack.c.l.b16 %v60
  %v260 = vunpack.c.l.b16 %v61
  %v261 = vunpack.c.l.b16 %v62
  %v262 = vunpack.c.l.b16 %v63
  %v263 = vunpack.c.l.b16 %v64
  %v264 = vunpack.c.l.b16 %v65
  %v265 = vunpack.c.l.b16 %v66
  %v266 = vunpack.c.l.b16 %v67
  %v267 = vunpack.c.l.b16 %v68
  %v268 = vunpack.c.l.b16 %v69
  %v269 = vunpack.c.l.b16 %v70
  %v270 = vunpack.c.l.b16 %v71
  %v271 = vunpack.c.l.b16 %v72
  %v272 = vunpack.c.l.b16 %v73
  %v273 = vunpack.c.l.b16 %v74
  %v274 = vunpack.c.l.b16 %v75
  %v275 = vunpack.c.l.b16 %v76
  %v276 = vunpack.c.l.b16 %v77
  %v277 = vunpack.c.l.b16 %v78
  %v278 = vunpack.c.l.b16 %v79
  %v279 = vunpack.c.l.b16 %v80
  %v280 = vunpack.c.l.b16 %v81
  %v281 = vunpack.c.l.b16 %v82
  %v282 = vpack.c.b16 %v247, %v246
  %v283 = vpack.c.b16 %v249, %v248
  %v284 = vpack.c.b16 %v251, %v250
  %v285 = vpack.c.b16 %v253, %v252
  %v286 = vpack.c.b16 %v255, %v254
  %v287 = vpack.c.b16 %v257, %v256
  %v288 = vpack.c.b16 %v259, %v258
  %v289 = vpack.c.b16 %v261, %v260
  %v290 = vpack.c.b16 %v263, %v262
  %v291 = vpack.c.b16 %v265, %v264
  %v292 = vpack.c.b16 %v267, %v266
  %v293 = vpack.c.b16 %v269, %v268
  %v294 = vpack.c.b16 %v271, %v270
  %v295 = vpack.c.b16 %v273, %v272
  %v296 = vpack.c.b16 %v275, %v274
  %v297 = vpack.c.b16 %v277, %v276
  %v298 = vpack.c.b16 %v279, %v278
  %v299 = vpack.c.b16 %v281, %v280
  %vm318 = vcmask 261120
  %v320 = vsel %vm318, %v172, 0
  %v323 = vsel %vm318, %v175, 0
  %v326 = vsel %vm318, %v178, 0
  %v329 = vsel %vm318, %v181, 0
  %v332 = vsel %vm318, %v184, 0
  %v335 = vsel %vm318, %v187, 0
  %v338 = vsel %vm318, %v190, 0
  %v341 = vsel %vm318, %v193, 0
  %343 = vmatprep.subr.bf16.mxu0 0
  %344 = vmatpush1.bf16.msra.mxu0 %v282
  %345 = vmatprep.subr.bf16.mxu0 0
  %346 = vmatpush1.bf16.msra.mxu0 %v283
  %347 = vmatprep.subr.bf16.mxu0 0
  %348 = vmatpush1.bf16.msra.mxu0 %v284
  %349 = vmatprep.subr.bf16.mxu0 0
  %350 = vmatpush1.bf16.msra.mxu0 %v285
  %351 = vmatprep.subr.bf16.mxu0 0
  %352 = vmatpush1.bf16.msra.mxu0 %v286
  %353 = vmatprep.subr.bf16.mxu0 0
  %354 = vmatpush1.bf16.msra.mxu0 %v287
  %355 = vmatprep.subr.bf16.mxu0 0
  %356 = vmatpush1.bf16.msra.mxu0 %v288
  %357 = vmatprep.subr.bf16.mxu0 0
  %358 = vmatpush1.bf16.msra.mxu0 %v289
  %359 = vmatprep.subr.bf16.mxu0 0
  %360 = vmatpush1.bf16.msra.mxu0 %v290
  %361 = vmatprep.subr.bf16.mxu0 0
  %362 = vmatpush1.bf16.msra.mxu0 %v291
  %363 = vmatprep.subr.bf16.mxu0 0
  %364 = vmatpush1.bf16.msra.mxu0 %v292
  %365 = vmatprep.subr.bf16.mxu0 0
  %366 = vmatpush1.bf16.msra.mxu0 %v293
  %367 = vmatprep.subr.bf16.mxu0 0
  %368 = vmatpush1.bf16.msra.mxu0 %v294
  %369 = vmatprep.subr.bf16.mxu0 0
  %370 = vmatpush1.bf16.msra.mxu0 %v295
  %371 = vmatprep.subr.bf16.mxu0 0
  %372 = vmatpush1.bf16.msra.mxu0 %v296
  %373 = vmatprep.subr.bf16.mxu0 0
  %374 = vmatpush1.bf16.msra.mxu0 %v297
  %375 = vmatprep.mubr.bf16.mxu0 %v171
  %376 = vmatmul.mubr.bf16.gmra.mrb[0].mxu0 %v170
  %v377 = vpop.f32.mrb[0].mxu0
  %v378 = vadd.f32 %v88, %v377
  %v379 = vpop.f32.mrb[0].mxu0
  %v380 = vpop.f32.mrb[0].mxu0
  %v381 = vadd.f32 %v88, %v380
  %v382 = vpop.f32.mrb[0].mxu0
  %383 = vmatprep.mubr.bf16.mxu0 %v174
  %384 = vmatmul.mubr.bf16.gmra.mrb[0].mxu0 %v173
  %v385 = vpop.f32.mrb[0].mxu0
  %v386 = vadd.f32 %v88, %v385
  %v387 = vpop.f32.mrb[0].mxu0
  %v388 = vpop.f32.mrb[0].mxu0
  %v389 = vadd.f32 %v88, %v388
  %v390 = vpop.f32.mrb[0].mxu0
  %391 = vmatprep.mubr.bf16.mxu0 %v177
  %392 = vmatmul.mubr.bf16.gmra.mrb[0].mxu0 %v176
  %v393 = vpop.f32.mrb[0].mxu0
  %v394 = vadd.f32 %v88, %v393
  %v395 = vpop.f32.mrb[0].mxu0
  %v396 = vpop.f32.mrb[0].mxu0
  %v397 = vadd.f32 %v88, %v396
  %v398 = vpop.f32.mrb[0].mxu0
  %399 = vmatprep.mubr.bf16.mxu0 %v180
  %400 = vmatmul.mubr.bf16.gmra.mrb[0].mxu0 %v179
  %v401 = vpop.f32.mrb[0].mxu0
  %v402 = vadd.f32 %v88, %v401
  %v403 = vpop.f32.mrb[0].mxu0
  %v404 = vpop.f32.mrb[0].mxu0
  %v405 = vadd.f32 %v88, %v404
  %v406 = vpop.f32.mrb[0].mxu0
  %407 = vmatprep.mubr.bf16.mxu0 %v183
  %408 = vmatmul.mubr.bf16.gmra.mrb[0].mxu0 %v182
  %v409 = vpop.f32.mrb[0].mxu0
  %v410 = vadd.f32 %v88, %v409
  %v411 = vpop.f32.mrb[0].mxu0
  %v412 = vpop.f32.mrb[0].mxu0
  %v413 = vadd.f32 %v88, %v412
  %v414 = vpop.f32.mrb[0].mxu0
  %415 = vmatprep.mubr.bf16.mxu0 %v186
  %416 = vmatmul.mubr.bf16.gmra.mrb[0].mxu0 %v185
  %v417 = vpop.f32.mrb[0].mxu0
  %v418 = vadd.f32 %v88, %v417
  %v419 = vpop.f32.mrb[0].mxu0
  %v420 = vpop.f32.mrb[0].mxu0
  %v421 = vadd.f32 %v88, %v420
  %v422 = vpop.f32.mrb[0].mxu0
  %423 = vmatprep.mubr.bf16.mxu0 %v189
  %424 = vmatmul.mubr.bf16.gmra.mrb[0].mxu0 %v188
  %v425 = vpop.f32.mrb[0].mxu0
  %v426 = vadd.f32 %v88, %v425
  %v427 = vpop.f32.mrb[0].mxu0
  %v428 = vpop.f32.mrb[0].mxu0
  %v429 = vadd.f32 %v88, %v428
  %v430 = vpop.f32.mrb[0].mxu0
  %431 = vmatprep.mubr.bf16.mxu0 %v192
  %432 = vmatmul.mubr.bf16.gmra.mrb[0].mxu0 %v191
  %v433 = vpop.f32.mrb[0].mxu0
  %v434 = vadd.f32 %v88, %v433
  %v435 = vpop.f32.mrb[0].mxu0
  %v436 = vpop.f32.mrb[0].mxu0
  %v437 = vadd.f32 %v88, %v436
  %v438 = vpop.f32.mrb[0].mxu0
  %439 = vdwg.mxu0
  %440 = vmatprep.subr.bf16.mxu0 0
  %441 = vmatpush1.bf16.msra.mxu0 %v298
  %442 = vmatprep.subr.bf16.mxu0 0
  %443 = vmatpush1.bf16.msra.mxu0 %v299
  %444 = vmatprep.subr.bf16.mxu0 0
  %445 = vmatpush1.bf16.msra.mxu0 0
  %446 = vmatprep.subr.bf16.mxu0 0
  %447 = vmatpush1.bf16.msra.mxu0 0
  %448 = vmatprep.subr.bf16.mxu0 0
  %449 = vmatpush1.bf16.msra.mxu0 0
  %450 = vmatprep.subr.bf16.mxu0 0
  %451 = vmatpush1.bf16.msra.mxu0 0
  %452 = vmatprep.subr.bf16.mxu0 0
  %453 = vmatpush1.bf16.msra.mxu0 0
  %454 = vmatprep.subr.bf16.mxu0 0
  %455 = vmatpush1.bf16.msra.mxu0 0
  %456 = vmatprep.subr.bf16.mxu0 0
  %457 = vmatpush1.bf16.msra.mxu0 0
  %458 = vmatprep.subr.bf16.mxu0 0
  %459 = vmatpush1.bf16.msra.mxu0 0
  %460 = vmatprep.subr.bf16.mxu0 0
  %461 = vmatpush1.bf16.msra.mxu0 0
  %462 = vmatprep.subr.bf16.mxu0 0
  %463 = vmatpush1.bf16.msra.mxu0 0
  %464 = vmatprep.subr.bf16.mxu0 0
  %465 = vmatpush1.bf16.msra.mxu0 0
  %466 = vmatprep.subr.bf16.mxu0 0
  %467 = vmatpush1.bf16.msra.mxu0 0
  %468 = vmatprep.subr.bf16.mxu0 0
  %469 = vmatpush1.bf16.msra.mxu0 0
  %470 = vmatprep.subr.bf16.mxu0 0
  %471 = vmatpush1.bf16.msra.mxu0 0
  %472 = vmatprep.mubr.bf16.mxu0 0
  %473 = vmatmul.mubr.bf16.gmra.mrb[0].mxu0 %v320
  %v474 = vpop.f32.mrb[0].mxu0
  %v475 = vadd.f32 %v378, %v474
  %v476 = vpop.f32.mrb[0].mxu0
  %v477 = vpop.f32.mrb[0].mxu0
  %v478 = vadd.f32 %v381, %v477
  %v479 = vpop.f32.mrb[0].mxu0
  %480 = vmatprep.mubr.bf16.mxu0 0
  %481 = vmatmul.mubr.bf16.gmra.mrb[0].mxu0 %v323
  %v482 = vpop.f32.mrb[0].mxu0
  %v483 = vadd.f32 %v386, %v482
  %v484 = vpop.f32.mrb[0].mxu0
  %v485 = vpop.f32.mrb[0].mxu0
  %v486 = vadd.f32 %v389, %v485
  %v487 = vpop.f32.mrb[0].mxu0
  %488 = vmatprep.mubr.bf16.mxu0 0
  %489 = vmatmul.mubr.bf16.gmra.mrb[0].mxu0 %v326
  %v490 = vpop.f32.mrb[0].mxu0
  %v491 = vadd.f32 %v394, %v490
  %v492 = vpop.f32.mrb[0].mxu0
  %v493 = vpop.f32.mrb[0].mxu0
  %v494 = vadd.f32 %v397, %v493
  %v495 = vpop.f32.mrb[0].mxu0
  %496 = vmatprep.mubr.bf16.mxu0 0
  %497 = vmatmul.mubr.bf16.gmra.mrb[0].mxu0 %v329
  %v498 = vpop.f32.mrb[0].mxu0
  %v499 = vadd.f32 %v402, %v498
  %v500 = vpop.f32.mrb[0].mxu0
  %v501 = vpop.f32.mrb[0].mxu0
  %v502 = vadd.f32 %v405, %v501
  %v503 = vpop.f32.mrb[0].mxu0
  %504 = vmatprep.mubr.bf16.mxu0 0
  %505 = vmatmul.mubr.bf16.gmra.mrb[0].mxu0 %v332
  %v506 = vpop.f32.mrb[0].mxu0
  %v507 = vadd.f32 %v410, %v506
  %v508 = vpop.f32.mrb[0].mxu0
  %v509 = vpop.f32.mrb[0].mxu0
  %v510 = vadd.f32 %v413, %v509
  %v511 = vpop.f32.mrb[0].mxu0
  %512 = vmatprep.mubr.bf16.mxu0 0
  %513 = vmatmul.mubr.bf16.gmra.mrb[0].mxu0 %v335
  %v514 = vpop.f32.mrb[0].mxu0
  %v515 = vadd.f32 %v418, %v514
  %v516 = vpop.f32.mrb[0].mxu0
  %v517 = vpop.f32.mrb[0].mxu0
  %v518 = vadd.f32 %v421, %v517
  %v519 = vpop.f32.mrb[0].mxu0
  %520 = vmatprep.mubr.bf16.mxu0 0
  %521 = vmatmul.mubr.bf16.gmra.mrb[0].mxu0 %v338
  %v522 = vpop.f32.mrb[0].mxu0
  %v523 = vadd.f32 %v426, %v522
  %v524 = vpop.f32.mrb[0].mxu0
  %v525 = vpop.f32.mrb[0].mxu0
  %v526 = vadd.f32 %v429, %v525
  %v527 = vpop.f32.mrb[0].mxu0
  %528 = vmatprep.mubr.bf16.mxu0 0
  %529 = vmatmul.mubr.bf16.gmra.mrb[0].mxu0 %v341
  %v530 = vpop.f32.mrb[0].mxu0
  %v531 = vadd.f32 %v434, %v530
  %v532 = vpop.f32.mrb[0].mxu0
  %v533 = vpop.f32.mrb[0].mxu0
  %v534 = vadd.f32 %v437, %v533
  %v535 = vpop.f32.mrb[0].mxu0
  %536 = vdwg.mxu0
  %v537 = vmax.f32 %v475, 0.0
  %v538 = vmax.f32 %v478, 0.0
  %v539 = vmax.f32 %v483, 0.0
  %v540 = vmax.f32 %v486, 0.0
  %v541 = vmax.f32 %v491, 0.0
  %v542 = vmax.f32 %v494, 0.0
  %v543 = vmax.f32 %v499, 0.0
  %v544 = vmax.f32 %v502, 0.0
  %v545 = vmax.f32 %v507, 0.0
  %v546 = vmax.f32 %v510, 0.0
  %v547 = vmax.f32 %v515, 0.0
  %v548 = vmax.f32 %v518, 0.0
  %v549 = vmax.f32 %v523, 0.0
  %v550 = vmax.f32 %v526, 0.0
  %v551 = vmax.f32 %v531, 0.0
  %v552 = vmax.f32 %v534, 0.0
  %553 = vst [vmem:[%s3] sm:$0xff] %v537
  %554 = vst [vmem:[%s3 + $0x8] sm:$0xff] %v538
  %555 = vst [vmem:[%s3 + $0x10] sm:$0xff] %v539
  %556 = vst [vmem:[%s3 + $0x18] sm:$0xff] %v540
  %557 = vst [vmem:[%s3 + $0x20] sm:$0xff] %v541
  %558 = vst [vmem:[%s3 + $0x28] sm:$0xff] %v542
  %559 = vst [vmem:[%s3 + $0x30] sm:$0xff] %v543
  %560 = vst [vmem:[%s3 + $0x38] sm:$0xff] %v544
  %561 = vst [vmem:[%s3 + $0x40] sm:$0xff] %v545
  %562 = vst [vmem:[%s3 + $0x48] sm:$0xff] %v546
  %563 = vst [vmem:[%s3 + $0x50] sm:$0xff] %v547
  %564 = vst [vmem:[%s3 + $0x58] sm:$0xff] %v548
  %565 = vst [vmem:[%s3 + $0x60] sm:$0xff] %v549
  %566 = vst [vmem:[%s3 + $0x68] sm:$0xff] %v550
  %567 = vst [vmem:[%s3 + $0x70] sm:$0xff] %v551
  %568 = vst [vmem:[%s3 + $0x78] sm:$0xff] %v552
  // Predicated region
  $region14: #{resnet_cifar_forward.16} parent=0 // pred_check
    _
  $region15: #{resnet_cifar_forward.16} parent=0 // pred_check_branch
    %570 = sbr.rel (0) target = $region17
  $region16: #{resnet_cifar_forward.16} parent=0 // pred_region
    _
  $region17: #{resnet_cifar_forward.16} parent=0 // pred_fallthru
    _
  // Predicated region
  $region18: #{resnet_cifar_forward.16} parent=0 // pred_check
    _
  $region19: #{resnet_cifar_forward.16} parent=0 // pred_check_branch
    %572 = sbr.rel (0) target = $region21
  $region20: #{resnet_cifar_forward.16} parent=0 // pred_region
    _
  $region21: #{resnet_cifar_forward.16} parent=0 // pred_fallthru
    _

// kernel: resnet_cifar_forward.19
$region0: #{resnet_cifar_forward.19}
  #allocation0 [shape = 'u32[]', space=smem, size = 0x4, offset = 0x4, fixed_abs, tag = 'smem constant byte address 0x4 - core index']
  #allocation1 [shape = 'u32[144,128]{1,0:T(1,128)}', space=vmem, size = 0x12000, scoped, tag = 'internal scratch']
  %s0 = inlined_call_operand.vmem [shape: f32[2,64,64], index: 0, kind: input, shape index: {}]
  %s1 = inlined_call_operand.vmem [shape: f32[64,128], index: 1, kind: input, shape index: {}]
  %s2 = inlined_call_operand.vmem [shape: f32[1,128], index: 2, kind: input, shape index: {}]
  %s3 = inlined_call_operand.hbm [shape: f32[2,128], index: 3, kind: output, shape index: {}]
  %s4 = sld [smem:[#allocation0]]
  $region22: #{resnet_cifar_forward.19} parent=0
    _
  %s6 = ssub.s32 1, %s4
  %s7 = scalar_select 0, %s6, %s4
  $region1: #{resnet_cifar_forward.19} parent=0
    #allocation2 [shape = 'u8[1024]{0}', space=vmem, size = 0x400, scoped, tag = 'output window, operand 0, single buffered']
    #allocation3 [shape = 's32[1]{0}', space=sflag, size = 0x4, scoped, tag = 'scoped memory for resnet_cifar_forward.19']
    %8 = vsyncpa [#allocation3], 0
    // Predicated region
    $region2: #{resnet_cifar_forward.19} parent=1 // pred_check
      _
    $region3: #{resnet_cifar_forward.19} parent=1 // pred_check_branch
      %10 = sbr.rel (0) target = $region5
    $region4: #{resnet_cifar_forward.19} parent=1 // pred_region
      _
    $region5: #{resnet_cifar_forward.19} parent=1 // pred_fallthru
      _
    // Predicated region
    $region6: #{resnet_cifar_forward.19} parent=1 // pred_check
      _
    $region7: #{resnet_cifar_forward.19} parent=1 // pred_check_branch
      %12 = sbr.rel (0) target = $region9
    $region8: #{resnet_cifar_forward.19} parent=1 // pred_region
      _
    $region9: #{resnet_cifar_forward.19} parent=1 // pred_fallthru
      _
    // Predicated region
    $region10: #{resnet_cifar_forward.19} parent=1 // pred_check
      _
    $region11: #{resnet_cifar_forward.19} parent=1 // pred_check_branch
      %14 = sbr.rel (0) target = $region13
    $region12: #{resnet_cifar_forward.19} parent=1 // pred_region
      _
    $region13: #{resnet_cifar_forward.19} parent=1 // pred_fallthru
      _
    %v15 = vld [vmem:[%s0] sm:$0xff]
    %v16 = vld [vmem:[%s0 + $0x8] sm:$0xff]
    %v17 = vld [vmem:[%s0 + $0x10] sm:$0xff]
    %v18 = vld [vmem:[%s0 + $0x18] sm:$0xff]
    %v19 = vld [vmem:[%s0 + $0x20] sm:$0xff]
    %v20 = vld [vmem:[%s0 + $0x28] sm:$0xff]
    %v21 = vld [vmem:[%s0 + $0x30] sm:$0xff]
    %v22 = vld [vmem:[%s0 + $0x38] sm:$0xff]
    %v23 = vld [vmem:[%s0 + $0x40] sm:$0xff]
    %v24 = vld [vmem:[%s0 + $0x48] sm:$0xff]
    %v25 = vld [vmem:[%s0 + $0x50] sm:$0xff]
    %v26 = vld [vmem:[%s0 + $0x58] sm:$0xff]
    %v27 = vld [vmem:[%s0 + $0x60] sm:$0xff]
    %v28 = vld [vmem:[%s0 + $0x68] sm:$0xff]
    %v29 = vld [vmem:[%s0 + $0x70] sm:$0xff]
    %v30 = vld [vmem:[%s0 + $0x78] sm:$0xff]
    %vm31 = vcmask 523264
    %v32 = vsel %vm31, %v15, 0.0
    %v33 = vsel %vm31, %v16, 0.0
    %v34 = vadd.f32 %v32, %v33
    %v35 = vsel %vm31, %v17, 0.0
    %v36 = vadd.f32 %v34, %v35
    %v37 = vsel %vm31, %v18, 0.0
    %v38 = vadd.f32 %v36, %v37
    %v39 = vsel %vm31, %v19, 0.0
    %v40 = vadd.f32 %v38, %v39
    %v41 = vsel %vm31, %v20, 0.0
    %v42 = vadd.f32 %v40, %v41
    %v43 = vsel %vm31, %v21, 0.0
    %v44 = vadd.f32 %v42, %v43
    %v45 = vsel %vm31, %v22, 0.0
    %v46 = vadd.f32 %v44, %v45
    %v47 = vrot.slane %v46, 4
    %v48 = vadd.f32 %v46, %v47
    %v49 = vrot.slane %v48, 2
    %v50 = vadd.f32 %v48, %v49
    %v51 = vrot.slane %v50, 1
    %v52 = vadd.f32 %v50, %v51
    %v53 = vsel %vm31, %v23, 0.0
    %v54 = vsel %vm31, %v24, 0.0
    %v55 = vadd.f32 %v53, %v54
    %v56 = vsel %vm31, %v25, 0.0
    %v57 = vadd.f32 %v55, %v56
    %v58 = vsel %vm31, %v26, 0.0
    %v59 = vadd.f32 %v57, %v58
    %v60 = vsel %vm31, %v27, 0.0
    %v61 = vadd.f32 %v59, %v60
    %v62 = vsel %vm31, %v28, 0.0
    %v63 = vadd.f32 %v61, %v62
    %v64 = vsel %vm31, %v29, 0.0
    %v65 = vadd.f32 %v63, %v64
    %v66 = vsel %vm31, %v30, 0.0
    %v67 = vadd.f32 %v65, %v66
    %v68 = vrot.slane %v67, 4
    %v69 = vadd.f32 %v67, %v68
    %v70 = vrot.slane %v69, 2
    %v71 = vadd.f32 %v69, %v70
    %v72 = vrot.slane %v71, 1
    %v73 = vadd.f32 %v71, %v72
    %v74 = vrcp.pop 64.0
    %v75 = vmul.f32 %v52, %v74
    %v76 = vmul.f32 %v73, %v74
    %v77 = vld [vmem:[%s1] sm:$0xff]
    %v78 = vld [vmem:[%s1 + $0x8] sm:$0xff]
    %v79 = vld [vmem:[%s1 + $0x10] sm:$0xff]
    %v80 = vld [vmem:[%s1 + $0x18] sm:$0xff]
    %v81 = vld [vmem:[%s1 + $0x20] sm:$0xff]
    %v82 = vld [vmem:[%s1 + $0x28] sm:$0xff]
    %v83 = vld [vmem:[%s1 + $0x30] sm:$0xff]
    %v84 = vld [vmem:[%s1 + $0x38] sm:$0xff]
    %v85 = vld [vmem:[%s2] sm:$0x1]
    %v87 = vlaneseq
    %v88 = vshrl.u32 %v87, 7
    %v89 = vsub.s32 0, %v88
    %v90 = vrot.slane %v85, %v89
    %vm94 = vcmask 1041409
    %v95 = vsel %vm94, %v76, %v75
    %v96 = vsel %vm31, %v95, 0
    %98 = vmatprep.subr.mxu0 0.0
    %99 = vmatpush1.msra.mxu0 %v77
    %100 = vmatprep.subr.mxu0 0.0
    %101 = vmatpush1.msra.mxu0 %v78
    %102 = vmatprep.subr.mxu0 0.0
    %103 = vmatpush1.msra.mxu0 %v79
    %104 = vmatprep.subr.mxu0 0.0
    %105 = vmatpush1.msra.mxu0 %v80
    %106 = vmatprep.subr.mxu0 0.0
    %107 = vmatpush1.msra.mxu0 %v81
    %108 = vmatprep.subr.mxu0 0.0
    %109 = vmatpush1.msra.mxu0 %v82
    %110 = vmatprep.subr.mxu0 0.0
    %111 = vmatpush1.msra.mxu0 %v83
    %112 = vmatprep.subr.mxu0 0.0
    %113 = vmatpush1.msra.mxu0 %v84
    %114 = vmatprep.subr.mxu0 0.0
    %115 = vmatpush1.msra.mxu0 0.0
    %116 = vmatprep.subr.mxu0 0.0
    %117 = vmatpush1.msra.mxu0 0.0
    %118 = vmatprep.subr.mxu0 0.0
    %119 = vmatpush1.msra.mxu0 0.0
    %120 = vmatprep.subr.mxu0 0.0
    %121 = vmatpush1.msra.mxu0 0.0
    %122 = vmatprep.subr.mxu0 0.0
    %123 = vmatpush1.msra.mxu0 0.0
    %124 = vmatprep.subr.mxu0 0.0
    %125 = vmatpush1.msra.mxu0 0.0
    %126 = vmatprep.subr.mxu0 0.0
    %127 = vmatpush1.msra.mxu0 0.0
    %128 = vmatprep.subr.mxu0 0.0
    %129 = vmatpush1.msra.mxu0 0.0
    %130 = vmatprep.subr.mxu0 0.0
    %131 = vmatpush1.msra.mxu0 0.0
    %132 = vmatprep.subr.mxu0 0.0
    %133 = vmatpush1.msra.mxu0 0.0
    %134 = vmatprep.subr.mxu0 0.0
    %135 = vmatpush1.msra.mxu0 0.0
    %136 = vmatprep.subr.mxu0 0.0
    %137 = vmatpush1.msra.mxu0 0.0
    %138 = vmatprep.subr.mxu0 0.0
    %139 = vmatpush1.msra.mxu0 0.0
    %140 = vmatprep.subr.mxu0 0.0
    %141 = vmatpush1.msra.mxu0 0.0
    %142 = vmatprep.subr.mxu0 0.0
    %143 = vmatpush1.msra.mxu0 0.0
    %144 = vmatprep.subr.mxu0 0.0
    %145 = vmatpush1.msra.mxu0 0.0
    %146 = vmatprep.subr.mxu0 0.0
    %147 = vmatpush1.msra.mxu0 0.0
    %148 = vmatprep.subr.mxu0 0.0
    %149 = vmatpush1.msra.mxu0 0.0
    %150 = vmatprep.subr.mxu0 0.0
    %151 = vmatpush1.msra.mxu0 0.0
    %152 = vmatprep.subr.mxu0 0.0
    %153 = vmatpush1.msra.mxu0 0.0
    %154 = vmatprep.subr.mxu0 0.0
    %155 = vmatpush1.msra.mxu0 0.0
    %156 = vmatprep.subr.mxu0 0.0
    %157 = vmatpush1.msra.mxu0 0.0
    %158 = vmatprep.subr.mxu0 0.0
    %159 = vmatpush1.msra.mxu0 0.0
    %160 = vmatprep.subr.mxu0 0.0
    %161 = vmatpush1.msra.mxu0 0.0
    %162 = vmatprep.mubr.f32.mxu0 0.0
    %163 = vmatmul.mubr.f32.gmra.mrb[0].mxu0 %v96
    %v164 = vpop.f32.mrb[0].mxu0
    %v165 = vadd.f32 %v90, %v164
    %v166 = vpop.f32.mrb[0].mxu0
    %167 = vdwg.mxu0
    %168 = vst [vmem:[#allocation2] sm:$0x3] %v165
    // Predicated region
    $region14: #{resnet_cifar_forward.19} parent=1 // pred_check
      _
    $region15: #{resnet_cifar_forward.19} parent=1 // pred_check_branch
      %170 = sbr.rel (0) target = $region17
    $region16: #{resnet_cifar_forward.19} parent=1 // pred_region
      %s172 = ssub.s32 32, 32
      %173 = vsyncadd [#allocation3], %s172
      %s175 = sshll.u32 [#allocation2], 4
      %s176 = int_to_ptr.vmem [resolvable:$true] %s175
      %178 = dma.vmem_to_hbm [thread:$0]  %s176, 32, %s3, [#allocation3]
    $region17: #{resnet_cifar_forward.19} parent=1 // pred_fallthru
      _
    // Predicated region
    $region18: #{resnet_cifar_forward.19} parent=1 // pred_check
      _
    $region19: #{resnet_cifar_forward.19} parent=1 // pred_check_branch
      %180 = sbr.rel (0) target = $region21
    $region20: #{resnet_cifar_forward.19} parent=1 // pred_region
      %181 = dma.done [#allocation3], 32
    $region21: #{resnet_cifar_forward.19} parent=1 // pred_fallthru
      _
    %182 = vsyncpa [#allocation3], 1

// kernel: resnet_cifar_forward.18
$region0: #{resnet_cifar_forward.18}
  #allocation0 [shape = 'u32[]', space=smem, size = 0x4, offset = 0x4, fixed_abs, tag = 'smem constant byte address 0x4 - core index']
  #allocation1 [shape = 'u32[144,128]{1,0:T(1,128)}', space=vmem, size = 0x12000, scoped, tag = 'internal scratch']
  %s0 = inlined_call_operand.vmem [shape: bf16[128,576], index: 0, kind: input, shape index: {}]
  %s1 = inlined_call_operand.vmem [shape: bf16[576,128], index: 1, kind: input, shape index: {}]
  %s2 = inlined_call_operand.vmem [shape: f32[1,128], index: 2, kind: input, shape index: {}]
  %s3 = inlined_call_operand.vmem [shape: f32[128,128], index: 3, kind: input, shape index: {}]
  %s4 = inlined_call_operand.vmem [shape: f32[128,128], index: 4, kind: output, shape index: {}]
  %s5 = sld [smem:[#allocation0]]
  $region26: #{resnet_cifar_forward.18} parent=0
    _
  %s7 = ssub.s32 1, %s5
  %s8 = scalar_select 0, %s7, %s5
  // Predicated region
  $region2: #{resnet_cifar_forward.18} parent=0 // pred_check
    _
  $region3: #{resnet_cifar_forward.18} parent=0 // pred_check_branch
    %10 = sbr.rel (0) target = $region5
  $region4: #{resnet_cifar_forward.18} parent=0 // pred_region
    _
  $region5: #{resnet_cifar_forward.18} parent=0 // pred_fallthru
    _
  // Predicated region
  $region6: #{resnet_cifar_forward.18} parent=0 // pred_check
    _
  $region7: #{resnet_cifar_forward.18} parent=0 // pred_check_branch
    %12 = sbr.rel (0) target = $region9
  $region8: #{resnet_cifar_forward.18} parent=0 // pred_region
    _
  $region9: #{resnet_cifar_forward.18} parent=0 // pred_fallthru
    _
  // Predicated region
  $region10: #{resnet_cifar_forward.18} parent=0 // pred_check
    _
  $region11: #{resnet_cifar_forward.18} parent=0 // pred_check_branch
    %14 = sbr.rel (0) target = $region13
  $region12: #{resnet_cifar_forward.18} parent=0 // pred_region
    _
  $region13: #{resnet_cifar_forward.18} parent=0 // pred_fallthru
    _
  // Predicated region
  $region14: #{resnet_cifar_forward.18} parent=0 // pred_check
    _
  $region15: #{resnet_cifar_forward.18} parent=0 // pred_check_branch
    %16 = sbr.rel (0) target = $region17
  $region16: #{resnet_cifar_forward.18} parent=0 // pred_region
    _
  $region17: #{resnet_cifar_forward.18} parent=0 // pred_fallthru
    _
  %v18 = vld [vmem:[%s0] sm:$0xff]
  %v19 = vld [vmem:[%s0 + $0x8] sm:$0xff]
  %v20 = vld [vmem:[%s0 + $0x10] sm:$0xf]
  %v21 = vld [vmem:[%s0 + $0x14] sm:$0xff]
  %v22 = vld [vmem:[%s0 + $0x1c] sm:$0xff]
  %v23 = vld [vmem:[%s0 + $0x24] sm:$0xf]
  %v24 = vld [vmem:[%s0 + $0x28] sm:$0xff]
  %v25 = vld [vmem:[%s0 + $0x30] sm:$0xff]
  %v26 = vld [vmem:[%s0 + $0x38] sm:$0xf]
  %v27 = vld [vmem:[%s0 + $0x3c] sm:$0xff]
  %v28 = vld [vmem:[%s0 + $0x44] sm:$0xff]
  %v29 = vld [vmem:[%s0 + $0x4c] sm:$0xf]
  %v30 = vld [vmem:[%s0 + $0x50] sm:$0xff]
  %v31 = vld [vmem:[%s0 + $0x58] sm:$0xff]
  %v32 = vld [vmem:[%s0 + $0x60] sm:$0xf]
  %v33 = vld [vmem:[%s0 + $0x64] sm:$0xff]
  %v34 = vld [vmem:[%s0 + $0x6c] sm:$0xff]
  %v35 = vld [vmem:[%s0 + $0x74] sm:$0xf]
  %v36 = vld [vmem:[%s0 + $0x78] sm:$0xff]
  %v37 = vld [vmem:[%s0 + $0x80] sm:$0xff]
  %v38 = vld [vmem:[%s0 + $0x88] sm:$0xf]
  %v39 = vld [vmem:[%s0 + $0x8c] sm:$0xff]
  %v40 = vld [vmem:[%s0 + $0x94] sm:$0xff]
  %v41 = vld [vmem:[%s0 + $0x9c] sm:$0xf]
  %v42 = vld [vmem:[%s0 + $0xa0] sm:$0xff]
  %v43 = vld [vmem:[%s0 + $0xa8] sm:$0xff]
  %v44 = vld [vmem:[%s0 + $0xb0] sm:$0xf]
  %v45 = vld [vmem:[%s0 + $0xb4] sm:$0xff]
  %v46 = vld [vmem:[%s0 + $0xbc] sm:$0xff]
  %v47 = vld [vmem:[%s0 + $0xc4] sm:$0xf]
  %v48 = vld [vmem:[%s0 + $0xc8] sm:$0xff]
  %v49 = vld [vmem:[%s0 + $0xd0] sm:$0xff]
  %v50 = vld [vmem:[%s0 + $0xd8] sm:$0xf]
  %v51 = vld [vmem:[%s0 + $0xdc] sm:$0xff]
  %v52 = vld [vmem:[%s0 + $0xe4] sm:$0xff]
  %v53 = vld [vmem:[%s0 + $0xec] sm:$0xf]
  %v54 = vld [vmem:[%s0 + $0xf0] sm:$0xff]
  %v55 = vld [vmem:[%s0 + $0xf8] sm:$0xff]
  %v56 = vld [vmem:[%s0 + $0x100] sm:$0xf]
  %v57 = vld [vmem:[%s0 + $0x104] sm:$0xff]
  %v58 = vld [vmem:[%s0 + $0x10c] sm:$0xff]
  %v59 = vld [vmem:[%s0 + $0x114] sm:$0xf]
  %v60 = vld [vmem:[%s0 + $0x118] sm:$0xff]
  %v61 = vld [vmem:[%s0 + $0x120] sm:$0xff]
  %v62 = vld [vmem:[%s0 + $0x128] sm:$0xf]
  %v63 = vld [vmem:[%s0 + $0x12c] sm:$0xff]
  %v64 = vld [vmem:[%s0 + $0x134] sm:$0xff]
  %v65 = vld [vmem:[%s0 + $0x13c] sm:$0xf]
  %v66 = vld [vmem:[%s1] sm:$0xf]
  %v67 = vld [vmem:[%s1 + $0x4] sm:$0xf]
  %v68 = vld [vmem:[%s1 + $0x8] sm:$0xf]
  %v69 = vld [vmem:[%s1 + $0xc] sm:$0xf]
  %v70 = vld [vmem:[%s1 + $0x10] sm:$0xf]
  %v71 = vld [vmem:[%s1 + $0x14] sm:$0xf]
  %v72 = vld [vmem:[%s1 + $0x18] sm:$0xf]
  %v73 = vld [vmem:[%s1 + $0x1c] sm:$0xf]
  %v74 = vld [vmem:[%s1 + $0x20] sm:$0xf]
  %v75 = vld [vmem:[%s1 + $0x24] sm:$0xf]
  %v76 = vld [vmem:[%s1 + $0x28] sm:$0xf]
  %v77 = vld [vmem:[%s1 + $0x2c] sm:$0xf]
  %v78 = vld [vmem:[%s1 + $0x30] sm:$0xf]
  %v79 = vld [vmem:[%s1 + $0x34] sm:$0xf]
  %v80 = vld [vmem:[%s1 + $0x38] sm:$0xf]
  %v81 = vld [vmem:[%s1 + $0x3c] sm:$0xf]
  %v82 = vld [vmem:[%s1 + $0x40] sm:$0xf]
  %v83 = vld [vmem:[%s1 + $0x44] sm:$0xf]
  %v84 = vld [vmem:[%s1 + $0x48] sm:$0xf]
  %v85 = vld [vmem:[%s1 + $0x4c] sm:$0xf]
  %v86 = vld [vmem:[%s1 + $0x50] sm:$0xf]
  %v87 = vld [vmem:[%s1 + $0x54] sm:$0xf]
  %v88 = vld [vmem:[%s1 + $0x58] sm:$0xf]
  %v89 = vld [vmem:[%s1 + $0x5c] sm:$0xf]
  %v90 = vld [vmem:[%s1 + $0x60] sm:$0xf]
  %v91 = vld [vmem:[%s1 + $0x64] sm:$0xf]
  %v92 = vld [vmem:[%s1 + $0x68] sm:$0xf]
  %v93 = vld [vmem:[%s1 + $0x6c] sm:$0xf]
  %v94 = vld [vmem:[%s1 + $0x70] sm:$0xf]
  %v95 = vld [vmem:[%s1 + $0x74] sm:$0xf]
  %v96 = vld [vmem:[%s1 + $0x78] sm:$0xf]
  %v97 = vld [vmem:[%s1 + $0x7c] sm:$0xf]
  %v98 = vld [vmem:[%s1 + $0x80] sm:$0xf]
  %v99 = vld [vmem:[%s1 + $0x84] sm:$0xf]
  %v100 = vld [vmem:[%s1 + $0x88] sm:$0xf]
  %v101 = vld [vmem:[%s1 + $0x8c] sm:$0xf]
  %v102 = vld [vmem:[%s1 + $0x90] sm:$0xf]
  %v103 = vld [vmem:[%s1 + $0x94] sm:$0xf]
  %v104 = vld [vmem:[%s1 + $0x98] sm:$0xf]
  %v105 = vld [vmem:[%s1 + $0x9c] sm:$0xf]
  %v106 = vld [vmem:[%s1 + $0xa0] sm:$0xf]
  %v107 = vld [vmem:[%s1 + $0xa4] sm:$0xf]
  %v108 = vld [vmem:[%s1 + $0xa8] sm:$0xf]
  %v109 = vld [vmem:[%s1 + $0xac] sm:$0xf]
  %v110 = vld [vmem:[%s1 + $0xb0] sm:$0xf]
  %v111 = vld [vmem:[%s1 + $0xb4] sm:$0xf]
  %v112 = vld [vmem:[%s1 + $0xb8] sm:$0xf]
  %v113 = vld [vmem:[%s1 + $0xbc] sm:$0xf]
  %v114 = vld [vmem:[%s1 + $0xc0] sm:$0xf]
  %v115 = vld [vmem:[%s1 + $0xc4] sm:$0xf]
  %v116 = vld [vmem:[%s1 + $0xc8] sm:$0xf]
  %v117 = vld [vmem:[%s1 + $0xcc] sm:$0xf]
  %v118 = vld [vmem:[%s1 + $0xd0] sm:$0xf]
  %v119 = vld [vmem:[%s1 + $0xd4] sm:$0xf]
  %v120 = vld [vmem:[%s1 + $0xd8] sm:$0xf]
  %v121 = vld [vmem:[%s1 + $0xdc] sm:$0xf]
  %v122 = vld [vmem:[%s1 + $0xe0] sm:$0xf]
  %v123 = vld [vmem:[%s1 + $0xe4] sm:$0xf]
  %v124 = vld [vmem:[%s1 + $0xe8] sm:$0xf]
  %v125 = vld [vmem:[%s1 + $0xec] sm:$0xf]
  %v126 = vld [vmem:[%s1 + $0xf0] sm:$0xf]
  %v127 = vld [vmem:[%s1 + $0xf4] sm:$0xf]
  %v128 = vld [vmem:[%s1 + $0xf8] sm:$0xf]
  %v129 = vld [vmem:[%s1 + $0xfc] sm:$0xf]
  %v130 = vld [vmem:[%s1 + $0x100] sm:$0xf]
  %v131 = vld [vmem:[%s1 + $0x104] sm:$0xf]
  %v132 = vld [vmem:[%s1 + $0x108] sm:$0xf]
  %v133 = vld [vmem:[%s1 + $0x10c] sm:$0xf]
  %v134 = vld [vmem:[%s1 + $0x110] sm:$0xf]
  %v135 = vld [vmem:[%s1 + $0x114] sm:$0xf]
  %v136 = vld [vmem:[%s1 + $0x118] sm:$0xf]
  %v137 = vld [vmem:[%s1 + $0x11c] sm:$0xf]
  %v138 = vld [vmem:[%s2] sm:$0x1]
  %v140 = vlaneseq
  %v141 = vshrl.u32 %v140, 7
  %v142 = vsub.s32 0, %v141
  %v143 = vrot.slane %v138, %v142
  %v193 = vunpack.c.l.b16 %v18
  %v194 = vunpack.c.h.b16 %v18
  %v195 = vunpack.c.l.b16 %v19
  %v196 = vunpack.c.h.b16 %v19
  %v197 = vunpack.c.l.b16 %v20
  %v198 = vunpack.c.l.b16 %v21
  %v199 = vunpack.c.h.b16 %v21
  %v200 = vunpack.c.l.b16 %v22
  %v201 = vunpack.c.h.b16 %v22
  %v202 = vunpack.c.l.b16 %v23
  %v203 = vunpack.c.l.b16 %v24
  %v204 = vunpack.c.h.b16 %v24
  %v205 = vunpack.c.l.b16 %v25
  %v206 = vunpack.c.h.b16 %v25
  %v207 = vunpack.c.l.b16 %v26
  %v208 = vunpack.c.l.b16 %v27
  %v209 = vunpack.c.h.b16 %v27
  %v210 = vunpack.c.l.b16 %v28
  %v211 = vunpack.c.h.b16 %v28
  %v212 = vunpack.c.l.b16 %v29
  %v213 = vunpack.c.l.b16 %v30
  %v214 = vunpack.c.h.b16 %v30
  %v215 = vunpack.c.l.b16 %v31
  %v216 = vunpack.c.h.b16 %v31
  %v217 = vunpack.c.l.b16 %v32
  %v218 = vunpack.c.l.b16 %v33
  %v219 = vunpack.c.h.b16 %v33
  %v220 = vunpack.c.l.b16 %v34
  %v221 = vunpack.c.h.b16 %v34
  %v222 = vunpack.c.l.b16 %v35
  %v223 = vunpack.c.l.b16 %v36
  %v224 = vunpack.c.h.b16 %v36
  %v225 = vunpack.c.l.b16 %v37
  %v226 = vunpack.c.h.b16 %v37
  %v227 = vunpack.c.l.b16 %v38
  %v228 = vunpack.c.l.b16 %v39
  %v229 = vunpack.c.h.b16 %v39
  %v230 = vunpack.c.l.b16 %v40
  %v231 = vunpack.c.h.b16 %v40
  %v232 = vunpack.c.l.b16 %v41
  %v233 = vunpack.c.l.b16 %v42
  %v234 = vunpack.c.h.b16 %v42
  %v235 = vunpack.c.l.b16 %v43
  %v236 = vunpack.c.h.b16 %v43
  %v237 = vunpack.c.l.b16 %v44
  %v238 = vunpack.c.l.b16 %v45
  %v239 = vunpack.c.h.b16 %v45
  %v240 = vunpack.c.l.b16 %v46
  %v241 = vunpack.c.h.b16 %v46
  %v242 = vunpack.c.l.b16 %v47
  %v243 = vunpack.c.l.b16 %v48
  %v244 = vunpack.c.h.b16 %v48
  %v245 = vunpack.c.l.b16 %v49
  %v246 = vunpack.c.h.b16 %v49
  %v247 = vunpack.c.l.b16 %v50
  %v248 = vunpack.c.l.b16 %v51
  %v249 = vunpack.c.h.b16 %v51
  %v250 = vunpack.c.l.b16 %v52
  %v251 = vunpack.c.h.b16 %v52
  %v252 = vunpack.c.l.b16 %v53
  %v253 = vunpack.c.l.b16 %v54
  %v254 = vunpack.c.h.b16 %v54
  %v255 = vunpack.c.l.b16 %v55
  %v256 = vunpack.c.h.b16 %v55
  %v257 = vunpack.c.l.b16 %v56
  %v258 = vunpack.c.l.b16 %v57
  %v259 = vunpack.c.h.b16 %v57
  %v260 = vunpack.c.l.b16 %v58
  %v261 = vunpack.c.h.b16 %v58
  %v262 = vunpack.c.l.b16 %v59
  %v263 = vunpack.c.l.b16 %v60
  %v264 = vunpack.c.h.b16 %v60
  %v265 = vunpack.c.l.b16 %v61
  %v266 = vunpack.c.h.b16 %v61
  %v267 = vunpack.c.l.b16 %v62
  %v268 = vunpack.c.l.b16 %v63
  %v269 = vunpack.c.h.b16 %v63
  %v270 = vunpack.c.l.b16 %v64
  %v271 = vunpack.c.h.b16 %v64
  %v272 = vunpack.c.l.b16 %v65
  %v273 = vpack.c.b16 %v198, %v193
  %v274 = vpack.c.b16 %v199, %v194
  %v275 = vpack.c.b16 %v200, %v195
  %v276 = vpack.c.b16 %v201, %v196
  %v277 = vpack.c.b16 %v202, %v197
  %v278 = vpack.c.b16 %v208, %v203
  %v279 = vpack.c.b16 %v209, %v204
  %v280 = vpack.c.b16 %v210, %v205
  %v281 = vpack.c.b16 %v211, %v206
  %v282 = vpack.c.b16 %v212, %v207
  %v283 = vpack.c.b16 %v218, %v213
  %v284 = vpack.c.b16 %v219, %v214
  %v285 = vpack.c.b16 %v220, %v215
  %v286 = vpack.c.b16 %v221, %v216
  %v287 = vpack.c.b16 %v222, %v217
  %v288 = vpack.c.b16 %v228, %v223
  %v289 = vpack.c.b16 %v229, %v224
  %v290 = vpack.c.b16 %v230, %v225
  %v291 = vpack.c.b16 %v231, %v226
  %v292 = vpack.c.b16 %v232, %v227
  %v293 = vpack.c.b16 %v238, %v233
  %v294 = vpack.c.b16 %v239, %v234
  %v295 = vpack.c.b16 %v240, %v235
  %v296 = vpack.c.b16 %v241, %v236
  %v297 = vpack.c.b16 %v242, %v237
  %v298 = vpack.c.b16 %v248, %v243
  %v299 = vpack.c.b16 %v249, %v244
  %v300 = vpack.c.b16 %v250, %v245
  %v301 = vpack.c.b16 %v251, %v246
  %v302 = vpack.c.b16 %v252, %v247
  %v303 = vpack.c.b16 %v258, %v253
  %v304 = vpack.c.b16 %v259, %v254
  %v305 = vpack.c.b16 %v260, %v255
  %v306 = vpack.c.b16 %v261, %v256
  %v307 = vpack.c.b16 %v262, %v257
  %v308 = vpack.c.b16 %v268, %v263
  %v309 = vpack.c.b16 %v269, %v264
  %v310 = vpack.c.b16 %v270, %v265
  %v311 = vpack.c.b16 %v271, %v266
  %v312 = vpack.c.b16 %v272, %v267
  %v417 = vunpack.c.l.b16 %v66
  %v418 = vunpack.c.l.b16 %v67
  %v419 = vunpack.c.l.b16 %v68
  %v420 = vunpack.c.l.b16 %v69
  %v421 = vunpack.c.l.b16 %v70
  %v422 = vunpack.c.l.b16 %v71
  %v423 = vunpack.c.l.b16 %v72
  %v424 = vunpack.c.l.b16 %v73
  %v425 = vunpack.c.l.b16 %v74
  %v426 = vunpack.c.l.b16 %v75
  %v427 = vunpack.c.l.b16 %v76
  %v428 = vunpack.c.l.b16 %v77
  %v429 = vunpack.c.l.b16 %v78
  %v430 = vunpack.c.l.b16 %v79
  %v431 = vunpack.c.l.b16 %v80
  %v432 = vunpack.c.l.b16 %v81
  %v433 = vunpack.c.l.b16 %v82
  %v434 = vunpack.c.l.b16 %v83
  %v435 = vunpack.c.l.b16 %v84
  %v436 = vunpack.c.l.b16 %v85
  %v437 = vunpack.c.l.b16 %v86
  %v438 = vunpack.c.l.b16 %v87
  %v439 = vunpack.c.l.b16 %v88
  %v440 = vunpack.c.l.b16 %v89
  %v441 = vunpack.c.l.b16 %v90
  %v442 = vunpack.c.l.b16 %v91
  %v443 = vunpack.c.l.b16 %v92
  %v444 = vunpack.c.l.b16 %v93
  %v445 = vunpack.c.l.b16 %v94
  %v446 = vunpack.c.l.b16 %v95
  %v447 = vunpack.c.l.b16 %v96
  %v448 = vunpack.c.l.b16 %v97
  %v449 = vunpack.c.l.b16 %v98
  %v450 = vunpack.c.l.b16 %v99
  %v451 = vunpack.c.l.b16 %v100
  %v452 = vunpack.c.l.b16 %v101
  %v453 = vunpack.c.l.b16 %v102
  %v454 = vunpack.c.l.b16 %v103
  %v455 = vunpack.c.l.b16 %v104
  %v456 = vunpack.c.l.b16 %v105
  %v457 = vunpack.c.l.b16 %v106
  %v458 = vunpack.c.l.b16 %v107
  %v459 = vunpack.c.l.b16 %v108
  %v460 = vunpack.c.l.b16 %v109
  %v461 = vunpack.c.l.b16 %v110
  %v462 = vunpack.c.l.b16 %v111
  %v463 = vunpack.c.l.b16 %v112
  %v464 = vunpack.c.l.b16 %v113
  %v465 = vunpack.c.l.b16 %v114
  %v466 = vunpack.c.l.b16 %v115
  %v467 = vunpack.c.l.b16 %v116
  %v468 = vunpack.c.l.b16 %v117
  %v469 = vunpack.c.l.b16 %v118
  %v470 = vunpack.c.l.b16 %v119
  %v471 = vunpack.c.l.b16 %v120
  %v472 = vunpack.c.l.b16 %v121
  %v473 = vunpack.c.l.b16 %v122
  %v474 = vunpack.c.l.b16 %v123
  %v475 = vunpack.c.l.b16 %v124
  %v476 = vunpack.c.l.b16 %v125
  %v477 = vunpack.c.l.b16 %v126
  %v478 = vunpack.c.l.b16 %v127
  %v479 = vunpack.c.l.b16 %v128
  %v480 = vunpack.c.l.b16 %v129
  %v481 = vunpack.c.l.b16 %v130
  %v482 = vunpack.c.l.b16 %v131
  %v483 = vunpack.c.l.b16 %v132
  %v484 = vunpack.c.l.b16 %v133
  %v485 = vunpack.c.l.b16 %v134
  %v486 = vunpack.c.l.b16 %v135
  %v487 = vunpack.c.l.b16 %v136
  %v488 = vunpack.c.l.b16 %v137
  %v489 = vpack.c.b16 %v418, %v417
  %v490 = vpack.c.b16 %v420, %v419
  %v491 = vpack.c.b16 %v422, %v421
  %v492 = vpack.c.b16 %v424, %v423
  %v493 = vpack.c.b16 %v426, %v425
  %v494 = vpack.c.b16 %v428, %v427
  %v495 = vpack.c.b16 %v430, %v429
  %v496 = vpack.c.b16 %v432, %v431
  %v497 = vpack.c.b16 %v434, %v433
  %v498 = vpack.c.b16 %v436, %v435
  %v499 = vpack.c.b16 %v438, %v437
  %v500 = vpack.c.b16 %v440, %v439
  %v501 = vpack.c.b16 %v442, %v441
  %v502 = vpack.c.b16 %v444, %v443
  %v503 = vpack.c.b16 %v446, %v445
  %v504 = vpack.c.b16 %v448, %v447
  %v505 = vpack.c.b16 %v450, %v449
  %v506 = vpack.c.b16 %v452, %v451
  %v507 = vpack.c.b16 %v454, %v453
  %v508 = vpack.c.b16 %v456, %v455
  %v509 = vpack.c.b16 %v458, %v457
  %v510 = vpack.c.b16 %v460, %v459
  %v511 = vpack.c.b16 %v462, %v461
  %v512 = vpack.c.b16 %v464, %v463
  %v513 = vpack.c.b16 %v466, %v465
  %v514 = vpack.c.b16 %v468, %v467
  %v515 = vpack.c.b16 %v470, %v469
  %v516 = vpack.c.b16 %v472, %v471
  %v517 = vpack.c.b16 %v474, %v473
  %v518 = vpack.c.b16 %v476, %v475
  %v519 = vpack.c.b16 %v478, %v477
  %v520 = vpack.c.b16 %v480, %v479
  %v521 = vpack.c.b16 %v482, %v481
  %v522 = vpack.c.b16 %v484, %v483
  %v523 = vpack.c.b16 %v486, %v485
  %v524 = vpack.c.b16 %v488, %v487
  %vm561 = vcmask 523264
  %v563 = vsel %vm561, %v277, 0
  %v566 = vsel %vm561, %v282, 0
  %v569 = vsel %vm561, %v287, 0
  %v572 = vsel %vm561, %v292, 0
  %v575 = vsel %vm561, %v297, 0
  %v578 = vsel %vm561, %v302, 0
  %v581 = vsel %vm561, %v307, 0
  %v584 = vsel %vm561, %v312, 0
  %586 = vmatprep.subr.bf16.mxu0 0
  %587 = vmatpush1.bf16.msra.mxu0 %v489
  %588 = vmatprep.subr.bf16.mxu0 0
  %589 = vmatpush1.bf16.msra.mxu0 %v490
  %590 = vmatprep.subr.bf16.mxu0 0
  %591 = vmatpush1.bf16.msra.mxu0 %v491
  %592 = vmatprep.subr.bf16.mxu0 0
  %593 = vmatpush1.bf16.msra.mxu0 %v492
  %594 = vmatprep.subr.bf16.mxu0 0
  %595 = vmatpush1.bf16.msra.mxu0 %v493
  %596 = vmatprep.subr.bf16.mxu0 0
  %597 = vmatpush1.bf16.msra.mxu0 %v494
  %598 = vmatprep.subr.bf16.mxu0 0
  %599 = vmatpush1.bf16.msra.mxu0 %v495
  %600 = vmatprep.subr.bf16.mxu0 0
  %601 = vmatpush1.bf16.msra.mxu0 %v496
  %602 = vmatprep.subr.bf16.mxu0 0
  %603 = vmatpush1.bf16.msra.mxu0 %v497
  %604 = vmatprep.subr.bf16.mxu0 0
  %605 = vmatpush1.bf16.msra.mxu0 %v498
  %606 = vmatprep.subr.bf16.mxu0 0
  %607 = vmatpush1.bf16.msra.mxu0 %v499
  %608 = vmatprep.subr.bf16.mxu0 0
  %609 = vmatpush1.bf16.msra.mxu0 %v500
  %610 = vmatprep.subr.bf16.mxu0 0
  %611 = vmatpush1.bf16.msra.mxu0 %v501
  %612 = vmatprep.subr.bf16.mxu0 0
  %613 = vmatpush1.bf16.msra.mxu0 %v502
  %614 = vmatprep.subr.bf16.mxu0 0
  %615 = vmatpush1.bf16.msra.mxu0 %v503
  %616 = vmatprep.subr.bf16.mxu0 0
  %617 = vmatpush1.bf16.msra.mxu0 %v504
  %618 = vmatprep.mubr.bf16.mxu0 %v274
  %619 = vmatmul.mubr.bf16.gmra.mrb[0].mxu0 %v273
  %v620 = vpop.f32.mrb[0].mxu0
  %v621 = vadd.f32 %v143, %v620
  %v622 = vpop.f32.mrb[0].mxu0
  %v623 = vpop.f32.mrb[0].mxu0
  %v624 = vadd.f32 %v143, %v623
  %v625 = vpop.f32.mrb[0].mxu0
  %626 = vmatprep.mubr.bf16.mxu0 %v279
  %627 = vmatmul.mubr.bf16.gmra.mrb[0].mxu0 %v278
  %v628 = vpop.f32.mrb[0].mxu0
  %v629 = vadd.f32 %v143, %v628
  %v630 = vpop.f32.mrb[0].mxu0
  %v631 = vpop.f32.mrb[0].mxu0
  %v632 = vadd.f32 %v143, %v631
  %v633 = vpop.f32.mrb[0].mxu0
  %634 = vmatprep.mubr.bf16.mxu0 %v284
  %635 = vmatmul.mubr.bf16.gmra.mrb[0].mxu0 %v283
  %v636 = vpop.f32.mrb[0].mxu0
  %v637 = vadd.f32 %v143, %v636
  %v638 = vpop.f32.mrb[0].mxu0
  %v639 = vpop.f32.mrb[0].mxu0
  %v640 = vadd.f32 %v143, %v639
  %v641 = vpop.f32.mrb[0].mxu0
  %642 = vmatprep.mubr.bf16.mxu0 %v289
  %643 = vmatmul.mubr.bf16.gmra.mrb[0].mxu0 %v288
  %v644 = vpop.f32.mrb[0].mxu0
  %v645 = vadd.f32 %v143, %v644
  %v646 = vpop.f32.mrb[0].mxu0
  %v647 = vpop.f32.mrb[0].mxu0
  %v648 = vadd.f32 %v143, %v647
  %v649 = vpop.f32.mrb[0].mxu0
  %650 = vmatprep.mubr.bf16.mxu0 %v294
  %651 = vmatmul.mubr.bf16.gmra.mrb[0].mxu0 %v293
  %v652 = vpop.f32.mrb[0].mxu0
  %v653 = vadd.f32 %v143, %v652
  %v654 = vpop.f32.mrb[0].mxu0
  %v655 = vpop.f32.mrb[0].mxu0
  %v656 = vadd.f32 %v143, %v655
  %v657 = vpop.f32.mrb[0].mxu0
  %658 = vmatprep.mubr.bf16.mxu0 %v299
  %659 = vmatmul.mubr.bf16.gmra.mrb[0].mxu0 %v298
  %v660 = vpop.f32.mrb[0].mxu0
  %v661 = vadd.f32 %v143, %v660
  %v662 = vpop.f32.mrb[0].mxu0
  %v663 = vpop.f32.mrb[0].mxu0
  %v664 = vadd.f32 %v143, %v663
  %v665 = vpop.f32.mrb[0].mxu0
  %666 = vmatprep.mubr.bf16.mxu0 %v304
  %667 = vmatmul.mubr.bf16.gmra.mrb[0].mxu0 %v303
  %v668 = vpop.f32.mrb[0].mxu0
  %v669 = vadd.f32 %v143, %v668
  %v670 = vpop.f32.mrb[0].mxu0
  %v671 = vpop.f32.mrb[0].mxu0
  %v672 = vadd.f32 %v143, %v671
  %v673 = vpop.f32.mrb[0].mxu0
  %674 = vmatprep.mubr.bf16.mxu0 %v309
  %675 = vmatmul.mubr.bf16.gmra.mrb[0].mxu0 %v308
  %v676 = vpop.f32.mrb[0].mxu0
  %v677 = vadd.f32 %v143, %v676
  %v678 = vpop.f32.mrb[0].mxu0
  %v679 = vpop.f32.mrb[0].mxu0
  %v680 = vadd.f32 %v143, %v679
  %v681 = vpop.f32.mrb[0].mxu0
  %682 = vdwg.mxu0
  %683 = vmatprep.subr.bf16.mxu0 0
  %684 = vmatpush1.bf16.msra.mxu0 %v505
  %685 = vmatprep.subr.bf16.mxu0 0
  %686 = vmatpush1.bf16.msra.mxu0 %v506
  %687 = vmatprep.subr.bf16.mxu0 0
  %688 = vmatpush1.bf16.msra.mxu0 %v507
  %689 = vmatprep.subr.bf16.mxu0 0
  %690 = vmatpush1.bf16.msra.mxu0 %v508
  %691 = vmatprep.subr.bf16.mxu0 0
  %692 = vmatpush1.bf16.msra.mxu0 %v509
  %693 = vmatprep.subr.bf16.mxu0 0
  %694 = vmatpush1.bf16.msra.mxu0 %v510
  %695 = vmatprep.subr.bf16.mxu0 0
  %696 = vmatpush1.bf16.msra.mxu0 %v511
  %697 = vmatprep.subr.bf16.mxu0 0
  %698 = vmatpush1.bf16.msra.mxu0 %v512
  %699 = vmatprep.subr.bf16.mxu0 0
  %700 = vmatpush1.bf16.msra.mxu0 %v513
  %701 = vmatprep.subr.bf16.mxu0 0
  %702 = vmatpush1.bf16.msra.mxu0 %v514
  %703 = vmatprep.subr.bf16.mxu0 0
  %704 = vmatpush1.bf16.msra.mxu0 %v515
  %705 = vmatprep.subr.bf16.mxu0 0
  %706 = vmatpush1.bf16.msra.mxu0 %v516
  %707 = vmatprep.subr.bf16.mxu0 0
  %708 = vmatpush1.bf16.msra.mxu0 %v517
  %709 = vmatprep.subr.bf16.mxu0 0
  %710 = vmatpush1.bf16.msra.mxu0 %v518
  %711 = vmatprep.subr.bf16.mxu0 0
  %712 = vmatpush1.bf16.msra.mxu0 %v519
  %713 = vmatprep.subr.bf16.mxu0 0
  %714 = vmatpush1.bf16.msra.mxu0 %v520
  %715 = vmatprep.mubr.bf16.mxu0 %v276
  %716 = vmatmul.mubr.bf16.gmra.mrb[0].mxu0 %v275
  %v717 = vpop.f32.mrb[0].mxu0
  %v718 = vadd.f32 %v621, %v717
  %v719 = vpop.f32.mrb[0].mxu0
  %v720 = vpop.f32.mrb[0].mxu0
  %v721 = vadd.f32 %v624, %v720
  %v722 = vpop.f32.mrb[0].mxu0
  %723 = vmatprep.mubr.bf16.mxu0 %v281
  %724 = vmatmul.mubr.bf16.gmra.mrb[0].mxu0 %v280
  %v725 = vpop.f32.mrb[0].mxu0
  %v726 = vadd.f32 %v629, %v725
  %v727 = vpop.f32.mrb[0].mxu0
  %v728 = vpop.f32.mrb[0].mxu0
  %v729 = vadd.f32 %v632, %v728
  %v730 = vpop.f32.mrb[0].mxu0
  %731 = vmatprep.mubr.bf16.mxu0 %v286
  %732 = vmatmul.mubr.bf16.gmra.mrb[0].mxu0 %v285
  %v733 = vpop.f32.mrb[0].mxu0
  %v734 = vadd.f32 %v637, %v733
  %v735 = vpop.f32.mrb[0].mxu0
  %v736 = vpop.f32.mrb[0].mxu0
  %v737 = vadd.f32 %v640, %v736
  %v738 = vpop.f32.mrb[0].mxu0
  %739 = vmatprep.mubr.bf16.mxu0 %v291
  %740 = vmatmul.mubr.bf16.gmra.mrb[0].mxu0 %v290
  %v741 = vpop.f32.mrb[0].mxu0
  %v742 = vadd.f32 %v645, %v741
  %v743 = vpop.f32.mrb[0].mxu0
  %v744 = vpop.f32.mrb[0].mxu0
  %v745 = vadd.f32 %v648, %v744
  %v746 = vpop.f32.mrb[0].mxu0
  %747 = vmatprep.mubr.bf16.mxu0 %v296
  %748 = vmatmul.mubr.bf16.gmra.mrb[0].mxu0 %v295
  %v749 = vpop.f32.mrb[0].mxu0
  %v750 = vadd.f32 %v653, %v749
  %v751 = vpop.f32.mrb[0].mxu0
  %v752 = vpop.f32.mrb[0].mxu0
  %v753 = vadd.f32 %v656, %v752
  %v754 = vpop.f32.mrb[0].mxu0
  %755 = vmatprep.mubr.bf16.mxu0 %v301
  %756 = vmatmul.mubr.bf16.gmra.mrb[0].mxu0 %v300
  %v757 = vpop.f32.mrb[0].mxu0
  %v758 = vadd.f32 %v661, %v757
  %v759 = vpop.f32.mrb[0].mxu0
  %v760 = vpop.f32.mrb[0].mxu0
  %v761 = vadd.f32 %v664, %v760
  %v762 = vpop.f32.mrb[0].mxu0
  %763 = vmatprep.mubr.bf16.mxu0 %v306
  %764 = vmatmul.mubr.bf16.gmra.mrb[0].mxu0 %v305
  %v765 = vpop.f32.mrb[0].mxu0
  %v766 = vadd.f32 %v669, %v765
  %v767 = vpop.f32.mrb[0].mxu0
  %v768 = vpop.f32.mrb[0].mxu0
  %v769 = vadd.f32 %v672, %v768
  %v770 = vpop.f32.mrb[0].mxu0
  %771 = vmatprep.mubr.bf16.mxu0 %v311
  %772 = vmatmul.mubr.bf16.gmra.mrb[0].mxu0 %v310
  %v773 = vpop.f32.mrb[0].mxu0
  %v774 = vadd.f32 %v677, %v773
  %v775 = vpop.f32.mrb[0].mxu0
  %v776 = vpop.f32.mrb[0].mxu0
  %v777 = vadd.f32 %v680, %v776
  %v778 = vpop.f32.mrb[0].mxu0
  %779 = vdwg.mxu0
  %780 = vmatprep.subr.bf16.mxu0 0
  %781 = vmatpush1.bf16.msra.mxu0 %v521
  %782 = vmatprep.subr.bf16.mxu0 0
  %783 = vmatpush1.bf16.msra.mxu0 %v522
  %784 = vmatprep.subr.bf16.mxu0 0
  %785 = vmatpush1.bf16.msra.mxu0 %v523
  %786 = vmatprep.subr.bf16.mxu0 0
  %787 = vmatpush1.bf16.msra.mxu0 %v524
  %788 = vmatprep.subr.bf16.mxu0 0
  %789 = vmatpush1.bf16.msra.mxu0 0
  %790 = vmatprep.subr.bf16.mxu0 0
  %791 = vmatpush1.bf16.msra.mxu0 0
  %792 = vmatprep.subr.bf16.mxu0 0
  %793 = vmatpush1.bf16.msra.mxu0 0
  %794 = vmatprep.subr.bf16.mxu0 0
  %795 = vmatpush1.bf16.msra.mxu0 0
  %796 = vmatprep.subr.bf16.mxu0 0
  %797 = vmatpush1.bf16.msra.mxu0 0
  %798 = vmatprep.subr.bf16.mxu0 0
  %799 = vmatpush1.bf16.msra.mxu0 0
  %800 = vmatprep.subr.bf16.mxu0 0
  %801 = vmatpush1.bf16.msra.mxu0 0
  %802 = vmatprep.subr.bf16.mxu0 0
  %803 = vmatpush1.bf16.msra.mxu0 0
  %804 = vmatprep.subr.bf16.mxu0 0
  %805 = vmatpush1.bf16.msra.mxu0 0
  %806 = vmatprep.subr.bf16.mxu0 0
  %807 = vmatpush1.bf16.msra.mxu0 0
  %808 = vmatprep.subr.bf16.mxu0 0
  %809 = vmatpush1.bf16.msra.mxu0 0
  %810 = vmatprep.subr.bf16.mxu0 0
  %811 = vmatpush1.bf16.msra.mxu0 0
  %812 = vmatprep.mubr.bf16.mxu0 0
  %813 = vmatmul.mubr.bf16.gmra.mrb[0].mxu0 %v563
  %v814 = vpop.f32.mrb[0].mxu0
  %v815 = vadd.f32 %v718, %v814
  %v816 = vpop.f32.mrb[0].mxu0
  %v817 = vpop.f32.mrb[0].mxu0
  %v818 = vadd.f32 %v721, %v817
  %v819 = vpop.f32.mrb[0].mxu0
  %820 = vmatprep.mubr.bf16.mxu0 0
  %821 = vmatmul.mubr.bf16.gmra.mrb[0].mxu0 %v566
  %v822 = vpop.f32.mrb[0].mxu0
  %v823 = vadd.f32 %v726, %v822
  %v824 = vpop.f32.mrb[0].mxu0
  %v825 = vpop.f32.mrb[0].mxu0
  %v826 = vadd.f32 %v729, %v825
  %v827 = vpop.f32.mrb[0].mxu0
  %828 = vmatprep.mubr.bf16.mxu0 0
  %829 = vmatmul.mubr.bf16.gmra.mrb[0].mxu0 %v569
  %v830 = vpop.f32.mrb[0].mxu0
  %v831 = vadd.f32 %v734, %v830
  %v832 = vpop.f32.mrb[0].mxu0
  %v833 = vpop.f32.mrb[0].mxu0
  %v834 = vadd.f32 %v737, %v833
  %v835 = vpop.f32.mrb[0].mxu0
  %836 = vmatprep.mubr.bf16.mxu0 0
  %837 = vmatmul.mubr.bf16.gmra.mrb[0].mxu0 %v572
  %v838 = vpop.f32.mrb[0].mxu0
  %v839 = vadd.f32 %v742, %v838
  %v840 = vpop.f32.mrb[0].mxu0
  %v841 = vpop.f32.mrb[0].mxu0
  %v842 = vadd.f32 %v745, %v841
  %v843 = vpop.f32.mrb[0].mxu0
  %844 = vmatprep.mubr.bf16.mxu0 0
  %845 = vmatmul.mubr.bf16.gmra.mrb[0].mxu0 %v575
  %v846 = vpop.f32.mrb[0].mxu0
  %v847 = vadd.f32 %v750, %v846
  %v848 = vpop.f32.mrb[0].mxu0
  %v849 = vpop.f32.mrb[0].mxu0
  %v850 = vadd.f32 %v753, %v849
  %v851 = vpop.f32.mrb[0].mxu0
  %852 = vmatprep.mubr.bf16.mxu0 0
  %853 = vmatmul.mubr.bf16.gmra.mrb[0].mxu0 %v578
  %v854 = vpop.f32.mrb[0].mxu0
  %v855 = vadd.f32 %v758, %v854
  %v856 = vpop.f32.mrb[0].mxu0
  %v857 = vpop.f32.mrb[0].mxu0
  %v858 = vadd.f32 %v761, %v857
  %v859 = vpop.f32.mrb[0].mxu0
  %860 = vmatprep.mubr.bf16.mxu0 0
  %861 = vmatmul.mubr.bf16.gmra.mrb[0].mxu0 %v581
  %v862 = vpop.f32.mrb[0].mxu0
  %v863 = vadd.f32 %v766, %v862
  %v864 = vpop.f32.mrb[0].mxu0
  %v865 = vpop.f32.mrb[0].mxu0
  %v866 = vadd.f32 %v769, %v865
  %v867 = vpop.f32.mrb[0].mxu0
  %868 = vmatprep.mubr.bf16.mxu0 0
  %869 = vmatmul.mubr.bf16.gmra.mrb[0].mxu0 %v584
  %v870 = vpop.f32.mrb[0].mxu0
  %v871 = vadd.f32 %v774, %v870
  %v872 = vpop.f32.mrb[0].mxu0
  %v873 = vpop.f32.mrb[0].mxu0
  %v874 = vadd.f32 %v777, %v873
  %v875 = vpop.f32.mrb[0].mxu0
  %876 = vdwg.mxu0
  %v877 = vld [vmem:[%s3] sm:$0xff]
  %v878 = vld [vmem:[%s3 + $0x8] sm:$0xff]
  %v879 = vld [vmem:[%s3 + $0x10] sm:$0xff]
  %v880 = vld [vmem:[%s3 + $0x18] sm:$0xff]
  %v881 = vld [vmem:[%s3 + $0x20] sm:$0xff]
  %v882 = vld [vmem:[%s3 + $0x28] sm:$0xff]
  %v883 = vld [vmem:[%s3 + $0x30] sm:$0xff]
  %v884 = vld [vmem:[%s3 + $0x38] sm:$0xff]
  %v885 = vld [vmem:[%s3 + $0x40] sm:$0xff]
  %v886 = vld [vmem:[%s3 + $0x48] sm:$0xff]
  %v887 = vld [vmem:[%s3 + $0x50] sm:$0xff]
  %v888 = vld [vmem:[%s3 + $0x58] sm:$0xff]
  %v889 = vld [vmem:[%s3 + $0x60] sm:$0xff]
  %v890 = vld [vmem:[%s3 + $0x68] sm:$0xff]
  %v891 = vld [vmem:[%s3 + $0x70] sm:$0xff]
  %v892 = vld [vmem:[%s3 + $0x78] sm:$0xff]
  %v893 = vadd.f32 %v815, %v877
  %v894 = vadd.f32 %v818, %v878
  %v895 = vadd.f32 %v823, %v879
  %v896 = vadd.f32 %v826, %v880
  %v897 = vadd.f32 %v831, %v881
  %v898 = vadd.f32 %v834, %v882
  %v899 = vadd.f32 %v839, %v883
  %v900 = vadd.f32 %v842, %v884
  %v901 = vadd.f32 %v847, %v885
  %v902 = vadd.f32 %v850, %v886
  %v903 = vadd.f32 %v855, %v887
  %v904 = vadd.f32 %v858, %v888
  %v905 = vadd.f32 %v863, %v889
  %v906 = vadd.f32 %v866, %v890
  %v907 = vadd.f32 %v871, %v891
  %v908 = vadd.f32 %v874, %v892
  %v909 = vmax.f32 %v893, 0.0
  %v910 = vmax.f32 %v894, 0.0
  %v911 = vmax.f32 %v895, 0.0
  %v912 = vmax.f32 %v896, 0.0
  %v913 = vmax.f32 %v897, 0.0
  %v914 = vmax.f32 %v898, 0.0
  %v915 = vmax.f32 %v899, 0.0
  %v916 = vmax.f32 %v900, 0.0
  %v917 = vmax.f32 %v901, 0.0
  %v918 = vmax.f32 %v902, 0.0
  %v919 = vmax.f32 %v903, 0.0
  %v920 = vmax.f32 %v904, 0.0
  %v921 = vmax.f32 %v905, 0.0
  %v922 = vmax.f32 %v906, 0.0
  %v923 = vmax.f32 %v907, 0.0
  %v924 = vmax.f32 %v908, 0.0
  %925 = vst [vmem:[%s4] sm:$0xff] %v909
  %926 = vst [vmem:[%s4 + $0x8] sm:$0xff] %v910
  %927 = vst [vmem:[%s4 + $0x10] sm:$0xff] %v911
  %928 = vst [vmem:[%s4 + $0x18] sm:$0xff] %v912
  %929 = vst [vmem:[%s4 + $0x20] sm:$0xff] %v913
  %930 = vst [vmem:[%s4 + $0x28] sm:$0xff] %v914
  %931 = vst [vmem:[%s4 + $0x30] sm:$0xff] %v915
  %932 = vst [vmem:[%s4 + $0x38] sm:$0xff] %v916
  %933 = vst [vmem:[%s4 + $0x40] sm:$0xff] %v917
  %934 = vst [vmem:[%s4 + $0x48] sm:$0xff] %v918
  %935 = vst [vmem:[%s4 + $0x50] sm:$0xff] %v919
  %936 = vst [vmem:[%s4 + $0x58] sm:$0xff] %v920
  %937 = vst [vmem:[%s4 + $0x60] sm:$0xff] %v921
  %938 = vst [vmem:[%s4 + $0x68] sm:$0xff] %v922
  %939 = vst [vmem:[%s4 + $0x70] sm:$0xff] %v923
  %940 = vst [vmem:[%s4 + $0x78] sm:$0xff] %v924
  // Predicated region
  $region18: #{resnet_cifar_forward.18} parent=0 // pred_check
    _
  $region19: #{resnet_cifar_forward.18} parent=0 // pred_check_branch
    %942 = sbr.rel (0) target = $region21
  $region20: #{resnet_cifar_forward.18} parent=0 // pred_region
    _
  $region21: #{resnet_cifar_forward.18} parent=0 // pred_fallthru
    _
  // Predicated region
  $region22: #{resnet_cifar_forward.18} parent=0 // pred_check
    _
  $region23: #{resnet_cifar_forward.18} parent=0 // pred_check_branch
    %944 = sbr.rel (0) target = $region25
  $region24: #{resnet_cifar_forward.18} parent=0 // pred_region
    _
  $region25: #{resnet_cifar_forward.18} parent=0 // pred_fallthru
    _

</llo_original>
